<compile_context>
chip_gen: v7x
topology: tpu7x:2x2x1
jax: 0.10.0
libtpu: 0.0.40
codegen_flags: <defaults>
</compile_context>

<pallas_src>
import functools

import jax
import jax.numpy as jnp
from jax.experimental import pallas as pl
from jax.experimental.pallas import tpu as pltpu

_EPS = 1e-5
_LANE = 128


def _round_up(x, m):
    return (x + m - 1) // m * m


def _largest_div_tile(units, max_units):
    for t in range(min(units, max_units), 0, -1):
        if units % t == 0:
            return t
    return 1


def _chip_config():
    """Per-generation tuning: scoped-VMEM limit, fused-IN accumulator budget, K-tile cap."""
    vmem_cap = None
    try:
        info = pltpu.get_tpu_info()
        vmem_cap = getattr(info, "vmem_capacity_bytes", None)
    except Exception:
        vmem_cap = None
    if not vmem_cap:
        vmem_cap = 64 * 1024 * 1024                 # conservative: assume v7x-class (64 MiB/TC)
    small_vmem = vmem_cap <= 96 * 1024 * 1024       # v7x-class => also 2 TensorCores/chip
    vmem_limit = int(vmem_cap * 0.75)               # ~48 MiB on v7x, ~96 MiB on v5e/v6e
    fuse_acc = (8 if small_vmem else 20) * 1024 * 1024
    tk_units = 4 if small_vmem else 8               # K-tile cap, in 128-lane units
    return vmem_limit, fuse_acc, tk_units, small_vmem


_VMEM_LIMIT, _FUSE_ACC_BYTES, _TK_UNITS, _SMALL_VMEM = _chip_config()
_IN_TILE_BYTES = 2 * 1024 * 1024                    # spatial-tile budget for standalone IN

_MM_CP = pltpu.CompilerParams(
    dimension_semantics=("parallel", "parallel", "arbitrary"),
    vmem_limit_bytes=_VMEM_LIMIT,
)


# ----------------------------------------------------------------------------
# Pallas kernels: tiled GEMM with fused epilogues
# ----------------------------------------------------------------------------
def _mm_kernel(x_ref, w_ref, o_ref, acc_ref):
    @pl.when(pl.program_id(2) == 0)
    def _():
        acc_ref[...] = jnp.zeros_like(acc_ref)

    acc_ref[...] += jnp.dot(x_ref[...], w_ref[...], preferred_element_type=jnp.float32)

    @pl.when(pl.program_id(2) == pl.num_programs(2) - 1)
    def _():
        o_ref[...] = acc_ref[...].astype(o_ref.dtype)


def _mm_bias_tanh_kernel(x_ref, w_ref, b_ref, o_ref, acc_ref):
    @pl.when(pl.program_id(2) == 0)
    def _():
        acc_ref[...] = jnp.zeros_like(acc_ref)

    acc_ref[...] += jnp.dot(x_ref[...], w_ref[...], preferred_element_type=jnp.float32)

    @pl.when(pl.program_id(2) == pl.num_programs(2) - 1)
    def _():
        o_ref[...] = jnp.tanh(acc_ref[...] + b_ref[...]).astype(o_ref.dtype)


def _in_finalize(a, inv_n):
    # single pass over the f32 accumulator: sum + sum-of-squares, var = E[a^2] - mu^2
    s1 = jnp.sum(a, axis=0, keepdims=True)
    s2 = jnp.sum(a * a, axis=0, keepdims=True)
    mu = s1 * inv_n
    var = jnp.maximum(s2 * inv_n - mu * mu, 0.0)
    return (a - mu) * jax.lax.rsqrt(var + _EPS)


def _mm_in_kernel(x_ref, w_ref, o_ref, acc_ref, *, relu, inv_n):
    # conv + InstanceNorm2d(affine=False, eps=1e-5) (+ReLU) fused: the output block spans
    # the full spatial extent of one image, so per-channel mean/var are exact.
    @pl.when(pl.program_id(2) == 0)
    def _():
        acc_ref[...] = jnp.zeros_like(acc_ref)

    acc_ref[...] += jnp.dot(x_ref[...], w_ref[...], preferred_element_type=jnp.float32)

    @pl.when(pl.program_id(2) == pl.num_programs(2) - 1)
    def _():
        y = _in_finalize(acc_ref[...], inv_n)
        if relu:
            y = jnp.maximum(y, 0.0)
        o_ref[...] = y.astype(o_ref.dtype)


def _mm_in_add_kernel(x_ref, w_ref, r_ref, o_ref, acc_ref, *, inv_n):
    # conv + InstanceNorm + residual skip (ResnetBlock tail) fused; residual read in bf16.
    @pl.when(pl.program_id(2) == 0)
    def _():
        acc_ref[...] = jnp.zeros_like(acc_ref)

    acc_ref[...] += jnp.dot(x_ref[...], w_ref[...], preferred_element_type=jnp.float32)

    @pl.when(pl.program_id(2) == pl.num_programs(2) - 1)
    def _():
        y = _in_finalize(acc_ref[...], inv_n) + r_ref[...].astype(jnp.float32)
        o_ref[...] = y.astype(o_ref.dtype)


# ----------------------------------------------------------------------------
# Pallas kernels: standalone two-pass instance norm (spatially tiled)
# ----------------------------------------------------------------------------
def _in_stats_kernel(x_ref, st_ref):
    # st rows 0/1 hold per-channel sum / sum-of-squares for one image.
    @pl.when(pl.program_id(1) == 0)
    def _():
        st_ref[...] = jnp.zeros_like(st_ref)
    x = x_ref[...].astype(jnp.float32)
    st_ref[0:1, :] += jnp.sum(x, axis=0, keepdims=True)
    st_ref[1:2, :] += jnp.sum(x * x, axis=0, keepdims=True)


def _in_apply_kernel(x_ref, st_ref, o_ref, *, relu, inv_n):
    x = x_ref[...].astype(jnp.float32)
    mu = st_ref[0:1, :] * inv_n
    var = jnp.maximum(st_ref[1:2, :] * inv_n - mu * mu, 0.0)
    y = (x - mu) * jax.lax.rsqrt(var + _EPS)
    if relu:
        y = jnp.maximum(y, 0.0)
    o_ref[...] = y.astype(o_ref.dtype)


def _in_apply_add_kernel(x_ref, st_ref, r_ref, o_ref, *, inv_n):
    x = x_ref[...].astype(jnp.float32)
    mu = st_ref[0:1, :] * inv_n
    var = jnp.maximum(st_ref[1:2, :] * inv_n - mu * mu, 0.0)
    y = (x - mu) * jax.lax.rsqrt(var + _EPS) + r_ref[...].astype(jnp.float32)
    o_ref[...] = y.astype(o_ref.dtype)


def _in_spatial_tile(S, Cp):
    if S % 8 != 0:
        return S
    max_rows = max(8, _IN_TILE_BYTES // (Cp * 4))
    return 8 * _largest_div_tile(S // 8, max(1, max_rows // 8))


def instance_norm_nhwc(x, relu=True, residual=None, out_dtype=jnp.bfloat16):
    """InstanceNorm2d(affine=False) on NHWC input, two-pass spatially-tiled Pallas.
    Channels are zero-padded to a 128-lane multiple for unmasked stores."""
    B, H, W, C = x.shape
    S = H * W
    Cp = _round_up(C, _LANE)
    x2 = x.reshape(B * S, C)
    if Cp != C:
        x2 = jnp.pad(x2, ((0, 0), (0, Cp - C)))
    ts = _in_spatial_tile(S, Cp)
    ns = S // ts

    # pass 1: per-(image, channel) sum / sum-of-squares accumulated over spatial tiles
    stats = pl.pallas_call(
        _in_stats_kernel,
        out_shape=jax.ShapeDtypeStruct((B * 8, Cp), jnp.float32),
        grid_spec=pltpu.PrefetchScalarGridSpec(
            num_scalar_prefetch=0,
            grid=(B, ns),
            in_specs=[pl.BlockSpec((ts, Cp), lambda b, s: (b * ns + s, 0))],
            out_specs=pl.BlockSpec((8, Cp), lambda b, s: (b, 0)),
        ),
        compiler_params=pltpu.CompilerParams(
            dimension_semantics=("parallel", "arbitrary"),
            vmem_limit_bytes=_VMEM_LIMIT,
        ),
    )(x2)

    # pass 2: normalize (+ReLU / +residual) tile-by-tile
    in_specs = [
        pl.BlockSpec((ts, Cp), lambda b, s: (b * ns + s, 0)),
        pl.BlockSpec((8, Cp), lambda b, s: (b, 0)),
    ]
    args = [x2, stats]
    if residual is not None:
        r2 = residual.reshape(B * S, C).astype(jnp.bfloat16)
        if Cp != C:
            r2 = jnp.pad(r2, ((0, 0), (0, Cp - C)))
        in_specs.append(pl.BlockSpec((ts, Cp), lambda b, s: (b * ns + s, 0)))
        args.append(r2)
        kernel = functools.partial(_in_apply_add_kernel, inv_n=1.0 / S)
    else:
        kernel = functools.partial(_in_apply_kernel, relu=relu, inv_n=1.0 / S)
    out = pl.pallas_call(
        kernel,
        out_shape=jax.ShapeDtypeStruct((B * S, Cp), out_dtype),
        grid_spec=pltpu.PrefetchScalarGridSpec(
            num_scalar_prefetch=0,
            grid=(B, ns),
            in_specs=in_specs,
            out_specs=pl.BlockSpec((ts, Cp), lambda b, s: (b * ns + s, 0)),
        ),
        compiler_params=pltpu.CompilerParams(
            dimension_semantics=("parallel", "parallel"),
            vmem_limit_bytes=_VMEM_LIMIT,
        ),
    )(*args)
    return out[:, :C].reshape(B, H, W, C)


# ----------------------------------------------------------------------------
# GEMM wrappers
# ----------------------------------------------------------------------------
def _gemm_fused_in(patches, weights, S, residual=None, relu=True):
    """[B*S,Kp]@[Kp,Np] with fused instance-norm epilogue.  M-block = S (one image)."""
    M, Kp = patches.shape
    Np = weights.shape[1]
    B = M // S
    max_n_units = max(1, _FUSE_ACC_BYTES // (S * 4 * _LANE))
    tn = _LANE * _largest_div_tile(Np // _LANE, max_n_units)
    # v7x megacore: ensure >=2 parallel grid points when batch == 1 by splitting N.
    if _SMALL_VMEM and B == 1 and (Np // tn) < 2 and (Np // _LANE) >= 2:
        tn = _LANE * _largest_div_tile(Np // _LANE, (Np // _LANE) // 2)
    tk = _LANE * _largest_div_tile(Kp // _LANE, _TK_UNITS)
    grid = (B, Np // tn, Kp // tk)
    inv_n = 1.0 / S
    in_specs = [
        pl.BlockSpec((S, tk), lambda b, n, k: (b, k)),
        pl.BlockSpec((tk, tn), lambda b, n, k: (k, n)),
    ]
    args = [patches, weights]
    if residual is not None:
        in_specs.append(pl.BlockSpec((S, tn), lambda b, n, k: (b, n)))
        args.append(residual.astype(jnp.bfloat16))          # residual streamed in bf16
        kernel = functools.partial(_mm_in_add_kernel, inv_n=inv_n)
    else:
        kernel = functools.partial(_mm_in_kernel, relu=relu, inv_n=inv_n)
    return pl.pallas_call(
        kernel,
        out_shape=jax.ShapeDtypeStruct((M, Np), jnp.bfloat16),   # bf16 activations in HBM
        grid_spec=pltpu.PrefetchScalarGridSpec(
            num_scalar_prefetch=0,
            grid=grid,
            in_specs=in_specs,
            out_specs=pl.BlockSpec((S, tn), lambda b, n, k: (b, n)),
            scratch_shapes=[pltpu.VMEM((S, tn), jnp.float32)],
        ),
        compiler_params=_MM_CP,
    )(*args)


def _gemm_tiled(x, w, bias=None, tanh=False, tm=256, out_dtype=jnp.bfloat16):
    """Plain tiled GEMM (optional bias+tanh epilogue).  Pads M to a multiple of tm."""
    M, Kp = x.shape
    Np = w.shape[1]
    tm = min(tm, max(8, _round_up(M, 8)))
    Mp = _round_up(M, tm)
    if Mp != M:
        x = jnp.pad(x, ((0, Mp - M), (0, 0)))
    tk = _LANE * _largest_div_tile(Kp // _LANE, _TK_UNITS)
    tn = _LANE * _largest_div_tile(Np // _LANE, 4)
    grid = (Mp // tm, Np // tn, Kp // tk)
    in_specs = [
        pl.BlockSpec((tm, tk), lambda i, j, k: (i, k)),
        pl.BlockSpec((tk, tn), lambda i, j, k: (k, j)),
    ]
    args = [x, w]
    if bias is not None:
        assert tanh, "bias-only epilogue is not used in this model"
        in_specs.append(pl.BlockSpec((1, tn), lambda i, j, k: (0, j)))
        args.append(bias)
        kernel = _mm_bias_tanh_kernel
    else:
        kernel = _mm_kernel
    out = pl.pallas_call(
        kernel,
        out_shape=jax.ShapeDtypeStruct((Mp, Np), out_dtype),
        grid_spec=pltpu.PrefetchScalarGridSpec(
            num_scalar_prefetch=0,
            grid=grid,
            in_specs=in_specs,
            out_specs=pl.BlockSpec((tm, tn), lambda i, j, k: (i, j)),
            scratch_shapes=[pltpu.VMEM((tm, tn), jnp.float32)],
        ),
        compiler_params=_MM_CP,
    )(*args)
    return out[:M] if Mp != M else out


# ----------------------------------------------------------------------------
# Conv glue (NHWC patch extraction; the matmuls + epilogues run in Pallas)
# ----------------------------------------------------------------------------
def reflect_pad_nhwc(x, p):
    # TODO(synk): reflect padding stays an XLA op; folding it into the conv DMA would need
    # non-rectangular halo reads that a BlockSpec index_map cannot express.
    return jnp.pad(x, ((0, 0), (p, p), (p, p), (0, 0)), mode="reflect")


def _im2col_nhwc(x, kh, kw, stride):
    # TODO(synk): im2col patches are materialized by XLA (in bf16, streamed via K-tiled
    # BlockSpecs, never fully VMEM-resident); a fully implicit GEMM (shifted-window DMA per
    # K step) would remove the kh*kw HBM inflation and is the remaining memory-system win.
    B, H, W, C = x.shape
    Ho = (H - kh) // stride + 1
    Wo = (W - kw) // stride + 1
    taps = []
    for i in range(kh):
        for j in range(kw):
            taps.append(x[:, i:i + (Ho - 1) * stride + 1:stride,
                          j:j + (Wo - 1) * stride + 1:stride, :])
    p = jnp.stack(taps, axis=3)                    # [B, Ho, Wo, kh*kw, C]
    return p.reshape(B, Ho * Wo, kh * kw * C), Ho, Wo


def conv2d_nhwc(x, w_oihw, *, stride=1, padding=0, pad_mode="constant",
                epilogue="in_relu", bias=None, residual=None):
    """Conv2d on NHWC input.  epilogue: 'in_relu' | 'in_add' | 'bias_tanh'."""
    x = x.astype(jnp.bfloat16)                     # activations + patches stay bf16 in HBM
    if padding > 0:
        x = jnp.pad(x, ((0, 0), (padding, padding), (padding, padding), (0, 0)),
                    mode=pad_mode)
    Cout, Cin, kh, kw = w_oihw.shape
    B = x.shape[0]
    patches, Ho, Wo = _im2col_nhwc(x, kh, kw, stride)
    S = Ho * Wo
    K = kh * kw * Cin
    Kp = _round_up(K, _LANE)
    Np = _round_up(Cout, _LANE)
    w2 = w_oihw.transpose(2, 3, 1, 0).reshape(K, Cout)
    w2 = jnp.pad(w2, ((0, Kp - K), (0, Np - Cout))).astype(jnp.bfloat16)
    patches = jnp.pad(patches.reshape(B * S, K), ((0, 0), (0, Kp - K)))

    fuse = (epilogue in ("in_relu", "in_add")
            and S % 8 == 0
            and S * _LANE * 4 <= _FUSE_ACC_BYTES)

    if fuse:
        res = None
        if epilogue == "in_add":
            res = residual.reshape(B * S, Cout).astype(jnp.bfloat16)
            if Np != Cout:
                res = jnp.pad(res, ((0, 0), (0, Np - Cout)))
        out = _gemm_fused_in(patches, w2, S, residual=res, relu=(epilogue == "in_relu"))
        return out[:, :Cout].reshape(B, Ho, Wo, Cout)

    if epilogue == "bias_tanh":
        b2 = jnp.pad(bias.reshape(1, Cout), ((0, 0), (0, Np - Cout))).astype(jnp.float32)
        out = _gemm_tiled(patches, w2, bias=b2, tanh=True, out_dtype=jnp.float32)
        return out[:, :Cout].reshape(B, Ho, Wo, Cout)

    # large-spatial fallback: unfused GEMM (bf16 out) + tiled two-pass instance norm
    out = _gemm_tiled(patches, w2)[:, :Cout].reshape(B, Ho, Wo, Cout)
    if epilogue == "in_relu":
        return instance_norm_nhwc(out, relu=True)
    return instance_norm_nhwc(out, relu=False, residual=residual)


def conv_transpose2d_nhwc(x, w_iohw):
    """PyTorch ConvTranspose2d(Cin, Cout, 3, stride=2, padding=1, output_padding=1)
    as a 4-phase sub-pixel decomposition (one GEMM on the un-dilated input).
    Bias omitted: cancelled by the following InstanceNorm(affine=False)."""
    # TODO(synk): the following InstanceNorm could be fused into this GEMM's epilogue with
    # phase-aware column-group stats and a phase-aware out_spec; kept separate (tiled IN)
    # for robustness.
    x = x.astype(jnp.bfloat16)
    B, H, W, Cin = x.shape
    Cout = w_iohw.shape[1]
    xp = jnp.pad(x, ((0, 0), (0, 1), (0, 1), (0, 0)))       # zero row/col at bottom/right
    t0 = xp[:, :H, :W, :]
    t1 = xp[:, :H, 1:W + 1, :]
    t2 = xp[:, 1:H + 1, :W, :]
    t3 = xp[:, 1:H + 1, 1:W + 1, :]
    patches = jnp.concatenate([t0, t1, t2, t3], axis=-1).reshape(B * H * W, 4 * Cin)

    # sub-pixel weight: rows = (tap, Cin), cols = (phase, Cout); taps/phases row-major 2x2
    wk = lambda ky, kx: w_iohw[:, :, ky, kx]                 # [Cin, Cout]
    wsub = jnp.zeros((4, Cin, 4, Cout), jnp.float32)
    wsub = wsub.at[0, :, 0, :].set(wk(1, 1))                 # phase (even,even)
    wsub = wsub.at[0, :, 1, :].set(wk(1, 2))                 # phase (even,odd)
    wsub = wsub.at[1, :, 1, :].set(wk(1, 0))
    wsub = wsub.at[0, :, 2, :].set(wk(2, 1))                 # phase (odd,even)
    wsub = wsub.at[2, :, 2, :].set(wk(0, 1))
    wsub = wsub.at[0, :, 3, :].set(wk(2, 2))                 # phase (odd,odd)
    wsub = wsub.at[1, :, 3, :].set(wk(2, 0))
    wsub = wsub.at[2, :, 3, :].set(wk(0, 2))
    wsub = wsub.at[3, :, 3, :].set(wk(0, 0))

    K, N = 4 * Cin, 4 * Cout
    Kp, Np = _round_up(K, _LANE), _round_up(N, _LANE)
    w2 = jnp.pad(wsub.reshape(K, N), ((0, Kp - K), (0, Np - N))).astype(jnp.bfloat16)
    patches = jnp.pad(patches, ((0, 0), (0, Kp - K)))

    out = _gemm_tiled(patches, w2)[:, :N]                    # [B*H*W, 4*Cout] bf16
    y = out.reshape(B, H, W, 2, 2, Cout).transpose(0, 1, 3, 2, 4, 5)
    return y.reshape(B, 2 * H, 2 * W, Cout)


# ----------------------------------------------------------------------------
# ResnetGenerator (resnet_9blocks) parameters + apply
# ----------------------------------------------------------------------------
def init_resnet_generator(key, in_nc, out_nc, ngf, n_blocks, n_v=None):
    # init_type='normal', init_gain=0.02 -> N(0, 0.02).  Biases of convs followed by
    # InstanceNorm(affine=False) are omitted: the mean subtraction cancels them exactly.
    keys = iter(jax.random.split(key, 64))

    def wconv(cout, cin, k):
        return 0.02 * jax.random.normal(next(keys), (cout, cin, k, k), jnp.float32)

    params = {
        "c0_w": wconv(ngf, in_nc, 7),
        "d1_w": wconv(ngf * 2, ngf, 3),
        "d2_w": wconv(ngf * 4, ngf * 2, 3),
        "u1_w": 0.02 * jax.random.normal(next(keys), (ngf * 4, ngf * 2, 3, 3), jnp.float32),
        "u2_w": 0.02 * jax.random.normal(next(keys), (ngf * 2, ngf, 3, 3), jnp.float32),
        "o_w": wconv(out_nc, ngf, 7),
        "o_b": jnp.zeros((out_nc,), jnp.float32),
    }
    for i in range(n_blocks):
        params[f"b{i}_1_w"] = wconv(ngf * 4, ngf * 4, 3)
        params[f"b{i}_2_w"] = wconv(ngf * 4, ngf * 4, 3)
    if n_v is not None:
        params["v_w"] = 0.02 * jax.random.normal(next(keys), (ngf * 4, n_v), jnp.float32)
        params["v_b"] = jnp.zeros((n_v,), jnp.float32)
    return params


def apply_resnet_generator(params, x_nchw, n_blocks, return_v=False):
    x = x_nchw.transpose(0, 2, 3, 1)                         # NCHW -> NHWC, once
    h = reflect_pad_nhwc(x, 3)
    h = conv2d_nhwc(h, params["c0_w"], epilogue="in_relu")
    h = conv2d_nhwc(h, params["d1_w"], stride=2, padding=1, epilogue="in_relu")
    h = conv2d_nhwc(h, params["d2_w"], stride=2, padding=1, epilogue="in_relu")
    for i in range(n_blocks):
        r = reflect_pad_nhwc(h, 1)
        r = conv2d_nhwc(r, params[f"b{i}_1_w"], epilogue="in_relu")
        # TODO(synk): nn.Dropout(0.5) inside ResnetBlock treated as identity (eval mode).
        r = reflect_pad_nhwc(r, 1)
        h = conv2d_nhwc(r, params[f"b{i}_2_w"], epilogue="in_add", residual=h)
    bottleneck = h
    h = conv_transpose2d_nhwc(h, params["u1_w"])
    h = instance_norm_nhwc(h, relu=True)
    h = conv_transpose2d_nhwc(h, params["u2_w"])
    h = instance_norm_nhwc(h, relu=True)
    h = reflect_pad_nhwc(h, 3)
    img = conv2d_nhwc(h, params["o_w"], epilogue="bias_tanh", bias=params["o_b"])
    img = img.transpose(0, 3, 1, 2)                          # NHWC -> NCHW, once (f32)
    if return_v:
        # TODO(synk): 'Ganana' auxiliary V head approximated as GAP + linear; tiny matmul
        # kept in plain XLA (a dedicated pallas_call would be pure launch overhead).
        gap = jnp.mean(bottleneck.astype(jnp.float32), axis=(1, 2))   # [B, ngf*4]
        v = gap @ params["v_w"] + params["v_b"]
        return img, v
    return img


# ----------------------------------------------------------------------------
# cycleGAN.forward()
# ----------------------------------------------------------------------------
@functools.partial(jax.jit, static_argnames=("n_blocks",))
def cyclegan_forward(params_GA, params_GB, real_A, real_B, n_blocks):
    fake_B, fake_V = apply_resnet_generator(params_GA, real_A, n_blocks, return_v=True)
    rec_A = apply_resnet_generator(params_GB, fake_B, n_blocks)
    fake_A = apply_resnet_generator(params_GB, real_B, n_blocks)
    rec_B, discarded_V = apply_resnet_generator(params_GA, fake_A, n_blocks, return_v=True)
    return {
        "fake_B": fake_B,
        "fake_V": fake_V,
        "rec_A": rec_A,
        "fake_A": fake_A,
        "rec_B": rec_B,
        "discarded_V": discarded_V,
    }


if __name__ == "__main__":
    # Small deterministic test configuration (input_nc=output_nc=3 as in the module,
    # reduced ngf / spatial size for a quick synthetic run; 9 resnet blocks kept).
    B, C, H, W = 2, 3, 16, 16
    NGF = 8
    N_BLOCKS = 9
    N_V = 8

    key = jax.random.PRNGKey(0)
    k_a, k_b, k_ga, k_gb = jax.random.split(key, 4)
    real_A = jax.random.normal(k_a, (B, C, H, W), jnp.float32)
    real_B = jax.random.normal(k_b, (B, C, H, W), jnp.float32)

    params_GA = init_resnet_generator(k_ga, C, C, NGF, N_BLOCKS, n_v=N_V)  # 'Ganana'
    params_GB = init_resnet_generator(k_gb, C, C, NGF, N_BLOCKS)           # resnet_9blocks

    out = cyclegan_forward(params_GA, params_GB, real_A, real_B, n_blocks=N_BLOCKS)
    out = jax.block_until_ready(out)

    assert out["fake_B"].shape == (B, C, H, W)
    assert out["rec_A"].shape == (B, C, H, W)
    assert out["fake_A"].shape == (B, C, H, W)
    assert out["rec_B"].shape == (B, C, H, W)
    assert out["fake_V"].shape == (B, N_V)
    assert all(bool(jnp.all(jnp.isfinite(v.astype(jnp.float32)))) for v in out.values())
    print("KERNEL_OK")
</pallas_src>

<mosaic_0001>
module attributes {stable_mosaic.version = 11 : i64} {
  func.func @_mm_in_kernel(%arg0: i32, %arg1: i32, %arg2: i32, %arg3: memref<256x256xbf16, #tpu.memory_space<vmem>>, %arg4: memref<256x128xbf16, #tpu.memory_space<vmem>>, %arg5: memref<256x128xbf16, #tpu.memory_space<vmem>>, %arg6: memref<256x128xf32, #tpu.memory_space<vmem>>) attributes {dimension_semantics = [#tpu.dimension_semantics<parallel>, #tpu.dimension_semantics<parallel>, #tpu.dimension_semantics<arbitrary>], iteration_bounds = array<i64: 2, 1, 1>, scalar_prefetch = 0 : i64, scratch_operands = 1 : i64, tpu.core_type = #tpu.core_type<tc>, window_params = [{transform_indices = @transform_0, window_bounds = array<i64: 256, 256>}, {transform_indices = @transform_1, window_bounds = array<i64: 256, 128>}, {transform_indices = @transform_2, window_bounds = array<i64: 256, 128>}]} {
    %c0_i32 = arith.constant 0 : i32
    %0 = arith.cmpi eq, %arg2, %c0_i32 : i32
    %1 = arith.extui %0 : i1 to i32
    %c0_i32_0 = arith.constant 0 : i32
    %2 = arith.cmpi ne, %1, %c0_i32_0 : i32
    scf.if %2 {
      %cst_10 = arith.constant 0.000000e+00 : f32
      %12 = vector.broadcast %cst_10 : f32 to vector<256x128xf32>
      %c0_11 = arith.constant 0 : index
      %c0_12 = arith.constant 0 : index
      %13 = vector.load %arg6[%c0_11, %c0_12] : memref<256x128xf32, #tpu.memory_space<vmem>>, vector<256x128xf32>
      tpu.vector_store %arg6[%c0_11, %c0_12], %12 {strides = array<i32>} : memref<256x128xf32, #tpu.memory_space<vmem>>, vector<256x128xf32>,
    } else {
    }
    %c0 = arith.constant 0 : index
    %c0_1 = arith.constant 0 : index
    %3 = vector.load %arg6[%c0, %c0_1] : memref<256x128xf32, #tpu.memory_space<vmem>>, vector<256x128xf32>
    %c0_2 = arith.constant 0 : index
    %c0_3 = arith.constant 0 : index
    %4 = vector.load %arg3[%c0_2, %c0_3] : memref<256x256xbf16, #tpu.memory_space<vmem>>, vector<256x256xbf16>
    %c0_4 = arith.constant 0 : index
    %c0_5 = arith.constant 0 : index
    %5 = vector.load %arg4[%c0_4, %c0_5] : memref<256x128xbf16, #tpu.memory_space<vmem>>, vector<256x128xbf16>
    %cst = arith.constant dense<0.000000e+00> : vector<256x128xf32>
    %6 = tpu.matmul %4, %5, %cst {dimension_numbers = #tpu.dot_dimension_numbers<[1], [0], [0], [1], [0, 0, 1, 1], [], []>} : vector<256x256xbf16>, vector<256x128xbf16>, vector<256x128xf32> -> vector<256x128xf32>
    %7 = arith.addf %3, %6 : vector<256x128xf32>
    %c0_6 = arith.constant 0 : index
    %c0_7 = arith.constant 0 : index
    %8 = vector.load %arg6[%c0_6, %c0_7] : memref<256x128xf32, #tpu.memory_space<vmem>>, vector<256x128xf32>
    tpu.vector_store %arg6[%c0_6, %c0_7], %7 {strides = array<i32>} : memref<256x128xf32, #tpu.memory_space<vmem>>, vector<256x128xf32>,
    %c0_i32_8 = arith.constant 0 : i32
    %9 = arith.cmpi eq, %arg2, %c0_i32_8 : i32
    %10 = arith.extui %9 : i1 to i32
    %c0_i32_9 = arith.constant 0 : i32
    %11 = arith.cmpi ne, %10, %c0_i32_9 : i32
    scf.if %11 {
      %c0_10 = arith.constant 0 : index
      %c0_11 = arith.constant 0 : index
      %12 = vector.load %arg6[%c0_10, %c0_11] : memref<256x128xf32, #tpu.memory_space<vmem>>, vector<256x128xf32>
      %cst_12 = arith.constant dense<0.000000e+00> : vector<128xf32>
      %13 = vector.multi_reduction <add>, %12, %cst_12 [0] : vector<256x128xf32> to vector<128xf32>
      %14 = vector.shape_cast %13 : vector<128xf32> to vector<1x128xf32>
      %15 = arith.mulf %12, %12 : vector<256x128xf32>
      %cst_13 = arith.constant dense<0.000000e+00> : vector<128xf32>
      %16 = vector.multi_reduction <add>, %15, %cst_13 [0] : vector<256x128xf32> to vector<128xf32>
      %17 = vector.shape_cast %16 : vector<128xf32> to vector<1x128xf32>
      %cst_14 = arith.constant 3.906250e-03 : f32
      %18 = vector.broadcast %cst_14 : f32 to vector<1x128xf32>
      %19 = arith.mulf %14, %18 : vector<1x128xf32>
      %cst_15 = arith.constant 3.906250e-03 : f32
      %20 = vector.broadcast %cst_15 : f32 to vector<1x128xf32>
      %21 = arith.mulf %17, %20 : vector<1x128xf32>
      %22 = arith.mulf %19, %19 : vector<1x128xf32>
      %23 = arith.subf %21, %22 : vector<1x128xf32>
      %cst_16 = arith.constant 0.000000e+00 : f32
      %24 = vector.broadcast %cst_16 : f32 to vector<1x128xf32>
      %25 = arith.maximumf %23, %24 : vector<1x128xf32>
      %26 = vector.broadcast %19 : vector<1x128xf32> to vector<256x128xf32>
      %27 = arith.subf %12, %26 : vector<256x128xf32>
      %cst_17 = arith.constant 9.99999974E-6 : f32
      %28 = vector.broadcast %cst_17 : f32 to vector<1x128xf32>
      %29 = arith.addf %25, %28 : vector<1x128xf32>
      %30 = math.rsqrt %29 : vector<1x128xf32>
      %31 = vector.broadcast %30 : vector<1x128xf32> to vector<256x128xf32>
      %32 = arith.mulf %27, %31 : vector<256x128xf32>
      %cst_18 = arith.constant 0.000000e+00 : f32
      %33 = vector.broadcast %cst_18 : f32 to vector<256x128xf32>
      %34 = arith.maximumf %32, %33 : vector<256x128xf32>
      %35 = arith.truncf %34 : vector<256x128xf32> to vector<256x128xbf16>
      %c0_19 = arith.constant 0 : index
      %c0_20 = arith.constant 0 : index
      %36 = vector.load %arg5[%c0_19, %c0_20] : memref<256x128xbf16, #tpu.memory_space<vmem>>, vector<256x128xbf16>
      tpu.vector_store %arg5[%c0_19, %c0_20], %35 {strides = array<i32>} : memref<256x128xbf16, #tpu.memory_space<vmem>>, vector<256x128xbf16>,
    } else {
    }
    return
  }
  func.func @transform_0(%arg0: i32, %arg1: i32, %arg2: i32) -> (i32, i32) {
    %c0_i32 = arith.constant 0 : i32
    return %arg0, %arg2 : i32, i32
  }
  func.func @transform_1(%arg0: i32, %arg1: i32, %arg2: i32) -> (i32, i32) {
    %c0_i32 = arith.constant 0 : i32
    return %arg2, %arg1 : i32, i32
  }
  func.func @transform_2(%arg0: i32, %arg1: i32, %arg2: i32) -> (i32, i32) {
    %c0_i32 = arith.constant 0 : i32
    return %arg0, %arg1 : i32, i32
  }
}

module attributes {stable_mosaic.version = 11 : i64} {
  func.func @_mm_in_kernel(%arg0: i32, %arg1: i32, %arg2: i32, %arg3: memref<64x128xbf16, #tpu.memory_space<vmem>>, %arg4: memref<128x128xbf16, #tpu.memory_space<vmem>>, %arg5: memref<64x128xbf16, #tpu.memory_space<vmem>>, %arg6: memref<64x128xf32, #tpu.memory_space<vmem>>) attributes {dimension_semantics = [#tpu.dimension_semantics<parallel>, #tpu.dimension_semantics<parallel>, #tpu.dimension_semantics<arbitrary>], iteration_bounds = array<i64: 2, 1, 1>, scalar_prefetch = 0 : i64, scratch_operands = 1 : i64, tpu.core_type = #tpu.core_type<tc>, window_params = [{transform_indices = @transform_0, window_bounds = array<i64: 64, 128>}, {transform_indices = @transform_1, window_bounds = array<i64: 128, 128>}, {transform_indices = @transform_2, window_bounds = array<i64: 64, 128>}]} {
    %c0_i32 = arith.constant 0 : i32
    %0 = arith.cmpi eq, %arg2, %c0_i32 : i32
    %1 = arith.extui %0 : i1 to i32
    %c0_i32_0 = arith.constant 0 : i32
    %2 = arith.cmpi ne, %1, %c0_i32_0 : i32
    scf.if %2 {
      %cst_10 = arith.constant 0.000000e+00 : f32
      %12 = vector.broadcast %cst_10 : f32 to vector<64x128xf32>
      %c0_11 = arith.constant 0 : index
      %c0_12 = arith.constant 0 : index
      %13 = vector.load %arg6[%c0_11, %c0_12] : memref<64x128xf32, #tpu.memory_space<vmem>>, vector<64x128xf32>
      tpu.vector_store %arg6[%c0_11, %c0_12], %12 {strides = array<i32>} : memref<64x128xf32, #tpu.memory_space<vmem>>, vector<64x128xf32>,
    } else {
    }
    %c0 = arith.constant 0 : index
    %c0_1 = arith.constant 0 : index
    %3 = vector.load %arg6[%c0, %c0_1] : memref<64x128xf32, #tpu.memory_space<vmem>>, vector<64x128xf32>
    %c0_2 = arith.constant 0 : index
    %c0_3 = arith.constant 0 : index
    %4 = vector.load %arg3[%c0_2, %c0_3] : memref<64x128xbf16, #tpu.memory_space<vmem>>, vector<64x128xbf16>
    %c0_4 = arith.constant 0 : index
    %c0_5 = arith.constant 0 : index
    %5 = vector.load %arg4[%c0_4, %c0_5] : memref<128x128xbf16, #tpu.memory_space<vmem>>, vector<128x128xbf16>
    %cst = arith.constant dense<0.000000e+00> : vector<64x128xf32>
    %6 = tpu.matmul %4, %5, %cst {dimension_numbers = #tpu.dot_dimension_numbers<[1], [0], [0], [1], [0, 0, 1, 1], [], []>} : vector<64x128xbf16>, vector<128x128xbf16>, vector<64x128xf32> -> vector<64x128xf32>
    %7 = arith.addf %3, %6 : vector<64x128xf32>
    %c0_6 = arith.constant 0 : index
    %c0_7 = arith.constant 0 : index
    %8 = vector.load %arg6[%c0_6, %c0_7] : memref<64x128xf32, #tpu.memory_space<vmem>>, vector<64x128xf32>
    tpu.vector_store %arg6[%c0_6, %c0_7], %7 {strides = array<i32>} : memref<64x128xf32, #tpu.memory_space<vmem>>, vector<64x128xf32>,
    %c0_i32_8 = arith.constant 0 : i32
    %9 = arith.cmpi eq, %arg2, %c0_i32_8 : i32
    %10 = arith.extui %9 : i1 to i32
    %c0_i32_9 = arith.constant 0 : i32
    %11 = arith.cmpi ne, %10, %c0_i32_9 : i32
    scf.if %11 {
      %c0_10 = arith.constant 0 : index
      %c0_11 = arith.constant 0 : index
      %12 = vector.load %arg6[%c0_10, %c0_11] : memref<64x128xf32, #tpu.memory_space<vmem>>, vector<64x128xf32>
      %cst_12 = arith.constant dense<0.000000e+00> : vector<128xf32>
      %13 = vector.multi_reduction <add>, %12, %cst_12 [0] : vector<64x128xf32> to vector<128xf32>
      %14 = vector.shape_cast %13 : vector<128xf32> to vector<1x128xf32>
      %15 = arith.mulf %12, %12 : vector<64x128xf32>
      %cst_13 = arith.constant dense<0.000000e+00> : vector<128xf32>
      %16 = vector.multi_reduction <add>, %15, %cst_13 [0] : vector<64x128xf32> to vector<128xf32>
      %17 = vector.shape_cast %16 : vector<128xf32> to vector<1x128xf32>
      %cst_14 = arith.constant 1.562500e-02 : f32
      %18 = vector.broadcast %cst_14 : f32 to vector<1x128xf32>
      %19 = arith.mulf %14, %18 : vector<1x128xf32>
      %cst_15 = arith.constant 1.562500e-02 : f32
      %20 = vector.broadcast %cst_15 : f32 to vector<1x128xf32>
      %21 = arith.mulf %17, %20 : vector<1x128xf32>
      %22 = arith.mulf %19, %19 : vector<1x128xf32>
      %23 = arith.subf %21, %22 : vector<1x128xf32>
      %cst_16 = arith.constant 0.000000e+00 : f32
      %24 = vector.broadcast %cst_16 : f32 to vector<1x128xf32>
      %25 = arith.maximumf %23, %24 : vector<1x128xf32>
      %26 = vector.broadcast %19 : vector<1x128xf32> to vector<64x128xf32>
      %27 = arith.subf %12, %26 : vector<64x128xf32>
      %cst_17 = arith.constant 9.99999974E-6 : f32
      %28 = vector.broadcast %cst_17 : f32 to vector<1x128xf32>
      %29 = arith.addf %25, %28 : vector<1x128xf32>
      %30 = math.rsqrt %29 : vector<1x128xf32>
      %31 = vector.broadcast %30 : vector<1x128xf32> to vector<64x128xf32>
      %32 = arith.mulf %27, %31 : vector<64x128xf32>
      %cst_18 = arith.constant 0.000000e+00 : f32
      %33 = vector.broadcast %cst_18 : f32 to vector<64x128xf32>
      %34 = arith.maximumf %32, %33 : vector<64x128xf32>
      %35 = arith.truncf %34 : vector<64x128xf32> to vector<64x128xbf16>
      %c0_19 = arith.constant 0 : index
      %c0_20 = arith.constant 0 : index
      %36 = vector.load %arg5[%c0_19, %c0_20] : memref<64x128xbf16, #tpu.memory_space<vmem>>, vector<64x128xbf16>
      tpu.vector_store %arg5[%c0_19, %c0_20], %35 {strides = array<i32>} : memref<64x128xbf16, #tpu.memory_space<vmem>>, vector<64x128xbf16>,
    } else {
    }
    return
  }
  func.func @transform_0(%arg0: i32, %arg1: i32, %arg2: i32) -> (i32, i32) {
    %c0_i32 = arith.constant 0 : i32
    return %arg0, %arg2 : i32, i32
  }
  func.func @transform_1(%arg0: i32, %arg1: i32, %arg2: i32) -> (i32, i32) {
    %c0_i32 = arith.constant 0 : i32
    return %arg2, %arg1 : i32, i32
  }
  func.func @transform_2(%arg0: i32, %arg1: i32, %arg2: i32) -> (i32, i32) {
    %c0_i32 = arith.constant 0 : i32
    return %arg0, %arg1 : i32, i32
  }
}

module attributes {stable_mosaic.version = 11 : i64} {
  func.func @_mm_in_kernel(%arg0: i32, %arg1: i32, %arg2: i32, %arg3: memref<16x256xbf16, #tpu.memory_space<vmem>>, %arg4: memref<256x128xbf16, #tpu.memory_space<vmem>>, %arg5: memref<16x128xbf16, #tpu.memory_space<vmem>>, %arg6: memref<16x128xf32, #tpu.memory_space<vmem>>) attributes {dimension_semantics = [#tpu.dimension_semantics<parallel>, #tpu.dimension_semantics<parallel>, #tpu.dimension_semantics<arbitrary>], iteration_bounds = array<i64: 2, 1, 1>, scalar_prefetch = 0 : i64, scratch_operands = 1 : i64, tpu.core_type = #tpu.core_type<tc>, window_params = [{transform_indices = @transform_0, window_bounds = array<i64: 16, 256>}, {transform_indices = @transform_1, window_bounds = array<i64: 256, 128>}, {transform_indices = @transform_2, window_bounds = array<i64: 16, 128>}]} {
    %c0_i32 = arith.constant 0 : i32
    %0 = arith.cmpi eq, %arg2, %c0_i32 : i32
    %1 = arith.extui %0 : i1 to i32
    %c0_i32_0 = arith.constant 0 : i32
    %2 = arith.cmpi ne, %1, %c0_i32_0 : i32
    scf.if %2 {
      %cst_10 = arith.constant 0.000000e+00 : f32
      %12 = vector.broadcast %cst_10 : f32 to vector<16x128xf32>
      %c0_11 = arith.constant 0 : index
      %c0_12 = arith.constant 0 : index
      %13 = vector.load %arg6[%c0_11, %c0_12] : memref<16x128xf32, #tpu.memory_space<vmem>>, vector<16x128xf32>
      tpu.vector_store %arg6[%c0_11, %c0_12], %12 {strides = array<i32>} : memref<16x128xf32, #tpu.memory_space<vmem>>, vector<16x128xf32>,
    } else {
    }
    %c0 = arith.constant 0 : index
    %c0_1 = arith.constant 0 : index
    %3 = vector.load %arg6[%c0, %c0_1] : memref<16x128xf32, #tpu.memory_space<vmem>>, vector<16x128xf32>
    %c0_2 = arith.constant 0 : index
    %c0_3 = arith.constant 0 : index
    %4 = vector.load %arg3[%c0_2, %c0_3] : memref<16x256xbf16, #tpu.memory_space<vmem>>, vector<16x256xbf16>
    %c0_4 = arith.constant 0 : index
    %c0_5 = arith.constant 0 : index
    %5 = vector.load %arg4[%c0_4, %c0_5] : memref<256x128xbf16, #tpu.memory_space<vmem>>, vector<256x128xbf16>
    %cst = arith.constant dense<0.000000e+00> : vector<16x128xf32>
    %6 = tpu.matmul %4, %5, %cst {dimension_numbers = #tpu.dot_dimension_numbers<[1], [0], [0], [1], [0, 0, 1, 1], [], []>} : vector<16x256xbf16>, vector<256x128xbf16>, vector<16x128xf32> -> vector<16x128xf32>
    %7 = arith.addf %3, %6 : vector<16x128xf32>
    %c0_6 = arith.constant 0 : index
    %c0_7 = arith.constant 0 : index
    %8 = vector.load %arg6[%c0_6, %c0_7] : memref<16x128xf32, #tpu.memory_space<vmem>>, vector<16x128xf32>
    tpu.vector_store %arg6[%c0_6, %c0_7], %7 {strides = array<i32>} : memref<16x128xf32, #tpu.memory_space<vmem>>, vector<16x128xf32>,
    %c0_i32_8 = arith.constant 0 : i32
    %9 = arith.cmpi eq, %arg2, %c0_i32_8 : i32
    %10 = arith.extui %9 : i1 to i32
    %c0_i32_9 = arith.constant 0 : i32
    %11 = arith.cmpi ne, %10, %c0_i32_9 : i32
    scf.if %11 {
      %c0_10 = arith.constant 0 : index
      %c0_11 = arith.constant 0 : index
      %12 = vector.load %arg6[%c0_10, %c0_11] : memref<16x128xf32, #tpu.memory_space<vmem>>, vector<16x128xf32>
      %cst_12 = arith.constant dense<0.000000e+00> : vector<128xf32>
      %13 = vector.multi_reduction <add>, %12, %cst_12 [0] : vector<16x128xf32> to vector<128xf32>
      %14 = vector.shape_cast %13 : vector<128xf32> to vector<1x128xf32>
      %15 = arith.mulf %12, %12 : vector<16x128xf32>
      %cst_13 = arith.constant dense<0.000000e+00> : vector<128xf32>
      %16 = vector.multi_reduction <add>, %15, %cst_13 [0] : vector<16x128xf32> to vector<128xf32>
      %17 = vector.shape_cast %16 : vector<128xf32> to vector<1x128xf32>
      %cst_14 = arith.constant 6.250000e-02 : f32
      %18 = vector.broadcast %cst_14 : f32 to vector<1x128xf32>
      %19 = arith.mulf %14, %18 : vector<1x128xf32>
      %cst_15 = arith.constant 6.250000e-02 : f32
      %20 = vector.broadcast %cst_15 : f32 to vector<1x128xf32>
      %21 = arith.mulf %17, %20 : vector<1x128xf32>
      %22 = arith.mulf %19, %19 : vector<1x128xf32>
      %23 = arith.subf %21, %22 : vector<1x128xf32>
      %cst_16 = arith.constant 0.000000e+00 : f32
      %24 = vector.broadcast %cst_16 : f32 to vector<1x128xf32>
      %25 = arith.maximumf %23, %24 : vector<1x128xf32>
      %26 = vector.broadcast %19 : vector<1x128xf32> to vector<16x128xf32>
      %27 = arith.subf %12, %26 : vector<16x128xf32>
      %cst_17 = arith.constant 9.99999974E-6 : f32
      %28 = vector.broadcast %cst_17 : f32 to vector<1x128xf32>
      %29 = arith.addf %25, %28 : vector<1x128xf32>
      %30 = math.rsqrt %29 : vector<1x128xf32>
      %31 = vector.broadcast %30 : vector<1x128xf32> to vector<16x128xf32>
      %32 = arith.mulf %27, %31 : vector<16x128xf32>
      %cst_18 = arith.constant 0.000000e+00 : f32
      %33 = vector.broadcast %cst_18 : f32 to vector<16x128xf32>
      %34 = arith.maximumf %32, %33 : vector<16x128xf32>
      %35 = arith.truncf %34 : vector<16x128xf32> to vector<16x128xbf16>
      %c0_19 = arith.constant 0 : index
      %c0_20 = arith.constant 0 : index
      %36 = vector.load %arg5[%c0_19, %c0_20] : memref<16x128xbf16, #tpu.memory_space<vmem>>, vector<16x128xbf16>
      tpu.vector_store %arg5[%c0_19, %c0_20], %35 {strides = array<i32>} : memref<16x128xbf16, #tpu.memory_space<vmem>>, vector<16x128xbf16>,
    } else {
    }
    return
  }
  func.func @transform_0(%arg0: i32, %arg1: i32, %arg2: i32) -> (i32, i32) {
    %c0_i32 = arith.constant 0 : i32
    return %arg0, %arg2 : i32, i32
  }
  func.func @transform_1(%arg0: i32, %arg1: i32, %arg2: i32) -> (i32, i32) {
    %c0_i32 = arith.constant 0 : i32
    return %arg2, %arg1 : i32, i32
  }
  func.func @transform_2(%arg0: i32, %arg1: i32, %arg2: i32) -> (i32, i32) {
    %c0_i32 = arith.constant 0 : i32
    return %arg0, %arg1 : i32, i32
  }
}

module attributes {stable_mosaic.version = 11 : i64} {
  func.func @_mm_in_kernel(%arg0: i32, %arg1: i32, %arg2: i32, %arg3: memref<16x384xbf16, #tpu.memory_space<vmem>>, %arg4: memref<384x128xbf16, #tpu.memory_space<vmem>>, %arg5: memref<16x128xbf16, #tpu.memory_space<vmem>>, %arg6: memref<16x128xf32, #tpu.memory_space<vmem>>) attributes {dimension_semantics = [#tpu.dimension_semantics<parallel>, #tpu.dimension_semantics<parallel>, #tpu.dimension_semantics<arbitrary>], iteration_bounds = array<i64: 2, 1, 1>, scalar_prefetch = 0 : i64, scratch_operands = 1 : i64, tpu.core_type = #tpu.core_type<tc>, window_params = [{transform_indices = @transform_0, window_bounds = array<i64: 16, 384>}, {transform_indices = @transform_1, window_bounds = array<i64: 384, 128>}, {transform_indices = @transform_2, window_bounds = array<i64: 16, 128>}]} {
    %c0_i32 = arith.constant 0 : i32
    %0 = arith.cmpi eq, %arg2, %c0_i32 : i32
    %1 = arith.extui %0 : i1 to i32
    %c0_i32_0 = arith.constant 0 : i32
    %2 = arith.cmpi ne, %1, %c0_i32_0 : i32
    scf.if %2 {
      %cst_10 = arith.constant 0.000000e+00 : f32
      %12 = vector.broadcast %cst_10 : f32 to vector<16x128xf32>
      %c0_11 = arith.constant 0 : index
      %c0_12 = arith.constant 0 : index
      %13 = vector.load %arg6[%c0_11, %c0_12] : memref<16x128xf32, #tpu.memory_space<vmem>>, vector<16x128xf32>
      tpu.vector_store %arg6[%c0_11, %c0_12], %12 {strides = array<i32>} : memref<16x128xf32, #tpu.memory_space<vmem>>, vector<16x128xf32>,
    } else {
    }
    %c0 = arith.constant 0 : index
    %c0_1 = arith.constant 0 : index
    %3 = vector.load %arg6[%c0, %c0_1] : memref<16x128xf32, #tpu.memory_space<vmem>>, vector<16x128xf32>
    %c0_2 = arith.constant 0 : index
    %c0_3 = arith.constant 0 : index
    %4 = vector.load %arg3[%c0_2, %c0_3] : memref<16x384xbf16, #tpu.memory_space<vmem>>, vector<16x384xbf16>
    %c0_4 = arith.constant 0 : index
    %c0_5 = arith.constant 0 : index
    %5 = vector.load %arg4[%c0_4, %c0_5] : memref<384x128xbf16, #tpu.memory_space<vmem>>, vector<384x128xbf16>
    %cst = arith.constant dense<0.000000e+00> : vector<16x128xf32>
    %6 = tpu.matmul %4, %5, %cst {dimension_numbers = #tpu.dot_dimension_numbers<[1], [0], [0], [1], [0, 0, 1, 1], [], []>} : vector<16x384xbf16>, vector<384x128xbf16>, vector<16x128xf32> -> vector<16x128xf32>
    %7 = arith.addf %3, %6 : vector<16x128xf32>
    %c0_6 = arith.constant 0 : index
    %c0_7 = arith.constant 0 : index
    %8 = vector.load %arg6[%c0_6, %c0_7] : memref<16x128xf32, #tpu.memory_space<vmem>>, vector<16x128xf32>
    tpu.vector_store %arg6[%c0_6, %c0_7], %7 {strides = array<i32>} : memref<16x128xf32, #tpu.memory_space<vmem>>, vector<16x128xf32>,
    %c0_i32_8 = arith.constant 0 : i32
    %9 = arith.cmpi eq, %arg2, %c0_i32_8 : i32
    %10 = arith.extui %9 : i1 to i32
    %c0_i32_9 = arith.constant 0 : i32
    %11 = arith.cmpi ne, %10, %c0_i32_9 : i32
    scf.if %11 {
      %c0_10 = arith.constant 0 : index
      %c0_11 = arith.constant 0 : index
      %12 = vector.load %arg6[%c0_10, %c0_11] : memref<16x128xf32, #tpu.memory_space<vmem>>, vector<16x128xf32>
      %cst_12 = arith.constant dense<0.000000e+00> : vector<128xf32>
      %13 = vector.multi_reduction <add>, %12, %cst_12 [0] : vector<16x128xf32> to vector<128xf32>
      %14 = vector.shape_cast %13 : vector<128xf32> to vector<1x128xf32>
      %15 = arith.mulf %12, %12 : vector<16x128xf32>
      %cst_13 = arith.constant dense<0.000000e+00> : vector<128xf32>
      %16 = vector.multi_reduction <add>, %15, %cst_13 [0] : vector<16x128xf32> to vector<128xf32>
      %17 = vector.shape_cast %16 : vector<128xf32> to vector<1x128xf32>
      %cst_14 = arith.constant 6.250000e-02 : f32
      %18 = vector.broadcast %cst_14 : f32 to vector<1x128xf32>
      %19 = arith.mulf %14, %18 : vector<1x128xf32>
      %cst_15 = arith.constant 6.250000e-02 : f32
      %20 = vector.broadcast %cst_15 : f32 to vector<1x128xf32>
      %21 = arith.mulf %17, %20 : vector<1x128xf32>
      %22 = arith.mulf %19, %19 : vector<1x128xf32>
      %23 = arith.subf %21, %22 : vector<1x128xf32>
      %cst_16 = arith.constant 0.000000e+00 : f32
      %24 = vector.broadcast %cst_16 : f32 to vector<1x128xf32>
      %25 = arith.maximumf %23, %24 : vector<1x128xf32>
      %26 = vector.broadcast %19 : vector<1x128xf32> to vector<16x128xf32>
      %27 = arith.subf %12, %26 : vector<16x128xf32>
      %cst_17 = arith.constant 9.99999974E-6 : f32
      %28 = vector.broadcast %cst_17 : f32 to vector<1x128xf32>
      %29 = arith.addf %25, %28 : vector<1x128xf32>
      %30 = math.rsqrt %29 : vector<1x128xf32>
      %31 = vector.broadcast %30 : vector<1x128xf32> to vector<16x128xf32>
      %32 = arith.mulf %27, %31 : vector<16x128xf32>
      %cst_18 = arith.constant 0.000000e+00 : f32
      %33 = vector.broadcast %cst_18 : f32 to vector<16x128xf32>
      %34 = arith.maximumf %32, %33 : vector<16x128xf32>
      %35 = arith.truncf %34 : vector<16x128xf32> to vector<16x128xbf16>
      %c0_19 = arith.constant 0 : index
      %c0_20 = arith.constant 0 : index
      %36 = vector.load %arg5[%c0_19, %c0_20] : memref<16x128xbf16, #tpu.memory_space<vmem>>, vector<16x128xbf16>
      tpu.vector_store %arg5[%c0_19, %c0_20], %35 {strides = array<i32>} : memref<16x128xbf16, #tpu.memory_space<vmem>>, vector<16x128xbf16>,
    } else {
    }
    return
  }
  func.func @transform_0(%arg0: i32, %arg1: i32, %arg2: i32) -> (i32, i32) {
    %c0_i32 = arith.constant 0 : i32
    return %arg0, %arg2 : i32, i32
  }
  func.func @transform_1(%arg0: i32, %arg1: i32, %arg2: i32) -> (i32, i32) {
    %c0_i32 = arith.constant 0 : i32
    return %arg2, %arg1 : i32, i32
  }
  func.func @transform_2(%arg0: i32, %arg1: i32, %arg2: i32) -> (i32, i32) {
    %c0_i32 = arith.constant 0 : i32
    return %arg0, %arg1 : i32, i32
  }
}

module attributes {stable_mosaic.version = 11 : i64} {
  func.func @_mm_in_add_kernel(%arg0: i32, %arg1: i32, %arg2: i32, %arg3: memref<16x384xbf16, #tpu.memory_space<vmem>>, %arg4: memref<384x128xbf16, #tpu.memory_space<vmem>>, %arg5: memref<16x128xbf16, #tpu.memory_space<vmem>>, %arg6: memref<16x128xbf16, #tpu.memory_space<vmem>>, %arg7: memref<16x128xf32, #tpu.memory_space<vmem>>) attributes {dimension_semantics = [#tpu.dimension_semantics<parallel>, #tpu.dimension_semantics<parallel>, #tpu.dimension_semantics<arbitrary>], iteration_bounds = array<i64: 2, 1, 1>, scalar_prefetch = 0 : i64, scratch_operands = 1 : i64, tpu.core_type = #tpu.core_type<tc>, window_params = [{transform_indices = @transform_0, window_bounds = array<i64: 16, 384>}, {transform_indices = @transform_1, window_bounds = array<i64: 384, 128>}, {transform_indices = @transform_2, window_bounds = array<i64: 16, 128>}, {transform_indices = @transform_3, window_bounds = array<i64: 16, 128>}]} {
    %c0_i32 = arith.constant 0 : i32
    %0 = arith.cmpi eq, %arg2, %c0_i32 : i32
    %1 = arith.extui %0 : i1 to i32
    %c0_i32_0 = arith.constant 0 : i32
    %2 = arith.cmpi ne, %1, %c0_i32_0 : i32
    scf.if %2 {
      %cst_10 = arith.constant 0.000000e+00 : f32
      %12 = vector.broadcast %cst_10 : f32 to vector<16x128xf32>
      %c0_11 = arith.constant 0 : index
      %c0_12 = arith.constant 0 : index
      %13 = vector.load %arg7[%c0_11, %c0_12] : memref<16x128xf32, #tpu.memory_space<vmem>>, vector<16x128xf32>
      tpu.vector_store %arg7[%c0_11, %c0_12], %12 {strides = array<i32>} : memref<16x128xf32, #tpu.memory_space<vmem>>, vector<16x128xf32>,
    } else {
    }
    %c0 = arith.constant 0 : index
    %c0_1 = arith.constant 0 : index
    %3 = vector.load %arg7[%c0, %c0_1] : memref<16x128xf32, #tpu.memory_space<vmem>>, vector<16x128xf32>
    %c0_2 = arith.constant 0 : index
    %c0_3 = arith.constant 0 : index
    %4 = vector.load %arg3[%c0_2, %c0_3] : memref<16x384xbf16, #tpu.memory_space<vmem>>, vector<16x384xbf16>
    %c0_4 = arith.constant 0 : index
    %c0_5 = arith.constant 0 : index
    %5 = vector.load %arg4[%c0_4, %c0_5] : memref<384x128xbf16, #tpu.memory_space<vmem>>, vector<384x128xbf16>
    %cst = arith.constant dense<0.000000e+00> : vector<16x128xf32>
    %6 = tpu.matmul %4, %5, %cst {dimension_numbers = #tpu.dot_dimension_numbers<[1], [0], [0], [1], [0, 0, 1, 1], [], []>} : vector<16x384xbf16>, vector<384x128xbf16>, vector<16x128xf32> -> vector<16x128xf32>
    %7 = arith.addf %3, %6 : vector<16x128xf32>
    %c0_6 = arith.constant 0 : index
    %c0_7 = arith.constant 0 : index
    %8 = vector.load %arg7[%c0_6, %c0_7] : memref<16x128xf32, #tpu.memory_space<vmem>>, vector<16x128xf32>
    tpu.vector_store %arg7[%c0_6, %c0_7], %7 {strides = array<i32>} : memref<16x128xf32, #tpu.memory_space<vmem>>, vector<16x128xf32>,
    %c0_i32_8 = arith.constant 0 : i32
    %9 = arith.cmpi eq, %arg2, %c0_i32_8 : i32
    %10 = arith.extui %9 : i1 to i32
    %c0_i32_9 = arith.constant 0 : i32
    %11 = arith.cmpi ne, %10, %c0_i32_9 : i32
    scf.if %11 {
      %c0_10 = arith.constant 0 : index
      %c0_11 = arith.constant 0 : index
      %12 = vector.load %arg7[%c0_10, %c0_11] : memref<16x128xf32, #tpu.memory_space<vmem>>, vector<16x128xf32>
      %cst_12 = arith.constant dense<0.000000e+00> : vector<128xf32>
      %13 = vector.multi_reduction <add>, %12, %cst_12 [0] : vector<16x128xf32> to vector<128xf32>
      %14 = vector.shape_cast %13 : vector<128xf32> to vector<1x128xf32>
      %15 = arith.mulf %12, %12 : vector<16x128xf32>
      %cst_13 = arith.constant dense<0.000000e+00> : vector<128xf32>
      %16 = vector.multi_reduction <add>, %15, %cst_13 [0] : vector<16x128xf32> to vector<128xf32>
      %17 = vector.shape_cast %16 : vector<128xf32> to vector<1x128xf32>
      %cst_14 = arith.constant 6.250000e-02 : f32
      %18 = vector.broadcast %cst_14 : f32 to vector<1x128xf32>
      %19 = arith.mulf %14, %18 : vector<1x128xf32>
      %cst_15 = arith.constant 6.250000e-02 : f32
      %20 = vector.broadcast %cst_15 : f32 to vector<1x128xf32>
      %21 = arith.mulf %17, %20 : vector<1x128xf32>
      %22 = arith.mulf %19, %19 : vector<1x128xf32>
      %23 = arith.subf %21, %22 : vector<1x128xf32>
      %cst_16 = arith.constant 0.000000e+00 : f32
      %24 = vector.broadcast %cst_16 : f32 to vector<1x128xf32>
      %25 = arith.maximumf %23, %24 : vector<1x128xf32>
      %26 = vector.broadcast %19 : vector<1x128xf32> to vector<16x128xf32>
      %27 = arith.subf %12, %26 : vector<16x128xf32>
      %cst_17 = arith.constant 9.99999974E-6 : f32
      %28 = vector.broadcast %cst_17 : f32 to vector<1x128xf32>
      %29 = arith.addf %25, %28 : vector<1x128xf32>
      %30 = math.rsqrt %29 : vector<1x128xf32>
      %31 = vector.broadcast %30 : vector<1x128xf32> to vector<16x128xf32>
      %32 = arith.mulf %27, %31 : vector<16x128xf32>
      %c0_18 = arith.constant 0 : index
      %c0_19 = arith.constant 0 : index
      %33 = vector.load %arg5[%c0_18, %c0_19] : memref<16x128xbf16, #tpu.memory_space<vmem>>, vector<16x128xbf16>
      %34 = arith.extf %33 : vector<16x128xbf16> to vector<16x128xf32>
      %35 = arith.addf %32, %34 : vector<16x128xf32>
      %36 = arith.truncf %35 : vector<16x128xf32> to vector<16x128xbf16>
      %c0_20 = arith.constant 0 : index
      %c0_21 = arith.constant 0 : index
      %37 = vector.load %arg6[%c0_20, %c0_21] : memref<16x128xbf16, #tpu.memory_space<vmem>>, vector<16x128xbf16>
      tpu.vector_store %arg6[%c0_20, %c0_21], %36 {strides = array<i32>} : memref<16x128xbf16, #tpu.memory_space<vmem>>, vector<16x128xbf16>,
    } else {
    }
    return
  }
  func.func @transform_0(%arg0: i32, %arg1: i32, %arg2: i32) -> (i32, i32) {
    %c0_i32 = arith.constant 0 : i32
    return %arg0, %arg2 : i32, i32
  }
  func.func @transform_1(%arg0: i32, %arg1: i32, %arg2: i32) -> (i32, i32) {
    %c0_i32 = arith.constant 0 : i32
    return %arg2, %arg1 : i32, i32
  }
  func.func @transform_2(%arg0: i32, %arg1: i32, %arg2: i32) -> (i32, i32) {
    %c0_i32 = arith.constant 0 : i32
    return %arg0, %arg1 : i32, i32
  }
  func.func @transform_3(%arg0: i32, %arg1: i32, %arg2: i32) -> (i32, i32) {
    %c0_i32 = arith.constant 0 : i32
    return %arg0, %arg1 : i32, i32
  }
}

module attributes {stable_mosaic.version = 11 : i64} {
  func.func @_mm_kernel(%arg0: i32, %arg1: i32, %arg2: i32, %arg3: memref<32x128xbf16, #tpu.memory_space<vmem>>, %arg4: memref<128x128xbf16, #tpu.memory_space<vmem>>, %arg5: memref<32x128xbf16, #tpu.memory_space<vmem>>, %arg6: memref<32x128xf32, #tpu.memory_space<vmem>>) attributes {dimension_semantics = [#tpu.dimension_semantics<parallel>, #tpu.dimension_semantics<parallel>, #tpu.dimension_semantics<arbitrary>], iteration_bounds = array<i64: 1, 1, 1>, scalar_prefetch = 0 : i64, scratch_operands = 1 : i64, tpu.core_type = #tpu.core_type<tc>, window_params = [{transform_indices = @transform_0, window_bounds = array<i64: 32, 128>}, {transform_indices = @transform_1, window_bounds = array<i64: 128, 128>}, {transform_indices = @transform_2, window_bounds = array<i64: 32, 128>}]} {
    %c0_i32 = arith.constant 0 : i32
    %0 = arith.cmpi eq, %arg2, %c0_i32 : i32
    %1 = arith.extui %0 : i1 to i32
    %c0_i32_0 = arith.constant 0 : i32
    %2 = arith.cmpi ne, %1, %c0_i32_0 : i32
    scf.if %2 {
      %cst_10 = arith.constant 0.000000e+00 : f32
      %12 = vector.broadcast %cst_10 : f32 to vector<32x128xf32>
      %c0_11 = arith.constant 0 : index
      %c0_12 = arith.constant 0 : index
      %13 = vector.load %arg6[%c0_11, %c0_12] : memref<32x128xf32, #tpu.memory_space<vmem>>, vector<32x128xf32>
      tpu.vector_store %arg6[%c0_11, %c0_12], %12 {strides = array<i32>} : memref<32x128xf32, #tpu.memory_space<vmem>>, vector<32x128xf32>,
    } else {
    }
    %c0 = arith.constant 0 : index
    %c0_1 = arith.constant 0 : index
    %3 = vector.load %arg6[%c0, %c0_1] : memref<32x128xf32, #tpu.memory_space<vmem>>, vector<32x128xf32>
    %c0_2 = arith.constant 0 : index
    %c0_3 = arith.constant 0 : index
    %4 = vector.load %arg3[%c0_2, %c0_3] : memref<32x128xbf16, #tpu.memory_space<vmem>>, vector<32x128xbf16>
    %c0_4 = arith.constant 0 : index
    %c0_5 = arith.constant 0 : index
    %5 = vector.load %arg4[%c0_4, %c0_5] : memref<128x128xbf16, #tpu.memory_space<vmem>>, vector<128x128xbf16>
    %cst = arith.constant dense<0.000000e+00> : vector<32x128xf32>
    %6 = tpu.matmul %4, %5, %cst {dimension_numbers = #tpu.dot_dimension_numbers<[1], [0], [0], [1], [0, 0, 1, 1], [], []>} : vector<32x128xbf16>, vector<128x128xbf16>, vector<32x128xf32> -> vector<32x128xf32>
    %7 = arith.addf %3, %6 : vector<32x128xf32>
    %c0_6 = arith.constant 0 : index
    %c0_7 = arith.constant 0 : index
    %8 = vector.load %arg6[%c0_6, %c0_7] : memref<32x128xf32, #tpu.memory_space<vmem>>, vector<32x128xf32>
    tpu.vector_store %arg6[%c0_6, %c0_7], %7 {strides = array<i32>} : memref<32x128xf32, #tpu.memory_space<vmem>>, vector<32x128xf32>,
    %c0_i32_8 = arith.constant 0 : i32
    %9 = arith.cmpi eq, %arg2, %c0_i32_8 : i32
    %10 = arith.extui %9 : i1 to i32
    %c0_i32_9 = arith.constant 0 : i32
    %11 = arith.cmpi ne, %10, %c0_i32_9 : i32
    scf.if %11 {
      %c0_10 = arith.constant 0 : index
      %c0_11 = arith.constant 0 : index
      %12 = vector.load %arg6[%c0_10, %c0_11] : memref<32x128xf32, #tpu.memory_space<vmem>>, vector<32x128xf32>
      %13 = arith.truncf %12 : vector<32x128xf32> to vector<32x128xbf16>
      %c0_12 = arith.constant 0 : index
      %c0_13 = arith.constant 0 : index
      %14 = vector.load %arg5[%c0_12, %c0_13] : memref<32x128xbf16, #tpu.memory_space<vmem>>, vector<32x128xbf16>
      tpu.vector_store %arg5[%c0_12, %c0_13], %13 {strides = array<i32>} : memref<32x128xbf16, #tpu.memory_space<vmem>>, vector<32x128xbf16>,
    } else {
    }
    return
  }
  func.func @transform_0(%arg0: i32, %arg1: i32, %arg2: i32) -> (i32, i32) {
    %c0_i32 = arith.constant 0 : i32
    return %arg0, %arg2 : i32, i32
  }
  func.func @transform_1(%arg0: i32, %arg1: i32, %arg2: i32) -> (i32, i32) {
    %c0_i32 = arith.constant 0 : i32
    return %arg2, %arg1 : i32, i32
  }
  func.func @transform_2(%arg0: i32, %arg1: i32, %arg2: i32) -> (i32, i32) {
    %c0_i32 = arith.constant 0 : i32
    return %arg0, %arg1 : i32, i32
  }
}

module attributes {stable_mosaic.version = 11 : i64} {
  func.func @_in_stats_kernel(%arg0: i32, %arg1: i32, %arg2: memref<64x128xbf16, #tpu.memory_space<vmem>>, %arg3: memref<8x128xf32, #tpu.memory_space<vmem>>) attributes {dimension_semantics = [#tpu.dimension_semantics<parallel>, #tpu.dimension_semantics<arbitrary>], iteration_bounds = array<i64: 2, 1>, scalar_prefetch = 0 : i64, scratch_operands = 0 : i64, tpu.core_type = #tpu.core_type<tc>, window_params = [{transform_indices = @transform_0, window_bounds = array<i64: 64, 128>}, {transform_indices = @transform_1, window_bounds = array<i64: 8, 128>}]} {
    %c0_i32 = arith.constant 0 : i32
    %0 = arith.cmpi eq, %arg1, %c0_i32 : i32
    %1 = arith.extui %0 : i1 to i32
    %c0_i32_0 = arith.constant 0 : i32
    %2 = arith.cmpi ne, %1, %c0_i32_0 : i32
    scf.if %2 {
      %cst_10 = arith.constant 0.000000e+00 : f32
      %16 = vector.broadcast %cst_10 : f32 to vector<8x128xf32>
      %c0_11 = arith.constant 0 : index
      %c0_12 = arith.constant 0 : index
      %17 = vector.load %arg3[%c0_11, %c0_12] : memref<8x128xf32, #tpu.memory_space<vmem>>, vector<8x128xf32>
      tpu.vector_store %arg3[%c0_11, %c0_12], %16 {strides = array<i32>} : memref<8x128xf32, #tpu.memory_space<vmem>>, vector<8x128xf32>,
    } else {
    }
    %c0 = arith.constant 0 : index
    %c0_1 = arith.constant 0 : index
    %3 = vector.load %arg2[%c0, %c0_1] : memref<64x128xbf16, #tpu.memory_space<vmem>>, vector<64x128xbf16>
    %4 = arith.extf %3 : vector<64x128xbf16> to vector<64x128xf32>
    %c0_2 = arith.constant 0 : index
    %c0_3 = arith.constant 0 : index
    %5 = vector.load %arg3[%c0_2, %c0_3] : memref<8x128xf32, #tpu.memory_space<vmem>>, vector<1x128xf32>
    %cst = arith.constant dense<0.000000e+00> : vector<128xf32>
    %6 = vector.multi_reduction <add>, %4, %cst [0] : vector<64x128xf32> to vector<128xf32>
    %7 = vector.shape_cast %6 : vector<128xf32> to vector<1x128xf32>
    %8 = arith.addf %5, %7 : vector<1x128xf32>
    %c0_4 = arith.constant 0 : index
    %c0_5 = arith.constant 0 : index
    %9 = vector.load %arg3[%c0_4, %c0_5] : memref<8x128xf32, #tpu.memory_space<vmem>>, vector<1x128xf32>
    tpu.vector_store %arg3[%c0_4, %c0_5], %8 {strides = array<i32>} : memref<8x128xf32, #tpu.memory_space<vmem>>, vector<1x128xf32>,
    %c1 = arith.constant 1 : index
    %c0_6 = arith.constant 0 : index
    %10 = vector.load %arg3[%c1, %c0_6] : memref<8x128xf32, #tpu.memory_space<vmem>>, vector<1x128xf32>
    %11 = arith.mulf %4, %4 : vector<64x128xf32>
    %cst_7 = arith.constant dense<0.000000e+00> : vector<128xf32>
    %12 = vector.multi_reduction <add>, %11, %cst_7 [0] : vector<64x128xf32> to vector<128xf32>
    %13 = vector.shape_cast %12 : vector<128xf32> to vector<1x128xf32>
    %14 = arith.addf %10, %13 : vector<1x128xf32>
    %c1_8 = arith.constant 1 : index
    %c0_9 = arith.constant 0 : index
    %15 = vector.load %arg3[%c1_8, %c0_9] : memref<8x128xf32, #tpu.memory_space<vmem>>, vector<1x128xf32>
    tpu.vector_store %arg3[%c1_8, %c0_9], %14 {strides = array<i32>} : memref<8x128xf32, #tpu.memory_space<vmem>>, vector<1x128xf32>,
    return
  }
  func.func @transform_0(%arg0: i32, %arg1: i32) -> (i32, i32) {
    %c1_i32 = arith.constant 1 : i32
    %0 = arith.muli %arg0, %c1_i32 : i32
    %1 = arith.addi %0, %arg1 : i32
    %c0_i32 = arith.constant 0 : i32
    %c0_i32_0 = arith.constant 0 : i32
    return %1, %c0_i32 : i32, i32
  }
  func.func @transform_1(%arg0: i32, %arg1: i32) -> (i32, i32) {
    %c0_i32 = arith.constant 0 : i32
    %c0_i32_0 = arith.constant 0 : i32
    return %arg0, %c0_i32 : i32, i32
  }
}

module attributes {stable_mosaic.version = 11 : i64} {
  func.func @_in_apply_kernel(%arg0: i32, %arg1: i32, %arg2: memref<64x128xbf16, #tpu.memory_space<vmem>>, %arg3: memref<8x128xf32, #tpu.memory_space<vmem>>, %arg4: memref<64x128xbf16, #tpu.memory_space<vmem>>) attributes {dimension_semantics = [#tpu.dimension_semantics<parallel>, #tpu.dimension_semantics<parallel>], iteration_bounds = array<i64: 2, 1>, scalar_prefetch = 0 : i64, scratch_operands = 0 : i64, tpu.core_type = #tpu.core_type<tc>, window_params = [{transform_indices = @transform_0, window_bounds = array<i64: 64, 128>}, {transform_indices = @transform_1, window_bounds = array<i64: 8, 128>}, {transform_indices = @transform_2, window_bounds = array<i64: 64, 128>}]} {
    %c0 = arith.constant 0 : index
    %c0_0 = arith.constant 0 : index
    %0 = vector.load %arg2[%c0, %c0_0] : memref<64x128xbf16, #tpu.memory_space<vmem>>, vector<64x128xbf16>
    %1 = arith.extf %0 : vector<64x128xbf16> to vector<64x128xf32>
    %c0_1 = arith.constant 0 : index
    %c0_2 = arith.constant 0 : index
    %2 = vector.load %arg3[%c0_1, %c0_2] : memref<8x128xf32, #tpu.memory_space<vmem>>, vector<1x128xf32>
    %cst = arith.constant 1.562500e-02 : f32
    %3 = vector.broadcast %cst : f32 to vector<1x128xf32>
    %4 = arith.mulf %2, %3 : vector<1x128xf32>
    %c1 = arith.constant 1 : index
    %c0_3 = arith.constant 0 : index
    %5 = vector.load %arg3[%c1, %c0_3] : memref<8x128xf32, #tpu.memory_space<vmem>>, vector<1x128xf32>
    %cst_4 = arith.constant 1.562500e-02 : f32
    %6 = vector.broadcast %cst_4 : f32 to vector<1x128xf32>
    %7 = arith.mulf %5, %6 : vector<1x128xf32>
    %8 = arith.mulf %4, %4 : vector<1x128xf32>
    %9 = arith.subf %7, %8 : vector<1x128xf32>
    %cst_5 = arith.constant 0.000000e+00 : f32
    %10 = vector.broadcast %cst_5 : f32 to vector<1x128xf32>
    %11 = arith.maximumf %9, %10 : vector<1x128xf32>
    %12 = vector.broadcast %4 : vector<1x128xf32> to vector<64x128xf32>
    %13 = arith.subf %1, %12 : vector<64x128xf32>
    %cst_6 = arith.constant 9.99999974E-6 : f32
    %14 = vector.broadcast %cst_6 : f32 to vector<1x128xf32>
    %15 = arith.addf %11, %14 : vector<1x128xf32>
    %16 = math.rsqrt %15 : vector<1x128xf32>
    %17 = vector.broadcast %16 : vector<1x128xf32> to vector<64x128xf32>
    %18 = arith.mulf %13, %17 : vector<64x128xf32>
    %cst_7 = arith.constant 0.000000e+00 : f32
    %19 = vector.broadcast %cst_7 : f32 to vector<64x128xf32>
    %20 = arith.maximumf %18, %19 : vector<64x128xf32>
    %21 = arith.truncf %20 : vector<64x128xf32> to vector<64x128xbf16>
    %c0_8 = arith.constant 0 : index
    %c0_9 = arith.constant 0 : index
    %22 = vector.load %arg4[%c0_8, %c0_9] : memref<64x128xbf16, #tpu.memory_space<vmem>>, vector<64x128xbf16>
    tpu.vector_store %arg4[%c0_8, %c0_9], %21 {strides = array<i32>} : memref<64x128xbf16, #tpu.memory_space<vmem>>, vector<64x128xbf16>,
    return
  }
  func.func @transform_0(%arg0: i32, %arg1: i32) -> (i32, i32) {
    %c1_i32 = arith.constant 1 : i32
    %0 = arith.muli %arg0, %c1_i32 : i32
    %1 = arith.addi %0, %arg1 : i32
    %c0_i32 = arith.constant 0 : i32
    %c0_i32_0 = arith.constant 0 : i32
    return %1, %c0_i32 : i32, i32
  }
  func.func @transform_1(%arg0: i32, %arg1: i32) -> (i32, i32) {
    %c0_i32 = arith.constant 0 : i32
    %c0_i32_0 = arith.constant 0 : i32
    return %arg0, %c0_i32 : i32, i32
  }
  func.func @transform_2(%arg0: i32, %arg1: i32) -> (i32, i32) {
    %c1_i32 = arith.constant 1 : i32
    %0 = arith.muli %arg0, %c1_i32 : i32
    %1 = arith.addi %0, %arg1 : i32
    %c0_i32 = arith.constant 0 : i32
    %c0_i32_0 = arith.constant 0 : i32
    return %1, %c0_i32 : i32, i32
  }
}

module attributes {stable_mosaic.version = 11 : i64} {
  func.func @_mm_kernel(%arg0: i32, %arg1: i32, %arg2: i32, %arg3: memref<128x128xbf16, #tpu.memory_space<vmem>>, %arg4: memref<128x128xbf16, #tpu.memory_space<vmem>>, %arg5: memref<128x128xbf16, #tpu.memory_space<vmem>>, %arg6: memref<128x128xf32, #tpu.memory_space<vmem>>) attributes {dimension_semantics = [#tpu.dimension_semantics<parallel>, #tpu.dimension_semantics<parallel>, #tpu.dimension_semantics<arbitrary>], iteration_bounds = array<i64: 1, 1, 1>, scalar_prefetch = 0 : i64, scratch_operands = 1 : i64, tpu.core_type = #tpu.core_type<tc>, window_params = [{transform_indices = @transform_0, window_bounds = array<i64: 128, 128>}, {transform_indices = @transform_1, window_bounds = array<i64: 128, 128>}, {transform_indices = @transform_2, window_bounds = array<i64: 128, 128>}]} {
    %c0_i32 = arith.constant 0 : i32
    %0 = arith.cmpi eq, %arg2, %c0_i32 : i32
    %1 = arith.extui %0 : i1 to i32
    %c0_i32_0 = arith.constant 0 : i32
    %2 = arith.cmpi ne, %1, %c0_i32_0 : i32
    scf.if %2 {
      %cst_10 = arith.constant 0.000000e+00 : f32
      %12 = vector.broadcast %cst_10 : f32 to vector<128x128xf32>
      %c0_11 = arith.constant 0 : index
      %c0_12 = arith.constant 0 : index
      %13 = vector.load %arg6[%c0_11, %c0_12] : memref<128x128xf32, #tpu.memory_space<vmem>>, vector<128x128xf32>
      tpu.vector_store %arg6[%c0_11, %c0_12], %12 {strides = array<i32>} : memref<128x128xf32, #tpu.memory_space<vmem>>, vector<128x128xf32>,
    } else {
    }
    %c0 = arith.constant 0 : index
    %c0_1 = arith.constant 0 : index
    %3 = vector.load %arg6[%c0, %c0_1] : memref<128x128xf32, #tpu.memory_space<vmem>>, vector<128x128xf32>
    %c0_2 = arith.constant 0 : index
    %c0_3 = arith.constant 0 : index
    %4 = vector.load %arg3[%c0_2, %c0_3] : memref<128x128xbf16, #tpu.memory_space<vmem>>, vector<128x128xbf16>
    %c0_4 = arith.constant 0 : index
    %c0_5 = arith.constant 0 : index
    %5 = vector.load %arg4[%c0_4, %c0_5] : memref<128x128xbf16, #tpu.memory_space<vmem>>, vector<128x128xbf16>
    %cst = arith.constant dense<0.000000e+00> : vector<128x128xf32>
    %6 = tpu.matmul %4, %5, %cst {dimension_numbers = #tpu.dot_dimension_numbers<[1], [0], [0], [1], [0, 0, 1, 1], [], []>} : vector<128x128xbf16>, vector<128x128xbf16>, vector<128x128xf32> -> vector<128x128xf32>
    %7 = arith.addf %3, %6 : vector<128x128xf32>
    %c0_6 = arith.constant 0 : index
    %c0_7 = arith.constant 0 : index
    %8 = vector.load %arg6[%c0_6, %c0_7] : memref<128x128xf32, #tpu.memory_space<vmem>>, vector<128x128xf32>
    tpu.vector_store %arg6[%c0_6, %c0_7], %7 {strides = array<i32>} : memref<128x128xf32, #tpu.memory_space<vmem>>, vector<128x128xf32>,
    %c0_i32_8 = arith.constant 0 : i32
    %9 = arith.cmpi eq, %arg2, %c0_i32_8 : i32
    %10 = arith.extui %9 : i1 to i32
    %c0_i32_9 = arith.constant 0 : i32
    %11 = arith.cmpi ne, %10, %c0_i32_9 : i32
    scf.if %11 {
      %c0_10 = arith.constant 0 : index
      %c0_11 = arith.constant 0 : index
      %12 = vector.load %arg6[%c0_10, %c0_11] : memref<128x128xf32, #tpu.memory_space<vmem>>, vector<128x128xf32>
      %13 = arith.truncf %12 : vector<128x128xf32> to vector<128x128xbf16>
      %c0_12 = arith.constant 0 : index
      %c0_13 = arith.constant 0 : index
      %14 = vector.load %arg5[%c0_12, %c0_13] : memref<128x128xbf16, #tpu.memory_space<vmem>>, vector<128x128xbf16>
      tpu.vector_store %arg5[%c0_12, %c0_13], %13 {strides = array<i32>} : memref<128x128xbf16, #tpu.memory_space<vmem>>, vector<128x128xbf16>,
    } else {
    }
    return
  }
  func.func @transform_0(%arg0: i32, %arg1: i32, %arg2: i32) -> (i32, i32) {
    %c0_i32 = arith.constant 0 : i32
    return %arg0, %arg2 : i32, i32
  }
  func.func @transform_1(%arg0: i32, %arg1: i32, %arg2: i32) -> (i32, i32) {
    %c0_i32 = arith.constant 0 : i32
    return %arg2, %arg1 : i32, i32
  }
  func.func @transform_2(%arg0: i32, %arg1: i32, %arg2: i32) -> (i32, i32) {
    %c0_i32 = arith.constant 0 : i32
    return %arg0, %arg1 : i32, i32
  }
}

module attributes {stable_mosaic.version = 11 : i64} {
  func.func @_in_stats_kernel(%arg0: i32, %arg1: i32, %arg2: memref<256x128xbf16, #tpu.memory_space<vmem>>, %arg3: memref<8x128xf32, #tpu.memory_space<vmem>>) attributes {dimension_semantics = [#tpu.dimension_semantics<parallel>, #tpu.dimension_semantics<arbitrary>], iteration_bounds = array<i64: 2, 1>, scalar_prefetch = 0 : i64, scratch_operands = 0 : i64, tpu.core_type = #tpu.core_type<tc>, window_params = [{transform_indices = @transform_0, window_bounds = array<i64: 256, 128>}, {transform_indices = @transform_1, window_bounds = array<i64: 8, 128>}]} {
    %c0_i32 = arith.constant 0 : i32
    %0 = arith.cmpi eq, %arg1, %c0_i32 : i32
    %1 = arith.extui %0 : i1 to i32
    %c0_i32_0 = arith.constant 0 : i32
    %2 = arith.cmpi ne, %1, %c0_i32_0 : i32
    scf.if %2 {
      %cst_10 = arith.constant 0.000000e+00 : f32
      %16 = vector.broadcast %cst_10 : f32 to vector<8x128xf32>
      %c0_11 = arith.constant 0 : index
      %c0_12 = arith.constant 0 : index
      %17 = vector.load %arg3[%c0_11, %c0_12] : memref<8x128xf32, #tpu.memory_space<vmem>>, vector<8x128xf32>
      tpu.vector_store %arg3[%c0_11, %c0_12], %16 {strides = array<i32>} : memref<8x128xf32, #tpu.memory_space<vmem>>, vector<8x128xf32>,
    } else {
    }
    %c0 = arith.constant 0 : index
    %c0_1 = arith.constant 0 : index
    %3 = vector.load %arg2[%c0, %c0_1] : memref<256x128xbf16, #tpu.memory_space<vmem>>, vector<256x128xbf16>
    %4 = arith.extf %3 : vector<256x128xbf16> to vector<256x128xf32>
    %c0_2 = arith.constant 0 : index
    %c0_3 = arith.constant 0 : index
    %5 = vector.load %arg3[%c0_2, %c0_3] : memref<8x128xf32, #tpu.memory_space<vmem>>, vector<1x128xf32>
    %cst = arith.constant dense<0.000000e+00> : vector<128xf32>
    %6 = vector.multi_reduction <add>, %4, %cst [0] : vector<256x128xf32> to vector<128xf32>
    %7 = vector.shape_cast %6 : vector<128xf32> to vector<1x128xf32>
    %8 = arith.addf %5, %7 : vector<1x128xf32>
    %c0_4 = arith.constant 0 : index
    %c0_5 = arith.constant 0 : index
    %9 = vector.load %arg3[%c0_4, %c0_5] : memref<8x128xf32, #tpu.memory_space<vmem>>, vector<1x128xf32>
    tpu.vector_store %arg3[%c0_4, %c0_5], %8 {strides = array<i32>} : memref<8x128xf32, #tpu.memory_space<vmem>>, vector<1x128xf32>,
    %c1 = arith.constant 1 : index
    %c0_6 = arith.constant 0 : index
    %10 = vector.load %arg3[%c1, %c0_6] : memref<8x128xf32, #tpu.memory_space<vmem>>, vector<1x128xf32>
    %11 = arith.mulf %4, %4 : vector<256x128xf32>
    %cst_7 = arith.constant dense<0.000000e+00> : vector<128xf32>
    %12 = vector.multi_reduction <add>, %11, %cst_7 [0] : vector<256x128xf32> to vector<128xf32>
    %13 = vector.shape_cast %12 : vector<128xf32> to vector<1x128xf32>
    %14 = arith.addf %10, %13 : vector<1x128xf32>
    %c1_8 = arith.constant 1 : index
    %c0_9 = arith.constant 0 : index
    %15 = vector.load %arg3[%c1_8, %c0_9] : memref<8x128xf32, #tpu.memory_space<vmem>>, vector<1x128xf32>
    tpu.vector_store %arg3[%c1_8, %c0_9], %14 {strides = array<i32>} : memref<8x128xf32, #tpu.memory_space<vmem>>, vector<1x128xf32>,
    return
  }
  func.func @transform_0(%arg0: i32, %arg1: i32) -> (i32, i32) {
    %c1_i32 = arith.constant 1 : i32
    %0 = arith.muli %arg0, %c1_i32 : i32
    %1 = arith.addi %0, %arg1 : i32
    %c0_i32 = arith.constant 0 : i32
    %c0_i32_0 = arith.constant 0 : i32
    return %1, %c0_i32 : i32, i32
  }
  func.func @transform_1(%arg0: i32, %arg1: i32) -> (i32, i32) {
    %c0_i32 = arith.constant 0 : i32
    %c0_i32_0 = arith.constant 0 : i32
    return %arg0, %c0_i32 : i32, i32
  }
}

module attributes {stable_mosaic.version = 11 : i64} {
  func.func @_in_apply_kernel(%arg0: i32, %arg1: i32, %arg2: memref<256x128xbf16, #tpu.memory_space<vmem>>, %arg3: memref<8x128xf32, #tpu.memory_space<vmem>>, %arg4: memref<256x128xbf16, #tpu.memory_space<vmem>>) attributes {dimension_semantics = [#tpu.dimension_semantics<parallel>, #tpu.dimension_semantics<parallel>], iteration_bounds = array<i64: 2, 1>, scalar_prefetch = 0 : i64, scratch_operands = 0 : i64, tpu.core_type = #tpu.core_type<tc>, window_params = [{transform_indices = @transform_0, window_bounds = array<i64: 256, 128>}, {transform_indices = @transform_1, window_bounds = array<i64: 8, 128>}, {transform_indices = @transform_2, window_bounds = array<i64: 256, 128>}]} {
    %c0 = arith.constant 0 : index
    %c0_0 = arith.constant 0 : index
    %0 = vector.load %arg2[%c0, %c0_0] : memref<256x128xbf16, #tpu.memory_space<vmem>>, vector<256x128xbf16>
    %1 = arith.extf %0 : vector<256x128xbf16> to vector<256x128xf32>
    %c0_1 = arith.constant 0 : index
    %c0_2 = arith.constant 0 : index
    %2 = vector.load %arg3[%c0_1, %c0_2] : memref<8x128xf32, #tpu.memory_space<vmem>>, vector<1x128xf32>
    %cst = arith.constant 3.906250e-03 : f32
    %3 = vector.broadcast %cst : f32 to vector<1x128xf32>
    %4 = arith.mulf %2, %3 : vector<1x128xf32>
    %c1 = arith.constant 1 : index
    %c0_3 = arith.constant 0 : index
    %5 = vector.load %arg3[%c1, %c0_3] : memref<8x128xf32, #tpu.memory_space<vmem>>, vector<1x128xf32>
    %cst_4 = arith.constant 3.906250e-03 : f32
    %6 = vector.broadcast %cst_4 : f32 to vector<1x128xf32>
    %7 = arith.mulf %5, %6 : vector<1x128xf32>
    %8 = arith.mulf %4, %4 : vector<1x128xf32>
    %9 = arith.subf %7, %8 : vector<1x128xf32>
    %cst_5 = arith.constant 0.000000e+00 : f32
    %10 = vector.broadcast %cst_5 : f32 to vector<1x128xf32>
    %11 = arith.maximumf %9, %10 : vector<1x128xf32>
    %12 = vector.broadcast %4 : vector<1x128xf32> to vector<256x128xf32>
    %13 = arith.subf %1, %12 : vector<256x128xf32>
    %cst_6 = arith.constant 9.99999974E-6 : f32
    %14 = vector.broadcast %cst_6 : f32 to vector<1x128xf32>
    %15 = arith.addf %11, %14 : vector<1x128xf32>
    %16 = math.rsqrt %15 : vector<1x128xf32>
    %17 = vector.broadcast %16 : vector<1x128xf32> to vector<256x128xf32>
    %18 = arith.mulf %13, %17 : vector<256x128xf32>
    %cst_7 = arith.constant 0.000000e+00 : f32
    %19 = vector.broadcast %cst_7 : f32 to vector<256x128xf32>
    %20 = arith.maximumf %18, %19 : vector<256x128xf32>
    %21 = arith.truncf %20 : vector<256x128xf32> to vector<256x128xbf16>
    %c0_8 = arith.constant 0 : index
    %c0_9 = arith.constant 0 : index
    %22 = vector.load %arg4[%c0_8, %c0_9] : memref<256x128xbf16, #tpu.memory_space<vmem>>, vector<256x128xbf16>
    tpu.vector_store %arg4[%c0_8, %c0_9], %21 {strides = array<i32>} : memref<256x128xbf16, #tpu.memory_space<vmem>>, vector<256x128xbf16>,
    return
  }
  func.func @transform_0(%arg0: i32, %arg1: i32) -> (i32, i32) {
    %c1_i32 = arith.constant 1 : i32
    %0 = arith.muli %arg0, %c1_i32 : i32
    %1 = arith.addi %0, %arg1 : i32
    %c0_i32 = arith.constant 0 : i32
    %c0_i32_0 = arith.constant 0 : i32
    return %1, %c0_i32 : i32, i32
  }
  func.func @transform_1(%arg0: i32, %arg1: i32) -> (i32, i32) {
    %c0_i32 = arith.constant 0 : i32
    %c0_i32_0 = arith.constant 0 : i32
    return %arg0, %c0_i32 : i32, i32
  }
  func.func @transform_2(%arg0: i32, %arg1: i32) -> (i32, i32) {
    %c1_i32 = arith.constant 1 : i32
    %0 = arith.muli %arg0, %c1_i32 : i32
    %1 = arith.addi %0, %arg1 : i32
    %c0_i32 = arith.constant 0 : i32
    %c0_i32_0 = arith.constant 0 : i32
    return %1, %c0_i32 : i32, i32
  }
}

module attributes {stable_mosaic.version = 11 : i64} {
  func.func @_mm_bias_tanh_kernel(%arg0: i32, %arg1: i32, %arg2: i32, %arg3: memref<256x512xbf16, #tpu.memory_space<vmem>>, %arg4: memref<512x128xbf16, #tpu.memory_space<vmem>>, %arg5: memref<1x128xf32, #tpu.memory_space<vmem>>, %arg6: memref<256x128xf32, #tpu.memory_space<vmem>>, %arg7: memref<256x128xf32, #tpu.memory_space<vmem>>) attributes {dimension_semantics = [#tpu.dimension_semantics<parallel>, #tpu.dimension_semantics<parallel>, #tpu.dimension_semantics<arbitrary>], iteration_bounds = array<i64: 2, 1, 1>, scalar_prefetch = 0 : i64, scratch_operands = 1 : i64, tpu.core_type = #tpu.core_type<tc>, window_params = [{transform_indices = @transform_0, window_bounds = array<i64: 256, 512>}, {transform_indices = @transform_1, window_bounds = array<i64: 512, 128>}, {transform_indices = @transform_2, window_bounds = array<i64: 1, 128>}, {transform_indices = @transform_3, window_bounds = array<i64: 256, 128>}]} {
    %c0_i32 = arith.constant 0 : i32
    %0 = arith.cmpi eq, %arg2, %c0_i32 : i32
    %1 = arith.extui %0 : i1 to i32
    %c0_i32_0 = arith.constant 0 : i32
    %2 = arith.cmpi ne, %1, %c0_i32_0 : i32
    scf.if %2 {
      %cst_10 = arith.constant 0.000000e+00 : f32
      %12 = vector.broadcast %cst_10 : f32 to vector<256x128xf32>
      %c0_11 = arith.constant 0 : index
      %c0_12 = arith.constant 0 : index
      %13 = vector.load %arg7[%c0_11, %c0_12] : memref<256x128xf32, #tpu.memory_space<vmem>>, vector<256x128xf32>
      tpu.vector_store %arg7[%c0_11, %c0_12], %12 {strides = array<i32>} : memref<256x128xf32, #tpu.memory_space<vmem>>, vector<256x128xf32>,
    } else {
    }
    %c0 = arith.constant 0 : index
    %c0_1 = arith.constant 0 : index
    %3 = vector.load %arg7[%c0, %c0_1] : memref<256x128xf32, #tpu.memory_space<vmem>>, vector<256x128xf32>
    %c0_2 = arith.constant 0 : index
    %c0_3 = arith.constant 0 : index
    %4 = vector.load %arg3[%c0_2, %c0_3] : memref<256x512xbf16, #tpu.memory_space<vmem>>, vector<256x512xbf16>
    %c0_4 = arith.constant 0 : index
    %c0_5 = arith.constant 0 : index
    %5 = vector.load %arg4[%c0_4, %c0_5] : memref<512x128xbf16, #tpu.memory_space<vmem>>, vector<512x128xbf16>
    %cst = arith.constant dense<0.000000e+00> : vector<256x128xf32>
    %6 = tpu.matmul %4, %5, %cst {dimension_numbers = #tpu.dot_dimension_numbers<[1], [0], [0], [1], [0, 0, 1, 1], [], []>} : vector<256x512xbf16>, vector<512x128xbf16>, vector<256x128xf32> -> vector<256x128xf32>
    %7 = arith.addf %3, %6 : vector<256x128xf32>
    %c0_6 = arith.constant 0 : index
    %c0_7 = arith.constant 0 : index
    %8 = vector.load %arg7[%c0_6, %c0_7] : memref<256x128xf32, #tpu.memory_space<vmem>>, vector<256x128xf32>
    tpu.vector_store %arg7[%c0_6, %c0_7], %7 {strides = array<i32>} : memref<256x128xf32, #tpu.memory_space<vmem>>, vector<256x128xf32>,
    %c0_i32_8 = arith.constant 0 : i32
    %9 = arith.cmpi eq, %arg2, %c0_i32_8 : i32
    %10 = arith.extui %9 : i1 to i32
    %c0_i32_9 = arith.constant 0 : i32
    %11 = arith.cmpi ne, %10, %c0_i32_9 : i32
    scf.if %11 {
      %c0_10 = arith.constant 0 : index
      %c0_11 = arith.constant 0 : index
      %12 = vector.load %arg7[%c0_10, %c0_11] : memref<256x128xf32, #tpu.memory_space<vmem>>, vector<256x128xf32>
      %c0_12 = arith.constant 0 : index
      %c0_13 = arith.constant 0 : index
      %13 = vector.load %arg5[%c0_12, %c0_13] : memref<1x128xf32, #tpu.memory_space<vmem>>, vector<1x128xf32>
      %14 = vector.broadcast %13 : vector<1x128xf32> to vector<256x128xf32>
      %15 = arith.addf %12, %14 : vector<256x128xf32>
      %16 = math.tanh %15 : vector<256x128xf32>
      %c0_14 = arith.constant 0 : index
      %c0_15 = arith.constant 0 : index
      %17 = vector.load %arg6[%c0_14, %c0_15] : memref<256x128xf32, #tpu.memory_space<vmem>>, vector<256x128xf32>
      tpu.vector_store %arg6[%c0_14, %c0_15], %16 {strides = array<i32>} : memref<256x128xf32, #tpu.memory_space<vmem>>, vector<256x128xf32>,
    } else {
    }
    return
  }
  func.func @transform_0(%arg0: i32, %arg1: i32, %arg2: i32) -> (i32, i32) {
    %c0_i32 = arith.constant 0 : i32
    return %arg0, %arg2 : i32, i32
  }
  func.func @transform_1(%arg0: i32, %arg1: i32, %arg2: i32) -> (i32, i32) {
    %c0_i32 = arith.constant 0 : i32
    return %arg2, %arg1 : i32, i32
  }
  func.func @transform_2(%arg0: i32, %arg1: i32, %arg2: i32) -> (i32, i32) {
    %c0_i32 = arith.constant 0 : i32
    %c0_i32_0 = arith.constant 0 : i32
    return %c0_i32, %arg1 : i32, i32
  }
  func.func @transform_3(%arg0: i32, %arg1: i32, %arg2: i32) -> (i32, i32) {
    %c0_i32 = arith.constant 0 : i32
    return %arg0, %arg1 : i32, i32
  }
}

</mosaic_0001>

<llo_original>
// kernel: cyclegan_forward.168
$region0: #{cyclegan_forward.168}
  #allocation0 [shape = 'u32[]', space=smem, size = 0x4, offset = 0x4, fixed_abs, tag = 'smem constant byte address 0x4 - core index']
  #allocation1 [shape = 'u32[144,128]{1,0:T(1,128)}', space=vmem, size = 0x12000, scoped, tag = 'internal scratch']
  #allocation2 [shape = 'f32[256,128]{1,0:T(8,128)}', space=vmem, size = 0x20000, scoped, tag = 'scratch operand']
  %s0 = inlined_call_operand.vmem [shape: bf16[512,256], index: 0, kind: input, shape index: {}]
  %s1 = inlined_call_operand.vmem [shape: bf16[256,128], index: 1, kind: input, shape index: {}]
  %s2 = inlined_call_operand.vmem [shape: bf16[512,128], index: 2, kind: output, shape index: {}]
  %s3 = sld [smem:[#allocation0]]
  $region49: #{cyclegan_forward.168} parent=0
    _
  %s5 = ssub.s32 1, %s3
  %s6 = scalar_select 0, %s5, %s3
  loop: start=0, step=1, limit=4
  $region2: #{cyclegan_forward.168} parent=0 // loop_pre_header
    _
  $region3: #{cyclegan_forward.168} parent=0 // loop_header
    %s8 = sphi 0, %s12
    %p9 = scmp.ge.s32.totalorder %s8, 4
    %s15 = sphi 0, %s34
    %s16 = sphi 0, %s30
    %s17 = sphi 0, %s26
    %s18 = sphi 0, %s15
    %s19 = sphi 0, %s16
    %s20 = sphi 0, %s17
    %s21 = sphi 0, %s18
    %s22 = sphi 0, %s19
    %s23 = sphi 0, %s20
    %s39 = sphi 0, %s41
    %s42 = sphi 0, %s39
    %s43 = sphi 0, %s42
    %s59 = sphi 0, %s43
    %s67 = sphi 0, %s69
    %s70 = sphi 0, %s67
    %s71 = sphi 0, %s70
    %s87 = sphi 0, %s71
    %s95 = sphi 0, %s97
    %s98 = sphi 0, %s95
    %s99 = sphi 0, %s98
    %s115 = sphi 0, %s99
  $region4: #{cyclegan_forward.168} parent=0 // loop_header_branch
    %11 = sbr.rel (%p9) target = $region8
  $region5: #{cyclegan_forward.168} parent=0 // loop_body
    %s13 = ssub.s32 %s8, 1
    %s14 = ssub.s32 %s8, 2
    %s24 = sadd.s32 1, %s17
    %p25 = scmp.ge.s32.totalorder %s24, 1
    %s26 = scalar_select %p25, 0, %s24
    %s27 = sadd.s32 1, %s16
    %s28 = scalar_select %p25, %s27, %s16
    %p29 = scmp.ge.s32.totalorder %s28, 1
    %s30 = scalar_select %p29, 0, %s28
    %s31 = sadd.s32 1, %s15
    %s32 = scalar_select %p29, %s31, %s15
    %p33 = scmp.ge.s32.totalorder %s32, 2
    %s34 = scalar_select %p33, 0, %s32
    %s35 = ssub.s32 %s15, %s34
    %s36 = ssub.s32 %s17, %s26
    %s37 = sor.u32 %s35, %s36
    %p38 = scmp.eq.s32.totalorder %s37, 0
    %s40 = sadd.s32 %s39, 1
    %s41 = scalar_select %p38, %s39, %s40
    %p44 = pneg %p38
    %p45 = scmp.eq.s32.totalorder %s8, 1
    %p46 = por %p44, %p45
    %p47 = scmp.ne.s32.totalorder %s39, %s42
    %p48 = scmp.eq.s32.totalorder %s8, 0
    %p49 = por %p47, %p48
    %p50 = scmp.ne.s32.totalorder %s39, %s42
    %p51 = scmp.eq.s32.totalorder %s13, 1
    %p52 = por %p50, %p51
    %p53 = scmp.ne.s32.totalorder %s42, %s43
    %p54 = scmp.eq.s32.totalorder %s13, 0
    %p55 = por %p53, %p54
    %p56 = scmp.ne.s32.totalorder %s42, %s43
    %p57 = scmp.eq.s32.totalorder %s14, 1
    %p58 = por %p56, %p57
    %p60 = scmp.ne.s32.totalorder %s43, %s59
    %p61 = scmp.eq.s32.totalorder %s14, 0
    %p62 = por %p60, %p61
    %s63 = ssub.s32 %s17, %s26
    %s64 = ssub.s32 %s16, %s30
    %s65 = sor.u32 %s63, %s64
    %p66 = scmp.eq.s32.totalorder %s65, 0
    %s68 = sadd.s32 %s67, 1
    %s69 = scalar_select %p66, %s67, %s68
    %p72 = pneg %p66
    %p73 = scmp.eq.s32.totalorder %s8, 1
    %p74 = por %p72, %p73
    %p75 = scmp.ne.s32.totalorder %s67, %s70
    %p76 = scmp.eq.s32.totalorder %s8, 0
    %p77 = por %p75, %p76
    %p78 = scmp.ne.s32.totalorder %s67, %s70
    %p79 = scmp.eq.s32.totalorder %s13, 1
    %p80 = por %p78, %p79
    %p81 = scmp.ne.s32.totalorder %s70, %s71
    %p82 = scmp.eq.s32.totalorder %s13, 0
    %p83 = por %p81, %p82
    %p84 = scmp.ne.s32.totalorder %s70, %s71
    %p85 = scmp.eq.s32.totalorder %s14, 1
    %p86 = por %p84, %p85
    %p88 = scmp.ne.s32.totalorder %s71, %s87
    %p89 = scmp.eq.s32.totalorder %s14, 0
    %p90 = por %p88, %p89
    %s91 = ssub.s32 %s15, %s34
    %s92 = ssub.s32 %s16, %s30
    %s93 = sor.u32 %s91, %s92
    %p94 = scmp.eq.s32.totalorder %s93, 0
    %s96 = sadd.s32 %s95, 1
    %s97 = scalar_select %p94, %s95, %s96
    %p100 = pneg %p94
    %p101 = scmp.eq.s32.totalorder %s8, 1
    %p102 = por %p100, %p101
    %p103 = scmp.ne.s32.totalorder %s95, %s98
    %p104 = scmp.eq.s32.totalorder %s8, 0
    %p105 = por %p103, %p104
    %p106 = scmp.ne.s32.totalorder %s95, %s98
    %p107 = scmp.eq.s32.totalorder %s13, 1
    %p108 = por %p106, %p107
    %p109 = scmp.ne.s32.totalorder %s98, %s99
    %p110 = scmp.eq.s32.totalorder %s13, 0
    %p111 = por %p109, %p110
    %p112 = scmp.ne.s32.totalorder %s98, %s99
    %p113 = scmp.eq.s32.totalorder %s14, 1
    %p114 = por %p112, %p113
    %p116 = scmp.ne.s32.totalorder %s99, %s115
    %p117 = scmp.eq.s32.totalorder %s14, 0
    %p118 = por %p116, %p117
    %p119 = scmp.le.s32.totalorder 1, %s8
    %p120 = scmp.lt.s32.totalorder %s8, 3
    %p121 = pnand %p119, %p120
    %p122 = pneg %p121
    // Predicated region
    $region9: #{cyclegan_forward.168} parent=5 // pred_check
      _
    $region10: #{cyclegan_forward.168} parent=5 // pred_check_branch
      %124 = sbr.rel (%p121) target = $region12
    $region11: #{cyclegan_forward.168} parent=5 // pred_region
      %s125 = ssub.s32 %s8, 1
      // Predicated region
      $region13: #{cyclegan_forward.168} parent=11 // pred_check
        %p126 = pneg %p83
      $region14: #{cyclegan_forward.168} parent=11 // pred_check_branch
        %128 = sbr.rel (%p126) target = $region16
      $region15: #{cyclegan_forward.168} parent=11 // pred_region
        %s129 = smul.u32 32, %s20
        %p130 = scmp.lt.s32.totalorder %s129, 31
        %s131 = scalar_select %p130, %s129, 31
        %p132 = scmp.lt.s32.totalorder %s19, 0
        %s133 = scalar_select %p132, %s19, 0
        %s134 = sadd.s32 %s133, %s131
        %s135 = smul.addr %s134, 4
        %s136 = scalar_lea.vmem %s1, %s135
        %s137 = smul.u32 32, %s20
      $region16: #{cyclegan_forward.168} parent=11 // pred_fallthru
        _
    $region12: #{cyclegan_forward.168} parent=5 // pred_fallthru
      _
    %p138 = scmp.lt.s32.totalorder %s8, 2
    // Predicated region
    $region17: #{cyclegan_forward.168} parent=5 // pred_check
      %p139 = pneg %p138
    $region18: #{cyclegan_forward.168} parent=5 // pred_check_branch
      %141 = sbr.rel (%p139) target = $region20
    $region19: #{cyclegan_forward.168} parent=5 // pred_region
      // Predicated region
      $region21: #{cyclegan_forward.168} parent=19 // pred_check
        %p142 = pneg %p49
      $region22: #{cyclegan_forward.168} parent=19 // pred_check_branch
        %144 = sbr.rel (%p142) target = $region24
      $region23: #{cyclegan_forward.168} parent=19 // pred_region
        %s145 = smul.u32 32, %s15
        %s146 = smul.u32 2, %s17
        %p147 = scmp.lt.s32.totalorder %s145, 63
        %s148 = scalar_select %p147, %s145, 63
        %p149 = scmp.lt.s32.totalorder %s146, 1
        %s150 = scalar_select %p149, %s146, 1
        %s151 = smul.addr %s148, 2
        %s152 = sadd.s32 %s150, %s151
        %s153 = smul.addr %s152, 4
        %s154 = scalar_lea.vmem %s0, %s153
        %s155 = smul.u32 32, %s15
        %s156 = smul.u32 2, %s17
      $region24: #{cyclegan_forward.168} parent=19 // pred_fallthru
        _
    $region20: #{cyclegan_forward.168} parent=5 // pred_fallthru
      _
    %p157 = scmp.le.s32.totalorder 1, %s8
    %p158 = scmp.lt.s32.totalorder %s8, 3
    %p159 = pnand %p157, %p158
    %p160 = pneg %p159
    // Predicated region
    $region25: #{cyclegan_forward.168} parent=5 // pred_check
      _
    $region26: #{cyclegan_forward.168} parent=5 // pred_check_branch
      %162 = sbr.rel (%p159) target = $region28
    $region27: #{cyclegan_forward.168} parent=5 // pred_region
      %s163 = ssub.s32 %s8, 1
      %s164 = smul.u32 32, %s18
      %s165 = smul.u32 2, %s20
      %p166 = scmp.lt.s32.totalorder %s164, 63
      %s167 = scalar_select %p166, %s164, 63
      %p168 = scmp.lt.s32.totalorder %s165, 1
      %s169 = scalar_select %p168, %s165, 1
      %s170 = smul.addr %s167, 2
      %s171 = sadd.s32 %s169, %s170
      %s172 = smul.addr %s171, 4
      %s173 = scalar_lea.vmem %s0, %s172
      %p174 = pneg %p55
      %p175 = pneg %p52
      %s176 = smul.u32 32, %s20
      %p177 = scmp.lt.s32.totalorder %s176, 31
      %s178 = scalar_select %p177, %s176, 31
      %p179 = scmp.lt.s32.totalorder %s19, 0
      %s180 = scalar_select %p179, %s19, 0
      %s181 = sadd.s32 %s180, %s178
      %s182 = smul.addr %s181, 4
      %s183 = scalar_lea.vmem %s1, %s182
      %p184 = pneg %p83
      %p185 = pneg %p80
      %p186 = pneg %p111
      %p187 = pneg %p108
      %s188 = smul.u32 32, %s18
      %p189 = scmp.lt.s32.totalorder %s188, 63
      %s190 = scalar_select %p189, %s188, 63
      %p191 = scmp.lt.s32.totalorder %s19, 0
      %s192 = scalar_select %p191, %s19, 0
      %s193 = sadd.s32 %s192, %s190
      %s194 = smul.addr %s193, 4
      %s195 = scalar_lea.vmem %s2, %s194
      %s196 = smul.u32 32, %s18
      %s197 = smul.u32 2, %s20
      %p198 = scmp.lt.s32.totalorder %s196, 63
      %s199 = scalar_select %p198, %s196, 63
      %p200 = scmp.lt.s32.totalorder %s197, 1
      %s201 = scalar_select %p200, %s197, 1
      %s202 = smul.addr %s199, 2
      %s203 = sadd.s32 %s201, %s202
      %s204 = smul.addr %s203, 4
      %s205 = scalar_lea.vmem %s0, %s204
      %s206 = smul.u32 32, %s18
      %s207 = smul.u32 2, %s20
      %s208 = smul.u32 32, %s20
      %p209 = scmp.lt.s32.totalorder %s208, 31
      %s210 = scalar_select %p209, %s208, 31
      %p211 = scmp.lt.s32.totalorder %s19, 0
      %s212 = scalar_select %p211, %s19, 0
      %s213 = sadd.s32 %s212, %s210
      %s214 = smul.addr %s213, 4
      %s215 = scalar_lea.vmem %s1, %s214
      %s216 = smul.u32 32, %s20
      %s217 = smul.u32 32, %s18
      %p218 = scmp.lt.s32.totalorder %s217, 63
      %s219 = scalar_select %p218, %s217, 63
      %p220 = scmp.lt.s32.totalorder %s19, 0
      %s221 = scalar_select %p220, %s19, 0
      %s222 = sadd.s32 %s221, %s219
      %s223 = smul.addr %s222, 4
      %s224 = scalar_lea.vmem %s2, %s223
      %s225 = smul.u32 32, %s18
      %p227 = scmp.eq.s32.totalorder %s20, 0
      // Predicated region
      $region29: #{cyclegan_forward.168} parent=27 // pred_check
        %p228 = pneg %p227
      $region30: #{cyclegan_forward.168} parent=27 // pred_check_branch
        %230 = sbr.rel (%p228) target = $region32
      $region31: #{cyclegan_forward.168} parent=27 // pred_region
        %231 = vst [vmem:[#allocation2] sm:$0xff] 0.0
        %232 = vst [vmem:[#allocation2 + $0x8] sm:$0xff] 0.0
        %233 = vst [vmem:[#allocation2 + $0x10] sm:$0xff] 0.0
        %234 = vst [vmem:[#allocation2 + $0x18] sm:$0xff] 0.0
        %235 = vst [vmem:[#allocation2 + $0x20] sm:$0xff] 0.0
        %236 = vst [vmem:[#allocation2 + $0x28] sm:$0xff] 0.0
        %237 = vst [vmem:[#allocation2 + $0x30] sm:$0xff] 0.0
        %238 = vst [vmem:[#allocation2 + $0x38] sm:$0xff] 0.0
        %239 = vst [vmem:[#allocation2 + $0x40] sm:$0xff] 0.0
        %240 = vst [vmem:[#allocation2 + $0x48] sm:$0xff] 0.0
        %241 = vst [vmem:[#allocation2 + $0x50] sm:$0xff] 0.0
        %242 = vst [vmem:[#allocation2 + $0x58] sm:$0xff] 0.0
        %243 = vst [vmem:[#allocation2 + $0x60] sm:$0xff] 0.0
        %244 = vst [vmem:[#allocation2 + $0x68] sm:$0xff] 0.0
        %245 = vst [vmem:[#allocation2 + $0x70] sm:$0xff] 0.0
        %246 = vst [vmem:[#allocation2 + $0x78] sm:$0xff] 0.0
        %247 = vst [vmem:[#allocation2 + $0x80] sm:$0xff] 0.0
        %248 = vst [vmem:[#allocation2 + $0x88] sm:$0xff] 0.0
        %249 = vst [vmem:[#allocation2 + $0x90] sm:$0xff] 0.0
        %250 = vst [vmem:[#allocation2 + $0x98] sm:$0xff] 0.0
        %251 = vst [vmem:[#allocation2 + $0xa0] sm:$0xff] 0.0
        %252 = vst [vmem:[#allocation2 + $0xa8] sm:$0xff] 0.0
        %253 = vst [vmem:[#allocation2 + $0xb0] sm:$0xff] 0.0
        %254 = vst [vmem:[#allocation2 + $0xb8] sm:$0xff] 0.0
        %255 = vst [vmem:[#allocation2 + $0xc0] sm:$0xff] 0.0
        %256 = vst [vmem:[#allocation2 + $0xc8] sm:$0xff] 0.0
        %257 = vst [vmem:[#allocation2 + $0xd0] sm:$0xff] 0.0
        %258 = vst [vmem:[#allocation2 + $0xd8] sm:$0xff] 0.0
        %259 = vst [vmem:[#allocation2 + $0xe0] sm:$0xff] 0.0
        %260 = vst [vmem:[#allocation2 + $0xe8] sm:$0xff] 0.0
        %261 = vst [vmem:[#allocation2 + $0xf0] sm:$0xff] 0.0
        %262 = vst [vmem:[#allocation2 + $0xf8] sm:$0xff] 0.0
      $region32: #{cyclegan_forward.168} parent=27 // pred_fallthru
        _
      %v263 = vld [vmem:[#allocation2] sm:$0xff]
      %v264 = vld [vmem:[#allocation2 + $0x8] sm:$0xff]
      %v265 = vld [vmem:[#allocation2 + $0x10] sm:$0xff]
      %v266 = vld [vmem:[#allocation2 + $0x18] sm:$0xff]
      %v267 = vld [vmem:[#allocation2 + $0x20] sm:$0xff]
      %v268 = vld [vmem:[#allocation2 + $0x28] sm:$0xff]
      %v269 = vld [vmem:[#allocation2 + $0x30] sm:$0xff]
      %v270 = vld [vmem:[#allocation2 + $0x38] sm:$0xff]
      %v271 = vld [vmem:[#allocation2 + $0x40] sm:$0xff]
      %v272 = vld [vmem:[#allocation2 + $0x48] sm:$0xff]
      %v273 = vld [vmem:[#allocation2 + $0x50] sm:$0xff]
      %v274 = vld [vmem:[#allocation2 + $0x58] sm:$0xff]
      %v275 = vld [vmem:[#allocation2 + $0x60] sm:$0xff]
      %v276 = vld [vmem:[#allocation2 + $0x68] sm:$0xff]
      %v277 = vld [vmem:[#allocation2 + $0x70] sm:$0xff]
      %v278 = vld [vmem:[#allocation2 + $0x78] sm:$0xff]
      %v279 = vld [vmem:[#allocation2 + $0x80] sm:$0xff]
      %v280 = vld [vmem:[#allocation2 + $0x88] sm:$0xff]
      %v281 = vld [vmem:[#allocation2 + $0x90] sm:$0xff]
      %v282 = vld [vmem:[#allocation2 + $0x98] sm:$0xff]
      %v283 = vld [vmem:[#allocation2 + $0xa0] sm:$0xff]
      %v284 = vld [vmem:[#allocation2 + $0xa8] sm:$0xff]
      %v285 = vld [vmem:[#allocation2 + $0xb0] sm:$0xff]
      %v286 = vld [vmem:[#allocation2 + $0xb8] sm:$0xff]
      %v287 = vld [vmem:[#allocation2 + $0xc0] sm:$0xff]
      %v288 = vld [vmem:[#allocation2 + $0xc8] sm:$0xff]
      %v289 = vld [vmem:[#allocation2 + $0xd0] sm:$0xff]
      %v290 = vld [vmem:[#allocation2 + $0xd8] sm:$0xff]
      %v291 = vld [vmem:[#allocation2 + $0xe0] sm:$0xff]
      %v292 = vld [vmem:[#allocation2 + $0xe8] sm:$0xff]
      %v293 = vld [vmem:[#allocation2 + $0xf0] sm:$0xff]
      %v294 = vld [vmem:[#allocation2 + $0xf8] sm:$0xff]
      %v295 = vld [vmem:[%s205] sm:$0xff]
      %v296 = vld [vmem:[%s205 + $0x8] sm:$0xff]
      %v297 = vld [vmem:[%s205 + $0x10] sm:$0xff]
      %v298 = vld [vmem:[%s205 + $0x18] sm:$0xff]
      %v299 = vld [vmem:[%s205 + $0x20] sm:$0xff]
      %v300 = vld [vmem:[%s205 + $0x28] sm:$0xff]
      %v301 = vld [vmem:[%s205 + $0x30] sm:$0xff]
      %v302 = vld [vmem:[%s205 + $0x38] sm:$0xff]
      %v303 = vld [vmem:[%s205 + $0x40] sm:$0xff]
      %v304 = vld [vmem:[%s205 + $0x48] sm:$0xff]
      %v305 = vld [vmem:[%s205 + $0x50] sm:$0xff]
      %v306 = vld [vmem:[%s205 + $0x58] sm:$0xff]
      %v307 = vld [vmem:[%s205 + $0x60] sm:$0xff]
      %v308 = vld [vmem:[%s205 + $0x68] sm:$0xff]
      %v309 = vld [vmem:[%s205 + $0x70] sm:$0xff]
      %v310 = vld [vmem:[%s205 + $0x78] sm:$0xff]
      %v311 = vld [vmem:[%s205 + $0x80] sm:$0xff]
      %v312 = vld [vmem:[%s205 + $0x88] sm:$0xff]
      %v313 = vld [vmem:[%s205 + $0x90] sm:$0xff]
      %v314 = vld [vmem:[%s205 + $0x98] sm:$0xff]
      %v315 = vld [vmem:[%s205 + $0xa0] sm:$0xff]
      %v316 = vld [vmem:[%s205 + $0xa8] sm:$0xff]
      %v317 = vld [vmem:[%s205 + $0xb0] sm:$0xff]
      %v318 = vld [vmem:[%s205 + $0xb8] sm:$0xff]
      %v319 = vld [vmem:[%s205 + $0xc0] sm:$0xff]
      %v320 = vld [vmem:[%s205 + $0xc8] sm:$0xff]
      %v321 = vld [vmem:[%s205 + $0xd0] sm:$0xff]
      %v322 = vld [vmem:[%s205 + $0xd8] sm:$0xff]
      %v323 = vld [vmem:[%s205 + $0xe0] sm:$0xff]
      %v324 = vld [vmem:[%s205 + $0xe8] sm:$0xff]
      %v325 = vld [vmem:[%s205 + $0xf0] sm:$0xff]
      %v326 = vld [vmem:[%s205 + $0xf8] sm:$0xff]
      %v327 = vld [vmem:[%s215] sm:$0xf]
      %v328 = vld [vmem:[%s215 + $0x4] sm:$0xf]
      %v329 = vld [vmem:[%s215 + $0x8] sm:$0xf]
      %v330 = vld [vmem:[%s215 + $0xc] sm:$0xf]
      %v331 = vld [vmem:[%s215 + $0x10] sm:$0xf]
      %v332 = vld [vmem:[%s215 + $0x14] sm:$0xf]
      %v333 = vld [vmem:[%s215 + $0x18] sm:$0xf]
      %v334 = vld [vmem:[%s215 + $0x1c] sm:$0xf]
      %v335 = vld [vmem:[%s215 + $0x20] sm:$0xf]
      %v336 = vld [vmem:[%s215 + $0x24] sm:$0xf]
      %v337 = vld [vmem:[%s215 + $0x28] sm:$0xf]
      %v338 = vld [vmem:[%s215 + $0x2c] sm:$0xf]
      %v339 = vld [vmem:[%s215 + $0x30] sm:$0xf]
      %v340 = vld [vmem:[%s215 + $0x34] sm:$0xf]
      %v341 = vld [vmem:[%s215 + $0x38] sm:$0xf]
      %v342 = vld [vmem:[%s215 + $0x3c] sm:$0xf]
      %v343 = vld [vmem:[%s215 + $0x40] sm:$0xf]
      %v344 = vld [vmem:[%s215 + $0x44] sm:$0xf]
      %v345 = vld [vmem:[%s215 + $0x48] sm:$0xf]
      %v346 = vld [vmem:[%s215 + $0x4c] sm:$0xf]
      %v347 = vld [vmem:[%s215 + $0x50] sm:$0xf]
      %v348 = vld [vmem:[%s215 + $0x54] sm:$0xf]
      %v349 = vld [vmem:[%s215 + $0x58] sm:$0xf]
      %v350 = vld [vmem:[%s215 + $0x5c] sm:$0xf]
      %v351 = vld [vmem:[%s215 + $0x60] sm:$0xf]
      %v352 = vld [vmem:[%s215 + $0x64] sm:$0xf]
      %v353 = vld [vmem:[%s215 + $0x68] sm:$0xf]
      %v354 = vld [vmem:[%s215 + $0x6c] sm:$0xf]
      %v355 = vld [vmem:[%s215 + $0x70] sm:$0xf]
      %v356 = vld [vmem:[%s215 + $0x74] sm:$0xf]
      %v357 = vld [vmem:[%s215 + $0x78] sm:$0xf]
      %v358 = vld [vmem:[%s215 + $0x7c] sm:$0xf]
      %v391 = vunpack.c.l.b16 %v295
      %v392 = vunpack.c.h.b16 %v295
      %v393 = vunpack.c.l.b16 %v296
      %v394 = vunpack.c.h.b16 %v296
      %v395 = vunpack.c.l.b16 %v297
      %v396 = vunpack.c.h.b16 %v297
      %v397 = vunpack.c.l.b16 %v298
      %v398 = vunpack.c.h.b16 %v298
      %v399 = vunpack.c.l.b16 %v299
      %v400 = vunpack.c.h.b16 %v299
      %v401 = vunpack.c.l.b16 %v300
      %v402 = vunpack.c.h.b16 %v300
      %v403 = vunpack.c.l.b16 %v301
      %v404 = vunpack.c.h.b16 %v301
      %v405 = vunpack.c.l.b16 %v302
      %v406 = vunpack.c.h.b16 %v302
      %v407 = vunpack.c.l.b16 %v303
      %v408 = vunpack.c.h.b16 %v303
      %v409 = vunpack.c.l.b16 %v304
      %v410 = vunpack.c.h.b16 %v304
      %v411 = vunpack.c.l.b16 %v305
      %v412 = vunpack.c.h.b16 %v305
      %v413 = vunpack.c.l.b16 %v306
      %v414 = vunpack.c.h.b16 %v306
      %v415 = vunpack.c.l.b16 %v307
      %v416 = vunpack.c.h.b16 %v307
      %v417 = vunpack.c.l.b16 %v308
      %v418 = vunpack.c.h.b16 %v308
      %v419 = vunpack.c.l.b16 %v309
      %v420 = vunpack.c.h.b16 %v309
      %v421 = vunpack.c.l.b16 %v310
      %v422 = vunpack.c.h.b16 %v310
      %v423 = vunpack.c.l.b16 %v311
      %v424 = vunpack.c.h.b16 %v311
      %v425 = vunpack.c.l.b16 %v312
      %v426 = vunpack.c.h.b16 %v312
      %v427 = vunpack.c.l.b16 %v313
      %v428 = vunpack.c.h.b16 %v313
      %v429 = vunpack.c.l.b16 %v314
      %v430 = vunpack.c.h.b16 %v314
      %v431 = vunpack.c.l.b16 %v315
      %v432 = vunpack.c.h.b16 %v315
      %v433 = vunpack.c.l.b16 %v316
      %v434 = vunpack.c.h.b16 %v316
      %v435 = vunpack.c.l.b16 %v317
      %v436 = vunpack.c.h.b16 %v317
      %v437 = vunpack.c.l.b16 %v318
      %v438 = vunpack.c.h.b16 %v318
      %v439 = vunpack.c.l.b16 %v319
      %v440 = vunpack.c.h.b16 %v319
      %v441 = vunpack.c.l.b16 %v320
      %v442 = vunpack.c.h.b16 %v320
      %v443 = vunpack.c.l.b16 %v321
      %v444 = vunpack.c.h.b16 %v321
      %v445 = vunpack.c.l.b16 %v322
      %v446 = vunpack.c.h.b16 %v322
      %v447 = vunpack.c.l.b16 %v323
      %v448 = vunpack.c.h.b16 %v323
      %v449 = vunpack.c.l.b16 %v324
      %v450 = vunpack.c.h.b16 %v324
      %v451 = vunpack.c.l.b16 %v325
      %v452 = vunpack.c.h.b16 %v325
      %v453 = vunpack.c.l.b16 %v326
      %v454 = vunpack.c.h.b16 %v326
      %v455 = vpack.c.b16 %v393, %v391
      %v456 = vpack.c.b16 %v394, %v392
      %v457 = vpack.c.b16 %v397, %v395
      %v458 = vpack.c.b16 %v398, %v396
      %v459 = vpack.c.b16 %v401, %v399
      %v460 = vpack.c.b16 %v402, %v400
      %v461 = vpack.c.b16 %v405, %v403
      %v462 = vpack.c.b16 %v406, %v404
      %v463 = vpack.c.b16 %v409, %v407
      %v464 = vpack.c.b16 %v410, %v408
      %v465 = vpack.c.b16 %v413, %v411
      %v466 = vpack.c.b16 %v414, %v412
      %v467 = vpack.c.b16 %v417, %v415
      %v468 = vpack.c.b16 %v418, %v416
      %v469 = vpack.c.b16 %v421, %v419
      %v470 = vpack.c.b16 %v422, %v420
      %v471 = vpack.c.b16 %v425, %v423
      %v472 = vpack.c.b16 %v426, %v424
      %v473 = vpack.c.b16 %v429, %v427
      %v474 = vpack.c.b16 %v430, %v428
      %v475 = vpack.c.b16 %v433, %v431
      %v476 = vpack.c.b16 %v434, %v432
      %v477 = vpack.c.b16 %v437, %v435
      %v478 = vpack.c.b16 %v438, %v436
      %v479 = vpack.c.b16 %v441, %v439
      %v480 = vpack.c.b16 %v442, %v440
      %v481 = vpack.c.b16 %v445, %v443
      %v482 = vpack.c.b16 %v446, %v444
      %v483 = vpack.c.b16 %v449, %v447
      %v484 = vpack.c.b16 %v450, %v448
      %v485 = vpack.c.b16 %v453, %v451
      %v486 = vpack.c.b16 %v454, %v452
      %v551 = vunpack.c.l.b16 %v327
      %v552 = vunpack.c.l.b16 %v328
      %v553 = vunpack.c.l.b16 %v329
      %v554 = vunpack.c.l.b16 %v330
      %v555 = vunpack.c.l.b16 %v331
      %v556 = vunpack.c.l.b16 %v332
      %v557 = vunpack.c.l.b16 %v333
      %v558 = vunpack.c.l.b16 %v334
      %v559 = vunpack.c.l.b16 %v335
      %v560 = vunpack.c.l.b16 %v336
      %v561 = vunpack.c.l.b16 %v337
      %v562 = vunpack.c.l.b16 %v338
      %v563 = vunpack.c.l.b16 %v339
      %v564 = vunpack.c.l.b16 %v340
      %v565 = vunpack.c.l.b16 %v341
      %v566 = vunpack.c.l.b16 %v342
      %v567 = vunpack.c.l.b16 %v343
      %v568 = vunpack.c.l.b16 %v344
      %v569 = vunpack.c.l.b16 %v345
      %v570 = vunpack.c.l.b16 %v346
      %v571 = vunpack.c.l.b16 %v347
      %v572 = vunpack.c.l.b16 %v348
      %v573 = vunpack.c.l.b16 %v349
      %v574 = vunpack.c.l.b16 %v350
      %v575 = vunpack.c.l.b16 %v351
      %v576 = vunpack.c.l.b16 %v352
      %v577 = vunpack.c.l.b16 %v353
      %v578 = vunpack.c.l.b16 %v354
      %v579 = vunpack.c.l.b16 %v355
      %v580 = vunpack.c.l.b16 %v356
      %v581 = vunpack.c.l.b16 %v357
      %v582 = vunpack.c.l.b16 %v358
      %v583 = vpack.c.b16 %v552, %v551
      %v584 = vpack.c.b16 %v554, %v553
      %v585 = vpack.c.b16 %v556, %v555
      %v586 = vpack.c.b16 %v558, %v557
      %v587 = vpack.c.b16 %v560, %v559
      %v588 = vpack.c.b16 %v562, %v561
      %v589 = vpack.c.b16 %v564, %v563
      %v590 = vpack.c.b16 %v566, %v565
      %v591 = vpack.c.b16 %v568, %v567
      %v592 = vpack.c.b16 %v570, %v569
      %v593 = vpack.c.b16 %v572, %v571
      %v594 = vpack.c.b16 %v574, %v573
      %v595 = vpack.c.b16 %v576, %v575
      %v596 = vpack.c.b16 %v578, %v577
      %v597 = vpack.c.b16 %v580, %v579
      %v598 = vpack.c.b16 %v582, %v581
      %615 = vmatprep.subr.bf16.mxu0 0
      %616 = vmatpush1.bf16.msra.mxu0 %v583
      %617 = vmatprep.subr.bf16.mxu0 0
      %618 = vmatpush1.bf16.msra.mxu0 %v584
      %619 = vmatprep.subr.bf16.mxu0 0
      %620 = vmatpush1.bf16.msra.mxu0 %v585
      %621 = vmatprep.subr.bf16.mxu0 0
      %622 = vmatpush1.bf16.msra.mxu0 %v586
      %623 = vmatprep.subr.bf16.mxu0 0
      %624 = vmatpush1.bf16.msra.mxu0 %v587
      %625 = vmatprep.subr.bf16.mxu0 0
      %626 = vmatpush1.bf16.msra.mxu0 %v588
      %627 = vmatprep.subr.bf16.mxu0 0
      %628 = vmatpush1.bf16.msra.mxu0 %v589
      %629 = vmatprep.subr.bf16.mxu0 0
      %630 = vmatpush1.bf16.msra.mxu0 %v590
      %631 = vmatprep.subr.bf16.mxu0 0
      %632 = vmatpush1.bf16.msra.mxu0 %v591
      %633 = vmatprep.subr.bf16.mxu0 0
      %634 = vmatpush1.bf16.msra.mxu0 %v592
      %635 = vmatprep.subr.bf16.mxu0 0
      %636 = vmatpush1.bf16.msra.mxu0 %v593
      %637 = vmatprep.subr.bf16.mxu0 0
      %638 = vmatpush1.bf16.msra.mxu0 %v594
      %639 = vmatprep.subr.bf16.mxu0 0
      %640 = vmatpush1.bf16.msra.mxu0 %v595
      %641 = vmatprep.subr.bf16.mxu0 0
      %642 = vmatpush1.bf16.msra.mxu0 %v596
      %643 = vmatprep.subr.bf16.mxu0 0
      %644 = vmatpush1.bf16.msra.mxu0 %v597
      %645 = vmatprep.subr.bf16.mxu0 0
      %646 = vmatpush1.bf16.msra.mxu0 %v598
      %647 = vmatprep.mubr.bf16.mxu0 %v456
      %648 = vmatmul.mubr.bf16.gmra.mrb[0].mxu0 %v455
      %v649 = vpop.f32.mrb[0].mxu0
      %v650 = vadd.f32 0.0, %v649
      %v651 = vpop.f32.mrb[0].mxu0
      %v652 = vpop.f32.mrb[0].mxu0
      %v653 = vadd.f32 0.0, %v652
      %v654 = vpop.f32.mrb[0].mxu0
      %655 = vmatprep.mubr.bf16.mxu0 %v458
      %656 = vmatmul.mubr.bf16.gmra.mrb[0].mxu0 %v457
      %v657 = vpop.f32.mrb[0].mxu0
      %v658 = vadd.f32 0.0, %v657
      %v659 = vpop.f32.mrb[0].mxu0
      %v660 = vpop.f32.mrb[0].mxu0
      %v661 = vadd.f32 0.0, %v660
      %v662 = vpop.f32.mrb[0].mxu0
      %663 = vmatprep.mubr.bf16.mxu0 %v460
      %664 = vmatmul.mubr.bf16.gmra.mrb[0].mxu0 %v459
      %v665 = vpop.f32.mrb[0].mxu0
      %v666 = vadd.f32 0.0, %v665
      %v667 = vpop.f32.mrb[0].mxu0
      %v668 = vpop.f32.mrb[0].mxu0
      %v669 = vadd.f32 0.0, %v668
      %v670 = vpop.f32.mrb[0].mxu0
      %671 = vmatprep.mubr.bf16.mxu0 %v462
      %672 = vmatmul.mubr.bf16.gmra.mrb[0].mxu0 %v461
      %v673 = vpop.f32.mrb[0].mxu0
      %v674 = vadd.f32 0.0, %v673
      %v675 = vpop.f32.mrb[0].mxu0
      %v676 = vpop.f32.mrb[0].mxu0
      %v677 = vadd.f32 0.0, %v676
      %v678 = vpop.f32.mrb[0].mxu0
      %679 = vmatprep.mubr.bf16.mxu0 %v464
      %680 = vmatmul.mubr.bf16.gmra.mrb[0].mxu0 %v463
      %v681 = vpop.f32.mrb[0].mxu0
      %v682 = vadd.f32 0.0, %v681
      %v683 = vpop.f32.mrb[0].mxu0
      %v684 = vpop.f32.mrb[0].mxu0
      %v685 = vadd.f32 0.0, %v684
      %v686 = vpop.f32.mrb[0].mxu0
      %687 = vmatprep.mubr.bf16.mxu0 %v466
      %688 = vmatmul.mubr.bf16.gmra.mrb[0].mxu0 %v465
      %v689 = vpop.f32.mrb[0].mxu0
      %v690 = vadd.f32 0.0, %v689
      %v691 = vpop.f32.mrb[0].mxu0
      %v692 = vpop.f32.mrb[0].mxu0
      %v693 = vadd.f32 0.0, %v692
      %v694 = vpop.f32.mrb[0].mxu0
      %695 = vmatprep.mubr.bf16.mxu0 %v468
      %696 = vmatmul.mubr.bf16.gmra.mrb[0].mxu0 %v467
      %v697 = vpop.f32.mrb[0].mxu0
      %v698 = vadd.f32 0.0, %v697
      %v699 = vpop.f32.mrb[0].mxu0
      %v700 = vpop.f32.mrb[0].mxu0
      %v701 = vadd.f32 0.0, %v700
      %v702 = vpop.f32.mrb[0].mxu0
      %703 = vmatprep.mubr.bf16.mxu0 %v470
      %704 = vmatmul.mubr.bf16.gmra.mrb[0].mxu0 %v469
      %v705 = vpop.f32.mrb[0].mxu0
      %v706 = vadd.f32 0.0, %v705
      %v707 = vpop.f32.mrb[0].mxu0
      %v708 = vpop.f32.mrb[0].mxu0
      %v709 = vadd.f32 0.0, %v708
      %v710 = vpop.f32.mrb[0].mxu0
      %711 = vmatprep.mubr.bf16.mxu0 %v472
      %712 = vmatmul.mubr.bf16.gmra.mrb[0].mxu0 %v471
      %v713 = vpop.f32.mrb[0].mxu0
      %v714 = vadd.f32 0.0, %v713
      %v715 = vpop.f32.mrb[0].mxu0
      %v716 = vpop.f32.mrb[0].mxu0
      %v717 = vadd.f32 0.0, %v716
      %v718 = vpop.f32.mrb[0].mxu0
      %719 = vmatprep.mubr.bf16.mxu0 %v474
      %720 = vmatmul.mubr.bf16.gmra.mrb[0].mxu0 %v473
      %v721 = vpop.f32.mrb[0].mxu0
      %v722 = vadd.f32 0.0, %v721
      %v723 = vpop.f32.mrb[0].mxu0
      %v724 = vpop.f32.mrb[0].mxu0
      %v725 = vadd.f32 0.0, %v724
      %v726 = vpop.f32.mrb[0].mxu0
      %727 = vmatprep.mubr.bf16.mxu0 %v476
      %728 = vmatmul.mubr.bf16.gmra.mrb[0].mxu0 %v475
      %v729 = vpop.f32.mrb[0].mxu0
      %v730 = vadd.f32 0.0, %v729
      %v731 = vpop.f32.mrb[0].mxu0
      %v732 = vpop.f32.mrb[0].mxu0
      %v733 = vadd.f32 0.0, %v732
      %v734 = vpop.f32.mrb[0].mxu0
      %735 = vmatprep.mubr.bf16.mxu0 %v478
      %736 = vmatmul.mubr.bf16.gmra.mrb[0].mxu0 %v477
      %v737 = vpop.f32.mrb[0].mxu0
      %v738 = vadd.f32 0.0, %v737
      %v739 = vpop.f32.mrb[0].mxu0
      %v740 = vpop.f32.mrb[0].mxu0
      %v741 = vadd.f32 0.0, %v740
      %v742 = vpop.f32.mrb[0].mxu0
      %743 = vmatprep.mubr.bf16.mxu0 %v480
      %744 = vmatmul.mubr.bf16.gmra.mrb[0].mxu0 %v479
      %v745 = vpop.f32.mrb[0].mxu0
      %v746 = vadd.f32 0.0, %v745
      %v747 = vpop.f32.mrb[0].mxu0
      %v748 = vpop.f32.mrb[0].mxu0
      %v749 = vadd.f32 0.0, %v748
      %v750 = vpop.f32.mrb[0].mxu0
      %751 = vmatprep.mubr.bf16.mxu0 %v482
      %752 = vmatmul.mubr.bf16.gmra.mrb[0].mxu0 %v481
      %v753 = vpop.f32.mrb[0].mxu0
      %v754 = vadd.f32 0.0, %v753
      %v755 = vpop.f32.mrb[0].mxu0
      %v756 = vpop.f32.mrb[0].mxu0
      %v757 = vadd.f32 0.0, %v756
      %v758 = vpop.f32.mrb[0].mxu0
      %759 = vmatprep.mubr.bf16.mxu0 %v484
      %760 = vmatmul.mubr.bf16.gmra.mrb[0].mxu0 %v483
      %v761 = vpop.f32.mrb[0].mxu0
      %v762 = vadd.f32 0.0, %v761
      %v763 = vpop.f32.mrb[0].mxu0
      %v764 = vpop.f32.mrb[0].mxu0
      %v765 = vadd.f32 0.0, %v764
      %v766 = vpop.f32.mrb[0].mxu0
      %767 = vmatprep.mubr.bf16.mxu0 %v486
      %768 = vmatmul.mubr.bf16.gmra.mrb[0].mxu0 %v485
      %v769 = vpop.f32.mrb[0].mxu0
      %v770 = vadd.f32 0.0, %v769
      %v771 = vpop.f32.mrb[0].mxu0
      %v772 = vpop.f32.mrb[0].mxu0
      %v773 = vadd.f32 0.0, %v772
      %v774 = vpop.f32.mrb[0].mxu0
      %775 = vdwg.mxu0
      %v776 = vadd.f32 %v263, %v650
      %v777 = vadd.f32 %v264, %v653
      %v778 = vadd.f32 %v265, %v658
      %v779 = vadd.f32 %v266, %v661
      %v780 = vadd.f32 %v267, %v666
      %v781 = vadd.f32 %v268, %v669
      %v782 = vadd.f32 %v269, %v674
      %v783 = vadd.f32 %v270, %v677
      %v784 = vadd.f32 %v271, %v682
      %v785 = vadd.f32 %v272, %v685
      %v786 = vadd.f32 %v273, %v690
      %v787 = vadd.f32 %v274, %v693
      %v788 = vadd.f32 %v275, %v698
      %v789 = vadd.f32 %v276, %v701
      %v790 = vadd.f32 %v277, %v706
      %v791 = vadd.f32 %v278, %v709
      %v792 = vadd.f32 %v279, %v714
      %v793 = vadd.f32 %v280, %v717
      %v794 = vadd.f32 %v281, %v722
      %v795 = vadd.f32 %v282, %v725
      %v796 = vadd.f32 %v283, %v730
      %v797 = vadd.f32 %v284, %v733
      %v798 = vadd.f32 %v285, %v738
      %v799 = vadd.f32 %v286, %v741
      %v800 = vadd.f32 %v287, %v746
      %v801 = vadd.f32 %v288, %v749
      %v802 = vadd.f32 %v289, %v754
      %v803 = vadd.f32 %v290, %v757
      %v804 = vadd.f32 %v291, %v762
      %v805 = vadd.f32 %v292, %v765
      %v806 = vadd.f32 %v293, %v770
      %v807 = vadd.f32 %v294, %v773
      %808 = vst [vmem:[#allocation2] sm:$0xff] %v776
      %809 = vst [vmem:[#allocation2 + $0x8] sm:$0xff] %v777
      %810 = vst [vmem:[#allocation2 + $0x10] sm:$0xff] %v778
      %811 = vst [vmem:[#allocation2 + $0x18] sm:$0xff] %v779
      %812 = vst [vmem:[#allocation2 + $0x20] sm:$0xff] %v780
      %813 = vst [vmem:[#allocation2 + $0x28] sm:$0xff] %v781
      %814 = vst [vmem:[#allocation2 + $0x30] sm:$0xff] %v782
      %815 = vst [vmem:[#allocation2 + $0x38] sm:$0xff] %v783
      %816 = vst [vmem:[#allocation2 + $0x40] sm:$0xff] %v784
      %817 = vst [vmem:[#allocation2 + $0x48] sm:$0xff] %v785
      %818 = vst [vmem:[#allocation2 + $0x50] sm:$0xff] %v786
      %819 = vst [vmem:[#allocation2 + $0x58] sm:$0xff] %v787
      %820 = vst [vmem:[#allocation2 + $0x60] sm:$0xff] %v788
      %821 = vst [vmem:[#allocation2 + $0x68] sm:$0xff] %v789
      %822 = vst [vmem:[#allocation2 + $0x70] sm:$0xff] %v790
      %823 = vst [vmem:[#allocation2 + $0x78] sm:$0xff] %v791
      %824 = vst [vmem:[#allocation2 + $0x80] sm:$0xff] %v792
      %825 = vst [vmem:[#allocation2 + $0x88] sm:$0xff] %v793
      %826 = vst [vmem:[#allocation2 + $0x90] sm:$0xff] %v794
      %827 = vst [vmem:[#allocation2 + $0x98] sm:$0xff] %v795
      %828 = vst [vmem:[#allocation2 + $0xa0] sm:$0xff] %v796
      %829 = vst [vmem:[#allocation2 + $0xa8] sm:$0xff] %v797
      %830 = vst [vmem:[#allocation2 + $0xb0] sm:$0xff] %v798
      %831 = vst [vmem:[#allocation2 + $0xb8] sm:$0xff] %v799
      %832 = vst [vmem:[#allocation2 + $0xc0] sm:$0xff] %v800
      %833 = vst [vmem:[#allocation2 + $0xc8] sm:$0xff] %v801
      %834 = vst [vmem:[#allocation2 + $0xd0] sm:$0xff] %v802
      %835 = vst [vmem:[#allocation2 + $0xd8] sm:$0xff] %v803
      %836 = vst [vmem:[#allocation2 + $0xe0] sm:$0xff] %v804
      %837 = vst [vmem:[#allocation2 + $0xe8] sm:$0xff] %v805
      %838 = vst [vmem:[#allocation2 + $0xf0] sm:$0xff] %v806
      %839 = vst [vmem:[#allocation2 + $0xf8] sm:$0xff] %v807
      // Predicated region
      $region33: #{cyclegan_forward.168} parent=27 // pred_check
        %p840 = pneg %p227
      $region34: #{cyclegan_forward.168} parent=27 // pred_check_branch
        %842 = sbr.rel (%p840) target = $region36
      $region35: #{cyclegan_forward.168} parent=27 // pred_region
        %v843 = vld [vmem:[#allocation2] sm:$0xff]
        %v844 = vld [vmem:[#allocation2 + $0x8] sm:$0xff]
        %v845 = vld [vmem:[#allocation2 + $0x10] sm:$0xff]
        %v846 = vld [vmem:[#allocation2 + $0x18] sm:$0xff]
        %v847 = vld [vmem:[#allocation2 + $0x20] sm:$0xff]
        %v848 = vld [vmem:[#allocation2 + $0x28] sm:$0xff]
        %v849 = vld [vmem:[#allocation2 + $0x30] sm:$0xff]
        %v850 = vld [vmem:[#allocation2 + $0x38] sm:$0xff]
        %v851 = vld [vmem:[#allocation2 + $0x40] sm:$0xff]
        %v852 = vld [vmem:[#allocation2 + $0x48] sm:$0xff]
        %v853 = vld [vmem:[#allocation2 + $0x50] sm:$0xff]
        %v854 = vld [vmem:[#allocation2 + $0x58] sm:$0xff]
        %v855 = vld [vmem:[#allocation2 + $0x60] sm:$0xff]
        %v856 = vld [vmem:[#allocation2 + $0x68] sm:$0xff]
        %v857 = vld [vmem:[#allocation2 + $0x70] sm:$0xff]
        %v858 = vld [vmem:[#allocation2 + $0x78] sm:$0xff]
        %v859 = vld [vmem:[#allocation2 + $0x80] sm:$0xff]
        %v860 = vld [vmem:[#allocation2 + $0x88] sm:$0xff]
        %v861 = vld [vmem:[#allocation2 + $0x90] sm:$0xff]
        %v862 = vld [vmem:[#allocation2 + $0x98] sm:$0xff]
        %v863 = vld [vmem:[#allocation2 + $0xa0] sm:$0xff]
        %v864 = vld [vmem:[#allocation2 + $0xa8] sm:$0xff]
        %v865 = vld [vmem:[#allocation2 + $0xb0] sm:$0xff]
        %v866 = vld [vmem:[#allocation2 + $0xb8] sm:$0xff]
        %v867 = vld [vmem:[#allocation2 + $0xc0] sm:$0xff]
        %v868 = vld [vmem:[#allocation2 + $0xc8] sm:$0xff]
        %v869 = vld [vmem:[#allocation2 + $0xd0] sm:$0xff]
        %v870 = vld [vmem:[#allocation2 + $0xd8] sm:$0xff]
        %v871 = vld [vmem:[#allocation2 + $0xe0] sm:$0xff]
        %v872 = vld [vmem:[#allocation2 + $0xe8] sm:$0xff]
        %v873 = vld [vmem:[#allocation2 + $0xf0] sm:$0xff]
        %v874 = vld [vmem:[#allocation2 + $0xf8] sm:$0xff]
        %v875 = vadd.f32 %v843, %v844
        %v876 = vadd.f32 %v875, %v845
        %v877 = vadd.f32 %v876, %v846
        %v878 = vadd.f32 %v877, %v847
        %v879 = vadd.f32 %v878, %v848
        %v880 = vadd.f32 %v879, %v849
        %v881 = vadd.f32 %v880, %v850
        %v882 = vadd.f32 %v881, %v851
        %v883 = vadd.f32 %v882, %v852
        %v884 = vadd.f32 %v883, %v853
        %v885 = vadd.f32 %v884, %v854
        %v886 = vadd.f32 %v885, %v855
        %v887 = vadd.f32 %v886, %v856
        %v888 = vadd.f32 %v887, %v857
        %v889 = vadd.f32 %v888, %v858
        %v890 = vadd.f32 %v889, %v859
        %v891 = vadd.f32 %v890, %v860
        %v892 = vadd.f32 %v891, %v861
        %v893 = vadd.f32 %v892, %v862
        %v894 = vadd.f32 %v893, %v863
        %v895 = vadd.f32 %v894, %v864
        %v896 = vadd.f32 %v895, %v865
        %v897 = vadd.f32 %v896, %v866
        %v898 = vadd.f32 %v897, %v867
        %v899 = vadd.f32 %v898, %v868
        %v900 = vadd.f32 %v899, %v869
        %v901 = vadd.f32 %v900, %v870
        %v902 = vadd.f32 %v901, %v871
        %v903 = vadd.f32 %v902, %v872
        %v904 = vadd.f32 %v903, %v873
        %v905 = vadd.f32 %v904, %v874
        %v906 = vrot.slane %v905, 4
        %v907 = vadd.f32 %v905, %v906
        %v908 = vrot.slane %v907, 2
        %v909 = vadd.f32 %v907, %v908
        %v910 = vrot.slane %v909, 1
        %v911 = vadd.f32 %v909, %v910
        %v912 = vmul.f32 %v843, %v843
        %v913 = vmul.f32 %v844, %v844
        %v914 = vmul.f32 %v845, %v845
        %v915 = vmul.f32 %v846, %v846
        %v916 = vmul.f32 %v847, %v847
        %v917 = vmul.f32 %v848, %v848
        %v918 = vmul.f32 %v849, %v849
        %v919 = vmul.f32 %v850, %v850
        %v920 = vmul.f32 %v851, %v851
        %v921 = vmul.f32 %v852, %v852
        %v922 = vmul.f32 %v853, %v853
        %v923 = vmul.f32 %v854, %v854
        %v924 = vmul.f32 %v855, %v855
        %v925 = vmul.f32 %v856, %v856
        %v926 = vmul.f32 %v857, %v857
        %v927 = vmul.f32 %v858, %v858
        %v928 = vmul.f32 %v859, %v859
        %v929 = vmul.f32 %v860, %v860
        %v930 = vmul.f32 %v861, %v861
        %v931 = vmul.f32 %v862, %v862
        %v932 = vmul.f32 %v863, %v863
        %v933 = vmul.f32 %v864, %v864
        %v934 = vmul.f32 %v865, %v865
        %v935 = vmul.f32 %v866, %v866
        %v936 = vmul.f32 %v867, %v867
        %v937 = vmul.f32 %v868, %v868
        %v938 = vmul.f32 %v869, %v869
        %v939 = vmul.f32 %v870, %v870
        %v940 = vmul.f32 %v871, %v871
        %v941 = vmul.f32 %v872, %v872
        %v942 = vmul.f32 %v873, %v873
        %v943 = vmul.f32 %v874, %v874
        %v944 = vadd.f32 %v912, %v913
        %v945 = vadd.f32 %v944, %v914
        %v946 = vadd.f32 %v945, %v915
        %v947 = vadd.f32 %v946, %v916
        %v948 = vadd.f32 %v947, %v917
        %v949 = vadd.f32 %v948, %v918
        %v950 = vadd.f32 %v949, %v919
        %v951 = vadd.f32 %v950, %v920
        %v952 = vadd.f32 %v951, %v921
        %v953 = vadd.f32 %v952, %v922
        %v954 = vadd.f32 %v953, %v923
        %v955 = vadd.f32 %v954, %v924
        %v956 = vadd.f32 %v955, %v925
        %v957 = vadd.f32 %v956, %v926
        %v958 = vadd.f32 %v957, %v927
        %v959 = vadd.f32 %v958, %v928
        %v960 = vadd.f32 %v959, %v929
        %v961 = vadd.f32 %v960, %v930
        %v962 = vadd.f32 %v961, %v931
        %v963 = vadd.f32 %v962, %v932
        %v964 = vadd.f32 %v963, %v933
        %v965 = vadd.f32 %v964, %v934
        %v966 = vadd.f32 %v965, %v935
        %v967 = vadd.f32 %v966, %v936
        %v968 = vadd.f32 %v967, %v937
        %v969 = vadd.f32 %v968, %v938
        %v970 = vadd.f32 %v969, %v939
        %v971 = vadd.f32 %v970, %v940
        %v972 = vadd.f32 %v971, %v941
        %v973 = vadd.f32 %v972, %v942
        %v974 = vadd.f32 %v973, %v943
        %v975 = vrot.slane %v974, 4
        %v976 = vadd.f32 %v974, %v975
        %v977 = vrot.slane %v976, 2
        %v978 = vadd.f32 %v976, %v977
        %v979 = vrot.slane %v978, 1
        %v980 = vadd.f32 %v978, %v979
        %v981 = vmul.f32 %v911, 0.00390625
        %v982 = vmul.f32 %v980, 0.00390625
        %v983 = vmul.f32 %v981, %v981
        %v984 = vsub.f32 %v982, %v983
        %v985 = vmax.f32 %v984, 0.0
        %v986 = vsub.f32 %v843, %v981
        %v987 = vsub.f32 %v844, %v981
        %v988 = vsub.f32 %v845, %v981
        %v989 = vsub.f32 %v846, %v981
        %v990 = vsub.f32 %v847, %v981
        %v991 = vsub.f32 %v848, %v981
        %v992 = vsub.f32 %v849, %v981
        %v993 = vsub.f32 %v850, %v981
        %v994 = vsub.f32 %v851, %v981
        %v995 = vsub.f32 %v852, %v981
        %v996 = vsub.f32 %v853, %v981
        %v997 = vsub.f32 %v854, %v981
        %v998 = vsub.f32 %v855, %v981
        %v999 = vsub.f32 %v856, %v981
        %v1000 = vsub.f32 %v857, %v981
        %v1001 = vsub.f32 %v858, %v981
        %v1002 = vsub.f32 %v859, %v981
        %v1003 = vsub.f32 %v860, %v981
        %v1004 = vsub.f32 %v861, %v981
        %v1005 = vsub.f32 %v862, %v981
        %v1006 = vsub.f32 %v863, %v981
        %v1007 = vsub.f32 %v864, %v981
        %v1008 = vsub.f32 %v865, %v981
        %v1009 = vsub.f32 %v866, %v981
        %v1010 = vsub.f32 %v867, %v981
        %v1011 = vsub.f32 %v868, %v981
        %v1012 = vsub.f32 %v869, %v981
        %v1013 = vsub.f32 %v870, %v981
        %v1014 = vsub.f32 %v871, %v981
        %v1015 = vsub.f32 %v872, %v981
        %v1016 = vsub.f32 %v873, %v981
        %v1017 = vsub.f32 %v874, %v981
        %v1018 = vadd.f32 %v985, 1e-05
        %v1019 = vrsqrt.pop %v1018
        %v1020 = vmul.f32 %v986, %v1019
        %v1021 = vmul.f32 %v987, %v1019
        %v1022 = vmul.f32 %v988, %v1019
        %v1023 = vmul.f32 %v989, %v1019
        %v1024 = vmul.f32 %v990, %v1019
        %v1025 = vmul.f32 %v991, %v1019
        %v1026 = vmul.f32 %v992, %v1019
        %v1027 = vmul.f32 %v993, %v1019
        %v1028 = vmul.f32 %v994, %v1019
        %v1029 = vmul.f32 %v995, %v1019
        %v1030 = vmul.f32 %v996, %v1019
        %v1031 = vmul.f32 %v997, %v1019
        %v1032 = vmul.f32 %v998, %v1019
        %v1033 = vmul.f32 %v999, %v1019
        %v1034 = vmul.f32 %v1000, %v1019
        %v1035 = vmul.f32 %v1001, %v1019
        %v1036 = vmul.f32 %v1002, %v1019
        %v1037 = vmul.f32 %v1003, %v1019
        %v1038 = vmul.f32 %v1004, %v1019
        %v1039 = vmul.f32 %v1005, %v1019
        %v1040 = vmul.f32 %v1006, %v1019
        %v1041 = vmul.f32 %v1007, %v1019
        %v1042 = vmul.f32 %v1008, %v1019
        %v1043 = vmul.f32 %v1009, %v1019
        %v1044 = vmul.f32 %v1010, %v1019
        %v1045 = vmul.f32 %v1011, %v1019
        %v1046 = vmul.f32 %v1012, %v1019
        %v1047 = vmul.f32 %v1013, %v1019
        %v1048 = vmul.f32 %v1014, %v1019
        %v1049 = vmul.f32 %v1015, %v1019
        %v1050 = vmul.f32 %v1016, %v1019
        %v1051 = vmul.f32 %v1017, %v1019
        %v1052 = vmax.f32 %v1020, 0.0
        %v1053 = vmax.f32 %v1021, 0.0
        %v1054 = vmax.f32 %v1022, 0.0
        %v1055 = vmax.f32 %v1023, 0.0
        %v1056 = vmax.f32 %v1024, 0.0
        %v1057 = vmax.f32 %v1025, 0.0
        %v1058 = vmax.f32 %v1026, 0.0
        %v1059 = vmax.f32 %v1027, 0.0
        %v1060 = vmax.f32 %v1028, 0.0
        %v1061 = vmax.f32 %v1029, 0.0
        %v1062 = vmax.f32 %v1030, 0.0
        %v1063 = vmax.f32 %v1031, 0.0
        %v1064 = vmax.f32 %v1032, 0.0
        %v1065 = vmax.f32 %v1033, 0.0
        %v1066 = vmax.f32 %v1034, 0.0
        %v1067 = vmax.f32 %v1035, 0.0
        %v1068 = vmax.f32 %v1036, 0.0
        %v1069 = vmax.f32 %v1037, 0.0
        %v1070 = vmax.f32 %v1038, 0.0
        %v1071 = vmax.f32 %v1039, 0.0
        %v1072 = vmax.f32 %v1040, 0.0
        %v1073 = vmax.f32 %v1041, 0.0
        %v1074 = vmax.f32 %v1042, 0.0
        %v1075 = vmax.f32 %v1043, 0.0
        %v1076 = vmax.f32 %v1044, 0.0
        %v1077 = vmax.f32 %v1045, 0.0
        %v1078 = vmax.f32 %v1046, 0.0
        %v1079 = vmax.f32 %v1047, 0.0
        %v1080 = vmax.f32 %v1048, 0.0
        %v1081 = vmax.f32 %v1049, 0.0
        %v1082 = vmax.f32 %v1050, 0.0
        %v1083 = vmax.f32 %v1051, 0.0
        %v1084 = vpack.c.bf16 %v1053, %v1052
        %v1085 = vpack.c.bf16 %v1055, %v1054
        %v1086 = vpack.c.bf16 %v1057, %v1056
        %v1087 = vpack.c.bf16 %v1059, %v1058
        %v1088 = vpack.c.bf16 %v1061, %v1060
        %v1089 = vpack.c.bf16 %v1063, %v1062
        %v1090 = vpack.c.bf16 %v1065, %v1064
        %v1091 = vpack.c.bf16 %v1067, %v1066
        %v1092 = vpack.c.bf16 %v1069, %v1068
        %v1093 = vpack.c.bf16 %v1071, %v1070
        %v1094 = vpack.c.bf16 %v1073, %v1072
        %v1095 = vpack.c.bf16 %v1075, %v1074
        %v1096 = vpack.c.bf16 %v1077, %v1076
        %v1097 = vpack.c.bf16 %v1079, %v1078
        %v1098 = vpack.c.bf16 %v1081, %v1080
        %v1099 = vpack.c.bf16 %v1083, %v1082
        %v1116 = vunpack.c.l.b16 %v1084
        %v1117 = vunpack.c.h.b16 %v1084
        %v1118 = vunpack.c.l.b16 %v1085
        %v1119 = vunpack.c.h.b16 %v1085
        %v1120 = vunpack.c.l.b16 %v1086
        %v1121 = vunpack.c.h.b16 %v1086
        %v1122 = vunpack.c.l.b16 %v1087
        %v1123 = vunpack.c.h.b16 %v1087
        %v1124 = vunpack.c.l.b16 %v1088
        %v1125 = vunpack.c.h.b16 %v1088
        %v1126 = vunpack.c.l.b16 %v1089
        %v1127 = vunpack.c.h.b16 %v1089
        %v1128 = vunpack.c.l.b16 %v1090
        %v1129 = vunpack.c.h.b16 %v1090
        %v1130 = vunpack.c.l.b16 %v1091
        %v1131 = vunpack.c.h.b16 %v1091
        %v1132 = vunpack.c.l.b16 %v1092
        %v1133 = vunpack.c.h.b16 %v1092
        %v1134 = vunpack.c.l.b16 %v1093
        %v1135 = vunpack.c.h.b16 %v1093
        %v1136 = vunpack.c.l.b16 %v1094
        %v1137 = vunpack.c.h.b16 %v1094
        %v1138 = vunpack.c.l.b16 %v1095
        %v1139 = vunpack.c.h.b16 %v1095
        %v1140 = vunpack.c.l.b16 %v1096
        %v1141 = vunpack.c.h.b16 %v1096
        %v1142 = vunpack.c.l.b16 %v1097
        %v1143 = vunpack.c.h.b16 %v1097
        %v1144 = vunpack.c.l.b16 %v1098
        %v1145 = vunpack.c.h.b16 %v1098
        %v1146 = vunpack.c.l.b16 %v1099
        %v1147 = vunpack.c.h.b16 %v1099
        %v1148 = vpack.c.b16 %v1116, %v1116
        %v1149 = vpack.c.b16 %v1117, %v1117
        %v1150 = vpack.c.b16 %v1118, %v1118
        %v1151 = vpack.c.b16 %v1119, %v1119
        %v1152 = vpack.c.b16 %v1120, %v1120
        %v1153 = vpack.c.b16 %v1121, %v1121
        %v1154 = vpack.c.b16 %v1122, %v1122
        %v1155 = vpack.c.b16 %v1123, %v1123
        %v1156 = vpack.c.b16 %v1124, %v1124
        %v1157 = vpack.c.b16 %v1125, %v1125
        %v1158 = vpack.c.b16 %v1126, %v1126
        %v1159 = vpack.c.b16 %v1127, %v1127
        %v1160 = vpack.c.b16 %v1128, %v1128
        %v1161 = vpack.c.b16 %v1129, %v1129
        %v1162 = vpack.c.b16 %v1130, %v1130
        %v1163 = vpack.c.b16 %v1131, %v1131
        %v1164 = vpack.c.b16 %v1132, %v1132
        %v1165 = vpack.c.b16 %v1133, %v1133
        %v1166 = vpack.c.b16 %v1134, %v1134
        %v1167 = vpack.c.b16 %v1135, %v1135
        %v1168 = vpack.c.b16 %v1136, %v1136
        %v1169 = vpack.c.b16 %v1137, %v1137
        %v1170 = vpack.c.b16 %v1138, %v1138
        %v1171 = vpack.c.b16 %v1139, %v1139
        %v1172 = vpack.c.b16 %v1140, %v1140
        %v1173 = vpack.c.b16 %v1141, %v1141
        %v1174 = vpack.c.b16 %v1142, %v1142
        %v1175 = vpack.c.b16 %v1143, %v1143
        %v1176 = vpack.c.b16 %v1144, %v1144
        %v1177 = vpack.c.b16 %v1145, %v1145
        %v1178 = vpack.c.b16 %v1146, %v1146
        %v1179 = vpack.c.b16 %v1147, %v1147
        %1212 = vst [vmem:[%s224] sm:$0xf] %v1148
        %1213 = vst [vmem:[%s224 + $0x4] sm:$0xf] %v1149
        %1214 = vst [vmem:[%s224 + $0x8] sm:$0xf] %v1150
        %1215 = vst [vmem:[%s224 + $0xc] sm:$0xf] %v1151
        %1216 = vst [vmem:[%s224 + $0x10] sm:$0xf] %v1152
        %1217 = vst [vmem:[%s224 + $0x14] sm:$0xf] %v1153
        %1218 = vst [vmem:[%s224 + $0x18] sm:$0xf] %v1154
        %1219 = vst [vmem:[%s224 + $0x1c] sm:$0xf] %v1155
        %1220 = vst [vmem:[%s224 + $0x20] sm:$0xf] %v1156
        %1221 = vst [vmem:[%s224 + $0x24] sm:$0xf] %v1157
        %1222 = vst [vmem:[%s224 + $0x28] sm:$0xf] %v1158
        %1223 = vst [vmem:[%s224 + $0x2c] sm:$0xf] %v1159
        %1224 = vst [vmem:[%s224 + $0x30] sm:$0xf] %v1160
        %1225 = vst [vmem:[%s224 + $0x34] sm:$0xf] %v1161
        %1226 = vst [vmem:[%s224 + $0x38] sm:$0xf] %v1162
        %1227 = vst [vmem:[%s224 + $0x3c] sm:$0xf] %v1163
        %1228 = vst [vmem:[%s224 + $0x40] sm:$0xf] %v1164
        %1229 = vst [vmem:[%s224 + $0x44] sm:$0xf] %v1165
        %1230 = vst [vmem:[%s224 + $0x48] sm:$0xf] %v1166
        %1231 = vst [vmem:[%s224 + $0x4c] sm:$0xf] %v1167
        %1232 = vst [vmem:[%s224 + $0x50] sm:$0xf] %v1168
        %1233 = vst [vmem:[%s224 + $0x54] sm:$0xf] %v1169
        %1234 = vst [vmem:[%s224 + $0x58] sm:$0xf] %v1170
        %1235 = vst [vmem:[%s224 + $0x5c] sm:$0xf] %v1171
        %1236 = vst [vmem:[%s224 + $0x60] sm:$0xf] %v1172
        %1237 = vst [vmem:[%s224 + $0x64] sm:$0xf] %v1173
        %1238 = vst [vmem:[%s224 + $0x68] sm:$0xf] %v1174
        %1239 = vst [vmem:[%s224 + $0x6c] sm:$0xf] %v1175
        %1240 = vst [vmem:[%s224 + $0x70] sm:$0xf] %v1176
        %1241 = vst [vmem:[%s224 + $0x74] sm:$0xf] %v1177
        %1242 = vst [vmem:[%s224 + $0x78] sm:$0xf] %v1178
        %1243 = vst [vmem:[%s224 + $0x7c] sm:$0xf] %v1179
      $region36: #{cyclegan_forward.168} parent=27 // pred_fallthru
        _
      %s1244 = smul.u32 32, %s18
      %p1245 = scmp.lt.s32.totalorder %s1244, 63
      %s1246 = scalar_select %p1245, %s1244, 63
      %p1247 = scmp.lt.s32.totalorder %s19, 0
      %s1248 = scalar_select %p1247, %s19, 0
      %s1249 = sadd.s32 %s1248, %s1246
      %s1250 = smul.addr %s1249, 4
      %s1251 = scalar_lea.vmem %s2, %s1250
      // Predicated region
      $region37: #{cyclegan_forward.168} parent=27 // pred_check
        %p1252 = pneg %p108
      $region38: #{cyclegan_forward.168} parent=27 // pred_check_branch
        %1254 = sbr.rel (%p1252) target = $region40
      $region39: #{cyclegan_forward.168} parent=27 // pred_region
        %s1255 = smul.u32 32, %s18
      $region40: #{cyclegan_forward.168} parent=27 // pred_fallthru
        _
    $region28: #{cyclegan_forward.168} parent=5 // pred_fallthru
      _
    %p1256 = scmp.le.s32.totalorder 2, %s8
    // Predicated region
    $region41: #{cyclegan_forward.168} parent=5 // pred_check
      %p1257 = pneg %p1256
    $region42: #{cyclegan_forward.168} parent=5 // pred_check_branch
      %1259 = sbr.rel (%p1257) target = $region44
    $region43: #{cyclegan_forward.168} parent=5 // pred_region
      %s1260 = ssub.s32 %s8, 2
      // Predicated region
      $region45: #{cyclegan_forward.168} parent=43 // pred_check
        %p1261 = pneg %p114
      $region46: #{cyclegan_forward.168} parent=43 // pred_check_branch
        %1263 = sbr.rel (%p1261) target = $region48
      $region47: #{cyclegan_forward.168} parent=43 // pred_region
        %s1264 = smul.u32 32, %s21
        %p1265 = scmp.lt.s32.totalorder %s1264, 63
        %s1266 = scalar_select %p1265, %s1264, 63
        %p1267 = scmp.lt.s32.totalorder %s22, 0
        %s1268 = scalar_select %p1267, %s22, 0
        %s1269 = sadd.s32 %s1268, %s1266
        %s1270 = smul.addr %s1269, 4
        %s1271 = scalar_lea.vmem %s2, %s1270
      $region48: #{cyclegan_forward.168} parent=43 // pred_fallthru
        _
    $region44: #{cyclegan_forward.168} parent=5 // pred_fallthru
      _
  $region6: #{cyclegan_forward.168} parent=0 // loop_footer
    %s12 = sadd.s32 1, %s8
  $region7: #{cyclegan_forward.168} parent=0 // loop_footer_branch
    %7 = sbr.rel target = $region3
  $region8: #{cyclegan_forward.168} parent=0 // loop_exit
    _

// kernel: cyclegan_forward.169
$region0: #{cyclegan_forward.169}
  #allocation0 [shape = 'u32[]', space=smem, size = 0x4, offset = 0x4, fixed_abs, tag = 'smem constant byte address 0x4 - core index']
  #allocation1 [shape = 'u32[144,128]{1,0:T(1,128)}', space=vmem, size = 0x12000, scoped, tag = 'internal scratch']
  #allocation2 [shape = 'f32[64,128]{1,0:T(8,128)}', space=vmem, size = 0x8000, scoped, tag = 'scratch operand']
  %s0 = inlined_call_operand.vmem [shape: bf16[128,128], index: 0, kind: input, shape index: {}]
  %s1 = inlined_call_operand.vmem [shape: bf16[128,128], index: 1, kind: input, shape index: {}]
  %s2 = inlined_call_operand.vmem [shape: bf16[128,128], index: 2, kind: output, shape index: {}]
  %s3 = sld [smem:[#allocation0]]
  $region49: #{cyclegan_forward.169} parent=0
    _
  %s5 = ssub.s32 1, %s3
  %s6 = scalar_select 0, %s5, %s3
  loop: start=0, step=1, limit=4
  $region2: #{cyclegan_forward.169} parent=0 // loop_pre_header
    _
  $region3: #{cyclegan_forward.169} parent=0 // loop_header
    %s8 = sphi 0, %s12
    %p9 = scmp.ge.s32.totalorder %s8, 4
    %s15 = sphi 0, %s34
    %s16 = sphi 0, %s30
    %s17 = sphi 0, %s26
    %s18 = sphi 0, %s15
    %s19 = sphi 0, %s16
    %s20 = sphi 0, %s17
    %s21 = sphi 0, %s18
    %s22 = sphi 0, %s19
    %s23 = sphi 0, %s20
    %s39 = sphi 0, %s41
    %s42 = sphi 0, %s39
    %s43 = sphi 0, %s42
    %s59 = sphi 0, %s43
    %s67 = sphi 0, %s69
    %s70 = sphi 0, %s67
    %s71 = sphi 0, %s70
    %s87 = sphi 0, %s71
    %s95 = sphi 0, %s97
    %s98 = sphi 0, %s95
    %s99 = sphi 0, %s98
    %s115 = sphi 0, %s99
  $region4: #{cyclegan_forward.169} parent=0 // loop_header_branch
    %11 = sbr.rel (%p9) target = $region8
  $region5: #{cyclegan_forward.169} parent=0 // loop_body
    %s13 = ssub.s32 %s8, 1
    %s14 = ssub.s32 %s8, 2
    %s24 = sadd.s32 1, %s17
    %p25 = scmp.ge.s32.totalorder %s24, 1
    %s26 = scalar_select %p25, 0, %s24
    %s27 = sadd.s32 1, %s16
    %s28 = scalar_select %p25, %s27, %s16
    %p29 = scmp.ge.s32.totalorder %s28, 1
    %s30 = scalar_select %p29, 0, %s28
    %s31 = sadd.s32 1, %s15
    %s32 = scalar_select %p29, %s31, %s15
    %p33 = scmp.ge.s32.totalorder %s32, 2
    %s34 = scalar_select %p33, 0, %s32
    %s35 = ssub.s32 %s15, %s34
    %s36 = ssub.s32 %s17, %s26
    %s37 = sor.u32 %s35, %s36
    %p38 = scmp.eq.s32.totalorder %s37, 0
    %s40 = sadd.s32 %s39, 1
    %s41 = scalar_select %p38, %s39, %s40
    %p44 = pneg %p38
    %p45 = scmp.eq.s32.totalorder %s8, 1
    %p46 = por %p44, %p45
    %p47 = scmp.ne.s32.totalorder %s39, %s42
    %p48 = scmp.eq.s32.totalorder %s8, 0
    %p49 = por %p47, %p48
    %p50 = scmp.ne.s32.totalorder %s39, %s42
    %p51 = scmp.eq.s32.totalorder %s13, 1
    %p52 = por %p50, %p51
    %p53 = scmp.ne.s32.totalorder %s42, %s43
    %p54 = scmp.eq.s32.totalorder %s13, 0
    %p55 = por %p53, %p54
    %p56 = scmp.ne.s32.totalorder %s42, %s43
    %p57 = scmp.eq.s32.totalorder %s14, 1
    %p58 = por %p56, %p57
    %p60 = scmp.ne.s32.totalorder %s43, %s59
    %p61 = scmp.eq.s32.totalorder %s14, 0
    %p62 = por %p60, %p61
    %s63 = ssub.s32 %s17, %s26
    %s64 = ssub.s32 %s16, %s30
    %s65 = sor.u32 %s63, %s64
    %p66 = scmp.eq.s32.totalorder %s65, 0
    %s68 = sadd.s32 %s67, 1
    %s69 = scalar_select %p66, %s67, %s68
    %p72 = pneg %p66
    %p73 = scmp.eq.s32.totalorder %s8, 1
    %p74 = por %p72, %p73
    %p75 = scmp.ne.s32.totalorder %s67, %s70
    %p76 = scmp.eq.s32.totalorder %s8, 0
    %p77 = por %p75, %p76
    %p78 = scmp.ne.s32.totalorder %s67, %s70
    %p79 = scmp.eq.s32.totalorder %s13, 1
    %p80 = por %p78, %p79
    %p81 = scmp.ne.s32.totalorder %s70, %s71
    %p82 = scmp.eq.s32.totalorder %s13, 0
    %p83 = por %p81, %p82
    %p84 = scmp.ne.s32.totalorder %s70, %s71
    %p85 = scmp.eq.s32.totalorder %s14, 1
    %p86 = por %p84, %p85
    %p88 = scmp.ne.s32.totalorder %s71, %s87
    %p89 = scmp.eq.s32.totalorder %s14, 0
    %p90 = por %p88, %p89
    %s91 = ssub.s32 %s15, %s34
    %s92 = ssub.s32 %s16, %s30
    %s93 = sor.u32 %s91, %s92
    %p94 = scmp.eq.s32.totalorder %s93, 0
    %s96 = sadd.s32 %s95, 1
    %s97 = scalar_select %p94, %s95, %s96
    %p100 = pneg %p94
    %p101 = scmp.eq.s32.totalorder %s8, 1
    %p102 = por %p100, %p101
    %p103 = scmp.ne.s32.totalorder %s95, %s98
    %p104 = scmp.eq.s32.totalorder %s8, 0
    %p105 = por %p103, %p104
    %p106 = scmp.ne.s32.totalorder %s95, %s98
    %p107 = scmp.eq.s32.totalorder %s13, 1
    %p108 = por %p106, %p107
    %p109 = scmp.ne.s32.totalorder %s98, %s99
    %p110 = scmp.eq.s32.totalorder %s13, 0
    %p111 = por %p109, %p110
    %p112 = scmp.ne.s32.totalorder %s98, %s99
    %p113 = scmp.eq.s32.totalorder %s14, 1
    %p114 = por %p112, %p113
    %p116 = scmp.ne.s32.totalorder %s99, %s115
    %p117 = scmp.eq.s32.totalorder %s14, 0
    %p118 = por %p116, %p117
    %p119 = scmp.le.s32.totalorder 1, %s8
    %p120 = scmp.lt.s32.totalorder %s8, 3
    %p121 = pnand %p119, %p120
    %p122 = pneg %p121
    // Predicated region
    $region9: #{cyclegan_forward.169} parent=5 // pred_check
      _
    $region10: #{cyclegan_forward.169} parent=5 // pred_check_branch
      %124 = sbr.rel (%p121) target = $region12
    $region11: #{cyclegan_forward.169} parent=5 // pred_region
      %s125 = ssub.s32 %s8, 1
      // Predicated region
      $region13: #{cyclegan_forward.169} parent=11 // pred_check
        %p126 = pneg %p83
      $region14: #{cyclegan_forward.169} parent=11 // pred_check_branch
        %128 = sbr.rel (%p126) target = $region16
      $region15: #{cyclegan_forward.169} parent=11 // pred_region
        %s129 = smul.u32 16, %s20
        %p130 = scmp.lt.s32.totalorder %s129, 15
        %s131 = scalar_select %p130, %s129, 15
        %p132 = scmp.lt.s32.totalorder %s19, 0
        %s133 = scalar_select %p132, %s19, 0
        %s134 = sadd.s32 %s133, %s131
        %s135 = smul.addr %s134, 4
        %s136 = scalar_lea.vmem %s1, %s135
        %s137 = smul.u32 16, %s20
      $region16: #{cyclegan_forward.169} parent=11 // pred_fallthru
        _
    $region12: #{cyclegan_forward.169} parent=5 // pred_fallthru
      _
    %p138 = scmp.lt.s32.totalorder %s8, 2
    // Predicated region
    $region17: #{cyclegan_forward.169} parent=5 // pred_check
      %p139 = pneg %p138
    $region18: #{cyclegan_forward.169} parent=5 // pred_check_branch
      %141 = sbr.rel (%p139) target = $region20
    $region19: #{cyclegan_forward.169} parent=5 // pred_region
      // Predicated region
      $region21: #{cyclegan_forward.169} parent=19 // pred_check
        %p142 = pneg %p49
      $region22: #{cyclegan_forward.169} parent=19 // pred_check_branch
        %144 = sbr.rel (%p142) target = $region24
      $region23: #{cyclegan_forward.169} parent=19 // pred_region
        %s145 = smul.u32 8, %s15
        %p146 = scmp.lt.s32.totalorder %s145, 15
        %s147 = scalar_select %p146, %s145, 15
        %p148 = scmp.lt.s32.totalorder %s17, 0
        %s149 = scalar_select %p148, %s17, 0
        %s150 = sadd.s32 %s149, %s147
        %s151 = smul.addr %s150, 4
        %s152 = scalar_lea.vmem %s0, %s151
        %s153 = smul.u32 8, %s15
      $region24: #{cyclegan_forward.169} parent=19 // pred_fallthru
        _
    $region20: #{cyclegan_forward.169} parent=5 // pred_fallthru
      _
    %p154 = scmp.le.s32.totalorder 1, %s8
    %p155 = scmp.lt.s32.totalorder %s8, 3
    %p156 = pnand %p154, %p155
    %p157 = pneg %p156
    // Predicated region
    $region25: #{cyclegan_forward.169} parent=5 // pred_check
      _
    $region26: #{cyclegan_forward.169} parent=5 // pred_check_branch
      %159 = sbr.rel (%p156) target = $region28
    $region27: #{cyclegan_forward.169} parent=5 // pred_region
      %s160 = ssub.s32 %s8, 1
      %s161 = smul.u32 8, %s18
      %p162 = scmp.lt.s32.totalorder %s161, 15
      %s163 = scalar_select %p162, %s161, 15
      %p164 = scmp.lt.s32.totalorder %s20, 0
      %s165 = scalar_select %p164, %s20, 0
      %s166 = sadd.s32 %s165, %s163
      %s167 = smul.addr %s166, 4
      %s168 = scalar_lea.vmem %s0, %s167
      %p169 = pneg %p55
      %p170 = pneg %p52
      %s171 = smul.u32 16, %s20
      %p172 = scmp.lt.s32.totalorder %s171, 15
      %s173 = scalar_select %p172, %s171, 15
      %p174 = scmp.lt.s32.totalorder %s19, 0
      %s175 = scalar_select %p174, %s19, 0
      %s176 = sadd.s32 %s175, %s173
      %s177 = smul.addr %s176, 4
      %s178 = scalar_lea.vmem %s1, %s177
      %p179 = pneg %p83
      %p180 = pneg %p80
      %p181 = pneg %p111
      %p182 = pneg %p108
      %s183 = smul.u32 8, %s18
      %p184 = scmp.lt.s32.totalorder %s183, 15
      %s185 = scalar_select %p184, %s183, 15
      %p186 = scmp.lt.s32.totalorder %s19, 0
      %s187 = scalar_select %p186, %s19, 0
      %s188 = sadd.s32 %s187, %s185
      %s189 = smul.addr %s188, 4
      %s190 = scalar_lea.vmem %s2, %s189
      %s191 = smul.u32 8, %s18
      %p192 = scmp.lt.s32.totalorder %s191, 15
      %s193 = scalar_select %p192, %s191, 15
      %p194 = scmp.lt.s32.totalorder %s20, 0
      %s195 = scalar_select %p194, %s20, 0
      %s196 = sadd.s32 %s195, %s193
      %s197 = smul.addr %s196, 4
      %s198 = scalar_lea.vmem %s0, %s197
      %s199 = smul.u32 8, %s18
      %s200 = smul.u32 16, %s20
      %p201 = scmp.lt.s32.totalorder %s200, 15
      %s202 = scalar_select %p201, %s200, 15
      %p203 = scmp.lt.s32.totalorder %s19, 0
      %s204 = scalar_select %p203, %s19, 0
      %s205 = sadd.s32 %s204, %s202
      %s206 = smul.addr %s205, 4
      %s207 = scalar_lea.vmem %s1, %s206
      %s208 = smul.u32 16, %s20
      %s209 = smul.u32 8, %s18
      %p210 = scmp.lt.s32.totalorder %s209, 15
      %s211 = scalar_select %p210, %s209, 15
      %p212 = scmp.lt.s32.totalorder %s19, 0
      %s213 = scalar_select %p212, %s19, 0
      %s214 = sadd.s32 %s213, %s211
      %s215 = smul.addr %s214, 4
      %s216 = scalar_lea.vmem %s2, %s215
      %s217 = smul.u32 8, %s18
      %p219 = scmp.eq.s32.totalorder %s20, 0
      // Predicated region
      $region29: #{cyclegan_forward.169} parent=27 // pred_check
        %p220 = pneg %p219
      $region30: #{cyclegan_forward.169} parent=27 // pred_check_branch
        %222 = sbr.rel (%p220) target = $region32
      $region31: #{cyclegan_forward.169} parent=27 // pred_region
        %223 = vst [vmem:[#allocation2] sm:$0xff] 0.0
        %224 = vst [vmem:[#allocation2 + $0x8] sm:$0xff] 0.0
        %225 = vst [vmem:[#allocation2 + $0x10] sm:$0xff] 0.0
        %226 = vst [vmem:[#allocation2 + $0x18] sm:$0xff] 0.0
        %227 = vst [vmem:[#allocation2 + $0x20] sm:$0xff] 0.0
        %228 = vst [vmem:[#allocation2 + $0x28] sm:$0xff] 0.0
        %229 = vst [vmem:[#allocation2 + $0x30] sm:$0xff] 0.0
        %230 = vst [vmem:[#allocation2 + $0x38] sm:$0xff] 0.0
      $region32: #{cyclegan_forward.169} parent=27 // pred_fallthru
        _
      %v231 = vld [vmem:[#allocation2] sm:$0xff]
      %v232 = vld [vmem:[#allocation2 + $0x8] sm:$0xff]
      %v233 = vld [vmem:[#allocation2 + $0x10] sm:$0xff]
      %v234 = vld [vmem:[#allocation2 + $0x18] sm:$0xff]
      %v235 = vld [vmem:[#allocation2 + $0x20] sm:$0xff]
      %v236 = vld [vmem:[#allocation2 + $0x28] sm:$0xff]
      %v237 = vld [vmem:[#allocation2 + $0x30] sm:$0xff]
      %v238 = vld [vmem:[#allocation2 + $0x38] sm:$0xff]
      %v239 = vld [vmem:[%s198] sm:$0xf]
      %v240 = vld [vmem:[%s198 + $0x4] sm:$0xf]
      %v241 = vld [vmem:[%s198 + $0x8] sm:$0xf]
      %v242 = vld [vmem:[%s198 + $0xc] sm:$0xf]
      %v243 = vld [vmem:[%s198 + $0x10] sm:$0xf]
      %v244 = vld [vmem:[%s198 + $0x14] sm:$0xf]
      %v245 = vld [vmem:[%s198 + $0x18] sm:$0xf]
      %v246 = vld [vmem:[%s198 + $0x1c] sm:$0xf]
      %v247 = vld [vmem:[%s207] sm:$0xf]
      %v248 = vld [vmem:[%s207 + $0x4] sm:$0xf]
      %v249 = vld [vmem:[%s207 + $0x8] sm:$0xf]
      %v250 = vld [vmem:[%s207 + $0xc] sm:$0xf]
      %v251 = vld [vmem:[%s207 + $0x10] sm:$0xf]
      %v252 = vld [vmem:[%s207 + $0x14] sm:$0xf]
      %v253 = vld [vmem:[%s207 + $0x18] sm:$0xf]
      %v254 = vld [vmem:[%s207 + $0x1c] sm:$0xf]
      %v255 = vld [vmem:[%s207 + $0x20] sm:$0xf]
      %v256 = vld [vmem:[%s207 + $0x24] sm:$0xf]
      %v257 = vld [vmem:[%s207 + $0x28] sm:$0xf]
      %v258 = vld [vmem:[%s207 + $0x2c] sm:$0xf]
      %v259 = vld [vmem:[%s207 + $0x30] sm:$0xf]
      %v260 = vld [vmem:[%s207 + $0x34] sm:$0xf]
      %v261 = vld [vmem:[%s207 + $0x38] sm:$0xf]
      %v262 = vld [vmem:[%s207 + $0x3c] sm:$0xf]
      %v271 = vunpack.c.l.b16 %v239
      %v272 = vunpack.c.l.b16 %v240
      %v273 = vunpack.c.l.b16 %v241
      %v274 = vunpack.c.l.b16 %v242
      %v275 = vunpack.c.l.b16 %v243
      %v276 = vunpack.c.l.b16 %v244
      %v277 = vunpack.c.l.b16 %v245
      %v278 = vunpack.c.l.b16 %v246
      %v279 = vpack.c.b16 %v272, %v271
      %v280 = vpack.c.b16 %v274, %v273
      %v281 = vpack.c.b16 %v276, %v275
      %v282 = vpack.c.b16 %v278, %v277
      %v303 = vunpack.c.l.b16 %v247
      %v304 = vunpack.c.l.b16 %v248
      %v305 = vunpack.c.l.b16 %v249
      %v306 = vunpack.c.l.b16 %v250
      %v307 = vunpack.c.l.b16 %v251
      %v308 = vunpack.c.l.b16 %v252
      %v309 = vunpack.c.l.b16 %v253
      %v310 = vunpack.c.l.b16 %v254
      %v311 = vunpack.c.l.b16 %v255
      %v312 = vunpack.c.l.b16 %v256
      %v313 = vunpack.c.l.b16 %v257
      %v314 = vunpack.c.l.b16 %v258
      %v315 = vunpack.c.l.b16 %v259
      %v316 = vunpack.c.l.b16 %v260
      %v317 = vunpack.c.l.b16 %v261
      %v318 = vunpack.c.l.b16 %v262
      %v319 = vpack.c.b16 %v304, %v303
      %v320 = vpack.c.b16 %v306, %v305
      %v321 = vpack.c.b16 %v308, %v307
      %v322 = vpack.c.b16 %v310, %v309
      %v323 = vpack.c.b16 %v312, %v311
      %v324 = vpack.c.b16 %v314, %v313
      %v325 = vpack.c.b16 %v316, %v315
      %v326 = vpack.c.b16 %v318, %v317
      %335 = vmatprep.subr.bf16.mxu0 0
      %336 = vmatpush1.bf16.msra.mxu0 %v319
      %337 = vmatprep.subr.bf16.mxu0 0
      %338 = vmatpush1.bf16.msra.mxu0 %v320
      %339 = vmatprep.subr.bf16.mxu0 0
      %340 = vmatpush1.bf16.msra.mxu0 %v321
      %341 = vmatprep.subr.bf16.mxu0 0
      %342 = vmatpush1.bf16.msra.mxu0 %v322
      %343 = vmatprep.subr.bf16.mxu0 0
      %344 = vmatpush1.bf16.msra.mxu0 %v323
      %345 = vmatprep.subr.bf16.mxu0 0
      %346 = vmatpush1.bf16.msra.mxu0 %v324
      %347 = vmatprep.subr.bf16.mxu0 0
      %348 = vmatpush1.bf16.msra.mxu0 %v325
      %349 = vmatprep.subr.bf16.mxu0 0
      %350 = vmatpush1.bf16.msra.mxu0 %v326
      %351 = vmatprep.subr.bf16.mxu0 0
      %352 = vmatpush1.bf16.msra.mxu0 0
      %353 = vmatprep.subr.bf16.mxu0 0
      %354 = vmatpush1.bf16.msra.mxu0 0
      %355 = vmatprep.subr.bf16.mxu0 0
      %356 = vmatpush1.bf16.msra.mxu0 0
      %357 = vmatprep.subr.bf16.mxu0 0
      %358 = vmatpush1.bf16.msra.mxu0 0
      %359 = vmatprep.subr.bf16.mxu0 0
      %360 = vmatpush1.bf16.msra.mxu0 0
      %361 = vmatprep.subr.bf16.mxu0 0
      %362 = vmatpush1.bf16.msra.mxu0 0
      %363 = vmatprep.subr.bf16.mxu0 0
      %364 = vmatpush1.bf16.msra.mxu0 0
      %365 = vmatprep.subr.bf16.mxu0 0
      %366 = vmatpush1.bf16.msra.mxu0 0
      %367 = vmatprep.mubr.bf16.mxu0 0
      %368 = vmatmul.mubr.bf16.gmra.mrb[0].mxu0 %v279
      %v369 = vpop.f32.mrb[0].mxu0
      %v370 = vadd.f32 0.0, %v369
      %v371 = vpop.f32.mrb[0].mxu0
      %v372 = vpop.f32.mrb[0].mxu0
      %v373 = vadd.f32 0.0, %v372
      %v374 = vpop.f32.mrb[0].mxu0
      %375 = vmatprep.mubr.bf16.mxu0 0
      %376 = vmatmul.mubr.bf16.gmra.mrb[0].mxu0 %v280
      %v377 = vpop.f32.mrb[0].mxu0
      %v378 = vadd.f32 0.0, %v377
      %v379 = vpop.f32.mrb[0].mxu0
      %v380 = vpop.f32.mrb[0].mxu0
      %v381 = vadd.f32 0.0, %v380
      %v382 = vpop.f32.mrb[0].mxu0
      %383 = vmatprep.mubr.bf16.mxu0 0
      %384 = vmatmul.mubr.bf16.gmra.mrb[0].mxu0 %v281
      %v385 = vpop.f32.mrb[0].mxu0
      %v386 = vadd.f32 0.0, %v385
      %v387 = vpop.f32.mrb[0].mxu0
      %v388 = vpop.f32.mrb[0].mxu0
      %v389 = vadd.f32 0.0, %v388
      %v390 = vpop.f32.mrb[0].mxu0
      %391 = vmatprep.mubr.bf16.mxu0 0
      %392 = vmatmul.mubr.bf16.gmra.mrb[0].mxu0 %v282
      %v393 = vpop.f32.mrb[0].mxu0
      %v394 = vadd.f32 0.0, %v393
      %v395 = vpop.f32.mrb[0].mxu0
      %v396 = vpop.f32.mrb[0].mxu0
      %v397 = vadd.f32 0.0, %v396
      %v398 = vpop.f32.mrb[0].mxu0
      %399 = vdwg.mxu0
      %v400 = vadd.f32 %v231, %v370
      %v401 = vadd.f32 %v232, %v373
      %v402 = vadd.f32 %v233, %v378
      %v403 = vadd.f32 %v234, %v381
      %v404 = vadd.f32 %v235, %v386
      %v405 = vadd.f32 %v236, %v389
      %v406 = vadd.f32 %v237, %v394
      %v407 = vadd.f32 %v238, %v397
      %408 = vst [vmem:[#allocation2] sm:$0xff] %v400
      %409 = vst [vmem:[#allocation2 + $0x8] sm:$0xff] %v401
      %410 = vst [vmem:[#allocation2 + $0x10] sm:$0xff] %v402
      %411 = vst [vmem:[#allocation2 + $0x18] sm:$0xff] %v403
      %412 = vst [vmem:[#allocation2 + $0x20] sm:$0xff] %v404
      %413 = vst [vmem:[#allocation2 + $0x28] sm:$0xff] %v405
      %414 = vst [vmem:[#allocation2 + $0x30] sm:$0xff] %v406
      %415 = vst [vmem:[#allocation2 + $0x38] sm:$0xff] %v407
      // Predicated region
      $region33: #{cyclegan_forward.169} parent=27 // pred_check
        %p416 = pneg %p219
      $region34: #{cyclegan_forward.169} parent=27 // pred_check_branch
        %418 = sbr.rel (%p416) target = $region36
      $region35: #{cyclegan_forward.169} parent=27 // pred_region
        %v419 = vld [vmem:[#allocation2] sm:$0xff]
        %v420 = vld [vmem:[#allocation2 + $0x8] sm:$0xff]
        %v421 = vld [vmem:[#allocation2 + $0x10] sm:$0xff]
        %v422 = vld [vmem:[#allocation2 + $0x18] sm:$0xff]
        %v423 = vld [vmem:[#allocation2 + $0x20] sm:$0xff]
        %v424 = vld [vmem:[#allocation2 + $0x28] sm:$0xff]
        %v425 = vld [vmem:[#allocation2 + $0x30] sm:$0xff]
        %v426 = vld [vmem:[#allocation2 + $0x38] sm:$0xff]
        %v427 = vadd.f32 %v419, %v420
        %v428 = vadd.f32 %v427, %v421
        %v429 = vadd.f32 %v428, %v422
        %v430 = vadd.f32 %v429, %v423
        %v431 = vadd.f32 %v430, %v424
        %v432 = vadd.f32 %v431, %v425
        %v433 = vadd.f32 %v432, %v426
        %v434 = vrot.slane %v433, 4
        %v435 = vadd.f32 %v433, %v434
        %v436 = vrot.slane %v435, 2
        %v437 = vadd.f32 %v435, %v436
        %v438 = vrot.slane %v437, 1
        %v439 = vadd.f32 %v437, %v438
        %v440 = vmul.f32 %v419, %v419
        %v441 = vmul.f32 %v420, %v420
        %v442 = vmul.f32 %v421, %v421
        %v443 = vmul.f32 %v422, %v422
        %v444 = vmul.f32 %v423, %v423
        %v445 = vmul.f32 %v424, %v424
        %v446 = vmul.f32 %v425, %v425
        %v447 = vmul.f32 %v426, %v426
        %v448 = vadd.f32 %v440, %v441
        %v449 = vadd.f32 %v448, %v442
        %v450 = vadd.f32 %v449, %v443
        %v451 = vadd.f32 %v450, %v444
        %v452 = vadd.f32 %v451, %v445
        %v453 = vadd.f32 %v452, %v446
        %v454 = vadd.f32 %v453, %v447
        %v455 = vrot.slane %v454, 4
        %v456 = vadd.f32 %v454, %v455
        %v457 = vrot.slane %v456, 2
        %v458 = vadd.f32 %v456, %v457
        %v459 = vrot.slane %v458, 1
        %v460 = vadd.f32 %v458, %v459
        %v461 = vmul.f32 %v439, 0.015625
        %v462 = vmul.f32 %v460, 0.015625
        %v463 = vmul.f32 %v461, %v461
        %v464 = vsub.f32 %v462, %v463
        %v465 = vmax.f32 %v464, 0.0
        %v466 = vsub.f32 %v419, %v461
        %v467 = vsub.f32 %v420, %v461
        %v468 = vsub.f32 %v421, %v461
        %v469 = vsub.f32 %v422, %v461
        %v470 = vsub.f32 %v423, %v461
        %v471 = vsub.f32 %v424, %v461
        %v472 = vsub.f32 %v425, %v461
        %v473 = vsub.f32 %v426, %v461
        %v474 = vadd.f32 %v465, 1e-05
        %v475 = vrsqrt.pop %v474
        %v476 = vmul.f32 %v466, %v475
        %v477 = vmul.f32 %v467, %v475
        %v478 = vmul.f32 %v468, %v475
        %v479 = vmul.f32 %v469, %v475
        %v480 = vmul.f32 %v470, %v475
        %v481 = vmul.f32 %v471, %v475
        %v482 = vmul.f32 %v472, %v475
        %v483 = vmul.f32 %v473, %v475
        %v484 = vmax.f32 %v476, 0.0
        %v485 = vmax.f32 %v477, 0.0
        %v486 = vmax.f32 %v478, 0.0
        %v487 = vmax.f32 %v479, 0.0
        %v488 = vmax.f32 %v480, 0.0
        %v489 = vmax.f32 %v481, 0.0
        %v490 = vmax.f32 %v482, 0.0
        %v491 = vmax.f32 %v483, 0.0
        %v492 = vpack.c.bf16 %v485, %v484
        %v493 = vpack.c.bf16 %v487, %v486
        %v494 = vpack.c.bf16 %v489, %v488
        %v495 = vpack.c.bf16 %v491, %v490
        %v500 = vunpack.c.l.b16 %v492
        %v501 = vunpack.c.h.b16 %v492
        %v502 = vunpack.c.l.b16 %v493
        %v503 = vunpack.c.h.b16 %v493
        %v504 = vunpack.c.l.b16 %v494
        %v505 = vunpack.c.h.b16 %v494
        %v506 = vunpack.c.l.b16 %v495
        %v507 = vunpack.c.h.b16 %v495
        %v508 = vpack.c.b16 %v500, %v500
        %v509 = vpack.c.b16 %v501, %v501
        %v510 = vpack.c.b16 %v502, %v502
        %v511 = vpack.c.b16 %v503, %v503
        %v512 = vpack.c.b16 %v504, %v504
        %v513 = vpack.c.b16 %v505, %v505
        %v514 = vpack.c.b16 %v506, %v506
        %v515 = vpack.c.b16 %v507, %v507
        %524 = vst [vmem:[%s216] sm:$0xf] %v508
        %525 = vst [vmem:[%s216 + $0x4] sm:$0xf] %v509
        %526 = vst [vmem:[%s216 + $0x8] sm:$0xf] %v510
        %527 = vst [vmem:[%s216 + $0xc] sm:$0xf] %v511
        %528 = vst [vmem:[%s216 + $0x10] sm:$0xf] %v512
        %529 = vst [vmem:[%s216 + $0x14] sm:$0xf] %v513
        %530 = vst [vmem:[%s216 + $0x18] sm:$0xf] %v514
        %531 = vst [vmem:[%s216 + $0x1c] sm:$0xf] %v515
      $region36: #{cyclegan_forward.169} parent=27 // pred_fallthru
        _
      %s532 = smul.u32 8, %s18
      %p533 = scmp.lt.s32.totalorder %s532, 15
      %s534 = scalar_select %p533, %s532, 15
      %p535 = scmp.lt.s32.totalorder %s19, 0
      %s536 = scalar_select %p535, %s19, 0
      %s537 = sadd.s32 %s536, %s534
      %s538 = smul.addr %s537, 4
      %s539 = scalar_lea.vmem %s2, %s538
      // Predicated region
      $region37: #{cyclegan_forward.169} parent=27 // pred_check
        %p540 = pneg %p108
      $region38: #{cyclegan_forward.169} parent=27 // pred_check_branch
        %542 = sbr.rel (%p540) target = $region40
      $region39: #{cyclegan_forward.169} parent=27 // pred_region
        %s543 = smul.u32 8, %s18
      $region40: #{cyclegan_forward.169} parent=27 // pred_fallthru
        _
    $region28: #{cyclegan_forward.169} parent=5 // pred_fallthru
      _
    %p544 = scmp.le.s32.totalorder 2, %s8
    // Predicated region
    $region41: #{cyclegan_forward.169} parent=5 // pred_check
      %p545 = pneg %p544
    $region42: #{cyclegan_forward.169} parent=5 // pred_check_branch
      %547 = sbr.rel (%p545) target = $region44
    $region43: #{cyclegan_forward.169} parent=5 // pred_region
      %s548 = ssub.s32 %s8, 2
      // Predicated region
      $region45: #{cyclegan_forward.169} parent=43 // pred_check
        %p549 = pneg %p114
      $region46: #{cyclegan_forward.169} parent=43 // pred_check_branch
        %551 = sbr.rel (%p549) target = $region48
      $region47: #{cyclegan_forward.169} parent=43 // pred_region
        %s552 = smul.u32 8, %s21
        %p553 = scmp.lt.s32.totalorder %s552, 15
        %s554 = scalar_select %p553, %s552, 15
        %p555 = scmp.lt.s32.totalorder %s22, 0
        %s556 = scalar_select %p555, %s22, 0
        %s557 = sadd.s32 %s556, %s554
        %s558 = smul.addr %s557, 4
        %s559 = scalar_lea.vmem %s2, %s558
      $region48: #{cyclegan_forward.169} parent=43 // pred_fallthru
        _
    $region44: #{cyclegan_forward.169} parent=5 // pred_fallthru
      _
  $region6: #{cyclegan_forward.169} parent=0 // loop_footer
    %s12 = sadd.s32 1, %s8
  $region7: #{cyclegan_forward.169} parent=0 // loop_footer_branch
    %7 = sbr.rel target = $region3
  $region8: #{cyclegan_forward.169} parent=0 // loop_exit
    _

// kernel: cyclegan_forward.170
$region0: #{cyclegan_forward.170}
  #allocation0 [shape = 'u32[]', space=smem, size = 0x4, offset = 0x4, fixed_abs, tag = 'smem constant byte address 0x4 - core index']
  #allocation1 [shape = 'u32[144,128]{1,0:T(1,128)}', space=vmem, size = 0x12000, scoped, tag = 'internal scratch']
  #allocation2 [shape = 'f32[16,128]{1,0:T(8,128)}', space=vmem, size = 0x2000, scoped, tag = 'scratch operand']
  %s0 = inlined_call_operand.vmem [shape: bf16[32,256], index: 0, kind: input, shape index: {}]
  %s1 = inlined_call_operand.vmem [shape: bf16[256,128], index: 1, kind: input, shape index: {}]
  %s2 = inlined_call_operand.vmem [shape: bf16[32,128], index: 2, kind: output, shape index: {}]
  %s3 = sld [smem:[#allocation0]]
  $region49: #{cyclegan_forward.170} parent=0
    _
  %s5 = ssub.s32 1, %s3
  %s6 = scalar_select 0, %s5, %s3
  loop: start=0, step=1, limit=4
  $region2: #{cyclegan_forward.170} parent=0 // loop_pre_header
    _
  $region3: #{cyclegan_forward.170} parent=0 // loop_header
    %s8 = sphi 0, %s12
    %p9 = scmp.ge.s32.totalorder %s8, 4
    %s15 = sphi 0, %s34
    %s16 = sphi 0, %s30
    %s17 = sphi 0, %s26
    %s18 = sphi 0, %s15
    %s19 = sphi 0, %s16
    %s20 = sphi 0, %s17
    %s21 = sphi 0, %s18
    %s22 = sphi 0, %s19
    %s23 = sphi 0, %s20
    %s39 = sphi 0, %s41
    %s42 = sphi 0, %s39
    %s43 = sphi 0, %s42
    %s59 = sphi 0, %s43
    %s67 = sphi 0, %s69
    %s70 = sphi 0, %s67
    %s71 = sphi 0, %s70
    %s87 = sphi 0, %s71
    %s95 = sphi 0, %s97
    %s98 = sphi 0, %s95
    %s99 = sphi 0, %s98
    %s115 = sphi 0, %s99
  $region4: #{cyclegan_forward.170} parent=0 // loop_header_branch
    %11 = sbr.rel (%p9) target = $region8
  $region5: #{cyclegan_forward.170} parent=0 // loop_body
    %s13 = ssub.s32 %s8, 1
    %s14 = ssub.s32 %s8, 2
    %s24 = sadd.s32 1, %s17
    %p25 = scmp.ge.s32.totalorder %s24, 1
    %s26 = scalar_select %p25, 0, %s24
    %s27 = sadd.s32 1, %s16
    %s28 = scalar_select %p25, %s27, %s16
    %p29 = scmp.ge.s32.totalorder %s28, 1
    %s30 = scalar_select %p29, 0, %s28
    %s31 = sadd.s32 1, %s15
    %s32 = scalar_select %p29, %s31, %s15
    %p33 = scmp.ge.s32.totalorder %s32, 2
    %s34 = scalar_select %p33, 0, %s32
    %s35 = ssub.s32 %s15, %s34
    %s36 = ssub.s32 %s17, %s26
    %s37 = sor.u32 %s35, %s36
    %p38 = scmp.eq.s32.totalorder %s37, 0
    %s40 = sadd.s32 %s39, 1
    %s41 = scalar_select %p38, %s39, %s40
    %p44 = pneg %p38
    %p45 = scmp.eq.s32.totalorder %s8, 1
    %p46 = por %p44, %p45
    %p47 = scmp.ne.s32.totalorder %s39, %s42
    %p48 = scmp.eq.s32.totalorder %s8, 0
    %p49 = por %p47, %p48
    %p50 = scmp.ne.s32.totalorder %s39, %s42
    %p51 = scmp.eq.s32.totalorder %s13, 1
    %p52 = por %p50, %p51
    %p53 = scmp.ne.s32.totalorder %s42, %s43
    %p54 = scmp.eq.s32.totalorder %s13, 0
    %p55 = por %p53, %p54
    %p56 = scmp.ne.s32.totalorder %s42, %s43
    %p57 = scmp.eq.s32.totalorder %s14, 1
    %p58 = por %p56, %p57
    %p60 = scmp.ne.s32.totalorder %s43, %s59
    %p61 = scmp.eq.s32.totalorder %s14, 0
    %p62 = por %p60, %p61
    %s63 = ssub.s32 %s17, %s26
    %s64 = ssub.s32 %s16, %s30
    %s65 = sor.u32 %s63, %s64
    %p66 = scmp.eq.s32.totalorder %s65, 0
    %s68 = sadd.s32 %s67, 1
    %s69 = scalar_select %p66, %s67, %s68
    %p72 = pneg %p66
    %p73 = scmp.eq.s32.totalorder %s8, 1
    %p74 = por %p72, %p73
    %p75 = scmp.ne.s32.totalorder %s67, %s70
    %p76 = scmp.eq.s32.totalorder %s8, 0
    %p77 = por %p75, %p76
    %p78 = scmp.ne.s32.totalorder %s67, %s70
    %p79 = scmp.eq.s32.totalorder %s13, 1
    %p80 = por %p78, %p79
    %p81 = scmp.ne.s32.totalorder %s70, %s71
    %p82 = scmp.eq.s32.totalorder %s13, 0
    %p83 = por %p81, %p82
    %p84 = scmp.ne.s32.totalorder %s70, %s71
    %p85 = scmp.eq.s32.totalorder %s14, 1
    %p86 = por %p84, %p85
    %p88 = scmp.ne.s32.totalorder %s71, %s87
    %p89 = scmp.eq.s32.totalorder %s14, 0
    %p90 = por %p88, %p89
    %s91 = ssub.s32 %s15, %s34
    %s92 = ssub.s32 %s16, %s30
    %s93 = sor.u32 %s91, %s92
    %p94 = scmp.eq.s32.totalorder %s93, 0
    %s96 = sadd.s32 %s95, 1
    %s97 = scalar_select %p94, %s95, %s96
    %p100 = pneg %p94
    %p101 = scmp.eq.s32.totalorder %s8, 1
    %p102 = por %p100, %p101
    %p103 = scmp.ne.s32.totalorder %s95, %s98
    %p104 = scmp.eq.s32.totalorder %s8, 0
    %p105 = por %p103, %p104
    %p106 = scmp.ne.s32.totalorder %s95, %s98
    %p107 = scmp.eq.s32.totalorder %s13, 1
    %p108 = por %p106, %p107
    %p109 = scmp.ne.s32.totalorder %s98, %s99
    %p110 = scmp.eq.s32.totalorder %s13, 0
    %p111 = por %p109, %p110
    %p112 = scmp.ne.s32.totalorder %s98, %s99
    %p113 = scmp.eq.s32.totalorder %s14, 1
    %p114 = por %p112, %p113
    %p116 = scmp.ne.s32.totalorder %s99, %s115
    %p117 = scmp.eq.s32.totalorder %s14, 0
    %p118 = por %p116, %p117
    %p119 = scmp.le.s32.totalorder 1, %s8
    %p120 = scmp.lt.s32.totalorder %s8, 3
    %p121 = pnand %p119, %p120
    %p122 = pneg %p121
    // Predicated region
    $region9: #{cyclegan_forward.170} parent=5 // pred_check
      _
    $region10: #{cyclegan_forward.170} parent=5 // pred_check_branch
      %124 = sbr.rel (%p121) target = $region12
    $region11: #{cyclegan_forward.170} parent=5 // pred_region
      %s125 = ssub.s32 %s8, 1
      // Predicated region
      $region13: #{cyclegan_forward.170} parent=11 // pred_check
        %p126 = pneg %p83
      $region14: #{cyclegan_forward.170} parent=11 // pred_check_branch
        %128 = sbr.rel (%p126) target = $region16
      $region15: #{cyclegan_forward.170} parent=11 // pred_region
        %s129 = smul.u32 32, %s20
        %p130 = scmp.lt.s32.totalorder %s129, 31
        %s131 = scalar_select %p130, %s129, 31
        %p132 = scmp.lt.s32.totalorder %s19, 0
        %s133 = scalar_select %p132, %s19, 0
        %s134 = sadd.s32 %s133, %s131
        %s135 = smul.addr %s134, 4
        %s136 = scalar_lea.vmem %s1, %s135
        %s137 = smul.u32 32, %s20
      $region16: #{cyclegan_forward.170} parent=11 // pred_fallthru
        _
    $region12: #{cyclegan_forward.170} parent=5 // pred_fallthru
      _
    %p138 = scmp.lt.s32.totalorder %s8, 2
    // Predicated region
    $region17: #{cyclegan_forward.170} parent=5 // pred_check
      %p139 = pneg %p138
    $region18: #{cyclegan_forward.170} parent=5 // pred_check_branch
      %141 = sbr.rel (%p139) target = $region20
    $region19: #{cyclegan_forward.170} parent=5 // pred_region
      // Predicated region
      $region21: #{cyclegan_forward.170} parent=19 // pred_check
        %p142 = pneg %p49
      $region22: #{cyclegan_forward.170} parent=19 // pred_check_branch
        %144 = sbr.rel (%p142) target = $region24
      $region23: #{cyclegan_forward.170} parent=19 // pred_region
        %s145 = smul.u32 2, %s15
        %s146 = smul.u32 2, %s17
        %p147 = scmp.lt.s32.totalorder %s145, 3
        %s148 = scalar_select %p147, %s145, 3
        %p149 = scmp.lt.s32.totalorder %s146, 1
        %s150 = scalar_select %p149, %s146, 1
        %s151 = smul.addr %s148, 2
        %s152 = sadd.s32 %s150, %s151
        %s153 = smul.addr %s152, 4
        %s154 = scalar_lea.vmem %s0, %s153
        %s155 = smul.u32 2, %s15
        %s156 = smul.u32 2, %s17
      $region24: #{cyclegan_forward.170} parent=19 // pred_fallthru
        _
    $region20: #{cyclegan_forward.170} parent=5 // pred_fallthru
      _
    %p157 = scmp.le.s32.totalorder 1, %s8
    %p158 = scmp.lt.s32.totalorder %s8, 3
    %p159 = pnand %p157, %p158
    %p160 = pneg %p159
    // Predicated region
    $region25: #{cyclegan_forward.170} parent=5 // pred_check
      _
    $region26: #{cyclegan_forward.170} parent=5 // pred_check_branch
      %162 = sbr.rel (%p159) target = $region28
    $region27: #{cyclegan_forward.170} parent=5 // pred_region
      %s163 = ssub.s32 %s8, 1
      %s164 = smul.u32 2, %s18
      %s165 = smul.u32 2, %s20
      %p166 = scmp.lt.s32.totalorder %s164, 3
      %s167 = scalar_select %p166, %s164, 3
      %p168 = scmp.lt.s32.totalorder %s165, 1
      %s169 = scalar_select %p168, %s165, 1
      %s170 = smul.addr %s167, 2
      %s171 = sadd.s32 %s169, %s170
      %s172 = smul.addr %s171, 4
      %s173 = scalar_lea.vmem %s0, %s172
      %p174 = pneg %p55
      %p175 = pneg %p52
      %s176 = smul.u32 32, %s20
      %p177 = scmp.lt.s32.totalorder %s176, 31
      %s178 = scalar_select %p177, %s176, 31
      %p179 = scmp.lt.s32.totalorder %s19, 0
      %s180 = scalar_select %p179, %s19, 0
      %s181 = sadd.s32 %s180, %s178
      %s182 = smul.addr %s181, 4
      %s183 = scalar_lea.vmem %s1, %s182
      %p184 = pneg %p83
      %p185 = pneg %p80
      %p186 = pneg %p111
      %p187 = pneg %p108
      %s188 = smul.u32 2, %s18
      %p189 = scmp.lt.s32.totalorder %s188, 3
      %s190 = scalar_select %p189, %s188, 3
      %p191 = scmp.lt.s32.totalorder %s19, 0
      %s192 = scalar_select %p191, %s19, 0
      %s193 = sadd.s32 %s192, %s190
      %s194 = smul.addr %s193, 4
      %s195 = scalar_lea.vmem %s2, %s194
      %s196 = smul.u32 2, %s18
      %s197 = smul.u32 2, %s20
      %p198 = scmp.lt.s32.totalorder %s196, 3
      %s199 = scalar_select %p198, %s196, 3
      %p200 = scmp.lt.s32.totalorder %s197, 1
      %s201 = scalar_select %p200, %s197, 1
      %s202 = smul.addr %s199, 2
      %s203 = sadd.s32 %s201, %s202
      %s204 = smul.addr %s203, 4
      %s205 = scalar_lea.vmem %s0, %s204
      %s206 = smul.u32 2, %s18
      %s207 = smul.u32 2, %s20
      %s208 = smul.u32 32, %s20
      %p209 = scmp.lt.s32.totalorder %s208, 31
      %s210 = scalar_select %p209, %s208, 31
      %p211 = scmp.lt.s32.totalorder %s19, 0
      %s212 = scalar_select %p211, %s19, 0
      %s213 = sadd.s32 %s212, %s210
      %s214 = smul.addr %s213, 4
      %s215 = scalar_lea.vmem %s1, %s214
      %s216 = smul.u32 32, %s20
      %s217 = smul.u32 2, %s18
      %p218 = scmp.lt.s32.totalorder %s217, 3
      %s219 = scalar_select %p218, %s217, 3
      %p220 = scmp.lt.s32.totalorder %s19, 0
      %s221 = scalar_select %p220, %s19, 0
      %s222 = sadd.s32 %s221, %s219
      %s223 = smul.addr %s222, 4
      %s224 = scalar_lea.vmem %s2, %s223
      %s225 = smul.u32 2, %s18
      %p227 = scmp.eq.s32.totalorder %s20, 0
      // Predicated region
      $region29: #{cyclegan_forward.170} parent=27 // pred_check
        %p228 = pneg %p227
      $region30: #{cyclegan_forward.170} parent=27 // pred_check_branch
        %230 = sbr.rel (%p228) target = $region32
      $region31: #{cyclegan_forward.170} parent=27 // pred_region
        %231 = vst [vmem:[#allocation2] sm:$0xff] 0.0
        %232 = vst [vmem:[#allocation2 + $0x8] sm:$0xff] 0.0
      $region32: #{cyclegan_forward.170} parent=27 // pred_fallthru
        _
      %v233 = vld [vmem:[#allocation2] sm:$0xff]
      %v234 = vld [vmem:[#allocation2 + $0x8] sm:$0xff]
      %v235 = vld [vmem:[%s205] sm:$0xff]
      %v236 = vld [vmem:[%s205 + $0x8] sm:$0xff]
      %v237 = vld [vmem:[%s215] sm:$0xf]
      %v238 = vld [vmem:[%s215 + $0x4] sm:$0xf]
      %v239 = vld [vmem:[%s215 + $0x8] sm:$0xf]
      %v240 = vld [vmem:[%s215 + $0xc] sm:$0xf]
      %v241 = vld [vmem:[%s215 + $0x10] sm:$0xf]
      %v242 = vld [vmem:[%s215 + $0x14] sm:$0xf]
      %v243 = vld [vmem:[%s215 + $0x18] sm:$0xf]
      %v244 = vld [vmem:[%s215 + $0x1c] sm:$0xf]
      %v245 = vld [vmem:[%s215 + $0x20] sm:$0xf]
      %v246 = vld [vmem:[%s215 + $0x24] sm:$0xf]
      %v247 = vld [vmem:[%s215 + $0x28] sm:$0xf]
      %v248 = vld [vmem:[%s215 + $0x2c] sm:$0xf]
      %v249 = vld [vmem:[%s215 + $0x30] sm:$0xf]
      %v250 = vld [vmem:[%s215 + $0x34] sm:$0xf]
      %v251 = vld [vmem:[%s215 + $0x38] sm:$0xf]
      %v252 = vld [vmem:[%s215 + $0x3c] sm:$0xf]
      %v253 = vld [vmem:[%s215 + $0x40] sm:$0xf]
      %v254 = vld [vmem:[%s215 + $0x44] sm:$0xf]
      %v255 = vld [vmem:[%s215 + $0x48] sm:$0xf]
      %v256 = vld [vmem:[%s215 + $0x4c] sm:$0xf]
      %v257 = vld [vmem:[%s215 + $0x50] sm:$0xf]
      %v258 = vld [vmem:[%s215 + $0x54] sm:$0xf]
      %v259 = vld [vmem:[%s215 + $0x58] sm:$0xf]
      %v260 = vld [vmem:[%s215 + $0x5c] sm:$0xf]
      %v261 = vld [vmem:[%s215 + $0x60] sm:$0xf]
      %v262 = vld [vmem:[%s215 + $0x64] sm:$0xf]
      %v263 = vld [vmem:[%s215 + $0x68] sm:$0xf]
      %v264 = vld [vmem:[%s215 + $0x6c] sm:$0xf]
      %v265 = vld [vmem:[%s215 + $0x70] sm:$0xf]
      %v266 = vld [vmem:[%s215 + $0x74] sm:$0xf]
      %v267 = vld [vmem:[%s215 + $0x78] sm:$0xf]
      %v268 = vld [vmem:[%s215 + $0x7c] sm:$0xf]
      %v271 = vunpack.c.l.b16 %v235
      %v272 = vunpack.c.h.b16 %v235
      %v273 = vunpack.c.l.b16 %v236
      %v274 = vunpack.c.h.b16 %v236
      %v275 = vpack.c.b16 %v273, %v271
      %v276 = vpack.c.b16 %v274, %v272
      %v311 = vunpack.c.l.b16 %v237
      %v312 = vunpack.c.l.b16 %v238
      %v313 = vunpack.c.l.b16 %v239
      %v314 = vunpack.c.l.b16 %v240
      %v315 = vunpack.c.l.b16 %v241
      %v316 = vunpack.c.l.b16 %v242
      %v317 = vunpack.c.l.b16 %v243
      %v318 = vunpack.c.l.b16 %v244
      %v319 = vunpack.c.l.b16 %v245
      %v320 = vunpack.c.l.b16 %v246
      %v321 = vunpack.c.l.b16 %v247
      %v322 = vunpack.c.l.b16 %v248
      %v323 = vunpack.c.l.b16 %v249
      %v324 = vunpack.c.l.b16 %v250
      %v325 = vunpack.c.l.b16 %v251
      %v326 = vunpack.c.l.b16 %v252
      %v327 = vunpack.c.l.b16 %v253
      %v328 = vunpack.c.l.b16 %v254
      %v329 = vunpack.c.l.b16 %v255
      %v330 = vunpack.c.l.b16 %v256
      %v331 = vunpack.c.l.b16 %v257
      %v332 = vunpack.c.l.b16 %v258
      %v333 = vunpack.c.l.b16 %v259
      %v334 = vunpack.c.l.b16 %v260
      %v335 = vunpack.c.l.b16 %v261
      %v336 = vunpack.c.l.b16 %v262
      %v337 = vunpack.c.l.b16 %v263
      %v338 = vunpack.c.l.b16 %v264
      %v339 = vunpack.c.l.b16 %v265
      %v340 = vunpack.c.l.b16 %v266
      %v341 = vunpack.c.l.b16 %v267
      %v342 = vunpack.c.l.b16 %v268
      %v343 = vpack.c.b16 %v312, %v311
      %v344 = vpack.c.b16 %v314, %v313
      %v345 = vpack.c.b16 %v316, %v315
      %v346 = vpack.c.b16 %v318, %v317
      %v347 = vpack.c.b16 %v320, %v319
      %v348 = vpack.c.b16 %v322, %v321
      %v349 = vpack.c.b16 %v324, %v323
      %v350 = vpack.c.b16 %v326, %v325
      %v351 = vpack.c.b16 %v328, %v327
      %v352 = vpack.c.b16 %v330, %v329
      %v353 = vpack.c.b16 %v332, %v331
      %v354 = vpack.c.b16 %v334, %v333
      %v355 = vpack.c.b16 %v336, %v335
      %v356 = vpack.c.b16 %v338, %v337
      %v357 = vpack.c.b16 %v340, %v339
      %v358 = vpack.c.b16 %v342, %v341
      %375 = vmatprep.subr.bf16.mxu0 0
      %376 = vmatpush1.bf16.msra.mxu0 %v343
      %377 = vmatprep.subr.bf16.mxu0 0
      %378 = vmatpush1.bf16.msra.mxu0 %v344
      %379 = vmatprep.subr.bf16.mxu0 0
      %380 = vmatpush1.bf16.msra.mxu0 %v345
      %381 = vmatprep.subr.bf16.mxu0 0
      %382 = vmatpush1.bf16.msra.mxu0 %v346
      %383 = vmatprep.subr.bf16.mxu0 0
      %384 = vmatpush1.bf16.msra.mxu0 %v347
      %385 = vmatprep.subr.bf16.mxu0 0
      %386 = vmatpush1.bf16.msra.mxu0 %v348
      %387 = vmatprep.subr.bf16.mxu0 0
      %388 = vmatpush1.bf16.msra.mxu0 %v349
      %389 = vmatprep.subr.bf16.mxu0 0
      %390 = vmatpush1.bf16.msra.mxu0 %v350
      %391 = vmatprep.subr.bf16.mxu0 0
      %392 = vmatpush1.bf16.msra.mxu0 %v351
      %393 = vmatprep.subr.bf16.mxu0 0
      %394 = vmatpush1.bf16.msra.mxu0 %v352
      %395 = vmatprep.subr.bf16.mxu0 0
      %396 = vmatpush1.bf16.msra.mxu0 %v353
      %397 = vmatprep.subr.bf16.mxu0 0
      %398 = vmatpush1.bf16.msra.mxu0 %v354
      %399 = vmatprep.subr.bf16.mxu0 0
      %400 = vmatpush1.bf16.msra.mxu0 %v355
      %401 = vmatprep.subr.bf16.mxu0 0
      %402 = vmatpush1.bf16.msra.mxu0 %v356
      %403 = vmatprep.subr.bf16.mxu0 0
      %404 = vmatpush1.bf16.msra.mxu0 %v357
      %405 = vmatprep.subr.bf16.mxu0 0
      %406 = vmatpush1.bf16.msra.mxu0 %v358
      %407 = vmatprep.mubr.bf16.mxu0 %v276
      %408 = vmatmul.mubr.bf16.gmra.mrb[0].mxu0 %v275
      %v409 = vpop.f32.mrb[0].mxu0
      %v410 = vadd.f32 0.0, %v409
      %v411 = vpop.f32.mrb[0].mxu0
      %v412 = vpop.f32.mrb[0].mxu0
      %v413 = vadd.f32 0.0, %v412
      %v414 = vpop.f32.mrb[0].mxu0
      %415 = vdwg.mxu0
      %v416 = vadd.f32 %v233, %v410
      %v417 = vadd.f32 %v234, %v413
      %418 = vst [vmem:[#allocation2] sm:$0xff] %v416
      %419 = vst [vmem:[#allocation2 + $0x8] sm:$0xff] %v417
      // Predicated region
      $region33: #{cyclegan_forward.170} parent=27 // pred_check
        %p420 = pneg %p227
      $region34: #{cyclegan_forward.170} parent=27 // pred_check_branch
        %422 = sbr.rel (%p420) target = $region36
      $region35: #{cyclegan_forward.170} parent=27 // pred_region
        %v423 = vld [vmem:[#allocation2] sm:$0xff]
        %v424 = vld [vmem:[#allocation2 + $0x8] sm:$0xff]
        %v425 = vadd.f32 %v423, %v424
        %v426 = vrot.slane %v425, 4
        %v427 = vadd.f32 %v425, %v426
        %v428 = vrot.slane %v427, 2
        %v429 = vadd.f32 %v427, %v428
        %v430 = vrot.slane %v429, 1
        %v431 = vadd.f32 %v429, %v430
        %v432 = vmul.f32 %v423, %v423
        %v433 = vmul.f32 %v424, %v424
        %v434 = vadd.f32 %v432, %v433
        %v435 = vrot.slane %v434, 4
        %v436 = vadd.f32 %v434, %v435
        %v437 = vrot.slane %v436, 2
        %v438 = vadd.f32 %v436, %v437
        %v439 = vrot.slane %v438, 1
        %v440 = vadd.f32 %v438, %v439
        %v441 = vmul.f32 %v431, 0.0625
        %v442 = vmul.f32 %v440, 0.0625
        %v443 = vmul.f32 %v441, %v441
        %v444 = vsub.f32 %v442, %v443
        %v445 = vmax.f32 %v444, 0.0
        %v446 = vsub.f32 %v423, %v441
        %v447 = vsub.f32 %v424, %v441
        %v448 = vadd.f32 %v445, 1e-05
        %v449 = vrsqrt.pop %v448
        %v450 = vmul.f32 %v446, %v449
        %v451 = vmul.f32 %v447, %v449
        %v452 = vmax.f32 %v450, 0.0
        %v453 = vmax.f32 %v451, 0.0
        %v454 = vpack.c.bf16 %v453, %v452
        %v456 = vunpack.c.l.b16 %v454
        %v457 = vunpack.c.h.b16 %v454
        %v458 = vpack.c.b16 %v456, %v456
        %v459 = vpack.c.b16 %v457, %v457
        %462 = vst [vmem:[%s224] sm:$0xf] %v458
        %463 = vst [vmem:[%s224 + $0x4] sm:$0xf] %v459
      $region36: #{cyclegan_forward.170} parent=27 // pred_fallthru
        _
      %s464 = smul.u32 2, %s18
      %p465 = scmp.lt.s32.totalorder %s464, 3
      %s466 = scalar_select %p465, %s464, 3
      %p467 = scmp.lt.s32.totalorder %s19, 0
      %s468 = scalar_select %p467, %s19, 0
      %s469 = sadd.s32 %s468, %s466
      %s470 = smul.addr %s469, 4
      %s471 = scalar_lea.vmem %s2, %s470
      // Predicated region
      $region37: #{cyclegan_forward.170} parent=27 // pred_check
        %p472 = pneg %p108
      $region38: #{cyclegan_forward.170} parent=27 // pred_check_branch
        %474 = sbr.rel (%p472) target = $region40
      $region39: #{cyclegan_forward.170} parent=27 // pred_region
        %s475 = smul.u32 2, %s18
      $region40: #{cyclegan_forward.170} parent=27 // pred_fallthru
        _
    $region28: #{cyclegan_forward.170} parent=5 // pred_fallthru
      _
    %p476 = scmp.le.s32.totalorder 2, %s8
    // Predicated region
    $region41: #{cyclegan_forward.170} parent=5 // pred_check
      %p477 = pneg %p476
    $region42: #{cyclegan_forward.170} parent=5 // pred_check_branch
      %479 = sbr.rel (%p477) target = $region44
    $region43: #{cyclegan_forward.170} parent=5 // pred_region
      %s480 = ssub.s32 %s8, 2
      // Predicated region
      $region45: #{cyclegan_forward.170} parent=43 // pred_check
        %p481 = pneg %p114
      $region46: #{cyclegan_forward.170} parent=43 // pred_check_branch
        %483 = sbr.rel (%p481) target = $region48
      $region47: #{cyclegan_forward.170} parent=43 // pred_region
        %s484 = smul.u32 2, %s21
        %p485 = scmp.lt.s32.totalorder %s484, 3
        %s486 = scalar_select %p485, %s484, 3
        %p487 = scmp.lt.s32.totalorder %s22, 0
        %s488 = scalar_select %p487, %s22, 0
        %s489 = sadd.s32 %s488, %s486
        %s490 = smul.addr %s489, 4
        %s491 = scalar_lea.vmem %s2, %s490
      $region48: #{cyclegan_forward.170} parent=43 // pred_fallthru
        _
    $region44: #{cyclegan_forward.170} parent=5 // pred_fallthru
      _
  $region6: #{cyclegan_forward.170} parent=0 // loop_footer
    %s12 = sadd.s32 1, %s8
  $region7: #{cyclegan_forward.170} parent=0 // loop_footer_branch
    %7 = sbr.rel target = $region3
  $region8: #{cyclegan_forward.170} parent=0 // loop_exit
    _

// kernel: cyclegan_forward.171
$region0: #{cyclegan_forward.171}
  #allocation0 [shape = 'u32[]', space=smem, size = 0x4, offset = 0x4, fixed_abs, tag = 'smem constant byte address 0x4 - core index']
  #allocation1 [shape = 'u32[144,128]{1,0:T(1,128)}', space=vmem, size = 0x12000, scoped, tag = 'internal scratch']
  #allocation2 [shape = 'f32[16,128]{1,0:T(8,128)}', space=vmem, size = 0x2000, scoped, tag = 'scratch operand']
  %s0 = inlined_call_operand.vmem [shape: bf16[32,384], index: 0, kind: input, shape index: {}]
  %s1 = inlined_call_operand.vmem [shape: bf16[384,128], index: 1, kind: input, shape index: {}]
  %s2 = inlined_call_operand.vmem [shape: bf16[32,128], index: 2, kind: output, shape index: {}]
  %s3 = sld [smem:[#allocation0]]
  $region49: #{cyclegan_forward.171} parent=0
    _
  %s5 = ssub.s32 1, %s3
  %s6 = scalar_select 0, %s5, %s3
  loop: start=0, step=1, limit=4
  $region2: #{cyclegan_forward.171} parent=0 // loop_pre_header
    _
  $region3: #{cyclegan_forward.171} parent=0 // loop_header
    %s8 = sphi 0, %s12
    %p9 = scmp.ge.s32.totalorder %s8, 4
    %s15 = sphi 0, %s34
    %s16 = sphi 0, %s30
    %s17 = sphi 0, %s26
    %s18 = sphi 0, %s15
    %s19 = sphi 0, %s16
    %s20 = sphi 0, %s17
    %s21 = sphi 0, %s18
    %s22 = sphi 0, %s19
    %s23 = sphi 0, %s20
    %s39 = sphi 0, %s41
    %s42 = sphi 0, %s39
    %s43 = sphi 0, %s42
    %s59 = sphi 0, %s43
    %s67 = sphi 0, %s69
    %s70 = sphi 0, %s67
    %s71 = sphi 0, %s70
    %s87 = sphi 0, %s71
    %s95 = sphi 0, %s97
    %s98 = sphi 0, %s95
    %s99 = sphi 0, %s98
    %s115 = sphi 0, %s99
  $region4: #{cyclegan_forward.171} parent=0 // loop_header_branch
    %11 = sbr.rel (%p9) target = $region8
  $region5: #{cyclegan_forward.171} parent=0 // loop_body
    %s13 = ssub.s32 %s8, 1
    %s14 = ssub.s32 %s8, 2
    %s24 = sadd.s32 1, %s17
    %p25 = scmp.ge.s32.totalorder %s24, 1
    %s26 = scalar_select %p25, 0, %s24
    %s27 = sadd.s32 1, %s16
    %s28 = scalar_select %p25, %s27, %s16
    %p29 = scmp.ge.s32.totalorder %s28, 1
    %s30 = scalar_select %p29, 0, %s28
    %s31 = sadd.s32 1, %s15
    %s32 = scalar_select %p29, %s31, %s15
    %p33 = scmp.ge.s32.totalorder %s32, 2
    %s34 = scalar_select %p33, 0, %s32
    %s35 = ssub.s32 %s15, %s34
    %s36 = ssub.s32 %s17, %s26
    %s37 = sor.u32 %s35, %s36
    %p38 = scmp.eq.s32.totalorder %s37, 0
    %s40 = sadd.s32 %s39, 1
    %s41 = scalar_select %p38, %s39, %s40
    %p44 = pneg %p38
    %p45 = scmp.eq.s32.totalorder %s8, 1
    %p46 = por %p44, %p45
    %p47 = scmp.ne.s32.totalorder %s39, %s42
    %p48 = scmp.eq.s32.totalorder %s8, 0
    %p49 = por %p47, %p48
    %p50 = scmp.ne.s32.totalorder %s39, %s42
    %p51 = scmp.eq.s32.totalorder %s13, 1
    %p52 = por %p50, %p51
    %p53 = scmp.ne.s32.totalorder %s42, %s43
    %p54 = scmp.eq.s32.totalorder %s13, 0
    %p55 = por %p53, %p54
    %p56 = scmp.ne.s32.totalorder %s42, %s43
    %p57 = scmp.eq.s32.totalorder %s14, 1
    %p58 = por %p56, %p57
    %p60 = scmp.ne.s32.totalorder %s43, %s59
    %p61 = scmp.eq.s32.totalorder %s14, 0
    %p62 = por %p60, %p61
    %s63 = ssub.s32 %s17, %s26
    %s64 = ssub.s32 %s16, %s30
    %s65 = sor.u32 %s63, %s64
    %p66 = scmp.eq.s32.totalorder %s65, 0
    %s68 = sadd.s32 %s67, 1
    %s69 = scalar_select %p66, %s67, %s68
    %p72 = pneg %p66
    %p73 = scmp.eq.s32.totalorder %s8, 1
    %p74 = por %p72, %p73
    %p75 = scmp.ne.s32.totalorder %s67, %s70
    %p76 = scmp.eq.s32.totalorder %s8, 0
    %p77 = por %p75, %p76
    %p78 = scmp.ne.s32.totalorder %s67, %s70
    %p79 = scmp.eq.s32.totalorder %s13, 1
    %p80 = por %p78, %p79
    %p81 = scmp.ne.s32.totalorder %s70, %s71
    %p82 = scmp.eq.s32.totalorder %s13, 0
    %p83 = por %p81, %p82
    %p84 = scmp.ne.s32.totalorder %s70, %s71
    %p85 = scmp.eq.s32.totalorder %s14, 1
    %p86 = por %p84, %p85
    %p88 = scmp.ne.s32.totalorder %s71, %s87
    %p89 = scmp.eq.s32.totalorder %s14, 0
    %p90 = por %p88, %p89
    %s91 = ssub.s32 %s15, %s34
    %s92 = ssub.s32 %s16, %s30
    %s93 = sor.u32 %s91, %s92
    %p94 = scmp.eq.s32.totalorder %s93, 0
    %s96 = sadd.s32 %s95, 1
    %s97 = scalar_select %p94, %s95, %s96
    %p100 = pneg %p94
    %p101 = scmp.eq.s32.totalorder %s8, 1
    %p102 = por %p100, %p101
    %p103 = scmp.ne.s32.totalorder %s95, %s98
    %p104 = scmp.eq.s32.totalorder %s8, 0
    %p105 = por %p103, %p104
    %p106 = scmp.ne.s32.totalorder %s95, %s98
    %p107 = scmp.eq.s32.totalorder %s13, 1
    %p108 = por %p106, %p107
    %p109 = scmp.ne.s32.totalorder %s98, %s99
    %p110 = scmp.eq.s32.totalorder %s13, 0
    %p111 = por %p109, %p110
    %p112 = scmp.ne.s32.totalorder %s98, %s99
    %p113 = scmp.eq.s32.totalorder %s14, 1
    %p114 = por %p112, %p113
    %p116 = scmp.ne.s32.totalorder %s99, %s115
    %p117 = scmp.eq.s32.totalorder %s14, 0
    %p118 = por %p116, %p117
    %p119 = scmp.le.s32.totalorder 1, %s8
    %p120 = scmp.lt.s32.totalorder %s8, 3
    %p121 = pnand %p119, %p120
    %p122 = pneg %p121
    // Predicated region
    $region9: #{cyclegan_forward.171} parent=5 // pred_check
      _
    $region10: #{cyclegan_forward.171} parent=5 // pred_check_branch
      %124 = sbr.rel (%p121) target = $region12
    $region11: #{cyclegan_forward.171} parent=5 // pred_region
      %s125 = ssub.s32 %s8, 1
      // Predicated region
      $region13: #{cyclegan_forward.171} parent=11 // pred_check
        %p126 = pneg %p83
      $region14: #{cyclegan_forward.171} parent=11 // pred_check_branch
        %128 = sbr.rel (%p126) target = $region16
      $region15: #{cyclegan_forward.171} parent=11 // pred_region
        %s129 = smul.u32 48, %s20
        %p130 = scmp.lt.s32.totalorder %s129, 47
        %s131 = scalar_select %p130, %s129, 47
        %p132 = scmp.lt.s32.totalorder %s19, 0
        %s133 = scalar_select %p132, %s19, 0
        %s134 = sadd.s32 %s133, %s131
        %s135 = smul.addr %s134, 4
        %s136 = scalar_lea.vmem %s1, %s135
        %s137 = smul.u32 48, %s20
      $region16: #{cyclegan_forward.171} parent=11 // pred_fallthru
        _
    $region12: #{cyclegan_forward.171} parent=5 // pred_fallthru
      _
    %p138 = scmp.lt.s32.totalorder %s8, 2
    // Predicated region
    $region17: #{cyclegan_forward.171} parent=5 // pred_check
      %p139 = pneg %p138
    $region18: #{cyclegan_forward.171} parent=5 // pred_check_branch
      %141 = sbr.rel (%p139) target = $region20
    $region19: #{cyclegan_forward.171} parent=5 // pred_region
      // Predicated region
      $region21: #{cyclegan_forward.171} parent=19 // pred_check
        %p142 = pneg %p49
      $region22: #{cyclegan_forward.171} parent=19 // pred_check_branch
        %144 = sbr.rel (%p142) target = $region24
      $region23: #{cyclegan_forward.171} parent=19 // pred_region
        %s145 = smul.u32 2, %s15
        %s146 = smul.u32 3, %s17
        %p147 = scmp.lt.s32.totalorder %s145, 3
        %s148 = scalar_select %p147, %s145, 3
        %p149 = scmp.lt.s32.totalorder %s146, 2
        %s150 = scalar_select %p149, %s146, 2
        %s151 = smul.addr %s148, 3
        %s152 = sadd.s32 %s150, %s151
        %s153 = smul.addr %s152, 4
        %s154 = scalar_lea.vmem %s0, %s153
        %s155 = smul.u32 2, %s15
        %s156 = smul.u32 3, %s17
      $region24: #{cyclegan_forward.171} parent=19 // pred_fallthru
        _
    $region20: #{cyclegan_forward.171} parent=5 // pred_fallthru
      _
    %p157 = scmp.le.s32.totalorder 1, %s8
    %p158 = scmp.lt.s32.totalorder %s8, 3
    %p159 = pnand %p157, %p158
    %p160 = pneg %p159
    // Predicated region
    $region25: #{cyclegan_forward.171} parent=5 // pred_check
      _
    $region26: #{cyclegan_forward.171} parent=5 // pred_check_branch
      %162 = sbr.rel (%p159) target = $region28
    $region27: #{cyclegan_forward.171} parent=5 // pred_region
      %s163 = ssub.s32 %s8, 1
      %s164 = smul.u32 2, %s18
      %s165 = smul.u32 3, %s20
      %p166 = scmp.lt.s32.totalorder %s164, 3
      %s167 = scalar_select %p166, %s164, 3
      %p168 = scmp.lt.s32.totalorder %s165, 2
      %s169 = scalar_select %p168, %s165, 2
      %s170 = smul.addr %s167, 3
      %s171 = sadd.s32 %s169, %s170
      %s172 = smul.addr %s171, 4
      %s173 = scalar_lea.vmem %s0, %s172
      %p174 = pneg %p55
      %p175 = pneg %p52
      %s176 = smul.u32 48, %s20
      %p177 = scmp.lt.s32.totalorder %s176, 47
      %s178 = scalar_select %p177, %s176, 47
      %p179 = scmp.lt.s32.totalorder %s19, 0
      %s180 = scalar_select %p179, %s19, 0
      %s181 = sadd.s32 %s180, %s178
      %s182 = smul.addr %s181, 4
      %s183 = scalar_lea.vmem %s1, %s182
      %p184 = pneg %p83
      %p185 = pneg %p80
      %p186 = pneg %p111
      %p187 = pneg %p108
      %s188 = smul.u32 2, %s18
      %p189 = scmp.lt.s32.totalorder %s188, 3
      %s190 = scalar_select %p189, %s188, 3
      %p191 = scmp.lt.s32.totalorder %s19, 0
      %s192 = scalar_select %p191, %s19, 0
      %s193 = sadd.s32 %s192, %s190
      %s194 = smul.addr %s193, 4
      %s195 = scalar_lea.vmem %s2, %s194
      %s196 = smul.u32 2, %s18
      %s197 = smul.u32 3, %s20
      %p198 = scmp.lt.s32.totalorder %s196, 3
      %s199 = scalar_select %p198, %s196, 3
      %p200 = scmp.lt.s32.totalorder %s197, 2
      %s201 = scalar_select %p200, %s197, 2
      %s202 = smul.addr %s199, 3
      %s203 = sadd.s32 %s201, %s202
      %s204 = smul.addr %s203, 4
      %s205 = scalar_lea.vmem %s0, %s204
      %s206 = smul.u32 2, %s18
      %s207 = smul.u32 3, %s20
      %s208 = smul.u32 48, %s20
      %p209 = scmp.lt.s32.totalorder %s208, 47
      %s210 = scalar_select %p209, %s208, 47
      %p211 = scmp.lt.s32.totalorder %s19, 0
      %s212 = scalar_select %p211, %s19, 0
      %s213 = sadd.s32 %s212, %s210
      %s214 = smul.addr %s213, 4
      %s215 = scalar_lea.vmem %s1, %s214
      %s216 = smul.u32 48, %s20
      %s217 = smul.u32 2, %s18
      %p218 = scmp.lt.s32.totalorder %s217, 3
      %s219 = scalar_select %p218, %s217, 3
      %p220 = scmp.lt.s32.totalorder %s19, 0
      %s221 = scalar_select %p220, %s19, 0
      %s222 = sadd.s32 %s221, %s219
      %s223 = smul.addr %s222, 4
      %s224 = scalar_lea.vmem %s2, %s223
      %s225 = smul.u32 2, %s18
      %p227 = scmp.eq.s32.totalorder %s20, 0
      // Predicated region
      $region29: #{cyclegan_forward.171} parent=27 // pred_check
        %p228 = pneg %p227
      $region30: #{cyclegan_forward.171} parent=27 // pred_check_branch
        %230 = sbr.rel (%p228) target = $region32
      $region31: #{cyclegan_forward.171} parent=27 // pred_region
        %231 = vst [vmem:[#allocation2] sm:$0xff] 0.0
        %232 = vst [vmem:[#allocation2 + $0x8] sm:$0xff] 0.0
      $region32: #{cyclegan_forward.171} parent=27 // pred_fallthru
        _
      %v233 = vld [vmem:[#allocation2] sm:$0xff]
      %v234 = vld [vmem:[#allocation2 + $0x8] sm:$0xff]
      %v235 = vld [vmem:[%s205] sm:$0xff]
      %v236 = vld [vmem:[%s205 + $0x8] sm:$0xf]
      %v237 = vld [vmem:[%s205 + $0xc] sm:$0xff]
      %v238 = vld [vmem:[%s205 + $0x14] sm:$0xf]
      %v239 = vld [vmem:[%s215] sm:$0xf]
      %v240 = vld [vmem:[%s215 + $0x4] sm:$0xf]
      %v241 = vld [vmem:[%s215 + $0x8] sm:$0xf]
      %v242 = vld [vmem:[%s215 + $0xc] sm:$0xf]
      %v243 = vld [vmem:[%s215 + $0x10] sm:$0xf]
      %v244 = vld [vmem:[%s215 + $0x14] sm:$0xf]
      %v245 = vld [vmem:[%s215 + $0x18] sm:$0xf]
      %v246 = vld [vmem:[%s215 + $0x1c] sm:$0xf]
      %v247 = vld [vmem:[%s215 + $0x20] sm:$0xf]
      %v248 = vld [vmem:[%s215 + $0x24] sm:$0xf]
      %v249 = vld [vmem:[%s215 + $0x28] sm:$0xf]
      %v250 = vld [vmem:[%s215 + $0x2c] sm:$0xf]
      %v251 = vld [vmem:[%s215 + $0x30] sm:$0xf]
      %v252 = vld [vmem:[%s215 + $0x34] sm:$0xf]
      %v253 = vld [vmem:[%s215 + $0x38] sm:$0xf]
      %v254 = vld [vmem:[%s215 + $0x3c] sm:$0xf]
      %v255 = vld [vmem:[%s215 + $0x40] sm:$0xf]
      %v256 = vld [vmem:[%s215 + $0x44] sm:$0xf]
      %v257 = vld [vmem:[%s215 + $0x48] sm:$0xf]
      %v258 = vld [vmem:[%s215 + $0x4c] sm:$0xf]
      %v259 = vld [vmem:[%s215 + $0x50] sm:$0xf]
      %v260 = vld [vmem:[%s215 + $0x54] sm:$0xf]
      %v261 = vld [vmem:[%s215 + $0x58] sm:$0xf]
      %v262 = vld [vmem:[%s215 + $0x5c] sm:$0xf]
      %v263 = vld [vmem:[%s215 + $0x60] sm:$0xf]
      %v264 = vld [vmem:[%s215 + $0x64] sm:$0xf]
      %v265 = vld [vmem:[%s215 + $0x68] sm:$0xf]
      %v266 = vld [vmem:[%s215 + $0x6c] sm:$0xf]
      %v267 = vld [vmem:[%s215 + $0x70] sm:$0xf]
      %v268 = vld [vmem:[%s215 + $0x74] sm:$0xf]
      %v269 = vld [vmem:[%s215 + $0x78] sm:$0xf]
      %v270 = vld [vmem:[%s215 + $0x7c] sm:$0xf]
      %v271 = vld [vmem:[%s215 + $0x80] sm:$0xf]
      %v272 = vld [vmem:[%s215 + $0x84] sm:$0xf]
      %v273 = vld [vmem:[%s215 + $0x88] sm:$0xf]
      %v274 = vld [vmem:[%s215 + $0x8c] sm:$0xf]
      %v275 = vld [vmem:[%s215 + $0x90] sm:$0xf]
      %v276 = vld [vmem:[%s215 + $0x94] sm:$0xf]
      %v277 = vld [vmem:[%s215 + $0x98] sm:$0xf]
      %v278 = vld [vmem:[%s215 + $0x9c] sm:$0xf]
      %v279 = vld [vmem:[%s215 + $0xa0] sm:$0xf]
      %v280 = vld [vmem:[%s215 + $0xa4] sm:$0xf]
      %v281 = vld [vmem:[%s215 + $0xa8] sm:$0xf]
      %v282 = vld [vmem:[%s215 + $0xac] sm:$0xf]
      %v283 = vld [vmem:[%s215 + $0xb0] sm:$0xf]
      %v284 = vld [vmem:[%s215 + $0xb4] sm:$0xf]
      %v285 = vld [vmem:[%s215 + $0xb8] sm:$0xf]
      %v286 = vld [vmem:[%s215 + $0xbc] sm:$0xf]
      %v291 = vunpack.c.l.b16 %v235
      %v292 = vunpack.c.h.b16 %v235
      %v293 = vunpack.c.l.b16 %v236
      %v294 = vunpack.c.l.b16 %v237
      %v295 = vunpack.c.h.b16 %v237
      %v296 = vunpack.c.l.b16 %v238
      %v297 = vpack.c.b16 %v294, %v291
      %v298 = vpack.c.b16 %v295, %v292
      %v299 = vpack.c.b16 %v296, %v293
      %v351 = vunpack.c.l.b16 %v239
      %v352 = vunpack.c.l.b16 %v240
      %v353 = vunpack.c.l.b16 %v241
      %v354 = vunpack.c.l.b16 %v242
      %v355 = vunpack.c.l.b16 %v243
      %v356 = vunpack.c.l.b16 %v244
      %v357 = vunpack.c.l.b16 %v245
      %v358 = vunpack.c.l.b16 %v246
      %v359 = vunpack.c.l.b16 %v247
      %v360 = vunpack.c.l.b16 %v248
      %v361 = vunpack.c.l.b16 %v249
      %v362 = vunpack.c.l.b16 %v250
      %v363 = vunpack.c.l.b16 %v251
      %v364 = vunpack.c.l.b16 %v252
      %v365 = vunpack.c.l.b16 %v253
      %v366 = vunpack.c.l.b16 %v254
      %v367 = vunpack.c.l.b16 %v255
      %v368 = vunpack.c.l.b16 %v256
      %v369 = vunpack.c.l.b16 %v257
      %v370 = vunpack.c.l.b16 %v258
      %v371 = vunpack.c.l.b16 %v259
      %v372 = vunpack.c.l.b16 %v260
      %v373 = vunpack.c.l.b16 %v261
      %v374 = vunpack.c.l.b16 %v262
      %v375 = vunpack.c.l.b16 %v263
      %v376 = vunpack.c.l.b16 %v264
      %v377 = vunpack.c.l.b16 %v265
      %v378 = vunpack.c.l.b16 %v266
      %v379 = vunpack.c.l.b16 %v267
      %v380 = vunpack.c.l.b16 %v268
      %v381 = vunpack.c.l.b16 %v269
      %v382 = vunpack.c.l.b16 %v270
      %v383 = vunpack.c.l.b16 %v271
      %v384 = vunpack.c.l.b16 %v272
      %v385 = vunpack.c.l.b16 %v273
      %v386 = vunpack.c.l.b16 %v274
      %v387 = vunpack.c.l.b16 %v275
      %v388 = vunpack.c.l.b16 %v276
      %v389 = vunpack.c.l.b16 %v277
      %v390 = vunpack.c.l.b16 %v278
      %v391 = vunpack.c.l.b16 %v279
      %v392 = vunpack.c.l.b16 %v280
      %v393 = vunpack.c.l.b16 %v281
      %v394 = vunpack.c.l.b16 %v282
      %v395 = vunpack.c.l.b16 %v283
      %v396 = vunpack.c.l.b16 %v284
      %v397 = vunpack.c.l.b16 %v285
      %v398 = vunpack.c.l.b16 %v286
      %v399 = vpack.c.b16 %v352, %v351
      %v400 = vpack.c.b16 %v354, %v353
      %v401 = vpack.c.b16 %v356, %v355
      %v402 = vpack.c.b16 %v358, %v357
      %v403 = vpack.c.b16 %v360, %v359
      %v404 = vpack.c.b16 %v362, %v361
      %v405 = vpack.c.b16 %v364, %v363
      %v406 = vpack.c.b16 %v366, %v365
      %v407 = vpack.c.b16 %v368, %v367
      %v408 = vpack.c.b16 %v370, %v369
      %v409 = vpack.c.b16 %v372, %v371
      %v410 = vpack.c.b16 %v374, %v373
      %v411 = vpack.c.b16 %v376, %v375
      %v412 = vpack.c.b16 %v378, %v377
      %v413 = vpack.c.b16 %v380, %v379
      %v414 = vpack.c.b16 %v382, %v381
      %v415 = vpack.c.b16 %v384, %v383
      %v416 = vpack.c.b16 %v386, %v385
      %v417 = vpack.c.b16 %v388, %v387
      %v418 = vpack.c.b16 %v390, %v389
      %v419 = vpack.c.b16 %v392, %v391
      %v420 = vpack.c.b16 %v394, %v393
      %v421 = vpack.c.b16 %v396, %v395
      %v422 = vpack.c.b16 %v398, %v397
      %447 = vmatprep.subr.bf16.mxu0 0
      %448 = vmatpush1.bf16.msra.mxu0 %v399
      %449 = vmatprep.subr.bf16.mxu0 0
      %450 = vmatpush1.bf16.msra.mxu0 %v400
      %451 = vmatprep.subr.bf16.mxu0 0
      %452 = vmatpush1.bf16.msra.mxu0 %v401
      %453 = vmatprep.subr.bf16.mxu0 0
      %454 = vmatpush1.bf16.msra.mxu0 %v402
      %455 = vmatprep.subr.bf16.mxu0 0
      %456 = vmatpush1.bf16.msra.mxu0 %v403
      %457 = vmatprep.subr.bf16.mxu0 0
      %458 = vmatpush1.bf16.msra.mxu0 %v404
      %459 = vmatprep.subr.bf16.mxu0 0
      %460 = vmatpush1.bf16.msra.mxu0 %v405
      %461 = vmatprep.subr.bf16.mxu0 0
      %462 = vmatpush1.bf16.msra.mxu0 %v406
      %463 = vmatprep.subr.bf16.mxu0 0
      %464 = vmatpush1.bf16.msra.mxu0 %v407
      %465 = vmatprep.subr.bf16.mxu0 0
      %466 = vmatpush1.bf16.msra.mxu0 %v408
      %467 = vmatprep.subr.bf16.mxu0 0
      %468 = vmatpush1.bf16.msra.mxu0 %v409
      %469 = vmatprep.subr.bf16.mxu0 0
      %470 = vmatpush1.bf16.msra.mxu0 %v410
      %471 = vmatprep.subr.bf16.mxu0 0
      %472 = vmatpush1.bf16.msra.mxu0 %v411
      %473 = vmatprep.subr.bf16.mxu0 0
      %474 = vmatpush1.bf16.msra.mxu0 %v412
      %475 = vmatprep.subr.bf16.mxu0 0
      %476 = vmatpush1.bf16.msra.mxu0 %v413
      %477 = vmatprep.subr.bf16.mxu0 0
      %478 = vmatpush1.bf16.msra.mxu0 %v414
      %479 = vmatprep.mubr.bf16.mxu0 %v298
      %480 = vmatmul.mubr.bf16.gmra.mrb[0].mxu0 %v297
      %v481 = vpop.f32.mrb[0].mxu0
      %v482 = vadd.f32 0.0, %v481
      %v483 = vpop.f32.mrb[0].mxu0
      %v484 = vpop.f32.mrb[0].mxu0
      %v485 = vadd.f32 0.0, %v484
      %v486 = vpop.f32.mrb[0].mxu0
      %487 = vdwg.mxu0
      %488 = vmatprep.subr.bf16.mxu0 0
      %489 = vmatpush1.bf16.msra.mxu0 %v415
      %490 = vmatprep.subr.bf16.mxu0 0
      %491 = vmatpush1.bf16.msra.mxu0 %v416
      %492 = vmatprep.subr.bf16.mxu0 0
      %493 = vmatpush1.bf16.msra.mxu0 %v417
      %494 = vmatprep.subr.bf16.mxu0 0
      %495 = vmatpush1.bf16.msra.mxu0 %v418
      %496 = vmatprep.subr.bf16.mxu0 0
      %497 = vmatpush1.bf16.msra.mxu0 %v419
      %498 = vmatprep.subr.bf16.mxu0 0
      %499 = vmatpush1.bf16.msra.mxu0 %v420
      %500 = vmatprep.subr.bf16.mxu0 0
      %501 = vmatpush1.bf16.msra.mxu0 %v421
      %502 = vmatprep.subr.bf16.mxu0 0
      %503 = vmatpush1.bf16.msra.mxu0 %v422
      %504 = vmatprep.subr.bf16.mxu0 0
      %505 = vmatpush1.bf16.msra.mxu0 0
      %506 = vmatprep.subr.bf16.mxu0 0
      %507 = vmatpush1.bf16.msra.mxu0 0
      %508 = vmatprep.subr.bf16.mxu0 0
      %509 = vmatpush1.bf16.msra.mxu0 0
      %510 = vmatprep.subr.bf16.mxu0 0
      %511 = vmatpush1.bf16.msra.mxu0 0
      %512 = vmatprep.subr.bf16.mxu0 0
      %513 = vmatpush1.bf16.msra.mxu0 0
      %514 = vmatprep.subr.bf16.mxu0 0
      %515 = vmatpush1.bf16.msra.mxu0 0
      %516 = vmatprep.subr.bf16.mxu0 0
      %517 = vmatpush1.bf16.msra.mxu0 0
      %518 = vmatprep.subr.bf16.mxu0 0
      %519 = vmatpush1.bf16.msra.mxu0 0
      %520 = vmatprep.mubr.bf16.mxu0 0
      %521 = vmatmul.mubr.bf16.gmra.mrb[0].mxu0 %v299
      %v522 = vpop.f32.mrb[0].mxu0
      %v523 = vadd.f32 %v482, %v522
      %v524 = vpop.f32.mrb[0].mxu0
      %v525 = vpop.f32.mrb[0].mxu0
      %v526 = vadd.f32 %v485, %v525
      %v527 = vpop.f32.mrb[0].mxu0
      %528 = vdwg.mxu0
      %v529 = vadd.f32 %v233, %v523
      %v530 = vadd.f32 %v234, %v526
      %531 = vst [vmem:[#allocation2] sm:$0xff] %v529
      %532 = vst [vmem:[#allocation2 + $0x8] sm:$0xff] %v530
      // Predicated region
      $region33: #{cyclegan_forward.171} parent=27 // pred_check
        %p533 = pneg %p227
      $region34: #{cyclegan_forward.171} parent=27 // pred_check_branch
        %535 = sbr.rel (%p533) target = $region36
      $region35: #{cyclegan_forward.171} parent=27 // pred_region
        %v536 = vld [vmem:[#allocation2] sm:$0xff]
        %v537 = vld [vmem:[#allocation2 + $0x8] sm:$0xff]
        %v538 = vadd.f32 %v536, %v537
        %v539 = vrot.slane %v538, 4
        %v540 = vadd.f32 %v538, %v539
        %v541 = vrot.slane %v540, 2
        %v542 = vadd.f32 %v540, %v541
        %v543 = vrot.slane %v542, 1
        %v544 = vadd.f32 %v542, %v543
        %v545 = vmul.f32 %v536, %v536
        %v546 = vmul.f32 %v537, %v537
        %v547 = vadd.f32 %v545, %v546
        %v548 = vrot.slane %v547, 4
        %v549 = vadd.f32 %v547, %v548
        %v550 = vrot.slane %v549, 2
        %v551 = vadd.f32 %v549, %v550
        %v552 = vrot.slane %v551, 1
        %v553 = vadd.f32 %v551, %v552
        %v554 = vmul.f32 %v544, 0.0625
        %v555 = vmul.f32 %v553, 0.0625
        %v556 = vmul.f32 %v554, %v554
        %v557 = vsub.f32 %v555, %v556
        %v558 = vmax.f32 %v557, 0.0
        %v559 = vsub.f32 %v536, %v554
        %v560 = vsub.f32 %v537, %v554
        %v561 = vadd.f32 %v558, 1e-05
        %v562 = vrsqrt.pop %v561
        %v563 = vmul.f32 %v559, %v562
        %v564 = vmul.f32 %v560, %v562
        %v565 = vmax.f32 %v563, 0.0
        %v566 = vmax.f32 %v564, 0.0
        %v567 = vpack.c.bf16 %v566, %v565
        %v569 = vunpack.c.l.b16 %v567
        %v570 = vunpack.c.h.b16 %v567
        %v571 = vpack.c.b16 %v569, %v569
        %v572 = vpack.c.b16 %v570, %v570
        %575 = vst [vmem:[%s224] sm:$0xf] %v571
        %576 = vst [vmem:[%s224 + $0x4] sm:$0xf] %v572
      $region36: #{cyclegan_forward.171} parent=27 // pred_fallthru
        _
      %s577 = smul.u32 2, %s18
      %p578 = scmp.lt.s32.totalorder %s577, 3
      %s579 = scalar_select %p578, %s577, 3
      %p580 = scmp.lt.s32.totalorder %s19, 0
      %s581 = scalar_select %p580, %s19, 0
      %s582 = sadd.s32 %s581, %s579
      %s583 = smul.addr %s582, 4
      %s584 = scalar_lea.vmem %s2, %s583
      // Predicated region
      $region37: #{cyclegan_forward.171} parent=27 // pred_check
        %p585 = pneg %p108
      $region38: #{cyclegan_forward.171} parent=27 // pred_check_branch
        %587 = sbr.rel (%p585) target = $region40
      $region39: #{cyclegan_forward.171} parent=27 // pred_region
        %s588 = smul.u32 2, %s18
      $region40: #{cyclegan_forward.171} parent=27 // pred_fallthru
        _
    $region28: #{cyclegan_forward.171} parent=5 // pred_fallthru
      _
    %p589 = scmp.le.s32.totalorder 2, %s8
    // Predicated region
    $region41: #{cyclegan_forward.171} parent=5 // pred_check
      %p590 = pneg %p589
    $region42: #{cyclegan_forward.171} parent=5 // pred_check_branch
      %592 = sbr.rel (%p590) target = $region44
    $region43: #{cyclegan_forward.171} parent=5 // pred_region
      %s593 = ssub.s32 %s8, 2
      // Predicated region
      $region45: #{cyclegan_forward.171} parent=43 // pred_check
        %p594 = pneg %p114
      $region46: #{cyclegan_forward.171} parent=43 // pred_check_branch
        %596 = sbr.rel (%p594) target = $region48
      $region47: #{cyclegan_forward.171} parent=43 // pred_region
        %s597 = smul.u32 2, %s21
        %p598 = scmp.lt.s32.totalorder %s597, 3
        %s599 = scalar_select %p598, %s597, 3
        %p600 = scmp.lt.s32.totalorder %s22, 0
        %s601 = scalar_select %p600, %s22, 0
        %s602 = sadd.s32 %s601, %s599
        %s603 = smul.addr %s602, 4
        %s604 = scalar_lea.vmem %s2, %s603
      $region48: #{cyclegan_forward.171} parent=43 // pred_fallthru
        _
    $region44: #{cyclegan_forward.171} parent=5 // pred_fallthru
      _
  $region6: #{cyclegan_forward.171} parent=0 // loop_footer
    %s12 = sadd.s32 1, %s8
  $region7: #{cyclegan_forward.171} parent=0 // loop_footer_branch
    %7 = sbr.rel target = $region3
  $region8: #{cyclegan_forward.171} parent=0 // loop_exit
    _

// kernel: cyclegan_forward.116
$region0: #{cyclegan_forward.116}
  #allocation0 [shape = 'u32[]', space=smem, size = 0x4, offset = 0x4, fixed_abs, tag = 'smem constant byte address 0x4 - core index']
  #allocation1 [shape = 'u32[144,128]{1,0:T(1,128)}', space=vmem, size = 0x12000, scoped, tag = 'internal scratch']
  #allocation2 [shape = 'f32[16,128]{1,0:T(8,128)}', space=vmem, size = 0x2000, scoped, tag = 'scratch operand']
  %s0 = inlined_call_operand.vmem [shape: bf16[32,384], index: 0, kind: input, shape index: {}]
  %s1 = inlined_call_operand.vmem [shape: bf16[384,128], index: 1, kind: input, shape index: {}]
  %s2 = inlined_call_operand.vmem [shape: bf16[32,128], index: 2, kind: input, shape index: {}]
  %s3 = inlined_call_operand.vmem [shape: bf16[32,128], index: 3, kind: output, shape index: {}]
  %s4 = sld [smem:[#allocation0]]
  $region53: #{cyclegan_forward.116} parent=0
    _
  %s6 = ssub.s32 1, %s4
  %s7 = scalar_select 0, %s6, %s4
  loop: start=0, step=1, limit=4
  $region2: #{cyclegan_forward.116} parent=0 // loop_pre_header
    _
  $region3: #{cyclegan_forward.116} parent=0 // loop_header
    %s9 = sphi 0, %s13
    %p10 = scmp.ge.s32.totalorder %s9, 4
    %s16 = sphi 0, %s35
    %s17 = sphi 0, %s31
    %s18 = sphi 0, %s27
    %s19 = sphi 0, %s16
    %s20 = sphi 0, %s17
    %s21 = sphi 0, %s18
    %s22 = sphi 0, %s19
    %s23 = sphi 0, %s20
    %s24 = sphi 0, %s21
    %s40 = sphi 0, %s42
    %s43 = sphi 0, %s40
    %s44 = sphi 0, %s43
    %s60 = sphi 0, %s44
    %s68 = sphi 0, %s70
    %s71 = sphi 0, %s68
    %s72 = sphi 0, %s71
    %s88 = sphi 0, %s72
    %s96 = sphi 0, %s98
    %s99 = sphi 0, %s96
    %s100 = sphi 0, %s99
    %s116 = sphi 0, %s100
    %s124 = sphi 0, %s126
    %s127 = sphi 0, %s124
    %s128 = sphi 0, %s127
    %s144 = sphi 0, %s128
  $region4: #{cyclegan_forward.116} parent=0 // loop_header_branch
    %12 = sbr.rel (%p10) target = $region8
  $region5: #{cyclegan_forward.116} parent=0 // loop_body
    %s14 = ssub.s32 %s9, 1
    %s15 = ssub.s32 %s9, 2
    %s25 = sadd.s32 1, %s18
    %p26 = scmp.ge.s32.totalorder %s25, 1
    %s27 = scalar_select %p26, 0, %s25
    %s28 = sadd.s32 1, %s17
    %s29 = scalar_select %p26, %s28, %s17
    %p30 = scmp.ge.s32.totalorder %s29, 1
    %s31 = scalar_select %p30, 0, %s29
    %s32 = sadd.s32 1, %s16
    %s33 = scalar_select %p30, %s32, %s16
    %p34 = scmp.ge.s32.totalorder %s33, 2
    %s35 = scalar_select %p34, 0, %s33
    %s36 = ssub.s32 %s16, %s35
    %s37 = ssub.s32 %s18, %s27
    %s38 = sor.u32 %s36, %s37
    %p39 = scmp.eq.s32.totalorder %s38, 0
    %s41 = sadd.s32 %s40, 1
    %s42 = scalar_select %p39, %s40, %s41
    %p45 = pneg %p39
    %p46 = scmp.eq.s32.totalorder %s9, 1
    %p47 = por %p45, %p46
    %p48 = scmp.ne.s32.totalorder %s40, %s43
    %p49 = scmp.eq.s32.totalorder %s9, 0
    %p50 = por %p48, %p49
    %p51 = scmp.ne.s32.totalorder %s40, %s43
    %p52 = scmp.eq.s32.totalorder %s14, 1
    %p53 = por %p51, %p52
    %p54 = scmp.ne.s32.totalorder %s43, %s44
    %p55 = scmp.eq.s32.totalorder %s14, 0
    %p56 = por %p54, %p55
    %p57 = scmp.ne.s32.totalorder %s43, %s44
    %p58 = scmp.eq.s32.totalorder %s15, 1
    %p59 = por %p57, %p58
    %p61 = scmp.ne.s32.totalorder %s44, %s60
    %p62 = scmp.eq.s32.totalorder %s15, 0
    %p63 = por %p61, %p62
    %s64 = ssub.s32 %s18, %s27
    %s65 = ssub.s32 %s17, %s31
    %s66 = sor.u32 %s64, %s65
    %p67 = scmp.eq.s32.totalorder %s66, 0
    %s69 = sadd.s32 %s68, 1
    %s70 = scalar_select %p67, %s68, %s69
    %p73 = pneg %p67
    %p74 = scmp.eq.s32.totalorder %s9, 1
    %p75 = por %p73, %p74
    %p76 = scmp.ne.s32.totalorder %s68, %s71
    %p77 = scmp.eq.s32.totalorder %s9, 0
    %p78 = por %p76, %p77
    %p79 = scmp.ne.s32.totalorder %s68, %s71
    %p80 = scmp.eq.s32.totalorder %s14, 1
    %p81 = por %p79, %p80
    %p82 = scmp.ne.s32.totalorder %s71, %s72
    %p83 = scmp.eq.s32.totalorder %s14, 0
    %p84 = por %p82, %p83
    %p85 = scmp.ne.s32.totalorder %s71, %s72
    %p86 = scmp.eq.s32.totalorder %s15, 1
    %p87 = por %p85, %p86
    %p89 = scmp.ne.s32.totalorder %s72, %s88
    %p90 = scmp.eq.s32.totalorder %s15, 0
    %p91 = por %p89, %p90
    %s92 = ssub.s32 %s16, %s35
    %s93 = ssub.s32 %s17, %s31
    %s94 = sor.u32 %s92, %s93
    %p95 = scmp.eq.s32.totalorder %s94, 0
    %s97 = sadd.s32 %s96, 1
    %s98 = scalar_select %p95, %s96, %s97
    %p101 = pneg %p95
    %p102 = scmp.eq.s32.totalorder %s9, 1
    %p103 = por %p101, %p102
    %p104 = scmp.ne.s32.totalorder %s96, %s99
    %p105 = scmp.eq.s32.totalorder %s9, 0
    %p106 = por %p104, %p105
    %p107 = scmp.ne.s32.totalorder %s96, %s99
    %p108 = scmp.eq.s32.totalorder %s14, 1
    %p109 = por %p107, %p108
    %p110 = scmp.ne.s32.totalorder %s99, %s100
    %p111 = scmp.eq.s32.totalorder %s14, 0
    %p112 = por %p110, %p111
    %p113 = scmp.ne.s32.totalorder %s99, %s100
    %p114 = scmp.eq.s32.totalorder %s15, 1
    %p115 = por %p113, %p114
    %p117 = scmp.ne.s32.totalorder %s100, %s116
    %p118 = scmp.eq.s32.totalorder %s15, 0
    %p119 = por %p117, %p118
    %s120 = ssub.s32 %s16, %s35
    %s121 = ssub.s32 %s17, %s31
    %s122 = sor.u32 %s120, %s121
    %p123 = scmp.eq.s32.totalorder %s122, 0
    %s125 = sadd.s32 %s124, 1
    %s126 = scalar_select %p123, %s124, %s125
    %p129 = pneg %p123
    %p130 = scmp.eq.s32.totalorder %s9, 1
    %p131 = por %p129, %p130
    %p132 = scmp.ne.s32.totalorder %s124, %s127
    %p133 = scmp.eq.s32.totalorder %s9, 0
    %p134 = por %p132, %p133
    %p135 = scmp.ne.s32.totalorder %s124, %s127
    %p136 = scmp.eq.s32.totalorder %s14, 1
    %p137 = por %p135, %p136
    %p138 = scmp.ne.s32.totalorder %s127, %s128
    %p139 = scmp.eq.s32.totalorder %s14, 0
    %p140 = por %p138, %p139
    %p141 = scmp.ne.s32.totalorder %s127, %s128
    %p142 = scmp.eq.s32.totalorder %s15, 1
    %p143 = por %p141, %p142
    %p145 = scmp.ne.s32.totalorder %s128, %s144
    %p146 = scmp.eq.s32.totalorder %s15, 0
    %p147 = por %p145, %p146
    %p148 = scmp.le.s32.totalorder 1, %s9
    %p149 = scmp.lt.s32.totalorder %s9, 3
    %p150 = pnand %p148, %p149
    %p151 = pneg %p150
    // Predicated region
    $region9: #{cyclegan_forward.116} parent=5 // pred_check
      _
    $region10: #{cyclegan_forward.116} parent=5 // pred_check_branch
      %153 = sbr.rel (%p150) target = $region12
    $region11: #{cyclegan_forward.116} parent=5 // pred_region
      %s154 = ssub.s32 %s9, 1
      // Predicated region
      $region13: #{cyclegan_forward.116} parent=11 // pred_check
        %p155 = pneg %p84
      $region14: #{cyclegan_forward.116} parent=11 // pred_check_branch
        %157 = sbr.rel (%p155) target = $region16
      $region15: #{cyclegan_forward.116} parent=11 // pred_region
        %s158 = smul.u32 48, %s21
        %p159 = scmp.lt.s32.totalorder %s158, 47
        %s160 = scalar_select %p159, %s158, 47
        %p161 = scmp.lt.s32.totalorder %s20, 0
        %s162 = scalar_select %p161, %s20, 0
        %s163 = sadd.s32 %s162, %s160
        %s164 = smul.addr %s163, 4
        %s165 = scalar_lea.vmem %s1, %s164
        %s166 = smul.u32 48, %s21
      $region16: #{cyclegan_forward.116} parent=11 // pred_fallthru
        _
    $region12: #{cyclegan_forward.116} parent=5 // pred_fallthru
      _
    %p167 = scmp.lt.s32.totalorder %s9, 2
    // Predicated region
    $region17: #{cyclegan_forward.116} parent=5 // pred_check
      %p168 = pneg %p167
    $region18: #{cyclegan_forward.116} parent=5 // pred_check_branch
      %170 = sbr.rel (%p168) target = $region20
    $region19: #{cyclegan_forward.116} parent=5 // pred_region
      // Predicated region
      $region21: #{cyclegan_forward.116} parent=19 // pred_check
        %p171 = pneg %p50
      $region22: #{cyclegan_forward.116} parent=19 // pred_check_branch
        %173 = sbr.rel (%p171) target = $region24
      $region23: #{cyclegan_forward.116} parent=19 // pred_region
        %s174 = smul.u32 2, %s16
        %s175 = smul.u32 3, %s18
        %p176 = scmp.lt.s32.totalorder %s174, 3
        %s177 = scalar_select %p176, %s174, 3
        %p178 = scmp.lt.s32.totalorder %s175, 2
        %s179 = scalar_select %p178, %s175, 2
        %s180 = smul.addr %s177, 3
        %s181 = sadd.s32 %s179, %s180
        %s182 = smul.addr %s181, 4
        %s183 = scalar_lea.vmem %s0, %s182
        %s184 = smul.u32 2, %s16
        %s185 = smul.u32 3, %s18
      $region24: #{cyclegan_forward.116} parent=19 // pred_fallthru
        _
      // Predicated region
      $region25: #{cyclegan_forward.116} parent=19 // pred_check
        %p186 = pneg %p106
      $region26: #{cyclegan_forward.116} parent=19 // pred_check_branch
        %188 = sbr.rel (%p186) target = $region28
      $region27: #{cyclegan_forward.116} parent=19 // pred_region
        %s189 = smul.u32 2, %s16
        %p190 = scmp.lt.s32.totalorder %s189, 3
        %s191 = scalar_select %p190, %s189, 3
        %p192 = scmp.lt.s32.totalorder %s17, 0
        %s193 = scalar_select %p192, %s17, 0
        %s194 = sadd.s32 %s193, %s191
        %s195 = smul.addr %s194, 4
        %s196 = scalar_lea.vmem %s2, %s195
        %s197 = smul.u32 2, %s16
      $region28: #{cyclegan_forward.116} parent=19 // pred_fallthru
        _
    $region20: #{cyclegan_forward.116} parent=5 // pred_fallthru
      _
    %p198 = scmp.le.s32.totalorder 1, %s9
    %p199 = scmp.lt.s32.totalorder %s9, 3
    %p200 = pnand %p198, %p199
    %p201 = pneg %p200
    // Predicated region
    $region29: #{cyclegan_forward.116} parent=5 // pred_check
      _
    $region30: #{cyclegan_forward.116} parent=5 // pred_check_branch
      %203 = sbr.rel (%p200) target = $region32
    $region31: #{cyclegan_forward.116} parent=5 // pred_region
      %s204 = ssub.s32 %s9, 1
      %s205 = smul.u32 2, %s19
      %s206 = smul.u32 3, %s21
      %p207 = scmp.lt.s32.totalorder %s205, 3
      %s208 = scalar_select %p207, %s205, 3
      %p209 = scmp.lt.s32.totalorder %s206, 2
      %s210 = scalar_select %p209, %s206, 2
      %s211 = smul.addr %s208, 3
      %s212 = sadd.s32 %s210, %s211
      %s213 = smul.addr %s212, 4
      %s214 = scalar_lea.vmem %s0, %s213
      %p215 = pneg %p56
      %p216 = pneg %p53
      %s217 = smul.u32 48, %s21
      %p218 = scmp.lt.s32.totalorder %s217, 47
      %s219 = scalar_select %p218, %s217, 47
      %p220 = scmp.lt.s32.totalorder %s20, 0
      %s221 = scalar_select %p220, %s20, 0
      %s222 = sadd.s32 %s221, %s219
      %s223 = smul.addr %s222, 4
      %s224 = scalar_lea.vmem %s1, %s223
      %p225 = pneg %p84
      %p226 = pneg %p81
      %s227 = smul.u32 2, %s19
      %p228 = scmp.lt.s32.totalorder %s227, 3
      %s229 = scalar_select %p228, %s227, 3
      %p230 = scmp.lt.s32.totalorder %s20, 0
      %s231 = scalar_select %p230, %s20, 0
      %s232 = sadd.s32 %s231, %s229
      %s233 = smul.addr %s232, 4
      %s234 = scalar_lea.vmem %s2, %s233
      %p235 = pneg %p112
      %p236 = pneg %p109
      %p237 = pneg %p140
      %p238 = pneg %p137
      %s239 = smul.u32 2, %s19
      %p240 = scmp.lt.s32.totalorder %s239, 3
      %s241 = scalar_select %p240, %s239, 3
      %p242 = scmp.lt.s32.totalorder %s20, 0
      %s243 = scalar_select %p242, %s20, 0
      %s244 = sadd.s32 %s243, %s241
      %s245 = smul.addr %s244, 4
      %s246 = scalar_lea.vmem %s3, %s245
      %s247 = smul.u32 2, %s19
      %s248 = smul.u32 3, %s21
      %p249 = scmp.lt.s32.totalorder %s247, 3
      %s250 = scalar_select %p249, %s247, 3
      %p251 = scmp.lt.s32.totalorder %s248, 2
      %s252 = scalar_select %p251, %s248, 2
      %s253 = smul.addr %s250, 3
      %s254 = sadd.s32 %s252, %s253
      %s255 = smul.addr %s254, 4
      %s256 = scalar_lea.vmem %s0, %s255
      %s257 = smul.u32 2, %s19
      %s258 = smul.u32 3, %s21
      %s259 = smul.u32 48, %s21
      %p260 = scmp.lt.s32.totalorder %s259, 47
      %s261 = scalar_select %p260, %s259, 47
      %p262 = scmp.lt.s32.totalorder %s20, 0
      %s263 = scalar_select %p262, %s20, 0
      %s264 = sadd.s32 %s263, %s261
      %s265 = smul.addr %s264, 4
      %s266 = scalar_lea.vmem %s1, %s265
      %s267 = smul.u32 48, %s21
      %s268 = smul.u32 2, %s19
      %p269 = scmp.lt.s32.totalorder %s268, 3
      %s270 = scalar_select %p269, %s268, 3
      %p271 = scmp.lt.s32.totalorder %s20, 0
      %s272 = scalar_select %p271, %s20, 0
      %s273 = sadd.s32 %s272, %s270
      %s274 = smul.addr %s273, 4
      %s275 = scalar_lea.vmem %s2, %s274
      %s276 = smul.u32 2, %s19
      %s277 = smul.u32 2, %s19
      %p278 = scmp.lt.s32.totalorder %s277, 3
      %s279 = scalar_select %p278, %s277, 3
      %p280 = scmp.lt.s32.totalorder %s20, 0
      %s281 = scalar_select %p280, %s20, 0
      %s282 = sadd.s32 %s281, %s279
      %s283 = smul.addr %s282, 4
      %s284 = scalar_lea.vmem %s3, %s283
      %s285 = smul.u32 2, %s19
      %p287 = scmp.eq.s32.totalorder %s21, 0
      // Predicated region
      $region33: #{cyclegan_forward.116} parent=31 // pred_check
        %p288 = pneg %p287
      $region34: #{cyclegan_forward.116} parent=31 // pred_check_branch
        %290 = sbr.rel (%p288) target = $region36
      $region35: #{cyclegan_forward.116} parent=31 // pred_region
        %291 = vst [vmem:[#allocation2] sm:$0xff] 0.0
        %292 = vst [vmem:[#allocation2 + $0x8] sm:$0xff] 0.0
      $region36: #{cyclegan_forward.116} parent=31 // pred_fallthru
        _
      %v293 = vld [vmem:[#allocation2] sm:$0xff]
      %v294 = vld [vmem:[#allocation2 + $0x8] sm:$0xff]
      %v295 = vld [vmem:[%s256] sm:$0xff]
      %v296 = vld [vmem:[%s256 + $0x8] sm:$0xf]
      %v297 = vld [vmem:[%s256 + $0xc] sm:$0xff]
      %v298 = vld [vmem:[%s256 + $0x14] sm:$0xf]
      %v299 = vld [vmem:[%s266] sm:$0xf]
      %v300 = vld [vmem:[%s266 + $0x4] sm:$0xf]
      %v301 = vld [vmem:[%s266 + $0x8] sm:$0xf]
      %v302 = vld [vmem:[%s266 + $0xc] sm:$0xf]
      %v303 = vld [vmem:[%s266 + $0x10] sm:$0xf]
      %v304 = vld [vmem:[%s266 + $0x14] sm:$0xf]
      %v305 = vld [vmem:[%s266 + $0x18] sm:$0xf]
      %v306 = vld [vmem:[%s266 + $0x1c] sm:$0xf]
      %v307 = vld [vmem:[%s266 + $0x20] sm:$0xf]
      %v308 = vld [vmem:[%s266 + $0x24] sm:$0xf]
      %v309 = vld [vmem:[%s266 + $0x28] sm:$0xf]
      %v310 = vld [vmem:[%s266 + $0x2c] sm:$0xf]
      %v311 = vld [vmem:[%s266 + $0x30] sm:$0xf]
      %v312 = vld [vmem:[%s266 + $0x34] sm:$0xf]
      %v313 = vld [vmem:[%s266 + $0x38] sm:$0xf]
      %v314 = vld [vmem:[%s266 + $0x3c] sm:$0xf]
      %v315 = vld [vmem:[%s266 + $0x40] sm:$0xf]
      %v316 = vld [vmem:[%s266 + $0x44] sm:$0xf]
      %v317 = vld [vmem:[%s266 + $0x48] sm:$0xf]
      %v318 = vld [vmem:[%s266 + $0x4c] sm:$0xf]
      %v319 = vld [vmem:[%s266 + $0x50] sm:$0xf]
      %v320 = vld [vmem:[%s266 + $0x54] sm:$0xf]
      %v321 = vld [vmem:[%s266 + $0x58] sm:$0xf]
      %v322 = vld [vmem:[%s266 + $0x5c] sm:$0xf]
      %v323 = vld [vmem:[%s266 + $0x60] sm:$0xf]
      %v324 = vld [vmem:[%s266 + $0x64] sm:$0xf]
      %v325 = vld [vmem:[%s266 + $0x68] sm:$0xf]
      %v326 = vld [vmem:[%s266 + $0x6c] sm:$0xf]
      %v327 = vld [vmem:[%s266 + $0x70] sm:$0xf]
      %v328 = vld [vmem:[%s266 + $0x74] sm:$0xf]
      %v329 = vld [vmem:[%s266 + $0x78] sm:$0xf]
      %v330 = vld [vmem:[%s266 + $0x7c] sm:$0xf]
      %v331 = vld [vmem:[%s266 + $0x80] sm:$0xf]
      %v332 = vld [vmem:[%s266 + $0x84] sm:$0xf]
      %v333 = vld [vmem:[%s266 + $0x88] sm:$0xf]
      %v334 = vld [vmem:[%s266 + $0x8c] sm:$0xf]
      %v335 = vld [vmem:[%s266 + $0x90] sm:$0xf]
      %v336 = vld [vmem:[%s266 + $0x94] sm:$0xf]
      %v337 = vld [vmem:[%s266 + $0x98] sm:$0xf]
      %v338 = vld [vmem:[%s266 + $0x9c] sm:$0xf]
      %v339 = vld [vmem:[%s266 + $0xa0] sm:$0xf]
      %v340 = vld [vmem:[%s266 + $0xa4] sm:$0xf]
      %v341 = vld [vmem:[%s266 + $0xa8] sm:$0xf]
      %v342 = vld [vmem:[%s266 + $0xac] sm:$0xf]
      %v343 = vld [vmem:[%s266 + $0xb0] sm:$0xf]
      %v344 = vld [vmem:[%s266 + $0xb4] sm:$0xf]
      %v345 = vld [vmem:[%s266 + $0xb8] sm:$0xf]
      %v346 = vld [vmem:[%s266 + $0xbc] sm:$0xf]
      %v351 = vunpack.c.l.b16 %v295
      %v352 = vunpack.c.h.b16 %v295
      %v353 = vunpack.c.l.b16 %v296
      %v354 = vunpack.c.l.b16 %v297
      %v355 = vunpack.c.h.b16 %v297
      %v356 = vunpack.c.l.b16 %v298
      %v357 = vpack.c.b16 %v354, %v351
      %v358 = vpack.c.b16 %v355, %v352
      %v359 = vpack.c.b16 %v356, %v353
      %v411 = vunpack.c.l.b16 %v299
      %v412 = vunpack.c.l.b16 %v300
      %v413 = vunpack.c.l.b16 %v301
      %v414 = vunpack.c.l.b16 %v302
      %v415 = vunpack.c.l.b16 %v303
      %v416 = vunpack.c.l.b16 %v304
      %v417 = vunpack.c.l.b16 %v305
      %v418 = vunpack.c.l.b16 %v306
      %v419 = vunpack.c.l.b16 %v307
      %v420 = vunpack.c.l.b16 %v308
      %v421 = vunpack.c.l.b16 %v309
      %v422 = vunpack.c.l.b16 %v310
      %v423 = vunpack.c.l.b16 %v311
      %v424 = vunpack.c.l.b16 %v312
      %v425 = vunpack.c.l.b16 %v313
      %v426 = vunpack.c.l.b16 %v314
      %v427 = vunpack.c.l.b16 %v315
      %v428 = vunpack.c.l.b16 %v316
      %v429 = vunpack.c.l.b16 %v317
      %v430 = vunpack.c.l.b16 %v318
      %v431 = vunpack.c.l.b16 %v319
      %v432 = vunpack.c.l.b16 %v320
      %v433 = vunpack.c.l.b16 %v321
      %v434 = vunpack.c.l.b16 %v322
      %v435 = vunpack.c.l.b16 %v323
      %v436 = vunpack.c.l.b16 %v324
      %v437 = vunpack.c.l.b16 %v325
      %v438 = vunpack.c.l.b16 %v326
      %v439 = vunpack.c.l.b16 %v327
      %v440 = vunpack.c.l.b16 %v328
      %v441 = vunpack.c.l.b16 %v329
      %v442 = vunpack.c.l.b16 %v330
      %v443 = vunpack.c.l.b16 %v331
      %v444 = vunpack.c.l.b16 %v332
      %v445 = vunpack.c.l.b16 %v333
      %v446 = vunpack.c.l.b16 %v334
      %v447 = vunpack.c.l.b16 %v335
      %v448 = vunpack.c.l.b16 %v336
      %v449 = vunpack.c.l.b16 %v337
      %v450 = vunpack.c.l.b16 %v338
      %v451 = vunpack.c.l.b16 %v339
      %v452 = vunpack.c.l.b16 %v340
      %v453 = vunpack.c.l.b16 %v341
      %v454 = vunpack.c.l.b16 %v342
      %v455 = vunpack.c.l.b16 %v343
      %v456 = vunpack.c.l.b16 %v344
      %v457 = vunpack.c.l.b16 %v345
      %v458 = vunpack.c.l.b16 %v346
      %v459 = vpack.c.b16 %v412, %v411
      %v460 = vpack.c.b16 %v414, %v413
      %v461 = vpack.c.b16 %v416, %v415
      %v462 = vpack.c.b16 %v418, %v417
      %v463 = vpack.c.b16 %v420, %v419
      %v464 = vpack.c.b16 %v422, %v421
      %v465 = vpack.c.b16 %v424, %v423
      %v466 = vpack.c.b16 %v426, %v425
      %v467 = vpack.c.b16 %v428, %v427
      %v468 = vpack.c.b16 %v430, %v429
      %v469 = vpack.c.b16 %v432, %v431
      %v470 = vpack.c.b16 %v434, %v433
      %v471 = vpack.c.b16 %v436, %v435
      %v472 = vpack.c.b16 %v438, %v437
      %v473 = vpack.c.b16 %v440, %v439
      %v474 = vpack.c.b16 %v442, %v441
      %v475 = vpack.c.b16 %v444, %v443
      %v476 = vpack.c.b16 %v446, %v445
      %v477 = vpack.c.b16 %v448, %v447
      %v478 = vpack.c.b16 %v450, %v449
      %v479 = vpack.c.b16 %v452, %v451
      %v480 = vpack.c.b16 %v454, %v453
      %v481 = vpack.c.b16 %v456, %v455
      %v482 = vpack.c.b16 %v458, %v457
      %507 = vmatprep.subr.bf16.mxu0 0
      %508 = vmatpush1.bf16.msra.mxu0 %v459
      %509 = vmatprep.subr.bf16.mxu0 0
      %510 = vmatpush1.bf16.msra.mxu0 %v460
      %511 = vmatprep.subr.bf16.mxu0 0
      %512 = vmatpush1.bf16.msra.mxu0 %v461
      %513 = vmatprep.subr.bf16.mxu0 0
      %514 = vmatpush1.bf16.msra.mxu0 %v462
      %515 = vmatprep.subr.bf16.mxu0 0
      %516 = vmatpush1.bf16.msra.mxu0 %v463
      %517 = vmatprep.subr.bf16.mxu0 0
      %518 = vmatpush1.bf16.msra.mxu0 %v464
      %519 = vmatprep.subr.bf16.mxu0 0
      %520 = vmatpush1.bf16.msra.mxu0 %v465
      %521 = vmatprep.subr.bf16.mxu0 0
      %522 = vmatpush1.bf16.msra.mxu0 %v466
      %523 = vmatprep.subr.bf16.mxu0 0
      %524 = vmatpush1.bf16.msra.mxu0 %v467
      %525 = vmatprep.subr.bf16.mxu0 0
      %526 = vmatpush1.bf16.msra.mxu0 %v468
      %527 = vmatprep.subr.bf16.mxu0 0
      %528 = vmatpush1.bf16.msra.mxu0 %v469
      %529 = vmatprep.subr.bf16.mxu0 0
      %530 = vmatpush1.bf16.msra.mxu0 %v470
      %531 = vmatprep.subr.bf16.mxu0 0
      %532 = vmatpush1.bf16.msra.mxu0 %v471
      %533 = vmatprep.subr.bf16.mxu0 0
      %534 = vmatpush1.bf16.msra.mxu0 %v472
      %535 = vmatprep.subr.bf16.mxu0 0
      %536 = vmatpush1.bf16.msra.mxu0 %v473
      %537 = vmatprep.subr.bf16.mxu0 0
      %538 = vmatpush1.bf16.msra.mxu0 %v474
      %539 = vmatprep.mubr.bf16.mxu0 %v358
      %540 = vmatmul.mubr.bf16.gmra.mrb[0].mxu0 %v357
      %v541 = vpop.f32.mrb[0].mxu0
      %v542 = vadd.f32 0.0, %v541
      %v543 = vpop.f32.mrb[0].mxu0
      %v544 = vpop.f32.mrb[0].mxu0
      %v545 = vadd.f32 0.0, %v544
      %v546 = vpop.f32.mrb[0].mxu0
      %547 = vdwg.mxu0
      %548 = vmatprep.subr.bf16.mxu0 0
      %549 = vmatpush1.bf16.msra.mxu0 %v475
      %550 = vmatprep.subr.bf16.mxu0 0
      %551 = vmatpush1.bf16.msra.mxu0 %v476
      %552 = vmatprep.subr.bf16.mxu0 0
      %553 = vmatpush1.bf16.msra.mxu0 %v477
      %554 = vmatprep.subr.bf16.mxu0 0
      %555 = vmatpush1.bf16.msra.mxu0 %v478
      %556 = vmatprep.subr.bf16.mxu0 0
      %557 = vmatpush1.bf16.msra.mxu0 %v479
      %558 = vmatprep.subr.bf16.mxu0 0
      %559 = vmatpush1.bf16.msra.mxu0 %v480
      %560 = vmatprep.subr.bf16.mxu0 0
      %561 = vmatpush1.bf16.msra.mxu0 %v481
      %562 = vmatprep.subr.bf16.mxu0 0
      %563 = vmatpush1.bf16.msra.mxu0 %v482
      %564 = vmatprep.subr.bf16.mxu0 0
      %565 = vmatpush1.bf16.msra.mxu0 0
      %566 = vmatprep.subr.bf16.mxu0 0
      %567 = vmatpush1.bf16.msra.mxu0 0
      %568 = vmatprep.subr.bf16.mxu0 0
      %569 = vmatpush1.bf16.msra.mxu0 0
      %570 = vmatprep.subr.bf16.mxu0 0
      %571 = vmatpush1.bf16.msra.mxu0 0
      %572 = vmatprep.subr.bf16.mxu0 0
      %573 = vmatpush1.bf16.msra.mxu0 0
      %574 = vmatprep.subr.bf16.mxu0 0
      %575 = vmatpush1.bf16.msra.mxu0 0
      %576 = vmatprep.subr.bf16.mxu0 0
      %577 = vmatpush1.bf16.msra.mxu0 0
      %578 = vmatprep.subr.bf16.mxu0 0
      %579 = vmatpush1.bf16.msra.mxu0 0
      %580 = vmatprep.mubr.bf16.mxu0 0
      %581 = vmatmul.mubr.bf16.gmra.mrb[0].mxu0 %v359
      %v582 = vpop.f32.mrb[0].mxu0
      %v583 = vadd.f32 %v542, %v582
      %v584 = vpop.f32.mrb[0].mxu0
      %v585 = vpop.f32.mrb[0].mxu0
      %v586 = vadd.f32 %v545, %v585
      %v587 = vpop.f32.mrb[0].mxu0
      %588 = vdwg.mxu0
      %v589 = vadd.f32 %v293, %v583
      %v590 = vadd.f32 %v294, %v586
      %591 = vst [vmem:[#allocation2] sm:$0xff] %v589
      %592 = vst [vmem:[#allocation2 + $0x8] sm:$0xff] %v590
      // Predicated region
      $region37: #{cyclegan_forward.116} parent=31 // pred_check
        %p593 = pneg %p287
      $region38: #{cyclegan_forward.116} parent=31 // pred_check_branch
        %595 = sbr.rel (%p593) target = $region40
      $region39: #{cyclegan_forward.116} parent=31 // pred_region
        %v596 = vld [vmem:[#allocation2] sm:$0xff]
        %v597 = vld [vmem:[#allocation2 + $0x8] sm:$0xff]
        %v598 = vadd.f32 %v596, %v597
        %v599 = vrot.slane %v598, 4
        %v600 = vadd.f32 %v598, %v599
        %v601 = vrot.slane %v600, 2
        %v602 = vadd.f32 %v600, %v601
        %v603 = vrot.slane %v602, 1
        %v604 = vadd.f32 %v602, %v603
        %v605 = vmul.f32 %v596, %v596
        %v606 = vmul.f32 %v597, %v597
        %v607 = vadd.f32 %v605, %v606
        %v608 = vrot.slane %v607, 4
        %v609 = vadd.f32 %v607, %v608
        %v610 = vrot.slane %v609, 2
        %v611 = vadd.f32 %v609, %v610
        %v612 = vrot.slane %v611, 1
        %v613 = vadd.f32 %v611, %v612
        %v614 = vmul.f32 %v604, 0.0625
        %v615 = vmul.f32 %v613, 0.0625
        %v616 = vmul.f32 %v614, %v614
        %v617 = vsub.f32 %v615, %v616
        %v618 = vmax.f32 %v617, 0.0
        %v619 = vsub.f32 %v596, %v614
        %v620 = vsub.f32 %v597, %v614
        %v621 = vadd.f32 %v618, 1e-05
        %v622 = vrsqrt.pop %v621
        %v623 = vmul.f32 %v619, %v622
        %v624 = vmul.f32 %v620, %v622
        %v625 = vld [vmem:[%s275] sm:$0xf]
        %v626 = vld [vmem:[%s275 + $0x4] sm:$0xf]
        %v627 = vunpack.c.l.bf16 %v625
        %v628 = vunpack.c.l.bf16 %v626
        %v629 = vadd.f32 %v623, %v627
        %v630 = vadd.f32 %v624, %v628
        %v631 = vpack.c.bf16 %v630, %v629
        %v633 = vunpack.c.l.b16 %v631
        %v634 = vunpack.c.h.b16 %v631
        %v635 = vpack.c.b16 %v633, %v633
        %v636 = vpack.c.b16 %v634, %v634
        %639 = vst [vmem:[%s284] sm:$0xf] %v635
        %640 = vst [vmem:[%s284 + $0x4] sm:$0xf] %v636
      $region40: #{cyclegan_forward.116} parent=31 // pred_fallthru
        _
      %s641 = smul.u32 2, %s19
      %p642 = scmp.lt.s32.totalorder %s641, 3
      %s643 = scalar_select %p642, %s641, 3
      %p644 = scmp.lt.s32.totalorder %s20, 0
      %s645 = scalar_select %p644, %s20, 0
      %s646 = sadd.s32 %s645, %s643
      %s647 = smul.addr %s646, 4
      %s648 = scalar_lea.vmem %s3, %s647
      // Predicated region
      $region41: #{cyclegan_forward.116} parent=31 // pred_check
        %p649 = pneg %p137
      $region42: #{cyclegan_forward.116} parent=31 // pred_check_branch
        %651 = sbr.rel (%p649) target = $region44
      $region43: #{cyclegan_forward.116} parent=31 // pred_region
        %s652 = smul.u32 2, %s19
      $region44: #{cyclegan_forward.116} parent=31 // pred_fallthru
        _
    $region32: #{cyclegan_forward.116} parent=5 // pred_fallthru
      _
    %p653 = scmp.le.s32.totalorder 2, %s9
    // Predicated region
    $region45: #{cyclegan_forward.116} parent=5 // pred_check
      %p654 = pneg %p653
    $region46: #{cyclegan_forward.116} parent=5 // pred_check_branch
      %656 = sbr.rel (%p654) target = $region48
    $region47: #{cyclegan_forward.116} parent=5 // pred_region
      %s657 = ssub.s32 %s9, 2
      // Predicated region
      $region49: #{cyclegan_forward.116} parent=47 // pred_check
        %p658 = pneg %p143
      $region50: #{cyclegan_forward.116} parent=47 // pred_check_branch
        %660 = sbr.rel (%p658) target = $region52
      $region51: #{cyclegan_forward.116} parent=47 // pred_region
        %s661 = smul.u32 2, %s22
        %p662 = scmp.lt.s32.totalorder %s661, 3
        %s663 = scalar_select %p662, %s661, 3
        %p664 = scmp.lt.s32.totalorder %s23, 0
        %s665 = scalar_select %p664, %s23, 0
        %s666 = sadd.s32 %s665, %s663
        %s667 = smul.addr %s666, 4
        %s668 = scalar_lea.vmem %s3, %s667
      $region52: #{cyclegan_forward.116} parent=47 // pred_fallthru
        _
    $region48: #{cyclegan_forward.116} parent=5 // pred_fallthru
      _
  $region6: #{cyclegan_forward.116} parent=0 // loop_footer
    %s13 = sadd.s32 1, %s9
  $region7: #{cyclegan_forward.116} parent=0 // loop_footer_branch
    %8 = sbr.rel target = $region3
  $region8: #{cyclegan_forward.116} parent=0 // loop_exit
    _

// kernel: cyclegan_forward.134
$region0: #{cyclegan_forward.134}
  #allocation0 [shape = 'u32[]', space=smem, size = 0x4, offset = 0x4, fixed_abs, tag = 'smem constant byte address 0x4 - core index']
  #allocation1 [shape = 'u32[144,128]{1,0:T(1,128)}', space=vmem, size = 0x12000, scoped, tag = 'internal scratch']
  %s0 = inlined_call_operand.vmem [shape: bf16[128,128], index: 0, kind: input, shape index: {}]
  %s1 = inlined_call_operand.vmem [shape: f32[16,128], index: 1, kind: output, shape index: {}]
  %s2 = sld [smem:[#allocation0]]
  $region41: #{cyclegan_forward.134} parent=0
    _
  %s4 = ssub.s32 1, %s2
  %s5 = scalar_select 0, %s4, %s2
  loop: start=0, step=1, limit=4
  $region2: #{cyclegan_forward.134} parent=0 // loop_pre_header
    _
  $region3: #{cyclegan_forward.134} parent=0 // loop_header
    %s7 = sphi 0, %s11
    %p8 = scmp.ge.s32.totalorder %s7, 4
    %s14 = sphi 0, %s26
    %s15 = sphi 0, %s22
    %s16 = sphi 0, %s14
    %s17 = sphi 0, %s15
    %s18 = sphi 0, %s16
    %s19 = sphi 0, %s17
    %s31 = sphi 0, %s33
    %s34 = sphi 0, %s31
    %s35 = sphi 0, %s34
    %s51 = sphi 0, %s35
    %s57 = sphi 0, %s59
    %s60 = sphi 0, %s57
    %s61 = sphi 0, %s60
    %s77 = sphi 0, %s61
  $region4: #{cyclegan_forward.134} parent=0 // loop_header_branch
    %10 = sbr.rel (%p8) target = $region8
  $region5: #{cyclegan_forward.134} parent=0 // loop_body
    %s12 = ssub.s32 %s7, 1
    %s13 = ssub.s32 %s7, 2
    %s20 = sadd.s32 1, %s15
    %p21 = scmp.ge.s32.totalorder %s20, 1
    %s22 = scalar_select %p21, 0, %s20
    %s23 = sadd.s32 1, %s14
    %s24 = scalar_select %p21, %s23, %s14
    %p25 = scmp.ge.s32.totalorder %s24, 2
    %s26 = scalar_select %p25, 0, %s24
    %s27 = sadd.s32 %s14, %s15
    %s28 = sadd.s32 %s26, %s22
    %s29 = ssub.s32 %s27, %s28
    %p30 = scmp.eq.s32.totalorder %s29, 0
    %s32 = sadd.s32 %s31, 1
    %s33 = scalar_select %p30, %s31, %s32
    %p36 = pneg %p30
    %p37 = scmp.eq.s32.totalorder %s7, 1
    %p38 = por %p36, %p37
    %p39 = scmp.ne.s32.totalorder %s31, %s34
    %p40 = scmp.eq.s32.totalorder %s7, 0
    %p41 = por %p39, %p40
    %p42 = scmp.ne.s32.totalorder %s31, %s34
    %p43 = scmp.eq.s32.totalorder %s12, 1
    %p44 = por %p42, %p43
    %p45 = scmp.ne.s32.totalorder %s34, %s35
    %p46 = scmp.eq.s32.totalorder %s12, 0
    %p47 = por %p45, %p46
    %p48 = scmp.ne.s32.totalorder %s34, %s35
    %p49 = scmp.eq.s32.totalorder %s13, 1
    %p50 = por %p48, %p49
    %p52 = scmp.ne.s32.totalorder %s35, %s51
    %p53 = scmp.eq.s32.totalorder %s13, 0
    %p54 = por %p52, %p53
    %s55 = ssub.s32 %s14, %s26
    %p56 = scmp.eq.s32.totalorder %s55, 0
    %s58 = sadd.s32 %s57, 1
    %s59 = scalar_select %p56, %s57, %s58
    %p62 = pneg %p56
    %p63 = scmp.eq.s32.totalorder %s7, 1
    %p64 = por %p62, %p63
    %p65 = scmp.ne.s32.totalorder %s57, %s60
    %p66 = scmp.eq.s32.totalorder %s7, 0
    %p67 = por %p65, %p66
    %p68 = scmp.ne.s32.totalorder %s57, %s60
    %p69 = scmp.eq.s32.totalorder %s12, 1
    %p70 = por %p68, %p69
    %p71 = scmp.ne.s32.totalorder %s60, %s61
    %p72 = scmp.eq.s32.totalorder %s12, 0
    %p73 = por %p71, %p72
    %p74 = scmp.ne.s32.totalorder %s60, %s61
    %p75 = scmp.eq.s32.totalorder %s13, 1
    %p76 = por %p74, %p75
    %p78 = scmp.ne.s32.totalorder %s61, %s77
    %p79 = scmp.eq.s32.totalorder %s13, 0
    %p80 = por %p78, %p79
    %p81 = scmp.le.s32.totalorder 1, %s7
    %p82 = scmp.lt.s32.totalorder %s7, 3
    %p83 = pnand %p81, %p82
    %p84 = pneg %p83
    // Predicated region
    $region9: #{cyclegan_forward.134} parent=5 // pred_check
      _
    $region10: #{cyclegan_forward.134} parent=5 // pred_check_branch
      %86 = sbr.rel (%p83) target = $region12
    $region11: #{cyclegan_forward.134} parent=5 // pred_region
      %s87 = ssub.s32 %s7, 1
    $region12: #{cyclegan_forward.134} parent=5 // pred_fallthru
      _
    %p88 = scmp.lt.s32.totalorder %s7, 2
    // Predicated region
    $region13: #{cyclegan_forward.134} parent=5 // pred_check
      %p89 = pneg %p88
    $region14: #{cyclegan_forward.134} parent=5 // pred_check_branch
      %91 = sbr.rel (%p89) target = $region16
    $region15: #{cyclegan_forward.134} parent=5 // pred_region
      // Predicated region
      $region17: #{cyclegan_forward.134} parent=15 // pred_check
        %p92 = pneg %p41
      $region18: #{cyclegan_forward.134} parent=15 // pred_check_branch
        %94 = sbr.rel (%p92) target = $region20
      $region19: #{cyclegan_forward.134} parent=15 // pred_region
        %s95 = sadd.s32 %s14, %s15
        %s96 = smul.u32 8, %s95
        %p97 = scmp.lt.s32.totalorder %s96, 15
        %s98 = scalar_select %p97, %s96, 15
        %s99 = smul.addr %s98, 4
        %s100 = scalar_lea.vmem %s0, %s99
        %s101 = sadd.s32 %s14, %s15
        %s102 = smul.u32 8, %s101
      $region20: #{cyclegan_forward.134} parent=15 // pred_fallthru
        _
    $region16: #{cyclegan_forward.134} parent=5 // pred_fallthru
      _
    %p103 = scmp.le.s32.totalorder 1, %s7
    %p104 = scmp.lt.s32.totalorder %s7, 3
    %p105 = pnand %p103, %p104
    %p106 = pneg %p105
    // Predicated region
    $region21: #{cyclegan_forward.134} parent=5 // pred_check
      _
    $region22: #{cyclegan_forward.134} parent=5 // pred_check_branch
      %108 = sbr.rel (%p105) target = $region24
    $region23: #{cyclegan_forward.134} parent=5 // pred_region
      %s109 = ssub.s32 %s7, 1
      %s110 = sadd.s32 %s16, %s17
      %s111 = smul.u32 8, %s110
      %p112 = scmp.lt.s32.totalorder %s111, 15
      %s113 = scalar_select %p112, %s111, 15
      %s114 = smul.addr %s113, 4
      %s115 = scalar_lea.vmem %s0, %s114
      %p116 = pneg %p47
      %p117 = pneg %p44
      %p118 = pneg %p73
      %p119 = pneg %p70
      %p120 = scmp.lt.s32.totalorder %s16, 1
      %s121 = scalar_select %p120, %s16, 1
      %s122 = smul.addr %s121, 8
      %s123 = scalar_lea.vmem %s1, %s122
      %s124 = sadd.s32 %s16, %s17
      %s125 = smul.u32 8, %s124
      %p126 = scmp.lt.s32.totalorder %s125, 15
      %s127 = scalar_select %p126, %s125, 15
      %s128 = smul.addr %s127, 4
      %s129 = scalar_lea.vmem %s0, %s128
      %s130 = sadd.s32 %s16, %s17
      %s131 = smul.u32 8, %s130
      %p132 = scmp.lt.s32.totalorder %s16, 1
      %s133 = scalar_select %p132, %s16, 1
      %s134 = smul.addr %s133, 8
      %s135 = scalar_lea.vmem %s1, %s134
      %p136 = scmp.eq.s32.totalorder %s17, 0
      // Predicated region
      $region25: #{cyclegan_forward.134} parent=23 // pred_check
        %p137 = pneg %p136
      $region26: #{cyclegan_forward.134} parent=23 // pred_check_branch
        %139 = sbr.rel (%p137) target = $region28
      $region27: #{cyclegan_forward.134} parent=23 // pred_region
        %140 = vst [vmem:[%s135] sm:$0xff] 0.0
      $region28: #{cyclegan_forward.134} parent=23 // pred_fallthru
        _
      %v141 = vld [vmem:[%s129] sm:$0xf]
      %v142 = vld [vmem:[%s129 + $0x4] sm:$0xf]
      %v143 = vld [vmem:[%s129 + $0x8] sm:$0xf]
      %v144 = vld [vmem:[%s129 + $0xc] sm:$0xf]
      %v145 = vld [vmem:[%s129 + $0x10] sm:$0xf]
      %v146 = vld [vmem:[%s129 + $0x14] sm:$0xf]
      %v147 = vld [vmem:[%s129 + $0x18] sm:$0xf]
      %v148 = vld [vmem:[%s129 + $0x1c] sm:$0xf]
      %v149 = vunpack.c.l.bf16 %v141
      %v150 = vunpack.c.l.bf16 %v142
      %v151 = vunpack.c.l.bf16 %v143
      %v152 = vunpack.c.l.bf16 %v144
      %v153 = vunpack.c.l.bf16 %v145
      %v154 = vunpack.c.l.bf16 %v146
      %v155 = vunpack.c.l.bf16 %v147
      %v156 = vunpack.c.l.bf16 %v148
      %v157 = vld [vmem:[%s135] sm:$0x1]
      %v158 = vadd.f32 %v149, %v150
      %v159 = vadd.f32 %v158, %v151
      %v160 = vadd.f32 %v159, %v152
      %v161 = vadd.f32 %v160, %v153
      %v162 = vadd.f32 %v161, %v154
      %v163 = vadd.f32 %v162, %v155
      %v164 = vadd.f32 %v163, %v156
      %v165 = vrot.slane %v164, 4
      %v166 = vadd.f32 %v164, %v165
      %v167 = vrot.slane %v166, 2
      %v168 = vadd.f32 %v166, %v167
      %v169 = vrot.slane %v168, 1
      %v170 = vadd.f32 %v168, %v169
      %v171 = vadd.f32 %v157, %v170
      %172 = vst [vmem:[%s135] sm:$0x1] %v171
      %v173 = vld [vmem:[%s135 + $0x1] sm:$0x1]
      %v174 = vmul.f32 %v149, %v149
      %v175 = vmul.f32 %v150, %v150
      %v176 = vmul.f32 %v151, %v151
      %v177 = vmul.f32 %v152, %v152
      %v178 = vmul.f32 %v153, %v153
      %v179 = vmul.f32 %v154, %v154
      %v180 = vmul.f32 %v155, %v155
      %v181 = vmul.f32 %v156, %v156
      %v182 = vadd.f32 %v174, %v175
      %v183 = vadd.f32 %v182, %v176
      %v184 = vadd.f32 %v183, %v177
      %v185 = vadd.f32 %v184, %v178
      %v186 = vadd.f32 %v185, %v179
      %v187 = vadd.f32 %v186, %v180
      %v188 = vadd.f32 %v187, %v181
      %v189 = vrot.slane %v188, 4
      %v190 = vadd.f32 %v188, %v189
      %v191 = vrot.slane %v190, 2
      %v192 = vadd.f32 %v190, %v191
      %v193 = vrot.slane %v192, 1
      %v194 = vadd.f32 %v192, %v193
      %v195 = vadd.f32 %v173, %v194
      %196 = vst [vmem:[%s135 + $0x1] sm:$0x1] %v195
      %p197 = scmp.lt.s32.totalorder %s16, 1
      %s198 = scalar_select %p197, %s16, 1
      %s199 = smul.addr %s198, 8
      %s200 = scalar_lea.vmem %s1, %s199
      // Predicated region
      $region29: #{cyclegan_forward.134} parent=23 // pred_check
        %p201 = pneg %p70
      $region30: #{cyclegan_forward.134} parent=23 // pred_check_branch
        %203 = sbr.rel (%p201) target = $region32
      $region31: #{cyclegan_forward.134} parent=23 // pred_region
        _
      $region32: #{cyclegan_forward.134} parent=23 // pred_fallthru
        _
    $region24: #{cyclegan_forward.134} parent=5 // pred_fallthru
      _
    %p204 = scmp.le.s32.totalorder 2, %s7
    // Predicated region
    $region33: #{cyclegan_forward.134} parent=5 // pred_check
      %p205 = pneg %p204
    $region34: #{cyclegan_forward.134} parent=5 // pred_check_branch
      %207 = sbr.rel (%p205) target = $region36
    $region35: #{cyclegan_forward.134} parent=5 // pred_region
      %s208 = ssub.s32 %s7, 2
      // Predicated region
      $region37: #{cyclegan_forward.134} parent=35 // pred_check
        %p209 = pneg %p76
      $region38: #{cyclegan_forward.134} parent=35 // pred_check_branch
        %211 = sbr.rel (%p209) target = $region40
      $region39: #{cyclegan_forward.134} parent=35 // pred_region
        %p212 = scmp.lt.s32.totalorder %s18, 1
        %s213 = scalar_select %p212, %s18, 1
        %s214 = smul.addr %s213, 8
        %s215 = scalar_lea.vmem %s1, %s214
      $region40: #{cyclegan_forward.134} parent=35 // pred_fallthru
        _
    $region36: #{cyclegan_forward.134} parent=5 // pred_fallthru
      _
  $region6: #{cyclegan_forward.134} parent=0 // loop_footer
    %s11 = sadd.s32 1, %s7
  $region7: #{cyclegan_forward.134} parent=0 // loop_footer_branch
    %6 = sbr.rel target = $region3
  $region8: #{cyclegan_forward.134} parent=0 // loop_exit
    _

// kernel: cyclegan_forward.133
$region0: #{cyclegan_forward.133}
  #allocation0 [shape = 'u32[]', space=smem, size = 0x4, offset = 0x4, fixed_abs, tag = 'smem constant byte address 0x4 - core index']
  #allocation1 [shape = 'u32[144,128]{1,0:T(1,128)}', space=vmem, size = 0x12000, scoped, tag = 'internal scratch']
  #allocation2 [shape = 'f32[32,128]{1,0:T(8,128)}', space=vmem, size = 0x4000, scoped, tag = 'scratch operand']
  %s0 = inlined_call_operand.vmem [shape: bf16[32,128], index: 0, kind: input, shape index: {}]
  %s1 = inlined_call_operand.vmem [shape: bf16[128,128], index: 1, kind: input, shape index: {}]
  %s2 = inlined_call_operand.vmem [shape: bf16[32,128], index: 2, kind: output, shape index: {}]
  %s3 = sld [smem:[#allocation0]]
  $region26: #{cyclegan_forward.133} parent=0
    _
  %s5 = ssub.s32 1, %s3
  %s6 = scalar_select 0, %s5, %s3
  // Predicated region
  $region2: #{cyclegan_forward.133} parent=0 // pred_check
    _
  $region3: #{cyclegan_forward.133} parent=0 // pred_check_branch
    %8 = sbr.rel (0) target = $region5
  $region4: #{cyclegan_forward.133} parent=0 // pred_region
    _
  $region5: #{cyclegan_forward.133} parent=0 // pred_fallthru
    _
  // Predicated region
  $region6: #{cyclegan_forward.133} parent=0 // pred_check
    _
  $region7: #{cyclegan_forward.133} parent=0 // pred_check_branch
    %10 = sbr.rel (0) target = $region9
  $region8: #{cyclegan_forward.133} parent=0 // pred_region
    _
  $region9: #{cyclegan_forward.133} parent=0 // pred_fallthru
    _
  %p12 = scmp.eq.s32.totalorder 0, 0
  // Predicated region
  $region10: #{cyclegan_forward.133} parent=0 // pred_check
    %p13 = pneg %p12
  $region11: #{cyclegan_forward.133} parent=0 // pred_check_branch
    %15 = sbr.rel (%p13) target = $region13
  $region12: #{cyclegan_forward.133} parent=0 // pred_region
    %16 = vst [vmem:[#allocation2] sm:$0xff] 0.0
    %17 = vst [vmem:[#allocation2 + $0x8] sm:$0xff] 0.0
    %18 = vst [vmem:[#allocation2 + $0x10] sm:$0xff] 0.0
    %19 = vst [vmem:[#allocation2 + $0x18] sm:$0xff] 0.0
  $region13: #{cyclegan_forward.133} parent=0 // pred_fallthru
    _
  %v20 = vld [vmem:[#allocation2] sm:$0xff]
  %v21 = vld [vmem:[#allocation2 + $0x8] sm:$0xff]
  %v22 = vld [vmem:[#allocation2 + $0x10] sm:$0xff]
  %v23 = vld [vmem:[#allocation2 + $0x18] sm:$0xff]
  %v24 = vld [vmem:[%s0] sm:$0xf]
  %v25 = vld [vmem:[%s0 + $0x4] sm:$0xf]
  %v26 = vld [vmem:[%s0 + $0x8] sm:$0xf]
  %v27 = vld [vmem:[%s0 + $0xc] sm:$0xf]
  %v28 = vld [vmem:[%s1] sm:$0xf]
  %v29 = vld [vmem:[%s1 + $0x4] sm:$0xf]
  %v30 = vld [vmem:[%s1 + $0x8] sm:$0xf]
  %v31 = vld [vmem:[%s1 + $0xc] sm:$0xf]
  %v32 = vld [vmem:[%s1 + $0x10] sm:$0xf]
  %v33 = vld [vmem:[%s1 + $0x14] sm:$0xf]
  %v34 = vld [vmem:[%s1 + $0x18] sm:$0xf]
  %v35 = vld [vmem:[%s1 + $0x1c] sm:$0xf]
  %v36 = vld [vmem:[%s1 + $0x20] sm:$0xf]
  %v37 = vld [vmem:[%s1 + $0x24] sm:$0xf]
  %v38 = vld [vmem:[%s1 + $0x28] sm:$0xf]
  %v39 = vld [vmem:[%s1 + $0x2c] sm:$0xf]
  %v40 = vld [vmem:[%s1 + $0x30] sm:$0xf]
  %v41 = vld [vmem:[%s1 + $0x34] sm:$0xf]
  %v42 = vld [vmem:[%s1 + $0x38] sm:$0xf]
  %v43 = vld [vmem:[%s1 + $0x3c] sm:$0xf]
  %v48 = vunpack.c.l.b16 %v24
  %v49 = vunpack.c.l.b16 %v25
  %v50 = vunpack.c.l.b16 %v26
  %v51 = vunpack.c.l.b16 %v27
  %v52 = vpack.c.b16 %v49, %v48
  %v53 = vpack.c.b16 %v51, %v50
  %v72 = vunpack.c.l.b16 %v28
  %v73 = vunpack.c.l.b16 %v29
  %v74 = vunpack.c.l.b16 %v30
  %v75 = vunpack.c.l.b16 %v31
  %v76 = vunpack.c.l.b16 %v32
  %v77 = vunpack.c.l.b16 %v33
  %v78 = vunpack.c.l.b16 %v34
  %v79 = vunpack.c.l.b16 %v35
  %v80 = vunpack.c.l.b16 %v36
  %v81 = vunpack.c.l.b16 %v37
  %v82 = vunpack.c.l.b16 %v38
  %v83 = vunpack.c.l.b16 %v39
  %v84 = vunpack.c.l.b16 %v40
  %v85 = vunpack.c.l.b16 %v41
  %v86 = vunpack.c.l.b16 %v42
  %v87 = vunpack.c.l.b16 %v43
  %v88 = vpack.c.b16 %v73, %v72
  %v89 = vpack.c.b16 %v75, %v74
  %v90 = vpack.c.b16 %v77, %v76
  %v91 = vpack.c.b16 %v79, %v78
  %v92 = vpack.c.b16 %v81, %v80
  %v93 = vpack.c.b16 %v83, %v82
  %v94 = vpack.c.b16 %v85, %v84
  %v95 = vpack.c.b16 %v87, %v86
  %104 = vmatprep.subr.bf16.mxu0 0
  %105 = vmatpush1.bf16.msra.mxu0 %v88
  %106 = vmatprep.subr.bf16.mxu0 0
  %107 = vmatpush1.bf16.msra.mxu0 %v89
  %108 = vmatprep.subr.bf16.mxu0 0
  %109 = vmatpush1.bf16.msra.mxu0 %v90
  %110 = vmatprep.subr.bf16.mxu0 0
  %111 = vmatpush1.bf16.msra.mxu0 %v91
  %112 = vmatprep.subr.bf16.mxu0 0
  %113 = vmatpush1.bf16.msra.mxu0 %v92
  %114 = vmatprep.subr.bf16.mxu0 0
  %115 = vmatpush1.bf16.msra.mxu0 %v93
  %116 = vmatprep.subr.bf16.mxu0 0
  %117 = vmatpush1.bf16.msra.mxu0 %v94
  %118 = vmatprep.subr.bf16.mxu0 0
  %119 = vmatpush1.bf16.msra.mxu0 %v95
  %120 = vmatprep.subr.bf16.mxu0 0
  %121 = vmatpush1.bf16.msra.mxu0 0
  %122 = vmatprep.subr.bf16.mxu0 0
  %123 = vmatpush1.bf16.msra.mxu0 0
  %124 = vmatprep.subr.bf16.mxu0 0
  %125 = vmatpush1.bf16.msra.mxu0 0
  %126 = vmatprep.subr.bf16.mxu0 0
  %127 = vmatpush1.bf16.msra.mxu0 0
  %128 = vmatprep.subr.bf16.mxu0 0
  %129 = vmatpush1.bf16.msra.mxu0 0
  %130 = vmatprep.subr.bf16.mxu0 0
  %131 = vmatpush1.bf16.msra.mxu0 0
  %132 = vmatprep.subr.bf16.mxu0 0
  %133 = vmatpush1.bf16.msra.mxu0 0
  %134 = vmatprep.subr.bf16.mxu0 0
  %135 = vmatpush1.bf16.msra.mxu0 0
  %136 = vmatprep.mubr.bf16.mxu0 0
  %137 = vmatmul.mubr.bf16.gmra.mrb[0].mxu0 %v52
  %v138 = vpop.f32.mrb[0].mxu0
  %v139 = vadd.f32 0.0, %v138
  %v140 = vpop.f32.mrb[0].mxu0
  %v141 = vpop.f32.mrb[0].mxu0
  %v142 = vadd.f32 0.0, %v141
  %v143 = vpop.f32.mrb[0].mxu0
  %144 = vmatprep.mubr.bf16.mxu0 0
  %145 = vmatmul.mubr.bf16.gmra.mrb[0].mxu0 %v53
  %v146 = vpop.f32.mrb[0].mxu0
  %v147 = vadd.f32 0.0, %v146
  %v148 = vpop.f32.mrb[0].mxu0
  %v149 = vpop.f32.mrb[0].mxu0
  %v150 = vadd.f32 0.0, %v149
  %v151 = vpop.f32.mrb[0].mxu0
  %152 = vdwg.mxu0
  %v153 = vadd.f32 %v20, %v139
  %v154 = vadd.f32 %v21, %v142
  %v155 = vadd.f32 %v22, %v147
  %v156 = vadd.f32 %v23, %v150
  %157 = vst [vmem:[#allocation2] sm:$0xff] %v153
  %158 = vst [vmem:[#allocation2 + $0x8] sm:$0xff] %v154
  %159 = vst [vmem:[#allocation2 + $0x10] sm:$0xff] %v155
  %160 = vst [vmem:[#allocation2 + $0x18] sm:$0xff] %v156
  // Predicated region
  $region14: #{cyclegan_forward.133} parent=0 // pred_check
    %p161 = pneg %p12
  $region15: #{cyclegan_forward.133} parent=0 // pred_check_branch
    %163 = sbr.rel (%p161) target = $region17
  $region16: #{cyclegan_forward.133} parent=0 // pred_region
    %v164 = vld [vmem:[#allocation2] sm:$0xff]
    %v165 = vld [vmem:[#allocation2 + $0x8] sm:$0xff]
    %v166 = vld [vmem:[#allocation2 + $0x10] sm:$0xff]
    %v167 = vld [vmem:[#allocation2 + $0x18] sm:$0xff]
    %v168 = vpack.c.bf16 %v165, %v164
    %v169 = vpack.c.bf16 %v167, %v166
    %v172 = vunpack.c.l.b16 %v168
    %v173 = vunpack.c.h.b16 %v168
    %v174 = vunpack.c.l.b16 %v169
    %v175 = vunpack.c.h.b16 %v169
    %v176 = vpack.c.b16 %v172, %v172
    %v177 = vpack.c.b16 %v173, %v173
    %v178 = vpack.c.b16 %v174, %v174
    %v179 = vpack.c.b16 %v175, %v175
    %184 = vst [vmem:[%s2] sm:$0xf] %v176
    %185 = vst [vmem:[%s2 + $0x4] sm:$0xf] %v177
    %186 = vst [vmem:[%s2 + $0x8] sm:$0xf] %v178
    %187 = vst [vmem:[%s2 + $0xc] sm:$0xf] %v179
  $region17: #{cyclegan_forward.133} parent=0 // pred_fallthru
    _
  // Predicated region
  $region18: #{cyclegan_forward.133} parent=0 // pred_check
    _
  $region19: #{cyclegan_forward.133} parent=0 // pred_check_branch
    %189 = sbr.rel (0) target = $region21
  $region20: #{cyclegan_forward.133} parent=0 // pred_region
    _
  $region21: #{cyclegan_forward.133} parent=0 // pred_fallthru
    _
  // Predicated region
  $region22: #{cyclegan_forward.133} parent=0 // pred_check
    _
  $region23: #{cyclegan_forward.133} parent=0 // pred_check_branch
    %191 = sbr.rel (0) target = $region25
  $region24: #{cyclegan_forward.133} parent=0 // pred_region
    _
  $region25: #{cyclegan_forward.133} parent=0 // pred_fallthru
    _

// kernel: cyclegan_forward.135
$region0: #{cyclegan_forward.135}
  #allocation0 [shape = 'u32[]', space=smem, size = 0x4, offset = 0x4, fixed_abs, tag = 'smem constant byte address 0x4 - core index']
  #allocation1 [shape = 'u32[144,128]{1,0:T(1,128)}', space=vmem, size = 0x12000, scoped, tag = 'internal scratch']
  %s0 = inlined_call_operand.vmem [shape: bf16[128,128], index: 0, kind: input, shape index: {}]
  %s1 = inlined_call_operand.vmem [shape: f32[16,128], index: 1, kind: input, shape index: {}]
  %s2 = inlined_call_operand.vmem [shape: bf16[128,128], index: 2, kind: output, shape index: {}]
  %s3 = sld [smem:[#allocation0]]
  $region41: #{cyclegan_forward.135} parent=0
    _
  %s5 = ssub.s32 1, %s3
  %s6 = scalar_select 0, %s5, %s3
  loop: start=0, step=1, limit=4
  $region2: #{cyclegan_forward.135} parent=0 // loop_pre_header
    _
  $region3: #{cyclegan_forward.135} parent=0 // loop_header
    %s8 = sphi 0, %s12
    %p9 = scmp.ge.s32.totalorder %s8, 4
    %s15 = sphi 0, %s27
    %s16 = sphi 0, %s23
    %s17 = sphi 0, %s15
    %s18 = sphi 0, %s16
    %s19 = sphi 0, %s17
    %s20 = sphi 0, %s18
    %s32 = sphi 0, %s34
    %s35 = sphi 0, %s32
    %s36 = sphi 0, %s35
    %s52 = sphi 0, %s36
    %s58 = sphi 0, %s60
    %s61 = sphi 0, %s58
    %s62 = sphi 0, %s61
    %s78 = sphi 0, %s62
    %s86 = sphi 0, %s88
    %s89 = sphi 0, %s86
    %s90 = sphi 0, %s89
    %s106 = sphi 0, %s90
  $region4: #{cyclegan_forward.135} parent=0 // loop_header_branch
    %11 = sbr.rel (%p9) target = $region8
  $region5: #{cyclegan_forward.135} parent=0 // loop_body
    %s13 = ssub.s32 %s8, 1
    %s14 = ssub.s32 %s8, 2
    %s21 = sadd.s32 1, %s16
    %p22 = scmp.ge.s32.totalorder %s21, 1
    %s23 = scalar_select %p22, 0, %s21
    %s24 = sadd.s32 1, %s15
    %s25 = scalar_select %p22, %s24, %s15
    %p26 = scmp.ge.s32.totalorder %s25, 2
    %s27 = scalar_select %p26, 0, %s25
    %s28 = sadd.s32 %s15, %s16
    %s29 = sadd.s32 %s27, %s23
    %s30 = ssub.s32 %s28, %s29
    %p31 = scmp.eq.s32.totalorder %s30, 0
    %s33 = sadd.s32 %s32, 1
    %s34 = scalar_select %p31, %s32, %s33
    %p37 = pneg %p31
    %p38 = scmp.eq.s32.totalorder %s8, 1
    %p39 = por %p37, %p38
    %p40 = scmp.ne.s32.totalorder %s32, %s35
    %p41 = scmp.eq.s32.totalorder %s8, 0
    %p42 = por %p40, %p41
    %p43 = scmp.ne.s32.totalorder %s32, %s35
    %p44 = scmp.eq.s32.totalorder %s13, 1
    %p45 = por %p43, %p44
    %p46 = scmp.ne.s32.totalorder %s35, %s36
    %p47 = scmp.eq.s32.totalorder %s13, 0
    %p48 = por %p46, %p47
    %p49 = scmp.ne.s32.totalorder %s35, %s36
    %p50 = scmp.eq.s32.totalorder %s14, 1
    %p51 = por %p49, %p50
    %p53 = scmp.ne.s32.totalorder %s36, %s52
    %p54 = scmp.eq.s32.totalorder %s14, 0
    %p55 = por %p53, %p54
    %s56 = ssub.s32 %s15, %s27
    %p57 = scmp.eq.s32.totalorder %s56, 0
    %s59 = sadd.s32 %s58, 1
    %s60 = scalar_select %p57, %s58, %s59
    %p63 = pneg %p57
    %p64 = scmp.eq.s32.totalorder %s8, 1
    %p65 = por %p63, %p64
    %p66 = scmp.ne.s32.totalorder %s58, %s61
    %p67 = scmp.eq.s32.totalorder %s8, 0
    %p68 = por %p66, %p67
    %p69 = scmp.ne.s32.totalorder %s58, %s61
    %p70 = scmp.eq.s32.totalorder %s13, 1
    %p71 = por %p69, %p70
    %p72 = scmp.ne.s32.totalorder %s61, %s62
    %p73 = scmp.eq.s32.totalorder %s13, 0
    %p74 = por %p72, %p73
    %p75 = scmp.ne.s32.totalorder %s61, %s62
    %p76 = scmp.eq.s32.totalorder %s14, 1
    %p77 = por %p75, %p76
    %p79 = scmp.ne.s32.totalorder %s62, %s78
    %p80 = scmp.eq.s32.totalorder %s14, 0
    %p81 = por %p79, %p80
    %s82 = sadd.s32 %s15, %s16
    %s83 = sadd.s32 %s27, %s23
    %s84 = ssub.s32 %s82, %s83
    %p85 = scmp.eq.s32.totalorder %s84, 0
    %s87 = sadd.s32 %s86, 1
    %s88 = scalar_select %p85, %s86, %s87
    %p91 = pneg %p85
    %p92 = scmp.eq.s32.totalorder %s8, 1
    %p93 = por %p91, %p92
    %p94 = scmp.ne.s32.totalorder %s86, %s89
    %p95 = scmp.eq.s32.totalorder %s8, 0
    %p96 = por %p94, %p95
    %p97 = scmp.ne.s32.totalorder %s86, %s89
    %p98 = scmp.eq.s32.totalorder %s13, 1
    %p99 = por %p97, %p98
    %p100 = scmp.ne.s32.totalorder %s89, %s90
    %p101 = scmp.eq.s32.totalorder %s13, 0
    %p102 = por %p100, %p101
    %p103 = scmp.ne.s32.totalorder %s89, %s90
    %p104 = scmp.eq.s32.totalorder %s14, 1
    %p105 = por %p103, %p104
    %p107 = scmp.ne.s32.totalorder %s90, %s106
    %p108 = scmp.eq.s32.totalorder %s14, 0
    %p109 = por %p107, %p108
    %p110 = scmp.le.s32.totalorder 1, %s8
    %p111 = scmp.lt.s32.totalorder %s8, 3
    %p112 = pnand %p110, %p111
    %p113 = pneg %p112
    // Predicated region
    $region9: #{cyclegan_forward.135} parent=5 // pred_check
      _
    $region10: #{cyclegan_forward.135} parent=5 // pred_check_branch
      %115 = sbr.rel (%p112) target = $region12
    $region11: #{cyclegan_forward.135} parent=5 // pred_region
      %s116 = ssub.s32 %s8, 1
    $region12: #{cyclegan_forward.135} parent=5 // pred_fallthru
      _
    %p117 = scmp.lt.s32.totalorder %s8, 2
    // Predicated region
    $region13: #{cyclegan_forward.135} parent=5 // pred_check
      %p118 = pneg %p117
    $region14: #{cyclegan_forward.135} parent=5 // pred_check_branch
      %120 = sbr.rel (%p118) target = $region16
    $region15: #{cyclegan_forward.135} parent=5 // pred_region
      // Predicated region
      $region17: #{cyclegan_forward.135} parent=15 // pred_check
        %p121 = pneg %p42
      $region18: #{cyclegan_forward.135} parent=15 // pred_check_branch
        %123 = sbr.rel (%p121) target = $region20
      $region19: #{cyclegan_forward.135} parent=15 // pred_region
        %s124 = sadd.s32 %s15, %s16
        %s125 = smul.u32 8, %s124
        %p126 = scmp.lt.s32.totalorder %s125, 15
        %s127 = scalar_select %p126, %s125, 15
        %s128 = smul.addr %s127, 4
        %s129 = scalar_lea.vmem %s0, %s128
        %s130 = sadd.s32 %s15, %s16
        %s131 = smul.u32 8, %s130
      $region20: #{cyclegan_forward.135} parent=15 // pred_fallthru
        _
      // Predicated region
      $region21: #{cyclegan_forward.135} parent=15 // pred_check
        %p132 = pneg %p68
      $region22: #{cyclegan_forward.135} parent=15 // pred_check_branch
        %134 = sbr.rel (%p132) target = $region24
      $region23: #{cyclegan_forward.135} parent=15 // pred_region
        %p135 = scmp.lt.s32.totalorder %s15, 1
        %s136 = scalar_select %p135, %s15, 1
        %s137 = smul.addr %s136, 8
        %s138 = scalar_lea.vmem %s1, %s137
      $region24: #{cyclegan_forward.135} parent=15 // pred_fallthru
        _
    $region16: #{cyclegan_forward.135} parent=5 // pred_fallthru
      _
    %p139 = scmp.le.s32.totalorder 1, %s8
    %p140 = scmp.lt.s32.totalorder %s8, 3
    %p141 = pnand %p139, %p140
    %p142 = pneg %p141
    // Predicated region
    $region25: #{cyclegan_forward.135} parent=5 // pred_check
      _
    $region26: #{cyclegan_forward.135} parent=5 // pred_check_branch
      %144 = sbr.rel (%p141) target = $region28
    $region27: #{cyclegan_forward.135} parent=5 // pred_region
      %s145 = ssub.s32 %s8, 1
      %s146 = sadd.s32 %s17, %s18
      %s147 = smul.u32 8, %s146
      %p148 = scmp.lt.s32.totalorder %s147, 15
      %s149 = scalar_select %p148, %s147, 15
      %s150 = smul.addr %s149, 4
      %s151 = scalar_lea.vmem %s0, %s150
      %p152 = pneg %p48
      %p153 = pneg %p45
      %p154 = scmp.lt.s32.totalorder %s17, 1
      %s155 = scalar_select %p154, %s17, 1
      %s156 = smul.addr %s155, 8
      %s157 = scalar_lea.vmem %s1, %s156
      %p158 = pneg %p74
      %p159 = pneg %p71
      %p160 = pneg %p102
      %p161 = pneg %p99
      %s162 = sadd.s32 %s17, %s18
      %s163 = smul.u32 8, %s162
      %p164 = scmp.lt.s32.totalorder %s163, 15
      %s165 = scalar_select %p164, %s163, 15
      %s166 = smul.addr %s165, 4
      %s167 = scalar_lea.vmem %s2, %s166
      %s168 = sadd.s32 %s17, %s18
      %s169 = smul.u32 8, %s168
      %p170 = scmp.lt.s32.totalorder %s169, 15
      %s171 = scalar_select %p170, %s169, 15
      %s172 = smul.addr %s171, 4
      %s173 = scalar_lea.vmem %s0, %s172
      %s174 = sadd.s32 %s17, %s18
      %s175 = smul.u32 8, %s174
      %p176 = scmp.lt.s32.totalorder %s17, 1
      %s177 = scalar_select %p176, %s17, 1
      %s178 = smul.addr %s177, 8
      %s179 = scalar_lea.vmem %s1, %s178
      %s180 = sadd.s32 %s17, %s18
      %s181 = smul.u32 8, %s180
      %p182 = scmp.lt.s32.totalorder %s181, 15
      %s183 = scalar_select %p182, %s181, 15
      %s184 = smul.addr %s183, 4
      %s185 = scalar_lea.vmem %s2, %s184
      %s186 = sadd.s32 %s17, %s18
      %s187 = smul.u32 8, %s186
      %v188 = vld [vmem:[%s173] sm:$0xf]
      %v189 = vld [vmem:[%s173 + $0x4] sm:$0xf]
      %v190 = vld [vmem:[%s173 + $0x8] sm:$0xf]
      %v191 = vld [vmem:[%s173 + $0xc] sm:$0xf]
      %v192 = vld [vmem:[%s173 + $0x10] sm:$0xf]
      %v193 = vld [vmem:[%s173 + $0x14] sm:$0xf]
      %v194 = vld [vmem:[%s173 + $0x18] sm:$0xf]
      %v195 = vld [vmem:[%s173 + $0x1c] sm:$0xf]
      %v196 = vunpack.c.l.bf16 %v188
      %v197 = vunpack.c.l.bf16 %v189
      %v198 = vunpack.c.l.bf16 %v190
      %v199 = vunpack.c.l.bf16 %v191
      %v200 = vunpack.c.l.bf16 %v192
      %v201 = vunpack.c.l.bf16 %v193
      %v202 = vunpack.c.l.bf16 %v194
      %v203 = vunpack.c.l.bf16 %v195
      %v204 = vld [vmem:[%s179] sm:$0x1]
      %v205 = vmul.f32 %v204, 0.015625
      %v206 = vld [vmem:[%s179 + $0x1] sm:$0x1]
      %v207 = vmul.f32 %v206, 0.015625
      %v208 = vmul.f32 %v205, %v205
      %v209 = vsub.f32 %v207, %v208
      %v210 = vmax.f32 %v209, 0.0
      %v211 = vlaneseq
      %v212 = vshrl.u32 %v211, 7
      %v213 = vsub.s32 0, %v212
      %v214 = vrot.slane %v205, %v213
      %v215 = vsub.f32 %v196, %v214
      %v216 = vsub.f32 %v197, %v214
      %v217 = vsub.f32 %v198, %v214
      %v218 = vsub.f32 %v199, %v214
      %v219 = vsub.f32 %v200, %v214
      %v220 = vsub.f32 %v201, %v214
      %v221 = vsub.f32 %v202, %v214
      %v222 = vsub.f32 %v203, %v214
      %v223 = vadd.f32 %v210, 1e-05
      %v224 = vrsqrt.pop %v223
      %v225 = vlaneseq
      %v226 = vshrl.u32 %v225, 7
      %v227 = vsub.s32 0, %v226
      %v228 = vrot.slane %v224, %v227
      %v229 = vmul.f32 %v215, %v228
      %v230 = vmul.f32 %v216, %v228
      %v231 = vmul.f32 %v217, %v228
      %v232 = vmul.f32 %v218, %v228
      %v233 = vmul.f32 %v219, %v228
      %v234 = vmul.f32 %v220, %v228
      %v235 = vmul.f32 %v221, %v228
      %v236 = vmul.f32 %v222, %v228
      %v237 = vmax.f32 %v229, 0.0
      %v238 = vmax.f32 %v230, 0.0
      %v239 = vmax.f32 %v231, 0.0
      %v240 = vmax.f32 %v232, 0.0
      %v241 = vmax.f32 %v233, 0.0
      %v242 = vmax.f32 %v234, 0.0
      %v243 = vmax.f32 %v235, 0.0
      %v244 = vmax.f32 %v236, 0.0
      %v245 = vpack.c.bf16 %v238, %v237
      %v246 = vpack.c.bf16 %v240, %v239
      %v247 = vpack.c.bf16 %v242, %v241
      %v248 = vpack.c.bf16 %v244, %v243
      %v253 = vunpack.c.l.b16 %v245
      %v254 = vunpack.c.h.b16 %v245
      %v255 = vunpack.c.l.b16 %v246
      %v256 = vunpack.c.h.b16 %v246
      %v257 = vunpack.c.l.b16 %v247
      %v258 = vunpack.c.h.b16 %v247
      %v259 = vunpack.c.l.b16 %v248
      %v260 = vunpack.c.h.b16 %v248
      %v261 = vpack.c.b16 %v253, %v253
      %v262 = vpack.c.b16 %v254, %v254
      %v263 = vpack.c.b16 %v255, %v255
      %v264 = vpack.c.b16 %v256, %v256
      %v265 = vpack.c.b16 %v257, %v257
      %v266 = vpack.c.b16 %v258, %v258
      %v267 = vpack.c.b16 %v259, %v259
      %v268 = vpack.c.b16 %v260, %v260
      %277 = vst [vmem:[%s185] sm:$0xf] %v261
      %278 = vst [vmem:[%s185 + $0x4] sm:$0xf] %v262
      %279 = vst [vmem:[%s185 + $0x8] sm:$0xf] %v263
      %280 = vst [vmem:[%s185 + $0xc] sm:$0xf] %v264
      %281 = vst [vmem:[%s185 + $0x10] sm:$0xf] %v265
      %282 = vst [vmem:[%s185 + $0x14] sm:$0xf] %v266
      %283 = vst [vmem:[%s185 + $0x18] sm:$0xf] %v267
      %284 = vst [vmem:[%s185 + $0x1c] sm:$0xf] %v268
      %s285 = sadd.s32 %s17, %s18
      %s286 = smul.u32 8, %s285
      %p287 = scmp.lt.s32.totalorder %s286, 15
      %s288 = scalar_select %p287, %s286, 15
      %s289 = smul.addr %s288, 4
      %s290 = scalar_lea.vmem %s2, %s289
      // Predicated region
      $region29: #{cyclegan_forward.135} parent=27 // pred_check
        %p291 = pneg %p99
      $region30: #{cyclegan_forward.135} parent=27 // pred_check_branch
        %293 = sbr.rel (%p291) target = $region32
      $region31: #{cyclegan_forward.135} parent=27 // pred_region
        %s294 = sadd.s32 %s17, %s18
        %s295 = smul.u32 8, %s294
      $region32: #{cyclegan_forward.135} parent=27 // pred_fallthru
        _
    $region28: #{cyclegan_forward.135} parent=5 // pred_fallthru
      _
    %p296 = scmp.le.s32.totalorder 2, %s8
    // Predicated region
    $region33: #{cyclegan_forward.135} parent=5 // pred_check
      %p297 = pneg %p296
    $region34: #{cyclegan_forward.135} parent=5 // pred_check_branch
      %299 = sbr.rel (%p297) target = $region36
    $region35: #{cyclegan_forward.135} parent=5 // pred_region
      %s300 = ssub.s32 %s8, 2
      // Predicated region
      $region37: #{cyclegan_forward.135} parent=35 // pred_check
        %p301 = pneg %p105
      $region38: #{cyclegan_forward.135} parent=35 // pred_check_branch
        %303 = sbr.rel (%p301) target = $region40
      $region39: #{cyclegan_forward.135} parent=35 // pred_region
        %s304 = sadd.s32 %s19, %s20
        %s305 = smul.u32 8, %s304
        %p306 = scmp.lt.s32.totalorder %s305, 15
        %s307 = scalar_select %p306, %s305, 15
        %s308 = smul.addr %s307, 4
        %s309 = scalar_lea.vmem %s2, %s308
      $region40: #{cyclegan_forward.135} parent=35 // pred_fallthru
        _
    $region36: #{cyclegan_forward.135} parent=5 // pred_fallthru
      _
  $region6: #{cyclegan_forward.135} parent=0 // loop_footer
    %s12 = sadd.s32 1, %s8
  $region7: #{cyclegan_forward.135} parent=0 // loop_footer_branch
    %7 = sbr.rel target = $region3
  $region8: #{cyclegan_forward.135} parent=0 // loop_exit
    _

// kernel: cyclegan_forward.136
$region0: #{cyclegan_forward.136}
  #allocation0 [shape = 'u32[]', space=smem, size = 0x4, offset = 0x4, fixed_abs, tag = 'smem constant byte address 0x4 - core index']
  #allocation1 [shape = 'u32[144,128]{1,0:T(1,128)}', space=vmem, size = 0x12000, scoped, tag = 'internal scratch']
  #allocation2 [shape = 'f32[128,128]{1,0:T(8,128)}', space=vmem, size = 0x10000, scoped, tag = 'scratch operand']
  %s0 = inlined_call_operand.vmem [shape: bf16[128,128], index: 0, kind: input, shape index: {}]
  %s1 = inlined_call_operand.vmem [shape: bf16[128,128], index: 1, kind: input, shape index: {}]
  %s2 = inlined_call_operand.vmem [shape: bf16[128,128], index: 2, kind: output, shape index: {}]
  %s3 = sld [smem:[#allocation0]]
  $region26: #{cyclegan_forward.136} parent=0
    _
  %s5 = ssub.s32 1, %s3
  %s6 = scalar_select 0, %s5, %s3
  // Predicated region
  $region2: #{cyclegan_forward.136} parent=0 // pred_check
    _
  $region3: #{cyclegan_forward.136} parent=0 // pred_check_branch
    %8 = sbr.rel (0) target = $region5
  $region4: #{cyclegan_forward.136} parent=0 // pred_region
    _
  $region5: #{cyclegan_forward.136} parent=0 // pred_fallthru
    _
  // Predicated region
  $region6: #{cyclegan_forward.136} parent=0 // pred_check
    _
  $region7: #{cyclegan_forward.136} parent=0 // pred_check_branch
    %10 = sbr.rel (0) target = $region9
  $region8: #{cyclegan_forward.136} parent=0 // pred_region
    _
  $region9: #{cyclegan_forward.136} parent=0 // pred_fallthru
    _
  %p12 = scmp.eq.s32.totalorder 0, 0
  // Predicated region
  $region10: #{cyclegan_forward.136} parent=0 // pred_check
    %p13 = pneg %p12
  $region11: #{cyclegan_forward.136} parent=0 // pred_check_branch
    %15 = sbr.rel (%p13) target = $region13
  $region12: #{cyclegan_forward.136} parent=0 // pred_region
    %16 = vst [vmem:[#allocation2] sm:$0xff] 0.0
    %17 = vst [vmem:[#allocation2 + $0x8] sm:$0xff] 0.0
    %18 = vst [vmem:[#allocation2 + $0x10] sm:$0xff] 0.0
    %19 = vst [vmem:[#allocation2 + $0x18] sm:$0xff] 0.0
    %20 = vst [vmem:[#allocation2 + $0x20] sm:$0xff] 0.0
    %21 = vst [vmem:[#allocation2 + $0x28] sm:$0xff] 0.0
    %22 = vst [vmem:[#allocation2 + $0x30] sm:$0xff] 0.0
    %23 = vst [vmem:[#allocation2 + $0x38] sm:$0xff] 0.0
    %24 = vst [vmem:[#allocation2 + $0x40] sm:$0xff] 0.0
    %25 = vst [vmem:[#allocation2 + $0x48] sm:$0xff] 0.0
    %26 = vst [vmem:[#allocation2 + $0x50] sm:$0xff] 0.0
    %27 = vst [vmem:[#allocation2 + $0x58] sm:$0xff] 0.0
    %28 = vst [vmem:[#allocation2 + $0x60] sm:$0xff] 0.0
    %29 = vst [vmem:[#allocation2 + $0x68] sm:$0xff] 0.0
    %30 = vst [vmem:[#allocation2 + $0x70] sm:$0xff] 0.0
    %31 = vst [vmem:[#allocation2 + $0x78] sm:$0xff] 0.0
  $region13: #{cyclegan_forward.136} parent=0 // pred_fallthru
    _
  %v32 = vld [vmem:[#allocation2] sm:$0xff]
  %v33 = vld [vmem:[#allocation2 + $0x8] sm:$0xff]
  %v34 = vld [vmem:[#allocation2 + $0x10] sm:$0xff]
  %v35 = vld [vmem:[#allocation2 + $0x18] sm:$0xff]
  %v36 = vld [vmem:[#allocation2 + $0x20] sm:$0xff]
  %v37 = vld [vmem:[#allocation2 + $0x28] sm:$0xff]
  %v38 = vld [vmem:[#allocation2 + $0x30] sm:$0xff]
  %v39 = vld [vmem:[#allocation2 + $0x38] sm:$0xff]
  %v40 = vld [vmem:[#allocation2 + $0x40] sm:$0xff]
  %v41 = vld [vmem:[#allocation2 + $0x48] sm:$0xff]
  %v42 = vld [vmem:[#allocation2 + $0x50] sm:$0xff]
  %v43 = vld [vmem:[#allocation2 + $0x58] sm:$0xff]
  %v44 = vld [vmem:[#allocation2 + $0x60] sm:$0xff]
  %v45 = vld [vmem:[#allocation2 + $0x68] sm:$0xff]
  %v46 = vld [vmem:[#allocation2 + $0x70] sm:$0xff]
  %v47 = vld [vmem:[#allocation2 + $0x78] sm:$0xff]
  %v48 = vld [vmem:[%s0] sm:$0xf]
  %v49 = vld [vmem:[%s0 + $0x4] sm:$0xf]
  %v50 = vld [vmem:[%s0 + $0x8] sm:$0xf]
  %v51 = vld [vmem:[%s0 + $0xc] sm:$0xf]
  %v52 = vld [vmem:[%s0 + $0x10] sm:$0xf]
  %v53 = vld [vmem:[%s0 + $0x14] sm:$0xf]
  %v54 = vld [vmem:[%s0 + $0x18] sm:$0xf]
  %v55 = vld [vmem:[%s0 + $0x1c] sm:$0xf]
  %v56 = vld [vmem:[%s0 + $0x20] sm:$0xf]
  %v57 = vld [vmem:[%s0 + $0x24] sm:$0xf]
  %v58 = vld [vmem:[%s0 + $0x28] sm:$0xf]
  %v59 = vld [vmem:[%s0 + $0x2c] sm:$0xf]
  %v60 = vld [vmem:[%s0 + $0x30] sm:$0xf]
  %v61 = vld [vmem:[%s0 + $0x34] sm:$0xf]
  %v62 = vld [vmem:[%s0 + $0x38] sm:$0xf]
  %v63 = vld [vmem:[%s0 + $0x3c] sm:$0xf]
  %v64 = vld [vmem:[%s1] sm:$0xf]
  %v65 = vld [vmem:[%s1 + $0x4] sm:$0xf]
  %v66 = vld [vmem:[%s1 + $0x8] sm:$0xf]
  %v67 = vld [vmem:[%s1 + $0xc] sm:$0xf]
  %v68 = vld [vmem:[%s1 + $0x10] sm:$0xf]
  %v69 = vld [vmem:[%s1 + $0x14] sm:$0xf]
  %v70 = vld [vmem:[%s1 + $0x18] sm:$0xf]
  %v71 = vld [vmem:[%s1 + $0x1c] sm:$0xf]
  %v72 = vld [vmem:[%s1 + $0x20] sm:$0xf]
  %v73 = vld [vmem:[%s1 + $0x24] sm:$0xf]
  %v74 = vld [vmem:[%s1 + $0x28] sm:$0xf]
  %v75 = vld [vmem:[%s1 + $0x2c] sm:$0xf]
  %v76 = vld [vmem:[%s1 + $0x30] sm:$0xf]
  %v77 = vld [vmem:[%s1 + $0x34] sm:$0xf]
  %v78 = vld [vmem:[%s1 + $0x38] sm:$0xf]
  %v79 = vld [vmem:[%s1 + $0x3c] sm:$0xf]
  %v96 = vunpack.c.l.b16 %v48
  %v97 = vunpack.c.l.b16 %v49
  %v98 = vunpack.c.l.b16 %v50
  %v99 = vunpack.c.l.b16 %v51
  %v100 = vunpack.c.l.b16 %v52
  %v101 = vunpack.c.l.b16 %v53
  %v102 = vunpack.c.l.b16 %v54
  %v103 = vunpack.c.l.b16 %v55
  %v104 = vunpack.c.l.b16 %v56
  %v105 = vunpack.c.l.b16 %v57
  %v106 = vunpack.c.l.b16 %v58
  %v107 = vunpack.c.l.b16 %v59
  %v108 = vunpack.c.l.b16 %v60
  %v109 = vunpack.c.l.b16 %v61
  %v110 = vunpack.c.l.b16 %v62
  %v111 = vunpack.c.l.b16 %v63
  %v112 = vpack.c.b16 %v97, %v96
  %v113 = vpack.c.b16 %v99, %v98
  %v114 = vpack.c.b16 %v101, %v100
  %v115 = vpack.c.b16 %v103, %v102
  %v116 = vpack.c.b16 %v105, %v104
  %v117 = vpack.c.b16 %v107, %v106
  %v118 = vpack.c.b16 %v109, %v108
  %v119 = vpack.c.b16 %v111, %v110
  %v144 = vunpack.c.l.b16 %v64
  %v145 = vunpack.c.l.b16 %v65
  %v146 = vunpack.c.l.b16 %v66
  %v147 = vunpack.c.l.b16 %v67
  %v148 = vunpack.c.l.b16 %v68
  %v149 = vunpack.c.l.b16 %v69
  %v150 = vunpack.c.l.b16 %v70
  %v151 = vunpack.c.l.b16 %v71
  %v152 = vunpack.c.l.b16 %v72
  %v153 = vunpack.c.l.b16 %v73
  %v154 = vunpack.c.l.b16 %v74
  %v155 = vunpack.c.l.b16 %v75
  %v156 = vunpack.c.l.b16 %v76
  %v157 = vunpack.c.l.b16 %v77
  %v158 = vunpack.c.l.b16 %v78
  %v159 = vunpack.c.l.b16 %v79
  %v160 = vpack.c.b16 %v145, %v144
  %v161 = vpack.c.b16 %v147, %v146
  %v162 = vpack.c.b16 %v149, %v148
  %v163 = vpack.c.b16 %v151, %v150
  %v164 = vpack.c.b16 %v153, %v152
  %v165 = vpack.c.b16 %v155, %v154
  %v166 = vpack.c.b16 %v157, %v156
  %v167 = vpack.c.b16 %v159, %v158
  %176 = vmatprep.subr.bf16.mxu0 0
  %177 = vmatpush1.bf16.msra.mxu0 %v160
  %178 = vmatprep.subr.bf16.mxu0 0
  %179 = vmatpush1.bf16.msra.mxu0 %v161
  %180 = vmatprep.subr.bf16.mxu0 0
  %181 = vmatpush1.bf16.msra.mxu0 %v162
  %182 = vmatprep.subr.bf16.mxu0 0
  %183 = vmatpush1.bf16.msra.mxu0 %v163
  %184 = vmatprep.subr.bf16.mxu0 0
  %185 = vmatpush1.bf16.msra.mxu0 %v164
  %186 = vmatprep.subr.bf16.mxu0 0
  %187 = vmatpush1.bf16.msra.mxu0 %v165
  %188 = vmatprep.subr.bf16.mxu0 0
  %189 = vmatpush1.bf16.msra.mxu0 %v166
  %190 = vmatprep.subr.bf16.mxu0 0
  %191 = vmatpush1.bf16.msra.mxu0 %v167
  %192 = vmatprep.subr.bf16.mxu0 0
  %193 = vmatpush1.bf16.msra.mxu0 0
  %194 = vmatprep.subr.bf16.mxu0 0
  %195 = vmatpush1.bf16.msra.mxu0 0
  %196 = vmatprep.subr.bf16.mxu0 0
  %197 = vmatpush1.bf16.msra.mxu0 0
  %198 = vmatprep.subr.bf16.mxu0 0
  %199 = vmatpush1.bf16.msra.mxu0 0
  %200 = vmatprep.subr.bf16.mxu0 0
  %201 = vmatpush1.bf16.msra.mxu0 0
  %202 = vmatprep.subr.bf16.mxu0 0
  %203 = vmatpush1.bf16.msra.mxu0 0
  %204 = vmatprep.subr.bf16.mxu0 0
  %205 = vmatpush1.bf16.msra.mxu0 0
  %206 = vmatprep.subr.bf16.mxu0 0
  %207 = vmatpush1.bf16.msra.mxu0 0
  %208 = vmatprep.mubr.bf16.mxu0 0
  %209 = vmatmul.mubr.bf16.gmra.mrb[0].mxu0 %v112
  %v210 = vpop.f32.mrb[0].mxu0
  %v211 = vadd.f32 0.0, %v210
  %v212 = vpop.f32.mrb[0].mxu0
  %v213 = vpop.f32.mrb[0].mxu0
  %v214 = vadd.f32 0.0, %v213
  %v215 = vpop.f32.mrb[0].mxu0
  %216 = vmatprep.mubr.bf16.mxu0 0
  %217 = vmatmul.mubr.bf16.gmra.mrb[0].mxu0 %v113
  %v218 = vpop.f32.mrb[0].mxu0
  %v219 = vadd.f32 0.0, %v218
  %v220 = vpop.f32.mrb[0].mxu0
  %v221 = vpop.f32.mrb[0].mxu0
  %v222 = vadd.f32 0.0, %v221
  %v223 = vpop.f32.mrb[0].mxu0
  %224 = vmatprep.mubr.bf16.mxu0 0
  %225 = vmatmul.mubr.bf16.gmra.mrb[0].mxu0 %v114
  %v226 = vpop.f32.mrb[0].mxu0
  %v227 = vadd.f32 0.0, %v226
  %v228 = vpop.f32.mrb[0].mxu0
  %v229 = vpop.f32.mrb[0].mxu0
  %v230 = vadd.f32 0.0, %v229
  %v231 = vpop.f32.mrb[0].mxu0
  %232 = vmatprep.mubr.bf16.mxu0 0
  %233 = vmatmul.mubr.bf16.gmra.mrb[0].mxu0 %v115
  %v234 = vpop.f32.mrb[0].mxu0
  %v235 = vadd.f32 0.0, %v234
  %v236 = vpop.f32.mrb[0].mxu0
  %v237 = vpop.f32.mrb[0].mxu0
  %v238 = vadd.f32 0.0, %v237
  %v239 = vpop.f32.mrb[0].mxu0
  %240 = vmatprep.mubr.bf16.mxu0 0
  %241 = vmatmul.mubr.bf16.gmra.mrb[0].mxu0 %v116
  %v242 = vpop.f32.mrb[0].mxu0
  %v243 = vadd.f32 0.0, %v242
  %v244 = vpop.f32.mrb[0].mxu0
  %v245 = vpop.f32.mrb[0].mxu0
  %v246 = vadd.f32 0.0, %v245
  %v247 = vpop.f32.mrb[0].mxu0
  %248 = vmatprep.mubr.bf16.mxu0 0
  %249 = vmatmul.mubr.bf16.gmra.mrb[0].mxu0 %v117
  %v250 = vpop.f32.mrb[0].mxu0
  %v251 = vadd.f32 0.0, %v250
  %v252 = vpop.f32.mrb[0].mxu0
  %v253 = vpop.f32.mrb[0].mxu0
  %v254 = vadd.f32 0.0, %v253
  %v255 = vpop.f32.mrb[0].mxu0
  %256 = vmatprep.mubr.bf16.mxu0 0
  %257 = vmatmul.mubr.bf16.gmra.mrb[0].mxu0 %v118
  %v258 = vpop.f32.mrb[0].mxu0
  %v259 = vadd.f32 0.0, %v258
  %v260 = vpop.f32.mrb[0].mxu0
  %v261 = vpop.f32.mrb[0].mxu0
  %v262 = vadd.f32 0.0, %v261
  %v263 = vpop.f32.mrb[0].mxu0
  %264 = vmatprep.mubr.bf16.mxu0 0
  %265 = vmatmul.mubr.bf16.gmra.mrb[0].mxu0 %v119
  %v266 = vpop.f32.mrb[0].mxu0
  %v267 = vadd.f32 0.0, %v266
  %v268 = vpop.f32.mrb[0].mxu0
  %v269 = vpop.f32.mrb[0].mxu0
  %v270 = vadd.f32 0.0, %v269
  %v271 = vpop.f32.mrb[0].mxu0
  %272 = vdwg.mxu0
  %v273 = vadd.f32 %v32, %v211
  %v274 = vadd.f32 %v33, %v214
  %v275 = vadd.f32 %v34, %v219
  %v276 = vadd.f32 %v35, %v222
  %v277 = vadd.f32 %v36, %v227
  %v278 = vadd.f32 %v37, %v230
  %v279 = vadd.f32 %v38, %v235
  %v280 = vadd.f32 %v39, %v238
  %v281 = vadd.f32 %v40, %v243
  %v282 = vadd.f32 %v41, %v246
  %v283 = vadd.f32 %v42, %v251
  %v284 = vadd.f32 %v43, %v254
  %v285 = vadd.f32 %v44, %v259
  %v286 = vadd.f32 %v45, %v262
  %v287 = vadd.f32 %v46, %v267
  %v288 = vadd.f32 %v47, %v270
  %289 = vst [vmem:[#allocation2] sm:$0xff] %v273
  %290 = vst [vmem:[#allocation2 + $0x8] sm:$0xff] %v274
  %291 = vst [vmem:[#allocation2 + $0x10] sm:$0xff] %v275
  %292 = vst [vmem:[#allocation2 + $0x18] sm:$0xff] %v276
  %293 = vst [vmem:[#allocation2 + $0x20] sm:$0xff] %v277
  %294 = vst [vmem:[#allocation2 + $0x28] sm:$0xff] %v278
  %295 = vst [vmem:[#allocation2 + $0x30] sm:$0xff] %v279
  %296 = vst [vmem:[#allocation2 + $0x38] sm:$0xff] %v280
  %297 = vst [vmem:[#allocation2 + $0x40] sm:$0xff] %v281
  %298 = vst [vmem:[#allocation2 + $0x48] sm:$0xff] %v282
  %299 = vst [vmem:[#allocation2 + $0x50] sm:$0xff] %v283
  %300 = vst [vmem:[#allocation2 + $0x58] sm:$0xff] %v284
  %301 = vst [vmem:[#allocation2 + $0x60] sm:$0xff] %v285
  %302 = vst [vmem:[#allocation2 + $0x68] sm:$0xff] %v286
  %303 = vst [vmem:[#allocation2 + $0x70] sm:$0xff] %v287
  %304 = vst [vmem:[#allocation2 + $0x78] sm:$0xff] %v288
  // Predicated region
  $region14: #{cyclegan_forward.136} parent=0 // pred_check
    %p305 = pneg %p12
  $region15: #{cyclegan_forward.136} parent=0 // pred_check_branch
    %307 = sbr.rel (%p305) target = $region17
  $region16: #{cyclegan_forward.136} parent=0 // pred_region
    %v308 = vld [vmem:[#allocation2] sm:$0xff]
    %v309 = vld [vmem:[#allocation2 + $0x8] sm:$0xff]
    %v310 = vld [vmem:[#allocation2 + $0x10] sm:$0xff]
    %v311 = vld [vmem:[#allocation2 + $0x18] sm:$0xff]
    %v312 = vld [vmem:[#allocation2 + $0x20] sm:$0xff]
    %v313 = vld [vmem:[#allocation2 + $0x28] sm:$0xff]
    %v314 = vld [vmem:[#allocation2 + $0x30] sm:$0xff]
    %v315 = vld [vmem:[#allocation2 + $0x38] sm:$0xff]
    %v316 = vld [vmem:[#allocation2 + $0x40] sm:$0xff]
    %v317 = vld [vmem:[#allocation2 + $0x48] sm:$0xff]
    %v318 = vld [vmem:[#allocation2 + $0x50] sm:$0xff]
    %v319 = vld [vmem:[#allocation2 + $0x58] sm:$0xff]
    %v320 = vld [vmem:[#allocation2 + $0x60] sm:$0xff]
    %v321 = vld [vmem:[#allocation2 + $0x68] sm:$0xff]
    %v322 = vld [vmem:[#allocation2 + $0x70] sm:$0xff]
    %v323 = vld [vmem:[#allocation2 + $0x78] sm:$0xff]
    %v324 = vpack.c.bf16 %v309, %v308
    %v325 = vpack.c.bf16 %v311, %v310
    %v326 = vpack.c.bf16 %v313, %v312
    %v327 = vpack.c.bf16 %v315, %v314
    %v328 = vpack.c.bf16 %v317, %v316
    %v329 = vpack.c.bf16 %v319, %v318
    %v330 = vpack.c.bf16 %v321, %v320
    %v331 = vpack.c.bf16 %v323, %v322
    %v340 = vunpack.c.l.b16 %v324
    %v341 = vunpack.c.h.b16 %v324
    %v342 = vunpack.c.l.b16 %v325
    %v343 = vunpack.c.h.b16 %v325
    %v344 = vunpack.c.l.b16 %v326
    %v345 = vunpack.c.h.b16 %v326
    %v346 = vunpack.c.l.b16 %v327
    %v347 = vunpack.c.h.b16 %v327
    %v348 = vunpack.c.l.b16 %v328
    %v349 = vunpack.c.h.b16 %v328
    %v350 = vunpack.c.l.b16 %v329
    %v351 = vunpack.c.h.b16 %v329
    %v352 = vunpack.c.l.b16 %v330
    %v353 = vunpack.c.h.b16 %v330
    %v354 = vunpack.c.l.b16 %v331
    %v355 = vunpack.c.h.b16 %v331
    %v356 = vpack.c.b16 %v340, %v340
    %v357 = vpack.c.b16 %v341, %v341
    %v358 = vpack.c.b16 %v342, %v342
    %v359 = vpack.c.b16 %v343, %v343
    %v360 = vpack.c.b16 %v344, %v344
    %v361 = vpack.c.b16 %v345, %v345
    %v362 = vpack.c.b16 %v346, %v346
    %v363 = vpack.c.b16 %v347, %v347
    %v364 = vpack.c.b16 %v348, %v348
    %v365 = vpack.c.b16 %v349, %v349
    %v366 = vpack.c.b16 %v350, %v350
    %v367 = vpack.c.b16 %v351, %v351
    %v368 = vpack.c.b16 %v352, %v352
    %v369 = vpack.c.b16 %v353, %v353
    %v370 = vpack.c.b16 %v354, %v354
    %v371 = vpack.c.b16 %v355, %v355
    %388 = vst [vmem:[%s2] sm:$0xf] %v356
    %389 = vst [vmem:[%s2 + $0x4] sm:$0xf] %v357
    %390 = vst [vmem:[%s2 + $0x8] sm:$0xf] %v358
    %391 = vst [vmem:[%s2 + $0xc] sm:$0xf] %v359
    %392 = vst [vmem:[%s2 + $0x10] sm:$0xf] %v360
    %393 = vst [vmem:[%s2 + $0x14] sm:$0xf] %v361
    %394 = vst [vmem:[%s2 + $0x18] sm:$0xf] %v362
    %395 = vst [vmem:[%s2 + $0x1c] sm:$0xf] %v363
    %396 = vst [vmem:[%s2 + $0x20] sm:$0xf] %v364
    %397 = vst [vmem:[%s2 + $0x24] sm:$0xf] %v365
    %398 = vst [vmem:[%s2 + $0x28] sm:$0xf] %v366
    %399 = vst [vmem:[%s2 + $0x2c] sm:$0xf] %v367
    %400 = vst [vmem:[%s2 + $0x30] sm:$0xf] %v368
    %401 = vst [vmem:[%s2 + $0x34] sm:$0xf] %v369
    %402 = vst [vmem:[%s2 + $0x38] sm:$0xf] %v370
    %403 = vst [vmem:[%s2 + $0x3c] sm:$0xf] %v371
  $region17: #{cyclegan_forward.136} parent=0 // pred_fallthru
    _
  // Predicated region
  $region18: #{cyclegan_forward.136} parent=0 // pred_check
    _
  $region19: #{cyclegan_forward.136} parent=0 // pred_check_branch
    %405 = sbr.rel (0) target = $region21
  $region20: #{cyclegan_forward.136} parent=0 // pred_region
    _
  $region21: #{cyclegan_forward.136} parent=0 // pred_fallthru
    _
  // Predicated region
  $region22: #{cyclegan_forward.136} parent=0 // pred_check
    _
  $region23: #{cyclegan_forward.136} parent=0 // pred_check_branch
    %407 = sbr.rel (0) target = $region25
  $region24: #{cyclegan_forward.136} parent=0 // pred_region
    _
  $region25: #{cyclegan_forward.136} parent=0 // pred_fallthru
    _

// kernel: cyclegan_forward.137
$region0: #{cyclegan_forward.137}
  #allocation0 [shape = 'u32[]', space=smem, size = 0x4, offset = 0x4, fixed_abs, tag = 'smem constant byte address 0x4 - core index']
  #allocation1 [shape = 'u32[144,128]{1,0:T(1,128)}', space=vmem, size = 0x12000, scoped, tag = 'internal scratch']
  %s0 = inlined_call_operand.vmem [shape: bf16[512,128], index: 0, kind: input, shape index: {}]
  %s1 = inlined_call_operand.vmem [shape: f32[16,128], index: 1, kind: output, shape index: {}]
  %s2 = sld [smem:[#allocation0]]
  $region41: #{cyclegan_forward.137} parent=0
    _
  %s4 = ssub.s32 1, %s2
  %s5 = scalar_select 0, %s4, %s2
  loop: start=0, step=1, limit=4
  $region2: #{cyclegan_forward.137} parent=0 // loop_pre_header
    _
  $region3: #{cyclegan_forward.137} parent=0 // loop_header
    %s7 = sphi 0, %s11
    %p8 = scmp.ge.s32.totalorder %s7, 4
    %s14 = sphi 0, %s26
    %s15 = sphi 0, %s22
    %s16 = sphi 0, %s14
    %s17 = sphi 0, %s15
    %s18 = sphi 0, %s16
    %s19 = sphi 0, %s17
    %s31 = sphi 0, %s33
    %s34 = sphi 0, %s31
    %s35 = sphi 0, %s34
    %s51 = sphi 0, %s35
    %s57 = sphi 0, %s59
    %s60 = sphi 0, %s57
    %s61 = sphi 0, %s60
    %s77 = sphi 0, %s61
  $region4: #{cyclegan_forward.137} parent=0 // loop_header_branch
    %10 = sbr.rel (%p8) target = $region8
  $region5: #{cyclegan_forward.137} parent=0 // loop_body
    %s12 = ssub.s32 %s7, 1
    %s13 = ssub.s32 %s7, 2
    %s20 = sadd.s32 1, %s15
    %p21 = scmp.ge.s32.totalorder %s20, 1
    %s22 = scalar_select %p21, 0, %s20
    %s23 = sadd.s32 1, %s14
    %s24 = scalar_select %p21, %s23, %s14
    %p25 = scmp.ge.s32.totalorder %s24, 2
    %s26 = scalar_select %p25, 0, %s24
    %s27 = sadd.s32 %s14, %s15
    %s28 = sadd.s32 %s26, %s22
    %s29 = ssub.s32 %s27, %s28
    %p30 = scmp.eq.s32.totalorder %s29, 0
    %s32 = sadd.s32 %s31, 1
    %s33 = scalar_select %p30, %s31, %s32
    %p36 = pneg %p30
    %p37 = scmp.eq.s32.totalorder %s7, 1
    %p38 = por %p36, %p37
    %p39 = scmp.ne.s32.totalorder %s31, %s34
    %p40 = scmp.eq.s32.totalorder %s7, 0
    %p41 = por %p39, %p40
    %p42 = scmp.ne.s32.totalorder %s31, %s34
    %p43 = scmp.eq.s32.totalorder %s12, 1
    %p44 = por %p42, %p43
    %p45 = scmp.ne.s32.totalorder %s34, %s35
    %p46 = scmp.eq.s32.totalorder %s12, 0
    %p47 = por %p45, %p46
    %p48 = scmp.ne.s32.totalorder %s34, %s35
    %p49 = scmp.eq.s32.totalorder %s13, 1
    %p50 = por %p48, %p49
    %p52 = scmp.ne.s32.totalorder %s35, %s51
    %p53 = scmp.eq.s32.totalorder %s13, 0
    %p54 = por %p52, %p53
    %s55 = ssub.s32 %s14, %s26
    %p56 = scmp.eq.s32.totalorder %s55, 0
    %s58 = sadd.s32 %s57, 1
    %s59 = scalar_select %p56, %s57, %s58
    %p62 = pneg %p56
    %p63 = scmp.eq.s32.totalorder %s7, 1
    %p64 = por %p62, %p63
    %p65 = scmp.ne.s32.totalorder %s57, %s60
    %p66 = scmp.eq.s32.totalorder %s7, 0
    %p67 = por %p65, %p66
    %p68 = scmp.ne.s32.totalorder %s57, %s60
    %p69 = scmp.eq.s32.totalorder %s12, 1
    %p70 = por %p68, %p69
    %p71 = scmp.ne.s32.totalorder %s60, %s61
    %p72 = scmp.eq.s32.totalorder %s12, 0
    %p73 = por %p71, %p72
    %p74 = scmp.ne.s32.totalorder %s60, %s61
    %p75 = scmp.eq.s32.totalorder %s13, 1
    %p76 = por %p74, %p75
    %p78 = scmp.ne.s32.totalorder %s61, %s77
    %p79 = scmp.eq.s32.totalorder %s13, 0
    %p80 = por %p78, %p79
    %p81 = scmp.le.s32.totalorder 1, %s7
    %p82 = scmp.lt.s32.totalorder %s7, 3
    %p83 = pnand %p81, %p82
    %p84 = pneg %p83
    // Predicated region
    $region9: #{cyclegan_forward.137} parent=5 // pred_check
      _
    $region10: #{cyclegan_forward.137} parent=5 // pred_check_branch
      %86 = sbr.rel (%p83) target = $region12
    $region11: #{cyclegan_forward.137} parent=5 // pred_region
      %s87 = ssub.s32 %s7, 1
    $region12: #{cyclegan_forward.137} parent=5 // pred_fallthru
      _
    %p88 = scmp.lt.s32.totalorder %s7, 2
    // Predicated region
    $region13: #{cyclegan_forward.137} parent=5 // pred_check
      %p89 = pneg %p88
    $region14: #{cyclegan_forward.137} parent=5 // pred_check_branch
      %91 = sbr.rel (%p89) target = $region16
    $region15: #{cyclegan_forward.137} parent=5 // pred_region
      // Predicated region
      $region17: #{cyclegan_forward.137} parent=15 // pred_check
        %p92 = pneg %p41
      $region18: #{cyclegan_forward.137} parent=15 // pred_check_branch
        %94 = sbr.rel (%p92) target = $region20
      $region19: #{cyclegan_forward.137} parent=15 // pred_region
        %s95 = sadd.s32 %s14, %s15
        %s96 = smul.u32 32, %s95
        %p97 = scmp.lt.s32.totalorder %s96, 63
        %s98 = scalar_select %p97, %s96, 63
        %s99 = smul.addr %s98, 4
        %s100 = scalar_lea.vmem %s0, %s99
        %s101 = sadd.s32 %s14, %s15
        %s102 = smul.u32 32, %s101
      $region20: #{cyclegan_forward.137} parent=15 // pred_fallthru
        _
    $region16: #{cyclegan_forward.137} parent=5 // pred_fallthru
      _
    %p103 = scmp.le.s32.totalorder 1, %s7
    %p104 = scmp.lt.s32.totalorder %s7, 3
    %p105 = pnand %p103, %p104
    %p106 = pneg %p105
    // Predicated region
    $region21: #{cyclegan_forward.137} parent=5 // pred_check
      _
    $region22: #{cyclegan_forward.137} parent=5 // pred_check_branch
      %108 = sbr.rel (%p105) target = $region24
    $region23: #{cyclegan_forward.137} parent=5 // pred_region
      %s109 = ssub.s32 %s7, 1
      %s110 = sadd.s32 %s16, %s17
      %s111 = smul.u32 32, %s110
      %p112 = scmp.lt.s32.totalorder %s111, 63
      %s113 = scalar_select %p112, %s111, 63
      %s114 = smul.addr %s113, 4
      %s115 = scalar_lea.vmem %s0, %s114
      %p116 = pneg %p47
      %p117 = pneg %p44
      %p118 = pneg %p73
      %p119 = pneg %p70
      %p120 = scmp.lt.s32.totalorder %s16, 1
      %s121 = scalar_select %p120, %s16, 1
      %s122 = smul.addr %s121, 8
      %s123 = scalar_lea.vmem %s1, %s122
      %s124 = sadd.s32 %s16, %s17
      %s125 = smul.u32 32, %s124
      %p126 = scmp.lt.s32.totalorder %s125, 63
      %s127 = scalar_select %p126, %s125, 63
      %s128 = smul.addr %s127, 4
      %s129 = scalar_lea.vmem %s0, %s128
      %s130 = sadd.s32 %s16, %s17
      %s131 = smul.u32 32, %s130
      %p132 = scmp.lt.s32.totalorder %s16, 1
      %s133 = scalar_select %p132, %s16, 1
      %s134 = smul.addr %s133, 8
      %s135 = scalar_lea.vmem %s1, %s134
      %p136 = scmp.eq.s32.totalorder %s17, 0
      // Predicated region
      $region25: #{cyclegan_forward.137} parent=23 // pred_check
        %p137 = pneg %p136
      $region26: #{cyclegan_forward.137} parent=23 // pred_check_branch
        %139 = sbr.rel (%p137) target = $region28
      $region27: #{cyclegan_forward.137} parent=23 // pred_region
        %140 = vst [vmem:[%s135] sm:$0xff] 0.0
      $region28: #{cyclegan_forward.137} parent=23 // pred_fallthru
        _
      %v141 = vld [vmem:[%s129] sm:$0xf]
      %v142 = vld [vmem:[%s129 + $0x4] sm:$0xf]
      %v143 = vld [vmem:[%s129 + $0x8] sm:$0xf]
      %v144 = vld [vmem:[%s129 + $0xc] sm:$0xf]
      %v145 = vld [vmem:[%s129 + $0x10] sm:$0xf]
      %v146 = vld [vmem:[%s129 + $0x14] sm:$0xf]
      %v147 = vld [vmem:[%s129 + $0x18] sm:$0xf]
      %v148 = vld [vmem:[%s129 + $0x1c] sm:$0xf]
      %v149 = vld [vmem:[%s129 + $0x20] sm:$0xf]
      %v150 = vld [vmem:[%s129 + $0x24] sm:$0xf]
      %v151 = vld [vmem:[%s129 + $0x28] sm:$0xf]
      %v152 = vld [vmem:[%s129 + $0x2c] sm:$0xf]
      %v153 = vld [vmem:[%s129 + $0x30] sm:$0xf]
      %v154 = vld [vmem:[%s129 + $0x34] sm:$0xf]
      %v155 = vld [vmem:[%s129 + $0x38] sm:$0xf]
      %v156 = vld [vmem:[%s129 + $0x3c] sm:$0xf]
      %v157 = vld [vmem:[%s129 + $0x40] sm:$0xf]
      %v158 = vld [vmem:[%s129 + $0x44] sm:$0xf]
      %v159 = vld [vmem:[%s129 + $0x48] sm:$0xf]
      %v160 = vld [vmem:[%s129 + $0x4c] sm:$0xf]
      %v161 = vld [vmem:[%s129 + $0x50] sm:$0xf]
      %v162 = vld [vmem:[%s129 + $0x54] sm:$0xf]
      %v163 = vld [vmem:[%s129 + $0x58] sm:$0xf]
      %v164 = vld [vmem:[%s129 + $0x5c] sm:$0xf]
      %v165 = vld [vmem:[%s129 + $0x60] sm:$0xf]
      %v166 = vld [vmem:[%s129 + $0x64] sm:$0xf]
      %v167 = vld [vmem:[%s129 + $0x68] sm:$0xf]
      %v168 = vld [vmem:[%s129 + $0x6c] sm:$0xf]
      %v169 = vld [vmem:[%s129 + $0x70] sm:$0xf]
      %v170 = vld [vmem:[%s129 + $0x74] sm:$0xf]
      %v171 = vld [vmem:[%s129 + $0x78] sm:$0xf]
      %v172 = vld [vmem:[%s129 + $0x7c] sm:$0xf]
      %v173 = vunpack.c.l.bf16 %v141
      %v174 = vunpack.c.l.bf16 %v142
      %v175 = vunpack.c.l.bf16 %v143
      %v176 = vunpack.c.l.bf16 %v144
      %v177 = vunpack.c.l.bf16 %v145
      %v178 = vunpack.c.l.bf16 %v146
      %v179 = vunpack.c.l.bf16 %v147
      %v180 = vunpack.c.l.bf16 %v148
      %v181 = vunpack.c.l.bf16 %v149
      %v182 = vunpack.c.l.bf16 %v150
      %v183 = vunpack.c.l.bf16 %v151
      %v184 = vunpack.c.l.bf16 %v152
      %v185 = vunpack.c.l.bf16 %v153
      %v186 = vunpack.c.l.bf16 %v154
      %v187 = vunpack.c.l.bf16 %v155
      %v188 = vunpack.c.l.bf16 %v156
      %v189 = vunpack.c.l.bf16 %v157
      %v190 = vunpack.c.l.bf16 %v158
      %v191 = vunpack.c.l.bf16 %v159
      %v192 = vunpack.c.l.bf16 %v160
      %v193 = vunpack.c.l.bf16 %v161
      %v194 = vunpack.c.l.bf16 %v162
      %v195 = vunpack.c.l.bf16 %v163
      %v196 = vunpack.c.l.bf16 %v164
      %v197 = vunpack.c.l.bf16 %v165
      %v198 = vunpack.c.l.bf16 %v166
      %v199 = vunpack.c.l.bf16 %v167
      %v200 = vunpack.c.l.bf16 %v168
      %v201 = vunpack.c.l.bf16 %v169
      %v202 = vunpack.c.l.bf16 %v170
      %v203 = vunpack.c.l.bf16 %v171
      %v204 = vunpack.c.l.bf16 %v172
      %v205 = vld [vmem:[%s135] sm:$0x1]
      %v206 = vadd.f32 %v173, %v174
      %v207 = vadd.f32 %v206, %v175
      %v208 = vadd.f32 %v207, %v176
      %v209 = vadd.f32 %v208, %v177
      %v210 = vadd.f32 %v209, %v178
      %v211 = vadd.f32 %v210, %v179
      %v212 = vadd.f32 %v211, %v180
      %v213 = vadd.f32 %v212, %v181
      %v214 = vadd.f32 %v213, %v182
      %v215 = vadd.f32 %v214, %v183
      %v216 = vadd.f32 %v215, %v184
      %v217 = vadd.f32 %v216, %v185
      %v218 = vadd.f32 %v217, %v186
      %v219 = vadd.f32 %v218, %v187
      %v220 = vadd.f32 %v219, %v188
      %v221 = vadd.f32 %v220, %v189
      %v222 = vadd.f32 %v221, %v190
      %v223 = vadd.f32 %v222, %v191
      %v224 = vadd.f32 %v223, %v192
      %v225 = vadd.f32 %v224, %v193
      %v226 = vadd.f32 %v225, %v194
      %v227 = vadd.f32 %v226, %v195
      %v228 = vadd.f32 %v227, %v196
      %v229 = vadd.f32 %v228, %v197
      %v230 = vadd.f32 %v229, %v198
      %v231 = vadd.f32 %v230, %v199
      %v232 = vadd.f32 %v231, %v200
      %v233 = vadd.f32 %v232, %v201
      %v234 = vadd.f32 %v233, %v202
      %v235 = vadd.f32 %v234, %v203
      %v236 = vadd.f32 %v235, %v204
      %v237 = vrot.slane %v236, 4
      %v238 = vadd.f32 %v236, %v237
      %v239 = vrot.slane %v238, 2
      %v240 = vadd.f32 %v238, %v239
      %v241 = vrot.slane %v240, 1
      %v242 = vadd.f32 %v240, %v241
      %v243 = vadd.f32 %v205, %v242
      %244 = vst [vmem:[%s135] sm:$0x1] %v243
      %v245 = vld [vmem:[%s135 + $0x1] sm:$0x1]
      %v246 = vmul.f32 %v173, %v173
      %v247 = vmul.f32 %v174, %v174
      %v248 = vmul.f32 %v175, %v175
      %v249 = vmul.f32 %v176, %v176
      %v250 = vmul.f32 %v177, %v177
      %v251 = vmul.f32 %v178, %v178
      %v252 = vmul.f32 %v179, %v179
      %v253 = vmul.f32 %v180, %v180
      %v254 = vmul.f32 %v181, %v181
      %v255 = vmul.f32 %v182, %v182
      %v256 = vmul.f32 %v183, %v183
      %v257 = vmul.f32 %v184, %v184
      %v258 = vmul.f32 %v185, %v185
      %v259 = vmul.f32 %v186, %v186
      %v260 = vmul.f32 %v187, %v187
      %v261 = vmul.f32 %v188, %v188
      %v262 = vmul.f32 %v189, %v189
      %v263 = vmul.f32 %v190, %v190
      %v264 = vmul.f32 %v191, %v191
      %v265 = vmul.f32 %v192, %v192
      %v266 = vmul.f32 %v193, %v193
      %v267 = vmul.f32 %v194, %v194
      %v268 = vmul.f32 %v195, %v195
      %v269 = vmul.f32 %v196, %v196
      %v270 = vmul.f32 %v197, %v197
      %v271 = vmul.f32 %v198, %v198
      %v272 = vmul.f32 %v199, %v199
      %v273 = vmul.f32 %v200, %v200
      %v274 = vmul.f32 %v201, %v201
      %v275 = vmul.f32 %v202, %v202
      %v276 = vmul.f32 %v203, %v203
      %v277 = vmul.f32 %v204, %v204
      %v278 = vadd.f32 %v246, %v247
      %v279 = vadd.f32 %v278, %v248
      %v280 = vadd.f32 %v279, %v249
      %v281 = vadd.f32 %v280, %v250
      %v282 = vadd.f32 %v281, %v251
      %v283 = vadd.f32 %v282, %v252
      %v284 = vadd.f32 %v283, %v253
      %v285 = vadd.f32 %v284, %v254
      %v286 = vadd.f32 %v285, %v255
      %v287 = vadd.f32 %v286, %v256
      %v288 = vadd.f32 %v287, %v257
      %v289 = vadd.f32 %v288, %v258
      %v290 = vadd.f32 %v289, %v259
      %v291 = vadd.f32 %v290, %v260
      %v292 = vadd.f32 %v291, %v261
      %v293 = vadd.f32 %v292, %v262
      %v294 = vadd.f32 %v293, %v263
      %v295 = vadd.f32 %v294, %v264
      %v296 = vadd.f32 %v295, %v265
      %v297 = vadd.f32 %v296, %v266
      %v298 = vadd.f32 %v297, %v267
      %v299 = vadd.f32 %v298, %v268
      %v300 = vadd.f32 %v299, %v269
      %v301 = vadd.f32 %v300, %v270
      %v302 = vadd.f32 %v301, %v271
      %v303 = vadd.f32 %v302, %v272
      %v304 = vadd.f32 %v303, %v273
      %v305 = vadd.f32 %v304, %v274
      %v306 = vadd.f32 %v305, %v275
      %v307 = vadd.f32 %v306, %v276
      %v308 = vadd.f32 %v307, %v277
      %v309 = vrot.slane %v308, 4
      %v310 = vadd.f32 %v308, %v309
      %v311 = vrot.slane %v310, 2
      %v312 = vadd.f32 %v310, %v311
      %v313 = vrot.slane %v312, 1
      %v314 = vadd.f32 %v312, %v313
      %v315 = vadd.f32 %v245, %v314
      %316 = vst [vmem:[%s135 + $0x1] sm:$0x1] %v315
      %p317 = scmp.lt.s32.totalorder %s16, 1
      %s318 = scalar_select %p317, %s16, 1
      %s319 = smul.addr %s318, 8
      %s320 = scalar_lea.vmem %s1, %s319
      // Predicated region
      $region29: #{cyclegan_forward.137} parent=23 // pred_check
        %p321 = pneg %p70
      $region30: #{cyclegan_forward.137} parent=23 // pred_check_branch
        %323 = sbr.rel (%p321) target = $region32
      $region31: #{cyclegan_forward.137} parent=23 // pred_region
        _
      $region32: #{cyclegan_forward.137} parent=23 // pred_fallthru
        _
    $region24: #{cyclegan_forward.137} parent=5 // pred_fallthru
      _
    %p324 = scmp.le.s32.totalorder 2, %s7
    // Predicated region
    $region33: #{cyclegan_forward.137} parent=5 // pred_check
      %p325 = pneg %p324
    $region34: #{cyclegan_forward.137} parent=5 // pred_check_branch
      %327 = sbr.rel (%p325) target = $region36
    $region35: #{cyclegan_forward.137} parent=5 // pred_region
      %s328 = ssub.s32 %s7, 2
      // Predicated region
      $region37: #{cyclegan_forward.137} parent=35 // pred_check
        %p329 = pneg %p76
      $region38: #{cyclegan_forward.137} parent=35 // pred_check_branch
        %331 = sbr.rel (%p329) target = $region40
      $region39: #{cyclegan_forward.137} parent=35 // pred_region
        %p332 = scmp.lt.s32.totalorder %s18, 1
        %s333 = scalar_select %p332, %s18, 1
        %s334 = smul.addr %s333, 8
        %s335 = scalar_lea.vmem %s1, %s334
      $region40: #{cyclegan_forward.137} parent=35 // pred_fallthru
        _
    $region36: #{cyclegan_forward.137} parent=5 // pred_fallthru
      _
  $region6: #{cyclegan_forward.137} parent=0 // loop_footer
    %s11 = sadd.s32 1, %s7
  $region7: #{cyclegan_forward.137} parent=0 // loop_footer_branch
    %6 = sbr.rel target = $region3
  $region8: #{cyclegan_forward.137} parent=0 // loop_exit
    _

// kernel: cyclegan_forward.138
$region0: #{cyclegan_forward.138}
  #allocation0 [shape = 'u32[]', space=smem, size = 0x4, offset = 0x4, fixed_abs, tag = 'smem constant byte address 0x4 - core index']
  #allocation1 [shape = 'u32[144,128]{1,0:T(1,128)}', space=vmem, size = 0x12000, scoped, tag = 'internal scratch']
  %s0 = inlined_call_operand.vmem [shape: bf16[512,128], index: 0, kind: input, shape index: {}]
  %s1 = inlined_call_operand.vmem [shape: f32[16,128], index: 1, kind: input, shape index: {}]
  %s2 = inlined_call_operand.vmem [shape: bf16[512,128], index: 2, kind: output, shape index: {}]
  %s3 = sld [smem:[#allocation0]]
  $region41: #{cyclegan_forward.138} parent=0
    _
  %s5 = ssub.s32 1, %s3
  %s6 = scalar_select 0, %s5, %s3
  loop: start=0, step=1, limit=4
  $region2: #{cyclegan_forward.138} parent=0 // loop_pre_header
    _
  $region3: #{cyclegan_forward.138} parent=0 // loop_header
    %s8 = sphi 0, %s12
    %p9 = scmp.ge.s32.totalorder %s8, 4
    %s15 = sphi 0, %s27
    %s16 = sphi 0, %s23
    %s17 = sphi 0, %s15
    %s18 = sphi 0, %s16
    %s19 = sphi 0, %s17
    %s20 = sphi 0, %s18
    %s32 = sphi 0, %s34
    %s35 = sphi 0, %s32
    %s36 = sphi 0, %s35
    %s52 = sphi 0, %s36
    %s58 = sphi 0, %s60
    %s61 = sphi 0, %s58
    %s62 = sphi 0, %s61
    %s78 = sphi 0, %s62
    %s86 = sphi 0, %s88
    %s89 = sphi 0, %s86
    %s90 = sphi 0, %s89
    %s106 = sphi 0, %s90
  $region4: #{cyclegan_forward.138} parent=0 // loop_header_branch
    %11 = sbr.rel (%p9) target = $region8
  $region5: #{cyclegan_forward.138} parent=0 // loop_body
    %s13 = ssub.s32 %s8, 1
    %s14 = ssub.s32 %s8, 2
    %s21 = sadd.s32 1, %s16
    %p22 = scmp.ge.s32.totalorder %s21, 1
    %s23 = scalar_select %p22, 0, %s21
    %s24 = sadd.s32 1, %s15
    %s25 = scalar_select %p22, %s24, %s15
    %p26 = scmp.ge.s32.totalorder %s25, 2
    %s27 = scalar_select %p26, 0, %s25
    %s28 = sadd.s32 %s15, %s16
    %s29 = sadd.s32 %s27, %s23
    %s30 = ssub.s32 %s28, %s29
    %p31 = scmp.eq.s32.totalorder %s30, 0
    %s33 = sadd.s32 %s32, 1
    %s34 = scalar_select %p31, %s32, %s33
    %p37 = pneg %p31
    %p38 = scmp.eq.s32.totalorder %s8, 1
    %p39 = por %p37, %p38
    %p40 = scmp.ne.s32.totalorder %s32, %s35
    %p41 = scmp.eq.s32.totalorder %s8, 0
    %p42 = por %p40, %p41
    %p43 = scmp.ne.s32.totalorder %s32, %s35
    %p44 = scmp.eq.s32.totalorder %s13, 1
    %p45 = por %p43, %p44
    %p46 = scmp.ne.s32.totalorder %s35, %s36
    %p47 = scmp.eq.s32.totalorder %s13, 0
    %p48 = por %p46, %p47
    %p49 = scmp.ne.s32.totalorder %s35, %s36
    %p50 = scmp.eq.s32.totalorder %s14, 1
    %p51 = por %p49, %p50
    %p53 = scmp.ne.s32.totalorder %s36, %s52
    %p54 = scmp.eq.s32.totalorder %s14, 0
    %p55 = por %p53, %p54
    %s56 = ssub.s32 %s15, %s27
    %p57 = scmp.eq.s32.totalorder %s56, 0
    %s59 = sadd.s32 %s58, 1
    %s60 = scalar_select %p57, %s58, %s59
    %p63 = pneg %p57
    %p64 = scmp.eq.s32.totalorder %s8, 1
    %p65 = por %p63, %p64
    %p66 = scmp.ne.s32.totalorder %s58, %s61
    %p67 = scmp.eq.s32.totalorder %s8, 0
    %p68 = por %p66, %p67
    %p69 = scmp.ne.s32.totalorder %s58, %s61
    %p70 = scmp.eq.s32.totalorder %s13, 1
    %p71 = por %p69, %p70
    %p72 = scmp.ne.s32.totalorder %s61, %s62
    %p73 = scmp.eq.s32.totalorder %s13, 0
    %p74 = por %p72, %p73
    %p75 = scmp.ne.s32.totalorder %s61, %s62
    %p76 = scmp.eq.s32.totalorder %s14, 1
    %p77 = por %p75, %p76
    %p79 = scmp.ne.s32.totalorder %s62, %s78
    %p80 = scmp.eq.s32.totalorder %s14, 0
    %p81 = por %p79, %p80
    %s82 = sadd.s32 %s15, %s16
    %s83 = sadd.s32 %s27, %s23
    %s84 = ssub.s32 %s82, %s83
    %p85 = scmp.eq.s32.totalorder %s84, 0
    %s87 = sadd.s32 %s86, 1
    %s88 = scalar_select %p85, %s86, %s87
    %p91 = pneg %p85
    %p92 = scmp.eq.s32.totalorder %s8, 1
    %p93 = por %p91, %p92
    %p94 = scmp.ne.s32.totalorder %s86, %s89
    %p95 = scmp.eq.s32.totalorder %s8, 0
    %p96 = por %p94, %p95
    %p97 = scmp.ne.s32.totalorder %s86, %s89
    %p98 = scmp.eq.s32.totalorder %s13, 1
    %p99 = por %p97, %p98
    %p100 = scmp.ne.s32.totalorder %s89, %s90
    %p101 = scmp.eq.s32.totalorder %s13, 0
    %p102 = por %p100, %p101
    %p103 = scmp.ne.s32.totalorder %s89, %s90
    %p104 = scmp.eq.s32.totalorder %s14, 1
    %p105 = por %p103, %p104
    %p107 = scmp.ne.s32.totalorder %s90, %s106
    %p108 = scmp.eq.s32.totalorder %s14, 0
    %p109 = por %p107, %p108
    %p110 = scmp.le.s32.totalorder 1, %s8
    %p111 = scmp.lt.s32.totalorder %s8, 3
    %p112 = pnand %p110, %p111
    %p113 = pneg %p112
    // Predicated region
    $region9: #{cyclegan_forward.138} parent=5 // pred_check
      _
    $region10: #{cyclegan_forward.138} parent=5 // pred_check_branch
      %115 = sbr.rel (%p112) target = $region12
    $region11: #{cyclegan_forward.138} parent=5 // pred_region
      %s116 = ssub.s32 %s8, 1
    $region12: #{cyclegan_forward.138} parent=5 // pred_fallthru
      _
    %p117 = scmp.lt.s32.totalorder %s8, 2
    // Predicated region
    $region13: #{cyclegan_forward.138} parent=5 // pred_check
      %p118 = pneg %p117
    $region14: #{cyclegan_forward.138} parent=5 // pred_check_branch
      %120 = sbr.rel (%p118) target = $region16
    $region15: #{cyclegan_forward.138} parent=5 // pred_region
      // Predicated region
      $region17: #{cyclegan_forward.138} parent=15 // pred_check
        %p121 = pneg %p42
      $region18: #{cyclegan_forward.138} parent=15 // pred_check_branch
        %123 = sbr.rel (%p121) target = $region20
      $region19: #{cyclegan_forward.138} parent=15 // pred_region
        %s124 = sadd.s32 %s15, %s16
        %s125 = smul.u32 32, %s124
        %p126 = scmp.lt.s32.totalorder %s125, 63
        %s127 = scalar_select %p126, %s125, 63
        %s128 = smul.addr %s127, 4
        %s129 = scalar_lea.vmem %s0, %s128
        %s130 = sadd.s32 %s15, %s16
        %s131 = smul.u32 32, %s130
      $region20: #{cyclegan_forward.138} parent=15 // pred_fallthru
        _
      // Predicated region
      $region21: #{cyclegan_forward.138} parent=15 // pred_check
        %p132 = pneg %p68
      $region22: #{cyclegan_forward.138} parent=15 // pred_check_branch
        %134 = sbr.rel (%p132) target = $region24
      $region23: #{cyclegan_forward.138} parent=15 // pred_region
        %p135 = scmp.lt.s32.totalorder %s15, 1
        %s136 = scalar_select %p135, %s15, 1
        %s137 = smul.addr %s136, 8
        %s138 = scalar_lea.vmem %s1, %s137
      $region24: #{cyclegan_forward.138} parent=15 // pred_fallthru
        _
    $region16: #{cyclegan_forward.138} parent=5 // pred_fallthru
      _
    %p139 = scmp.le.s32.totalorder 1, %s8
    %p140 = scmp.lt.s32.totalorder %s8, 3
    %p141 = pnand %p139, %p140
    %p142 = pneg %p141
    // Predicated region
    $region25: #{cyclegan_forward.138} parent=5 // pred_check
      _
    $region26: #{cyclegan_forward.138} parent=5 // pred_check_branch
      %144 = sbr.rel (%p141) target = $region28
    $region27: #{cyclegan_forward.138} parent=5 // pred_region
      %s145 = ssub.s32 %s8, 1
      %s146 = sadd.s32 %s17, %s18
      %s147 = smul.u32 32, %s146
      %p148 = scmp.lt.s32.totalorder %s147, 63
      %s149 = scalar_select %p148, %s147, 63
      %s150 = smul.addr %s149, 4
      %s151 = scalar_lea.vmem %s0, %s150
      %p152 = pneg %p48
      %p153 = pneg %p45
      %p154 = scmp.lt.s32.totalorder %s17, 1
      %s155 = scalar_select %p154, %s17, 1
      %s156 = smul.addr %s155, 8
      %s157 = scalar_lea.vmem %s1, %s156
      %p158 = pneg %p74
      %p159 = pneg %p71
      %p160 = pneg %p102
      %p161 = pneg %p99
      %s162 = sadd.s32 %s17, %s18
      %s163 = smul.u32 32, %s162
      %p164 = scmp.lt.s32.totalorder %s163, 63
      %s165 = scalar_select %p164, %s163, 63
      %s166 = smul.addr %s165, 4
      %s167 = scalar_lea.vmem %s2, %s166
      %s168 = sadd.s32 %s17, %s18
      %s169 = smul.u32 32, %s168
      %p170 = scmp.lt.s32.totalorder %s169, 63
      %s171 = scalar_select %p170, %s169, 63
      %s172 = smul.addr %s171, 4
      %s173 = scalar_lea.vmem %s0, %s172
      %s174 = sadd.s32 %s17, %s18
      %s175 = smul.u32 32, %s174
      %p176 = scmp.lt.s32.totalorder %s17, 1
      %s177 = scalar_select %p176, %s17, 1
      %s178 = smul.addr %s177, 8
      %s179 = scalar_lea.vmem %s1, %s178
      %s180 = sadd.s32 %s17, %s18
      %s181 = smul.u32 32, %s180
      %p182 = scmp.lt.s32.totalorder %s181, 63
      %s183 = scalar_select %p182, %s181, 63
      %s184 = smul.addr %s183, 4
      %s185 = scalar_lea.vmem %s2, %s184
      %s186 = sadd.s32 %s17, %s18
      %s187 = smul.u32 32, %s186
      %v188 = vld [vmem:[%s173] sm:$0xf]
      %v189 = vld [vmem:[%s173 + $0x4] sm:$0xf]
      %v190 = vld [vmem:[%s173 + $0x8] sm:$0xf]
      %v191 = vld [vmem:[%s173 + $0xc] sm:$0xf]
      %v192 = vld [vmem:[%s173 + $0x10] sm:$0xf]
      %v193 = vld [vmem:[%s173 + $0x14] sm:$0xf]
      %v194 = vld [vmem:[%s173 + $0x18] sm:$0xf]
      %v195 = vld [vmem:[%s173 + $0x1c] sm:$0xf]
      %v196 = vld [vmem:[%s173 + $0x20] sm:$0xf]
      %v197 = vld [vmem:[%s173 + $0x24] sm:$0xf]
      %v198 = vld [vmem:[%s173 + $0x28] sm:$0xf]
      %v199 = vld [vmem:[%s173 + $0x2c] sm:$0xf]
      %v200 = vld [vmem:[%s173 + $0x30] sm:$0xf]
      %v201 = vld [vmem:[%s173 + $0x34] sm:$0xf]
      %v202 = vld [vmem:[%s173 + $0x38] sm:$0xf]
      %v203 = vld [vmem:[%s173 + $0x3c] sm:$0xf]
      %v204 = vld [vmem:[%s173 + $0x40] sm:$0xf]
      %v205 = vld [vmem:[%s173 + $0x44] sm:$0xf]
      %v206 = vld [vmem:[%s173 + $0x48] sm:$0xf]
      %v207 = vld [vmem:[%s173 + $0x4c] sm:$0xf]
      %v208 = vld [vmem:[%s173 + $0x50] sm:$0xf]
      %v209 = vld [vmem:[%s173 + $0x54] sm:$0xf]
      %v210 = vld [vmem:[%s173 + $0x58] sm:$0xf]
      %v211 = vld [vmem:[%s173 + $0x5c] sm:$0xf]
      %v212 = vld [vmem:[%s173 + $0x60] sm:$0xf]
      %v213 = vld [vmem:[%s173 + $0x64] sm:$0xf]
      %v214 = vld [vmem:[%s173 + $0x68] sm:$0xf]
      %v215 = vld [vmem:[%s173 + $0x6c] sm:$0xf]
      %v216 = vld [vmem:[%s173 + $0x70] sm:$0xf]
      %v217 = vld [vmem:[%s173 + $0x74] sm:$0xf]
      %v218 = vld [vmem:[%s173 + $0x78] sm:$0xf]
      %v219 = vld [vmem:[%s173 + $0x7c] sm:$0xf]
      %v220 = vunpack.c.l.bf16 %v188
      %v221 = vunpack.c.l.bf16 %v189
      %v222 = vunpack.c.l.bf16 %v190
      %v223 = vunpack.c.l.bf16 %v191
      %v224 = vunpack.c.l.bf16 %v192
      %v225 = vunpack.c.l.bf16 %v193
      %v226 = vunpack.c.l.bf16 %v194
      %v227 = vunpack.c.l.bf16 %v195
      %v228 = vunpack.c.l.bf16 %v196
      %v229 = vunpack.c.l.bf16 %v197
      %v230 = vunpack.c.l.bf16 %v198
      %v231 = vunpack.c.l.bf16 %v199
      %v232 = vunpack.c.l.bf16 %v200
      %v233 = vunpack.c.l.bf16 %v201
      %v234 = vunpack.c.l.bf16 %v202
      %v235 = vunpack.c.l.bf16 %v203
      %v236 = vunpack.c.l.bf16 %v204
      %v237 = vunpack.c.l.bf16 %v205
      %v238 = vunpack.c.l.bf16 %v206
      %v239 = vunpack.c.l.bf16 %v207
      %v240 = vunpack.c.l.bf16 %v208
      %v241 = vunpack.c.l.bf16 %v209
      %v242 = vunpack.c.l.bf16 %v210
      %v243 = vunpack.c.l.bf16 %v211
      %v244 = vunpack.c.l.bf16 %v212
      %v245 = vunpack.c.l.bf16 %v213
      %v246 = vunpack.c.l.bf16 %v214
      %v247 = vunpack.c.l.bf16 %v215
      %v248 = vunpack.c.l.bf16 %v216
      %v249 = vunpack.c.l.bf16 %v217
      %v250 = vunpack.c.l.bf16 %v218
      %v251 = vunpack.c.l.bf16 %v219
      %v252 = vld [vmem:[%s179] sm:$0x1]
      %v253 = vmul.f32 %v252, 0.00390625
      %v254 = vld [vmem:[%s179 + $0x1] sm:$0x1]
      %v255 = vmul.f32 %v254, 0.00390625
      %v256 = vmul.f32 %v253, %v253
      %v257 = vsub.f32 %v255, %v256
      %v258 = vmax.f32 %v257, 0.0
      %v259 = vlaneseq
      %v260 = vshrl.u32 %v259, 7
      %v261 = vsub.s32 0, %v260
      %v262 = vrot.slane %v253, %v261
      %v263 = vsub.f32 %v220, %v262
      %v264 = vsub.f32 %v221, %v262
      %v265 = vsub.f32 %v222, %v262
      %v266 = vsub.f32 %v223, %v262
      %v267 = vsub.f32 %v224, %v262
      %v268 = vsub.f32 %v225, %v262
      %v269 = vsub.f32 %v226, %v262
      %v270 = vsub.f32 %v227, %v262
      %v271 = vsub.f32 %v228, %v262
      %v272 = vsub.f32 %v229, %v262
      %v273 = vsub.f32 %v230, %v262
      %v274 = vsub.f32 %v231, %v262
      %v275 = vsub.f32 %v232, %v262
      %v276 = vsub.f32 %v233, %v262
      %v277 = vsub.f32 %v234, %v262
      %v278 = vsub.f32 %v235, %v262
      %v279 = vsub.f32 %v236, %v262
      %v280 = vsub.f32 %v237, %v262
      %v281 = vsub.f32 %v238, %v262
      %v282 = vsub.f32 %v239, %v262
      %v283 = vsub.f32 %v240, %v262
      %v284 = vsub.f32 %v241, %v262
      %v285 = vsub.f32 %v242, %v262
      %v286 = vsub.f32 %v243, %v262
      %v287 = vsub.f32 %v244, %v262
      %v288 = vsub.f32 %v245, %v262
      %v289 = vsub.f32 %v246, %v262
      %v290 = vsub.f32 %v247, %v262
      %v291 = vsub.f32 %v248, %v262
      %v292 = vsub.f32 %v249, %v262
      %v293 = vsub.f32 %v250, %v262
      %v294 = vsub.f32 %v251, %v262
      %v295 = vadd.f32 %v258, 1e-05
      %v296 = vrsqrt.pop %v295
      %v297 = vlaneseq
      %v298 = vshrl.u32 %v297, 7
      %v299 = vsub.s32 0, %v298
      %v300 = vrot.slane %v296, %v299
      %v301 = vmul.f32 %v263, %v300
      %v302 = vmul.f32 %v264, %v300
      %v303 = vmul.f32 %v265, %v300
      %v304 = vmul.f32 %v266, %v300
      %v305 = vmul.f32 %v267, %v300
      %v306 = vmul.f32 %v268, %v300
      %v307 = vmul.f32 %v269, %v300
      %v308 = vmul.f32 %v270, %v300
      %v309 = vmul.f32 %v271, %v300
      %v310 = vmul.f32 %v272, %v300
      %v311 = vmul.f32 %v273, %v300
      %v312 = vmul.f32 %v274, %v300
      %v313 = vmul.f32 %v275, %v300
      %v314 = vmul.f32 %v276, %v300
      %v315 = vmul.f32 %v277, %v300
      %v316 = vmul.f32 %v278, %v300
      %v317 = vmul.f32 %v279, %v300
      %v318 = vmul.f32 %v280, %v300
      %v319 = vmul.f32 %v281, %v300
      %v320 = vmul.f32 %v282, %v300
      %v321 = vmul.f32 %v283, %v300
      %v322 = vmul.f32 %v284, %v300
      %v323 = vmul.f32 %v285, %v300
      %v324 = vmul.f32 %v286, %v300
      %v325 = vmul.f32 %v287, %v300
      %v326 = vmul.f32 %v288, %v300
      %v327 = vmul.f32 %v289, %v300
      %v328 = vmul.f32 %v290, %v300
      %v329 = vmul.f32 %v291, %v300
      %v330 = vmul.f32 %v292, %v300
      %v331 = vmul.f32 %v293, %v300
      %v332 = vmul.f32 %v294, %v300
      %v333 = vmax.f32 %v301, 0.0
      %v334 = vmax.f32 %v302, 0.0
      %v335 = vmax.f32 %v303, 0.0
      %v336 = vmax.f32 %v304, 0.0
      %v337 = vmax.f32 %v305, 0.0
      %v338 = vmax.f32 %v306, 0.0
      %v339 = vmax.f32 %v307, 0.0
      %v340 = vmax.f32 %v308, 0.0
      %v341 = vmax.f32 %v309, 0.0
      %v342 = vmax.f32 %v310, 0.0
      %v343 = vmax.f32 %v311, 0.0
      %v344 = vmax.f32 %v312, 0.0
      %v345 = vmax.f32 %v313, 0.0
      %v346 = vmax.f32 %v314, 0.0
      %v347 = vmax.f32 %v315, 0.0
      %v348 = vmax.f32 %v316, 0.0
      %v349 = vmax.f32 %v317, 0.0
      %v350 = vmax.f32 %v318, 0.0
      %v351 = vmax.f32 %v319, 0.0
      %v352 = vmax.f32 %v320, 0.0
      %v353 = vmax.f32 %v321, 0.0
      %v354 = vmax.f32 %v322, 0.0
      %v355 = vmax.f32 %v323, 0.0
      %v356 = vmax.f32 %v324, 0.0
      %v357 = vmax.f32 %v325, 0.0
      %v358 = vmax.f32 %v326, 0.0
      %v359 = vmax.f32 %v327, 0.0
      %v360 = vmax.f32 %v328, 0.0
      %v361 = vmax.f32 %v329, 0.0
      %v362 = vmax.f32 %v330, 0.0
      %v363 = vmax.f32 %v331, 0.0
      %v364 = vmax.f32 %v332, 0.0
      %v365 = vpack.c.bf16 %v334, %v333
      %v366 = vpack.c.bf16 %v336, %v335
      %v367 = vpack.c.bf16 %v338, %v337
      %v368 = vpack.c.bf16 %v340, %v339
      %v369 = vpack.c.bf16 %v342, %v341
      %v370 = vpack.c.bf16 %v344, %v343
      %v371 = vpack.c.bf16 %v346, %v345
      %v372 = vpack.c.bf16 %v348, %v347
      %v373 = vpack.c.bf16 %v350, %v349
      %v374 = vpack.c.bf16 %v352, %v351
      %v375 = vpack.c.bf16 %v354, %v353
      %v376 = vpack.c.bf16 %v356, %v355
      %v377 = vpack.c.bf16 %v358, %v357
      %v378 = vpack.c.bf16 %v360, %v359
      %v379 = vpack.c.bf16 %v362, %v361
      %v380 = vpack.c.bf16 %v364, %v363
      %v397 = vunpack.c.l.b16 %v365
      %v398 = vunpack.c.h.b16 %v365
      %v399 = vunpack.c.l.b16 %v366
      %v400 = vunpack.c.h.b16 %v366
      %v401 = vunpack.c.l.b16 %v367
      %v402 = vunpack.c.h.b16 %v367
      %v403 = vunpack.c.l.b16 %v368
      %v404 = vunpack.c.h.b16 %v368
      %v405 = vunpack.c.l.b16 %v369
      %v406 = vunpack.c.h.b16 %v369
      %v407 = vunpack.c.l.b16 %v370
      %v408 = vunpack.c.h.b16 %v370
      %v409 = vunpack.c.l.b16 %v371
      %v410 = vunpack.c.h.b16 %v371
      %v411 = vunpack.c.l.b16 %v372
      %v412 = vunpack.c.h.b16 %v372
      %v413 = vunpack.c.l.b16 %v373
      %v414 = vunpack.c.h.b16 %v373
      %v415 = vunpack.c.l.b16 %v374
      %v416 = vunpack.c.h.b16 %v374
      %v417 = vunpack.c.l.b16 %v375
      %v418 = vunpack.c.h.b16 %v375
      %v419 = vunpack.c.l.b16 %v376
      %v420 = vunpack.c.h.b16 %v376
      %v421 = vunpack.c.l.b16 %v377
      %v422 = vunpack.c.h.b16 %v377
      %v423 = vunpack.c.l.b16 %v378
      %v424 = vunpack.c.h.b16 %v378
      %v425 = vunpack.c.l.b16 %v379
      %v426 = vunpack.c.h.b16 %v379
      %v427 = vunpack.c.l.b16 %v380
      %v428 = vunpack.c.h.b16 %v380
      %v429 = vpack.c.b16 %v397, %v397
      %v430 = vpack.c.b16 %v398, %v398
      %v431 = vpack.c.b16 %v399, %v399
      %v432 = vpack.c.b16 %v400, %v400
      %v433 = vpack.c.b16 %v401, %v401
      %v434 = vpack.c.b16 %v402, %v402
      %v435 = vpack.c.b16 %v403, %v403
      %v436 = vpack.c.b16 %v404, %v404
      %v437 = vpack.c.b16 %v405, %v405
      %v438 = vpack.c.b16 %v406, %v406
      %v439 = vpack.c.b16 %v407, %v407
      %v440 = vpack.c.b16 %v408, %v408
      %v441 = vpack.c.b16 %v409, %v409
      %v442 = vpack.c.b16 %v410, %v410
      %v443 = vpack.c.b16 %v411, %v411
      %v444 = vpack.c.b16 %v412, %v412
      %v445 = vpack.c.b16 %v413, %v413
      %v446 = vpack.c.b16 %v414, %v414
      %v447 = vpack.c.b16 %v415, %v415
      %v448 = vpack.c.b16 %v416, %v416
      %v449 = vpack.c.b16 %v417, %v417
      %v450 = vpack.c.b16 %v418, %v418
      %v451 = vpack.c.b16 %v419, %v419
      %v452 = vpack.c.b16 %v420, %v420
      %v453 = vpack.c.b16 %v421, %v421
      %v454 = vpack.c.b16 %v422, %v422
      %v455 = vpack.c.b16 %v423, %v423
      %v456 = vpack.c.b16 %v424, %v424
      %v457 = vpack.c.b16 %v425, %v425
      %v458 = vpack.c.b16 %v426, %v426
      %v459 = vpack.c.b16 %v427, %v427
      %v460 = vpack.c.b16 %v428, %v428
      %493 = vst [vmem:[%s185] sm:$0xf] %v429
      %494 = vst [vmem:[%s185 + $0x4] sm:$0xf] %v430
      %495 = vst [vmem:[%s185 + $0x8] sm:$0xf] %v431
      %496 = vst [vmem:[%s185 + $0xc] sm:$0xf] %v432
      %497 = vst [vmem:[%s185 + $0x10] sm:$0xf] %v433
      %498 = vst [vmem:[%s185 + $0x14] sm:$0xf] %v434
      %499 = vst [vmem:[%s185 + $0x18] sm:$0xf] %v435
      %500 = vst [vmem:[%s185 + $0x1c] sm:$0xf] %v436
      %501 = vst [vmem:[%s185 + $0x20] sm:$0xf] %v437
      %502 = vst [vmem:[%s185 + $0x24] sm:$0xf] %v438
      %503 = vst [vmem:[%s185 + $0x28] sm:$0xf] %v439
      %504 = vst [vmem:[%s185 + $0x2c] sm:$0xf] %v440
      %505 = vst [vmem:[%s185 + $0x30] sm:$0xf] %v441
      %506 = vst [vmem:[%s185 + $0x34] sm:$0xf] %v442
      %507 = vst [vmem:[%s185 + $0x38] sm:$0xf] %v443
      %508 = vst [vmem:[%s185 + $0x3c] sm:$0xf] %v444
      %509 = vst [vmem:[%s185 + $0x40] sm:$0xf] %v445
      %510 = vst [vmem:[%s185 + $0x44] sm:$0xf] %v446
      %511 = vst [vmem:[%s185 + $0x48] sm:$0xf] %v447
      %512 = vst [vmem:[%s185 + $0x4c] sm:$0xf] %v448
      %513 = vst [vmem:[%s185 + $0x50] sm:$0xf] %v449
      %514 = vst [vmem:[%s185 + $0x54] sm:$0xf] %v450
      %515 = vst [vmem:[%s185 + $0x58] sm:$0xf] %v451
      %516 = vst [vmem:[%s185 + $0x5c] sm:$0xf] %v452
      %517 = vst [vmem:[%s185 + $0x60] sm:$0xf] %v453
      %518 = vst [vmem:[%s185 + $0x64] sm:$0xf] %v454
      %519 = vst [vmem:[%s185 + $0x68] sm:$0xf] %v455
      %520 = vst [vmem:[%s185 + $0x6c] sm:$0xf] %v456
      %521 = vst [vmem:[%s185 + $0x70] sm:$0xf] %v457
      %522 = vst [vmem:[%s185 + $0x74] sm:$0xf] %v458
      %523 = vst [vmem:[%s185 + $0x78] sm:$0xf] %v459
      %524 = vst [vmem:[%s185 + $0x7c] sm:$0xf] %v460
      %s525 = sadd.s32 %s17, %s18
      %s526 = smul.u32 32, %s525
      %p527 = scmp.lt.s32.totalorder %s526, 63
      %s528 = scalar_select %p527, %s526, 63
      %s529 = smul.addr %s528, 4
      %s530 = scalar_lea.vmem %s2, %s529
      // Predicated region
      $region29: #{cyclegan_forward.138} parent=27 // pred_check
        %p531 = pneg %p99
      $region30: #{cyclegan_forward.138} parent=27 // pred_check_branch
        %533 = sbr.rel (%p531) target = $region32
      $region31: #{cyclegan_forward.138} parent=27 // pred_region
        %s534 = sadd.s32 %s17, %s18
        %s535 = smul.u32 32, %s534
      $region32: #{cyclegan_forward.138} parent=27 // pred_fallthru
        _
    $region28: #{cyclegan_forward.138} parent=5 // pred_fallthru
      _
    %p536 = scmp.le.s32.totalorder 2, %s8
    // Predicated region
    $region33: #{cyclegan_forward.138} parent=5 // pred_check
      %p537 = pneg %p536
    $region34: #{cyclegan_forward.138} parent=5 // pred_check_branch
      %539 = sbr.rel (%p537) target = $region36
    $region35: #{cyclegan_forward.138} parent=5 // pred_region
      %s540 = ssub.s32 %s8, 2
      // Predicated region
      $region37: #{cyclegan_forward.138} parent=35 // pred_check
        %p541 = pneg %p105
      $region38: #{cyclegan_forward.138} parent=35 // pred_check_branch
        %543 = sbr.rel (%p541) target = $region40
      $region39: #{cyclegan_forward.138} parent=35 // pred_region
        %s544 = sadd.s32 %s19, %s20
        %s545 = smul.u32 32, %s544
        %p546 = scmp.lt.s32.totalorder %s545, 63
        %s547 = scalar_select %p546, %s545, 63
        %s548 = smul.addr %s547, 4
        %s549 = scalar_lea.vmem %s2, %s548
      $region40: #{cyclegan_forward.138} parent=35 // pred_fallthru
        _
    $region36: #{cyclegan_forward.138} parent=5 // pred_fallthru
      _
  $region6: #{cyclegan_forward.138} parent=0 // loop_footer
    %s12 = sadd.s32 1, %s8
  $region7: #{cyclegan_forward.138} parent=0 // loop_footer_branch
    %7 = sbr.rel target = $region3
  $region8: #{cyclegan_forward.138} parent=0 // loop_exit
    _

// kernel: cyclegan_forward.139
$region0: #{cyclegan_forward.139}
  #allocation0 [shape = 'u32[]', space=smem, size = 0x4, offset = 0x4, fixed_abs, tag = 'smem constant byte address 0x4 - core index']
  #allocation1 [shape = 'u32[144,128]{1,0:T(1,128)}', space=vmem, size = 0x12000, scoped, tag = 'internal scratch']
  #allocation2 [shape = 'f32[256,128]{1,0:T(8,128)}', space=vmem, size = 0x20000, scoped, tag = 'scratch operand']
  %s0 = inlined_call_operand.vmem [shape: bf16[512,512], index: 0, kind: input, shape index: {}]
  %s1 = inlined_call_operand.vmem [shape: bf16[512,128], index: 1, kind: input, shape index: {}]
  %s2 = inlined_call_operand.vmem [shape: f32[1,128], index: 2, kind: input, shape index: {}]
  %s3 = inlined_call_operand.vmem [shape: f32[512,128], index: 3, kind: output, shape index: {}]
  %s4 = sld [smem:[#allocation0]]
  $region53: #{cyclegan_forward.139} parent=0
    _
  %s6 = ssub.s32 1, %s4
  %s7 = scalar_select 0, %s6, %s4
  loop: start=0, step=1, limit=4
  $region2: #{cyclegan_forward.139} parent=0 // loop_pre_header
    _
  $region3: #{cyclegan_forward.139} parent=0 // loop_header
    %s9 = sphi 0, %s13
    %p10 = scmp.ge.s32.totalorder %s9, 4
    %s16 = sphi 0, %s35
    %s17 = sphi 0, %s31
    %s18 = sphi 0, %s27
    %s19 = sphi 0, %s16
    %s20 = sphi 0, %s17
    %s21 = sphi 0, %s18
    %s22 = sphi 0, %s19
    %s23 = sphi 0, %s20
    %s24 = sphi 0, %s21
    %s40 = sphi 0, %s42
    %s43 = sphi 0, %s40
    %s44 = sphi 0, %s43
    %s60 = sphi 0, %s44
    %s68 = sphi 0, %s70
    %s71 = sphi 0, %s68
    %s72 = sphi 0, %s71
    %s88 = sphi 0, %s72
    %s94 = sphi 0, %s96
    %s97 = sphi 0, %s94
    %s98 = sphi 0, %s97
    %s114 = sphi 0, %s98
    %s122 = sphi 0, %s124
    %s125 = sphi 0, %s122
    %s126 = sphi 0, %s125
    %s142 = sphi 0, %s126
  $region4: #{cyclegan_forward.139} parent=0 // loop_header_branch
    %12 = sbr.rel (%p10) target = $region8
  $region5: #{cyclegan_forward.139} parent=0 // loop_body
    %s14 = ssub.s32 %s9, 1
    %s15 = ssub.s32 %s9, 2
    %s25 = sadd.s32 1, %s18
    %p26 = scmp.ge.s32.totalorder %s25, 1
    %s27 = scalar_select %p26, 0, %s25
    %s28 = sadd.s32 1, %s17
    %s29 = scalar_select %p26, %s28, %s17
    %p30 = scmp.ge.s32.totalorder %s29, 1
    %s31 = scalar_select %p30, 0, %s29
    %s32 = sadd.s32 1, %s16
    %s33 = scalar_select %p30, %s32, %s16
    %p34 = scmp.ge.s32.totalorder %s33, 2
    %s35 = scalar_select %p34, 0, %s33
    %s36 = ssub.s32 %s16, %s35
    %s37 = ssub.s32 %s18, %s27
    %s38 = sor.u32 %s36, %s37
    %p39 = scmp.eq.s32.totalorder %s38, 0
    %s41 = sadd.s32 %s40, 1
    %s42 = scalar_select %p39, %s40, %s41
    %p45 = pneg %p39
    %p46 = scmp.eq.s32.totalorder %s9, 1
    %p47 = por %p45, %p46
    %p48 = scmp.ne.s32.totalorder %s40, %s43
    %p49 = scmp.eq.s32.totalorder %s9, 0
    %p50 = por %p48, %p49
    %p51 = scmp.ne.s32.totalorder %s40, %s43
    %p52 = scmp.eq.s32.totalorder %s14, 1
    %p53 = por %p51, %p52
    %p54 = scmp.ne.s32.totalorder %s43, %s44
    %p55 = scmp.eq.s32.totalorder %s14, 0
    %p56 = por %p54, %p55
    %p57 = scmp.ne.s32.totalorder %s43, %s44
    %p58 = scmp.eq.s32.totalorder %s15, 1
    %p59 = por %p57, %p58
    %p61 = scmp.ne.s32.totalorder %s44, %s60
    %p62 = scmp.eq.s32.totalorder %s15, 0
    %p63 = por %p61, %p62
    %s64 = ssub.s32 %s18, %s27
    %s65 = ssub.s32 %s17, %s31
    %s66 = sor.u32 %s64, %s65
    %p67 = scmp.eq.s32.totalorder %s66, 0
    %s69 = sadd.s32 %s68, 1
    %s70 = scalar_select %p67, %s68, %s69
    %p73 = pneg %p67
    %p74 = scmp.eq.s32.totalorder %s9, 1
    %p75 = por %p73, %p74
    %p76 = scmp.ne.s32.totalorder %s68, %s71
    %p77 = scmp.eq.s32.totalorder %s9, 0
    %p78 = por %p76, %p77
    %p79 = scmp.ne.s32.totalorder %s68, %s71
    %p80 = scmp.eq.s32.totalorder %s14, 1
    %p81 = por %p79, %p80
    %p82 = scmp.ne.s32.totalorder %s71, %s72
    %p83 = scmp.eq.s32.totalorder %s14, 0
    %p84 = por %p82, %p83
    %p85 = scmp.ne.s32.totalorder %s71, %s72
    %p86 = scmp.eq.s32.totalorder %s15, 1
    %p87 = por %p85, %p86
    %p89 = scmp.ne.s32.totalorder %s72, %s88
    %p90 = scmp.eq.s32.totalorder %s15, 0
    %p91 = por %p89, %p90
    %s92 = ssub.s32 %s17, %s31
    %p93 = scmp.eq.s32.totalorder %s92, 0
    %s95 = sadd.s32 %s94, 1
    %s96 = scalar_select %p93, %s94, %s95
    %p99 = pneg %p93
    %p100 = scmp.eq.s32.totalorder %s9, 1
    %p101 = por %p99, %p100
    %p102 = scmp.ne.s32.totalorder %s94, %s97
    %p103 = scmp.eq.s32.totalorder %s9, 0
    %p104 = por %p102, %p103
    %p105 = scmp.ne.s32.totalorder %s94, %s97
    %p106 = scmp.eq.s32.totalorder %s14, 1
    %p107 = por %p105, %p106
    %p108 = scmp.ne.s32.totalorder %s97, %s98
    %p109 = scmp.eq.s32.totalorder %s14, 0
    %p110 = por %p108, %p109
    %p111 = scmp.ne.s32.totalorder %s97, %s98
    %p112 = scmp.eq.s32.totalorder %s15, 1
    %p113 = por %p111, %p112
    %p115 = scmp.ne.s32.totalorder %s98, %s114
    %p116 = scmp.eq.s32.totalorder %s15, 0
    %p117 = por %p115, %p116
    %s118 = ssub.s32 %s16, %s35
    %s119 = ssub.s32 %s17, %s31
    %s120 = sor.u32 %s118, %s119
    %p121 = scmp.eq.s32.totalorder %s120, 0
    %s123 = sadd.s32 %s122, 1
    %s124 = scalar_select %p121, %s122, %s123
    %p127 = pneg %p121
    %p128 = scmp.eq.s32.totalorder %s9, 1
    %p129 = por %p127, %p128
    %p130 = scmp.ne.s32.totalorder %s122, %s125
    %p131 = scmp.eq.s32.totalorder %s9, 0
    %p132 = por %p130, %p131
    %p133 = scmp.ne.s32.totalorder %s122, %s125
    %p134 = scmp.eq.s32.totalorder %s14, 1
    %p135 = por %p133, %p134
    %p136 = scmp.ne.s32.totalorder %s125, %s126
    %p137 = scmp.eq.s32.totalorder %s14, 0
    %p138 = por %p136, %p137
    %p139 = scmp.ne.s32.totalorder %s125, %s126
    %p140 = scmp.eq.s32.totalorder %s15, 1
    %p141 = por %p139, %p140
    %p143 = scmp.ne.s32.totalorder %s126, %s142
    %p144 = scmp.eq.s32.totalorder %s15, 0
    %p145 = por %p143, %p144
    %p146 = scmp.le.s32.totalorder 1, %s9
    %p147 = scmp.lt.s32.totalorder %s9, 3
    %p148 = pnand %p146, %p147
    %p149 = pneg %p148
    // Predicated region
    $region9: #{cyclegan_forward.139} parent=5 // pred_check
      _
    $region10: #{cyclegan_forward.139} parent=5 // pred_check_branch
      %151 = sbr.rel (%p148) target = $region12
    $region11: #{cyclegan_forward.139} parent=5 // pred_region
      %s152 = ssub.s32 %s9, 1
      // Predicated region
      $region13: #{cyclegan_forward.139} parent=11 // pred_check
        %p153 = pneg %p84
      $region14: #{cyclegan_forward.139} parent=11 // pred_check_branch
        %155 = sbr.rel (%p153) target = $region16
      $region15: #{cyclegan_forward.139} parent=11 // pred_region
        %s156 = smul.u32 64, %s21
        %p157 = scmp.lt.s32.totalorder %s156, 63
        %s158 = scalar_select %p157, %s156, 63
        %p159 = scmp.lt.s32.totalorder %s20, 0
        %s160 = scalar_select %p159, %s20, 0
        %s161 = sadd.s32 %s160, %s158
        %s162 = smul.addr %s161, 4
        %s163 = scalar_lea.vmem %s1, %s162
        %s164 = smul.u32 64, %s21
      $region16: #{cyclegan_forward.139} parent=11 // pred_fallthru
        _
      // Predicated region
      $region17: #{cyclegan_forward.139} parent=11 // pred_check
        %p165 = pneg %p110
      $region18: #{cyclegan_forward.139} parent=11 // pred_check_branch
        %167 = sbr.rel (%p165) target = $region20
      $region19: #{cyclegan_forward.139} parent=11 // pred_region
        %p168 = scmp.lt.s32.totalorder %s20, 0
        %s169 = scalar_select %p168, %s20, 0
        %s170 = scalar_lea.vmem %s2, %s169
      $region20: #{cyclegan_forward.139} parent=11 // pred_fallthru
        _
    $region12: #{cyclegan_forward.139} parent=5 // pred_fallthru
      _
    %p171 = scmp.lt.s32.totalorder %s9, 2
    // Predicated region
    $region21: #{cyclegan_forward.139} parent=5 // pred_check
      %p172 = pneg %p171
    $region22: #{cyclegan_forward.139} parent=5 // pred_check_branch
      %174 = sbr.rel (%p172) target = $region24
    $region23: #{cyclegan_forward.139} parent=5 // pred_region
      // Predicated region
      $region25: #{cyclegan_forward.139} parent=23 // pred_check
        %p175 = pneg %p50
      $region26: #{cyclegan_forward.139} parent=23 // pred_check_branch
        %177 = sbr.rel (%p175) target = $region28
      $region27: #{cyclegan_forward.139} parent=23 // pred_region
        %s178 = smul.u32 32, %s16
        %s179 = smul.u32 4, %s18
        %p180 = scmp.lt.s32.totalorder %s178, 63
        %s181 = scalar_select %p180, %s178, 63
        %p182 = scmp.lt.s32.totalorder %s179, 3
        %s183 = scalar_select %p182, %s179, 3
        %s184 = smul.addr %s181, 4
        %s185 = sadd.s32 %s183, %s184
        %s186 = smul.addr %s185, 4
        %s187 = scalar_lea.vmem %s0, %s186
        %s188 = smul.u32 32, %s16
        %s189 = smul.u32 4, %s18
      $region28: #{cyclegan_forward.139} parent=23 // pred_fallthru
        _
    $region24: #{cyclegan_forward.139} parent=5 // pred_fallthru
      _
    %p190 = scmp.le.s32.totalorder 1, %s9
    %p191 = scmp.lt.s32.totalorder %s9, 3
    %p192 = pnand %p190, %p191
    %p193 = pneg %p192
    // Predicated region
    $region29: #{cyclegan_forward.139} parent=5 // pred_check
      _
    $region30: #{cyclegan_forward.139} parent=5 // pred_check_branch
      %195 = sbr.rel (%p192) target = $region32
    $region31: #{cyclegan_forward.139} parent=5 // pred_region
      %s196 = ssub.s32 %s9, 1
      %s197 = smul.u32 32, %s19
      %s198 = smul.u32 4, %s21
      %p199 = scmp.lt.s32.totalorder %s197, 63
      %s200 = scalar_select %p199, %s197, 63
      %p201 = scmp.lt.s32.totalorder %s198, 3
      %s202 = scalar_select %p201, %s198, 3
      %s203 = smul.addr %s200, 4
      %s204 = sadd.s32 %s202, %s203
      %s205 = smul.addr %s204, 4
      %s206 = scalar_lea.vmem %s0, %s205
      %p207 = pneg %p56
      %p208 = pneg %p53
      %s209 = smul.u32 64, %s21
      %p210 = scmp.lt.s32.totalorder %s209, 63
      %s211 = scalar_select %p210, %s209, 63
      %p212 = scmp.lt.s32.totalorder %s20, 0
      %s213 = scalar_select %p212, %s20, 0
      %s214 = sadd.s32 %s213, %s211
      %s215 = smul.addr %s214, 4
      %s216 = scalar_lea.vmem %s1, %s215
      %p217 = pneg %p84
      %p218 = pneg %p81
      %p219 = scmp.lt.s32.totalorder %s20, 0
      %s220 = scalar_select %p219, %s20, 0
      %s221 = scalar_lea.vmem %s2, %s220
      %p222 = pneg %p110
      %p223 = pneg %p107
      %p224 = pneg %p138
      %p225 = pneg %p135
      %s226 = smul.u32 32, %s19
      %p227 = scmp.lt.s32.totalorder %s226, 63
      %s228 = scalar_select %p227, %s226, 63
      %p229 = scmp.lt.s32.totalorder %s20, 0
      %s230 = scalar_select %p229, %s20, 0
      %s231 = sadd.s32 %s230, %s228
      %s232 = smul.addr %s231, 8
      %s233 = scalar_lea.vmem %s3, %s232
      %s234 = smul.u32 32, %s19
      %s235 = smul.u32 4, %s21
      %p236 = scmp.lt.s32.totalorder %s234, 63
      %s237 = scalar_select %p236, %s234, 63
      %p238 = scmp.lt.s32.totalorder %s235, 3
      %s239 = scalar_select %p238, %s235, 3
      %s240 = smul.addr %s237, 4
      %s241 = sadd.s32 %s239, %s240
      %s242 = smul.addr %s241, 4
      %s243 = scalar_lea.vmem %s0, %s242
      %s244 = smul.u32 32, %s19
      %s245 = smul.u32 4, %s21
      %s246 = smul.u32 64, %s21
      %p247 = scmp.lt.s32.totalorder %s246, 63
      %s248 = scalar_select %p247, %s246, 63
      %p249 = scmp.lt.s32.totalorder %s20, 0
      %s250 = scalar_select %p249, %s20, 0
      %s251 = sadd.s32 %s250, %s248
      %s252 = smul.addr %s251, 4
      %s253 = scalar_lea.vmem %s1, %s252
      %s254 = smul.u32 64, %s21
      %p255 = scmp.lt.s32.totalorder %s20, 0
      %s256 = scalar_select %p255, %s20, 0
      %s257 = scalar_lea.vmem %s2, %s256
      %s258 = smul.u32 32, %s19
      %p259 = scmp.lt.s32.totalorder %s258, 63
      %s260 = scalar_select %p259, %s258, 63
      %p261 = scmp.lt.s32.totalorder %s20, 0
      %s262 = scalar_select %p261, %s20, 0
      %s263 = sadd.s32 %s262, %s260
      %s264 = smul.addr %s263, 8
      %s265 = scalar_lea.vmem %s3, %s264
      %s266 = smul.u32 32, %s19
      %p268 = scmp.eq.s32.totalorder %s21, 0
      // Predicated region
      $region33: #{cyclegan_forward.139} parent=31 // pred_check
        %p269 = pneg %p268
      $region34: #{cyclegan_forward.139} parent=31 // pred_check_branch
        %271 = sbr.rel (%p269) target = $region36
      $region35: #{cyclegan_forward.139} parent=31 // pred_region
        %272 = vst [vmem:[#allocation2] sm:$0xff] 0.0
        %273 = vst [vmem:[#allocation2 + $0x8] sm:$0xff] 0.0
        %274 = vst [vmem:[#allocation2 + $0x10] sm:$0xff] 0.0
        %275 = vst [vmem:[#allocation2 + $0x18] sm:$0xff] 0.0
        %276 = vst [vmem:[#allocation2 + $0x20] sm:$0xff] 0.0
        %277 = vst [vmem:[#allocation2 + $0x28] sm:$0xff] 0.0
        %278 = vst [vmem:[#allocation2 + $0x30] sm:$0xff] 0.0
        %279 = vst [vmem:[#allocation2 + $0x38] sm:$0xff] 0.0
        %280 = vst [vmem:[#allocation2 + $0x40] sm:$0xff] 0.0
        %281 = vst [vmem:[#allocation2 + $0x48] sm:$0xff] 0.0
        %282 = vst [vmem:[#allocation2 + $0x50] sm:$0xff] 0.0
        %283 = vst [vmem:[#allocation2 + $0x58] sm:$0xff] 0.0
        %284 = vst [vmem:[#allocation2 + $0x60] sm:$0xff] 0.0
        %285 = vst [vmem:[#allocation2 + $0x68] sm:$0xff] 0.0
        %286 = vst [vmem:[#allocation2 + $0x70] sm:$0xff] 0.0
        %287 = vst [vmem:[#allocation2 + $0x78] sm:$0xff] 0.0
        %288 = vst [vmem:[#allocation2 + $0x80] sm:$0xff] 0.0
        %289 = vst [vmem:[#allocation2 + $0x88] sm:$0xff] 0.0
        %290 = vst [vmem:[#allocation2 + $0x90] sm:$0xff] 0.0
        %291 = vst [vmem:[#allocation2 + $0x98] sm:$0xff] 0.0
        %292 = vst [vmem:[#allocation2 + $0xa0] sm:$0xff] 0.0
        %293 = vst [vmem:[#allocation2 + $0xa8] sm:$0xff] 0.0
        %294 = vst [vmem:[#allocation2 + $0xb0] sm:$0xff] 0.0
        %295 = vst [vmem:[#allocation2 + $0xb8] sm:$0xff] 0.0
        %296 = vst [vmem:[#allocation2 + $0xc0] sm:$0xff] 0.0
        %297 = vst [vmem:[#allocation2 + $0xc8] sm:$0xff] 0.0
        %298 = vst [vmem:[#allocation2 + $0xd0] sm:$0xff] 0.0
        %299 = vst [vmem:[#allocation2 + $0xd8] sm:$0xff] 0.0
        %300 = vst [vmem:[#allocation2 + $0xe0] sm:$0xff] 0.0
        %301 = vst [vmem:[#allocation2 + $0xe8] sm:$0xff] 0.0
        %302 = vst [vmem:[#allocation2 + $0xf0] sm:$0xff] 0.0
        %303 = vst [vmem:[#allocation2 + $0xf8] sm:$0xff] 0.0
      $region36: #{cyclegan_forward.139} parent=31 // pred_fallthru
        _
      %v304 = vld [vmem:[#allocation2] sm:$0xff]
      %v305 = vld [vmem:[#allocation2 + $0x8] sm:$0xff]
      %v306 = vld [vmem:[#allocation2 + $0x10] sm:$0xff]
      %v307 = vld [vmem:[#allocation2 + $0x18] sm:$0xff]
      %v308 = vld [vmem:[#allocation2 + $0x20] sm:$0xff]
      %v309 = vld [vmem:[#allocation2 + $0x28] sm:$0xff]
      %v310 = vld [vmem:[#allocation2 + $0x30] sm:$0xff]
      %v311 = vld [vmem:[#allocation2 + $0x38] sm:$0xff]
      %v312 = vld [vmem:[#allocation2 + $0x40] sm:$0xff]
      %v313 = vld [vmem:[#allocation2 + $0x48] sm:$0xff]
      %v314 = vld [vmem:[#allocation2 + $0x50] sm:$0xff]
      %v315 = vld [vmem:[#allocation2 + $0x58] sm:$0xff]
      %v316 = vld [vmem:[#allocation2 + $0x60] sm:$0xff]
      %v317 = vld [vmem:[#allocation2 + $0x68] sm:$0xff]
      %v318 = vld [vmem:[#allocation2 + $0x70] sm:$0xff]
      %v319 = vld [vmem:[#allocation2 + $0x78] sm:$0xff]
      %v320 = vld [vmem:[#allocation2 + $0x80] sm:$0xff]
      %v321 = vld [vmem:[#allocation2 + $0x88] sm:$0xff]
      %v322 = vld [vmem:[#allocation2 + $0x90] sm:$0xff]
      %v323 = vld [vmem:[#allocation2 + $0x98] sm:$0xff]
      %v324 = vld [vmem:[#allocation2 + $0xa0] sm:$0xff]
      %v325 = vld [vmem:[#allocation2 + $0xa8] sm:$0xff]
      %v326 = vld [vmem:[#allocation2 + $0xb0] sm:$0xff]
      %v327 = vld [vmem:[#allocation2 + $0xb8] sm:$0xff]
      %v328 = vld [vmem:[#allocation2 + $0xc0] sm:$0xff]
      %v329 = vld [vmem:[#allocation2 + $0xc8] sm:$0xff]
      %v330 = vld [vmem:[#allocation2 + $0xd0] sm:$0xff]
      %v331 = vld [vmem:[#allocation2 + $0xd8] sm:$0xff]
      %v332 = vld [vmem:[#allocation2 + $0xe0] sm:$0xff]
      %v333 = vld [vmem:[#allocation2 + $0xe8] sm:$0xff]
      %v334 = vld [vmem:[#allocation2 + $0xf0] sm:$0xff]
      %v335 = vld [vmem:[#allocation2 + $0xf8] sm:$0xff]
      %v336 = vld [vmem:[%s243] sm:$0xff]
      %v337 = vld [vmem:[%s243 + $0x8] sm:$0xff]
      %v338 = vld [vmem:[%s243 + $0x10] sm:$0xff]
      %v339 = vld [vmem:[%s243 + $0x18] sm:$0xff]
      %v340 = vld [vmem:[%s243 + $0x20] sm:$0xff]
      %v341 = vld [vmem:[%s243 + $0x28] sm:$0xff]
      %v342 = vld [vmem:[%s243 + $0x30] sm:$0xff]
      %v343 = vld [vmem:[%s243 + $0x38] sm:$0xff]
      %v344 = vld [vmem:[%s243 + $0x40] sm:$0xff]
      %v345 = vld [vmem:[%s243 + $0x48] sm:$0xff]
      %v346 = vld [vmem:[%s243 + $0x50] sm:$0xff]
      %v347 = vld [vmem:[%s243 + $0x58] sm:$0xff]
      %v348 = vld [vmem:[%s243 + $0x60] sm:$0xff]
      %v349 = vld [vmem:[%s243 + $0x68] sm:$0xff]
      %v350 = vld [vmem:[%s243 + $0x70] sm:$0xff]
      %v351 = vld [vmem:[%s243 + $0x78] sm:$0xff]
      %v352 = vld [vmem:[%s243 + $0x80] sm:$0xff]
      %v353 = vld [vmem:[%s243 + $0x88] sm:$0xff]
      %v354 = vld [vmem:[%s243 + $0x90] sm:$0xff]
      %v355 = vld [vmem:[%s243 + $0x98] sm:$0xff]
      %v356 = vld [vmem:[%s243 + $0xa0] sm:$0xff]
      %v357 = vld [vmem:[%s243 + $0xa8] sm:$0xff]
      %v358 = vld [vmem:[%s243 + $0xb0] sm:$0xff]
      %v359 = vld [vmem:[%s243 + $0xb8] sm:$0xff]
      %v360 = vld [vmem:[%s243 + $0xc0] sm:$0xff]
      %v361 = vld [vmem:[%s243 + $0xc8] sm:$0xff]
      %v362 = vld [vmem:[%s243 + $0xd0] sm:$0xff]
      %v363 = vld [vmem:[%s243 + $0xd8] sm:$0xff]
      %v364 = vld [vmem:[%s243 + $0xe0] sm:$0xff]
      %v365 = vld [vmem:[%s243 + $0xe8] sm:$0xff]
      %v366 = vld [vmem:[%s243 + $0xf0] sm:$0xff]
      %v367 = vld [vmem:[%s243 + $0xf8] sm:$0xff]
      %v368 = vld [vmem:[%s243 + $0x100] sm:$0xff]
      %v369 = vld [vmem:[%s243 + $0x108] sm:$0xff]
      %v370 = vld [vmem:[%s243 + $0x110] sm:$0xff]
      %v371 = vld [vmem:[%s243 + $0x118] sm:$0xff]
      %v372 = vld [vmem:[%s243 + $0x120] sm:$0xff]
      %v373 = vld [vmem:[%s243 + $0x128] sm:$0xff]
      %v374 = vld [vmem:[%s243 + $0x130] sm:$0xff]
      %v375 = vld [vmem:[%s243 + $0x138] sm:$0xff]
      %v376 = vld [vmem:[%s243 + $0x140] sm:$0xff]
      %v377 = vld [vmem:[%s243 + $0x148] sm:$0xff]
      %v378 = vld [vmem:[%s243 + $0x150] sm:$0xff]
      %v379 = vld [vmem:[%s243 + $0x158] sm:$0xff]
      %v380 = vld [vmem:[%s243 + $0x160] sm:$0xff]
      %v381 = vld [vmem:[%s243 + $0x168] sm:$0xff]
      %v382 = vld [vmem:[%s243 + $0x170] sm:$0xff]
      %v383 = vld [vmem:[%s243 + $0x178] sm:$0xff]
      %v384 = vld [vmem:[%s243 + $0x180] sm:$0xff]
      %v385 = vld [vmem:[%s243 + $0x188] sm:$0xff]
      %v386 = vld [vmem:[%s243 + $0x190] sm:$0xff]
      %v387 = vld [vmem:[%s243 + $0x198] sm:$0xff]
      %v388 = vld [vmem:[%s243 + $0x1a0] sm:$0xff]
      %v389 = vld [vmem:[%s243 + $0x1a8] sm:$0xff]
      %v390 = vld [vmem:[%s243 + $0x1b0] sm:$0xff]
      %v391 = vld [vmem:[%s243 + $0x1b8] sm:$0xff]
      %v392 = vld [vmem:[%s243 + $0x1c0] sm:$0xff]
      %v393 = vld [vmem:[%s243 + $0x1c8] sm:$0xff]
      %v394 = vld [vmem:[%s243 + $0x1d0] sm:$0xff]
      %v395 = vld [vmem:[%s243 + $0x1d8] sm:$0xff]
      %v396 = vld [vmem:[%s243 + $0x1e0] sm:$0xff]
      %v397 = vld [vmem:[%s243 + $0x1e8] sm:$0xff]
      %v398 = vld [vmem:[%s243 + $0x1f0] sm:$0xff]
      %v399 = vld [vmem:[%s243 + $0x1f8] sm:$0xff]
      %v400 = vld [vmem:[%s253] sm:$0xf]
      %v401 = vld [vmem:[%s253 + $0x4] sm:$0xf]
      %v402 = vld [vmem:[%s253 + $0x8] sm:$0xf]
      %v403 = vld [vmem:[%s253 + $0xc] sm:$0xf]
      %v404 = vld [vmem:[%s253 + $0x10] sm:$0xf]
      %v405 = vld [vmem:[%s253 + $0x14] sm:$0xf]
      %v406 = vld [vmem:[%s253 + $0x18] sm:$0xf]
      %v407 = vld [vmem:[%s253 + $0x1c] sm:$0xf]
      %v408 = vld [vmem:[%s253 + $0x20] sm:$0xf]
      %v409 = vld [vmem:[%s253 + $0x24] sm:$0xf]
      %v410 = vld [vmem:[%s253 + $0x28] sm:$0xf]
      %v411 = vld [vmem:[%s253 + $0x2c] sm:$0xf]
      %v412 = vld [vmem:[%s253 + $0x30] sm:$0xf]
      %v413 = vld [vmem:[%s253 + $0x34] sm:$0xf]
      %v414 = vld [vmem:[%s253 + $0x38] sm:$0xf]
      %v415 = vld [vmem:[%s253 + $0x3c] sm:$0xf]
      %v416 = vld [vmem:[%s253 + $0x40] sm:$0xf]
      %v417 = vld [vmem:[%s253 + $0x44] sm:$0xf]
      %v418 = vld [vmem:[%s253 + $0x48] sm:$0xf]
      %v419 = vld [vmem:[%s253 + $0x4c] sm:$0xf]
      %v420 = vld [vmem:[%s253 + $0x50] sm:$0xf]
      %v421 = vld [vmem:[%s253 + $0x54] sm:$0xf]
      %v422 = vld [vmem:[%s253 + $0x58] sm:$0xf]
      %v423 = vld [vmem:[%s253 + $0x5c] sm:$0xf]
      %v424 = vld [vmem:[%s253 + $0x60] sm:$0xf]
      %v425 = vld [vmem:[%s253 + $0x64] sm:$0xf]
      %v426 = vld [vmem:[%s253 + $0x68] sm:$0xf]
      %v427 = vld [vmem:[%s253 + $0x6c] sm:$0xf]
      %v428 = vld [vmem:[%s253 + $0x70] sm:$0xf]
      %v429 = vld [vmem:[%s253 + $0x74] sm:$0xf]
      %v430 = vld [vmem:[%s253 + $0x78] sm:$0xf]
      %v431 = vld [vmem:[%s253 + $0x7c] sm:$0xf]
      %v432 = vld [vmem:[%s253 + $0x80] sm:$0xf]
      %v433 = vld [vmem:[%s253 + $0x84] sm:$0xf]
      %v434 = vld [vmem:[%s253 + $0x88] sm:$0xf]
      %v435 = vld [vmem:[%s253 + $0x8c] sm:$0xf]
      %v436 = vld [vmem:[%s253 + $0x90] sm:$0xf]
      %v437 = vld [vmem:[%s253 + $0x94] sm:$0xf]
      %v438 = vld [vmem:[%s253 + $0x98] sm:$0xf]
      %v439 = vld [vmem:[%s253 + $0x9c] sm:$0xf]
      %v440 = vld [vmem:[%s253 + $0xa0] sm:$0xf]
      %v441 = vld [vmem:[%s253 + $0xa4] sm:$0xf]
      %v442 = vld [vmem:[%s253 + $0xa8] sm:$0xf]
      %v443 = vld [vmem:[%s253 + $0xac] sm:$0xf]
      %v444 = vld [vmem:[%s253 + $0xb0] sm:$0xf]
      %v445 = vld [vmem:[%s253 + $0xb4] sm:$0xf]
      %v446 = vld [vmem:[%s253 + $0xb8] sm:$0xf]
      %v447 = vld [vmem:[%s253 + $0xbc] sm:$0xf]
      %v448 = vld [vmem:[%s253 + $0xc0] sm:$0xf]
      %v449 = vld [vmem:[%s253 + $0xc4] sm:$0xf]
      %v450 = vld [vmem:[%s253 + $0xc8] sm:$0xf]
      %v451 = vld [vmem:[%s253 + $0xcc] sm:$0xf]
      %v452 = vld [vmem:[%s253 + $0xd0] sm:$0xf]
      %v453 = vld [vmem:[%s253 + $0xd4] sm:$0xf]
      %v454 = vld [vmem:[%s253 + $0xd8] sm:$0xf]
      %v455 = vld [vmem:[%s253 + $0xdc] sm:$0xf]
      %v456 = vld [vmem:[%s253 + $0xe0] sm:$0xf]
      %v457 = vld [vmem:[%s253 + $0xe4] sm:$0xf]
      %v458 = vld [vmem:[%s253 + $0xe8] sm:$0xf]
      %v459 = vld [vmem:[%s253 + $0xec] sm:$0xf]
      %v460 = vld [vmem:[%s253 + $0xf0] sm:$0xf]
      %v461 = vld [vmem:[%s253 + $0xf4] sm:$0xf]
      %v462 = vld [vmem:[%s253 + $0xf8] sm:$0xf]
      %v463 = vld [vmem:[%s253 + $0xfc] sm:$0xf]
      %v528 = vunpack.c.l.b16 %v336
      %v529 = vunpack.c.h.b16 %v336
      %v530 = vunpack.c.l.b16 %v337
      %v531 = vunpack.c.h.b16 %v337
      %v532 = vunpack.c.l.b16 %v338
      %v533 = vunpack.c.h.b16 %v338
      %v534 = vunpack.c.l.b16 %v339
      %v535 = vunpack.c.h.b16 %v339
      %v536 = vunpack.c.l.b16 %v340
      %v537 = vunpack.c.h.b16 %v340
      %v538 = vunpack.c.l.b16 %v341
      %v539 = vunpack.c.h.b16 %v341
      %v540 = vunpack.c.l.b16 %v342
      %v541 = vunpack.c.h.b16 %v342
      %v542 = vunpack.c.l.b16 %v343
      %v543 = vunpack.c.h.b16 %v343
      %v544 = vunpack.c.l.b16 %v344
      %v545 = vunpack.c.h.b16 %v344
      %v546 = vunpack.c.l.b16 %v345
      %v547 = vunpack.c.h.b16 %v345
      %v548 = vunpack.c.l.b16 %v346
      %v549 = vunpack.c.h.b16 %v346
      %v550 = vunpack.c.l.b16 %v347
      %v551 = vunpack.c.h.b16 %v347
      %v552 = vunpack.c.l.b16 %v348
      %v553 = vunpack.c.h.b16 %v348
      %v554 = vunpack.c.l.b16 %v349
      %v555 = vunpack.c.h.b16 %v349
      %v556 = vunpack.c.l.b16 %v350
      %v557 = vunpack.c.h.b16 %v350
      %v558 = vunpack.c.l.b16 %v351
      %v559 = vunpack.c.h.b16 %v351
      %v560 = vunpack.c.l.b16 %v352
      %v561 = vunpack.c.h.b16 %v352
      %v562 = vunpack.c.l.b16 %v353
      %v563 = vunpack.c.h.b16 %v353
      %v564 = vunpack.c.l.b16 %v354
      %v565 = vunpack.c.h.b16 %v354
      %v566 = vunpack.c.l.b16 %v355
      %v567 = vunpack.c.h.b16 %v355
      %v568 = vunpack.c.l.b16 %v356
      %v569 = vunpack.c.h.b16 %v356
      %v570 = vunpack.c.l.b16 %v357
      %v571 = vunpack.c.h.b16 %v357
      %v572 = vunpack.c.l.b16 %v358
      %v573 = vunpack.c.h.b16 %v358
      %v574 = vunpack.c.l.b16 %v359
      %v575 = vunpack.c.h.b16 %v359
      %v576 = vunpack.c.l.b16 %v360
      %v577 = vunpack.c.h.b16 %v360
      %v578 = vunpack.c.l.b16 %v361
      %v579 = vunpack.c.h.b16 %v361
      %v580 = vunpack.c.l.b16 %v362
      %v581 = vunpack.c.h.b16 %v362
      %v582 = vunpack.c.l.b16 %v363
      %v583 = vunpack.c.h.b16 %v363
      %v584 = vunpack.c.l.b16 %v364
      %v585 = vunpack.c.h.b16 %v364
      %v586 = vunpack.c.l.b16 %v365
      %v587 = vunpack.c.h.b16 %v365
      %v588 = vunpack.c.l.b16 %v366
      %v589 = vunpack.c.h.b16 %v366
      %v590 = vunpack.c.l.b16 %v367
      %v591 = vunpack.c.h.b16 %v367
      %v592 = vunpack.c.l.b16 %v368
      %v593 = vunpack.c.h.b16 %v368
      %v594 = vunpack.c.l.b16 %v369
      %v595 = vunpack.c.h.b16 %v369
      %v596 = vunpack.c.l.b16 %v370
      %v597 = vunpack.c.h.b16 %v370
      %v598 = vunpack.c.l.b16 %v371
      %v599 = vunpack.c.h.b16 %v371
      %v600 = vunpack.c.l.b16 %v372
      %v601 = vunpack.c.h.b16 %v372
      %v602 = vunpack.c.l.b16 %v373
      %v603 = vunpack.c.h.b16 %v373
      %v604 = vunpack.c.l.b16 %v374
      %v605 = vunpack.c.h.b16 %v374
      %v606 = vunpack.c.l.b16 %v375
      %v607 = vunpack.c.h.b16 %v375
      %v608 = vunpack.c.l.b16 %v376
      %v609 = vunpack.c.h.b16 %v376
      %v610 = vunpack.c.l.b16 %v377
      %v611 = vunpack.c.h.b16 %v377
      %v612 = vunpack.c.l.b16 %v378
      %v613 = vunpack.c.h.b16 %v378
      %v614 = vunpack.c.l.b16 %v379
      %v615 = vunpack.c.h.b16 %v379
      %v616 = vunpack.c.l.b16 %v380
      %v617 = vunpack.c.h.b16 %v380
      %v618 = vunpack.c.l.b16 %v381
      %v619 = vunpack.c.h.b16 %v381
      %v620 = vunpack.c.l.b16 %v382
      %v621 = vunpack.c.h.b16 %v382
      %v622 = vunpack.c.l.b16 %v383
      %v623 = vunpack.c.h.b16 %v383
      %v624 = vunpack.c.l.b16 %v384
      %v625 = vunpack.c.h.b16 %v384
      %v626 = vunpack.c.l.b16 %v385
      %v627 = vunpack.c.h.b16 %v385
      %v628 = vunpack.c.l.b16 %v386
      %v629 = vunpack.c.h.b16 %v386
      %v630 = vunpack.c.l.b16 %v387
      %v631 = vunpack.c.h.b16 %v387
      %v632 = vunpack.c.l.b16 %v388
      %v633 = vunpack.c.h.b16 %v388
      %v634 = vunpack.c.l.b16 %v389
      %v635 = vunpack.c.h.b16 %v389
      %v636 = vunpack.c.l.b16 %v390
      %v637 = vunpack.c.h.b16 %v390
      %v638 = vunpack.c.l.b16 %v391
      %v639 = vunpack.c.h.b16 %v391
      %v640 = vunpack.c.l.b16 %v392
      %v641 = vunpack.c.h.b16 %v392
      %v642 = vunpack.c.l.b16 %v393
      %v643 = vunpack.c.h.b16 %v393
      %v644 = vunpack.c.l.b16 %v394
      %v645 = vunpack.c.h.b16 %v394
      %v646 = vunpack.c.l.b16 %v395
      %v647 = vunpack.c.h.b16 %v395
      %v648 = vunpack.c.l.b16 %v396
      %v649 = vunpack.c.h.b16 %v396
      %v650 = vunpack.c.l.b16 %v397
      %v651 = vunpack.c.h.b16 %v397
      %v652 = vunpack.c.l.b16 %v398
      %v653 = vunpack.c.h.b16 %v398
      %v654 = vunpack.c.l.b16 %v399
      %v655 = vunpack.c.h.b16 %v399
      %v656 = vpack.c.b16 %v532, %v528
      %v657 = vpack.c.b16 %v533, %v529
      %v658 = vpack.c.b16 %v534, %v530
      %v659 = vpack.c.b16 %v535, %v531
      %v660 = vpack.c.b16 %v540, %v536
      %v661 = vpack.c.b16 %v541, %v537
      %v662 = vpack.c.b16 %v542, %v538
      %v663 = vpack.c.b16 %v543, %v539
      %v664 = vpack.c.b16 %v548, %v544
      %v665 = vpack.c.b16 %v549, %v545
      %v666 = vpack.c.b16 %v550, %v546
      %v667 = vpack.c.b16 %v551, %v547
      %v668 = vpack.c.b16 %v556, %v552
      %v669 = vpack.c.b16 %v557, %v553
      %v670 = vpack.c.b16 %v558, %v554
      %v671 = vpack.c.b16 %v559, %v555
      %v672 = vpack.c.b16 %v564, %v560
      %v673 = vpack.c.b16 %v565, %v561
      %v674 = vpack.c.b16 %v566, %v562
      %v675 = vpack.c.b16 %v567, %v563
      %v676 = vpack.c.b16 %v572, %v568
      %v677 = vpack.c.b16 %v573, %v569
      %v678 = vpack.c.b16 %v574, %v570
      %v679 = vpack.c.b16 %v575, %v571
      %v680 = vpack.c.b16 %v580, %v576
      %v681 = vpack.c.b16 %v581, %v577
      %v682 = vpack.c.b16 %v582, %v578
      %v683 = vpack.c.b16 %v583, %v579
      %v684 = vpack.c.b16 %v588, %v584
      %v685 = vpack.c.b16 %v589, %v585
      %v686 = vpack.c.b16 %v590, %v586
      %v687 = vpack.c.b16 %v591, %v587
      %v688 = vpack.c.b16 %v596, %v592
      %v689 = vpack.c.b16 %v597, %v593
      %v690 = vpack.c.b16 %v598, %v594
      %v691 = vpack.c.b16 %v599, %v595
      %v692 = vpack.c.b16 %v604, %v600
      %v693 = vpack.c.b16 %v605, %v601
      %v694 = vpack.c.b16 %v606, %v602
      %v695 = vpack.c.b16 %v607, %v603
      %v696 = vpack.c.b16 %v612, %v608
      %v697 = vpack.c.b16 %v613, %v609
      %v698 = vpack.c.b16 %v614, %v610
      %v699 = vpack.c.b16 %v615, %v611
      %v700 = vpack.c.b16 %v620, %v616
      %v701 = vpack.c.b16 %v621, %v617
      %v702 = vpack.c.b16 %v622, %v618
      %v703 = vpack.c.b16 %v623, %v619
      %v704 = vpack.c.b16 %v628, %v624
      %v705 = vpack.c.b16 %v629, %v625
      %v706 = vpack.c.b16 %v630, %v626
      %v707 = vpack.c.b16 %v631, %v627
      %v708 = vpack.c.b16 %v636, %v632
      %v709 = vpack.c.b16 %v637, %v633
      %v710 = vpack.c.b16 %v638, %v634
      %v711 = vpack.c.b16 %v639, %v635
      %v712 = vpack.c.b16 %v644, %v640
      %v713 = vpack.c.b16 %v645, %v641
      %v714 = vpack.c.b16 %v646, %v642
      %v715 = vpack.c.b16 %v647, %v643
      %v716 = vpack.c.b16 %v652, %v648
      %v717 = vpack.c.b16 %v653, %v649
      %v718 = vpack.c.b16 %v654, %v650
      %v719 = vpack.c.b16 %v655, %v651
      %v848 = vunpack.c.l.b16 %v400
      %v849 = vunpack.c.l.b16 %v401
      %v850 = vunpack.c.l.b16 %v402
      %v851 = vunpack.c.l.b16 %v403
      %v852 = vunpack.c.l.b16 %v404
      %v853 = vunpack.c.l.b16 %v405
      %v854 = vunpack.c.l.b16 %v406
      %v855 = vunpack.c.l.b16 %v407
      %v856 = vunpack.c.l.b16 %v408
      %v857 = vunpack.c.l.b16 %v409
      %v858 = vunpack.c.l.b16 %v410
      %v859 = vunpack.c.l.b16 %v411
      %v860 = vunpack.c.l.b16 %v412
      %v861 = vunpack.c.l.b16 %v413
      %v862 = vunpack.c.l.b16 %v414
      %v863 = vunpack.c.l.b16 %v415
      %v864 = vunpack.c.l.b16 %v416
      %v865 = vunpack.c.l.b16 %v417
      %v866 = vunpack.c.l.b16 %v418
      %v867 = vunpack.c.l.b16 %v419
      %v868 = vunpack.c.l.b16 %v420
      %v869 = vunpack.c.l.b16 %v421
      %v870 = vunpack.c.l.b16 %v422
      %v871 = vunpack.c.l.b16 %v423
      %v872 = vunpack.c.l.b16 %v424
      %v873 = vunpack.c.l.b16 %v425
      %v874 = vunpack.c.l.b16 %v426
      %v875 = vunpack.c.l.b16 %v427
      %v876 = vunpack.c.l.b16 %v428
      %v877 = vunpack.c.l.b16 %v429
      %v878 = vunpack.c.l.b16 %v430
      %v879 = vunpack.c.l.b16 %v431
      %v880 = vunpack.c.l.b16 %v432
      %v881 = vunpack.c.l.b16 %v433
      %v882 = vunpack.c.l.b16 %v434
      %v883 = vunpack.c.l.b16 %v435
      %v884 = vunpack.c.l.b16 %v436
      %v885 = vunpack.c.l.b16 %v437
      %v886 = vunpack.c.l.b16 %v438
      %v887 = vunpack.c.l.b16 %v439
      %v888 = vunpack.c.l.b16 %v440
      %v889 = vunpack.c.l.b16 %v441
      %v890 = vunpack.c.l.b16 %v442
      %v891 = vunpack.c.l.b16 %v443
      %v892 = vunpack.c.l.b16 %v444
      %v893 = vunpack.c.l.b16 %v445
      %v894 = vunpack.c.l.b16 %v446
      %v895 = vunpack.c.l.b16 %v447
      %v896 = vunpack.c.l.b16 %v448
      %v897 = vunpack.c.l.b16 %v449
      %v898 = vunpack.c.l.b16 %v450
      %v899 = vunpack.c.l.b16 %v451
      %v900 = vunpack.c.l.b16 %v452
      %v901 = vunpack.c.l.b16 %v453
      %v902 = vunpack.c.l.b16 %v454
      %v903 = vunpack.c.l.b16 %v455
      %v904 = vunpack.c.l.b16 %v456
      %v905 = vunpack.c.l.b16 %v457
      %v906 = vunpack.c.l.b16 %v458
      %v907 = vunpack.c.l.b16 %v459
      %v908 = vunpack.c.l.b16 %v460
      %v909 = vunpack.c.l.b16 %v461
      %v910 = vunpack.c.l.b16 %v462
      %v911 = vunpack.c.l.b16 %v463
      %v912 = vpack.c.b16 %v849, %v848
      %v913 = vpack.c.b16 %v851, %v850
      %v914 = vpack.c.b16 %v853, %v852
      %v915 = vpack.c.b16 %v855, %v854
      %v916 = vpack.c.b16 %v857, %v856
      %v917 = vpack.c.b16 %v859, %v858
      %v918 = vpack.c.b16 %v861, %v860
      %v919 = vpack.c.b16 %v863, %v862
      %v920 = vpack.c.b16 %v865, %v864
      %v921 = vpack.c.b16 %v867, %v866
      %v922 = vpack.c.b16 %v869, %v868
      %v923 = vpack.c.b16 %v871, %v870
      %v924 = vpack.c.b16 %v873, %v872
      %v925 = vpack.c.b16 %v875, %v874
      %v926 = vpack.c.b16 %v877, %v876
      %v927 = vpack.c.b16 %v879, %v878
      %v928 = vpack.c.b16 %v881, %v880
      %v929 = vpack.c.b16 %v883, %v882
      %v930 = vpack.c.b16 %v885, %v884
      %v931 = vpack.c.b16 %v887, %v886
      %v932 = vpack.c.b16 %v889, %v888
      %v933 = vpack.c.b16 %v891, %v890
      %v934 = vpack.c.b16 %v893, %v892
      %v935 = vpack.c.b16 %v895, %v894
      %v936 = vpack.c.b16 %v897, %v896
      %v937 = vpack.c.b16 %v899, %v898
      %v938 = vpack.c.b16 %v901, %v900
      %v939 = vpack.c.b16 %v903, %v902
      %v940 = vpack.c.b16 %v905, %v904
      %v941 = vpack.c.b16 %v907, %v906
      %v942 = vpack.c.b16 %v909, %v908
      %v943 = vpack.c.b16 %v911, %v910
      %976 = vmatprep.subr.bf16.mxu0 0
      %977 = vmatpush1.bf16.msra.mxu0 %v912
      %978 = vmatprep.subr.bf16.mxu0 0
      %979 = vmatpush1.bf16.msra.mxu0 %v913
      %980 = vmatprep.subr.bf16.mxu0 0
      %981 = vmatpush1.bf16.msra.mxu0 %v914
      %982 = vmatprep.subr.bf16.mxu0 0
      %983 = vmatpush1.bf16.msra.mxu0 %v915
      %984 = vmatprep.subr.bf16.mxu0 0
      %985 = vmatpush1.bf16.msra.mxu0 %v916
      %986 = vmatprep.subr.bf16.mxu0 0
      %987 = vmatpush1.bf16.msra.mxu0 %v917
      %988 = vmatprep.subr.bf16.mxu0 0
      %989 = vmatpush1.bf16.msra.mxu0 %v918
      %990 = vmatprep.subr.bf16.mxu0 0
      %991 = vmatpush1.bf16.msra.mxu0 %v919
      %992 = vmatprep.subr.bf16.mxu0 0
      %993 = vmatpush1.bf16.msra.mxu0 %v920
      %994 = vmatprep.subr.bf16.mxu0 0
      %995 = vmatpush1.bf16.msra.mxu0 %v921
      %996 = vmatprep.subr.bf16.mxu0 0
      %997 = vmatpush1.bf16.msra.mxu0 %v922
      %998 = vmatprep.subr.bf16.mxu0 0
      %999 = vmatpush1.bf16.msra.mxu0 %v923
      %1000 = vmatprep.subr.bf16.mxu0 0
      %1001 = vmatpush1.bf16.msra.mxu0 %v924
      %1002 = vmatprep.subr.bf16.mxu0 0
      %1003 = vmatpush1.bf16.msra.mxu0 %v925
      %1004 = vmatprep.subr.bf16.mxu0 0
      %1005 = vmatpush1.bf16.msra.mxu0 %v926
      %1006 = vmatprep.subr.bf16.mxu0 0
      %1007 = vmatpush1.bf16.msra.mxu0 %v927
      %1008 = vmatprep.mubr.bf16.mxu0 %v657
      %1009 = vmatmul.mubr.bf16.gmra.mrb[0].mxu0 %v656
      %v1010 = vpop.f32.mrb[0].mxu0
      %v1011 = vadd.f32 0.0, %v1010
      %v1012 = vpop.f32.mrb[0].mxu0
      %v1013 = vpop.f32.mrb[0].mxu0
      %v1014 = vadd.f32 0.0, %v1013
      %v1015 = vpop.f32.mrb[0].mxu0
      %1016 = vmatprep.mubr.bf16.mxu0 %v661
      %1017 = vmatmul.mubr.bf16.gmra.mrb[0].mxu0 %v660
      %v1018 = vpop.f32.mrb[0].mxu0
      %v1019 = vadd.f32 0.0, %v1018
      %v1020 = vpop.f32.mrb[0].mxu0
      %v1021 = vpop.f32.mrb[0].mxu0
      %v1022 = vadd.f32 0.0, %v1021
      %v1023 = vpop.f32.mrb[0].mxu0
      %1024 = vmatprep.mubr.bf16.mxu0 %v665
      %1025 = vmatmul.mubr.bf16.gmra.mrb[0].mxu0 %v664
      %v1026 = vpop.f32.mrb[0].mxu0
      %v1027 = vadd.f32 0.0, %v1026
      %v1028 = vpop.f32.mrb[0].mxu0
      %v1029 = vpop.f32.mrb[0].mxu0
      %v1030 = vadd.f32 0.0, %v1029
      %v1031 = vpop.f32.mrb[0].mxu0
      %1032 = vmatprep.mubr.bf16.mxu0 %v669
      %1033 = vmatmul.mubr.bf16.gmra.mrb[0].mxu0 %v668
      %v1034 = vpop.f32.mrb[0].mxu0
      %v1035 = vadd.f32 0.0, %v1034
      %v1036 = vpop.f32.mrb[0].mxu0
      %v1037 = vpop.f32.mrb[0].mxu0
      %v1038 = vadd.f32 0.0, %v1037
      %v1039 = vpop.f32.mrb[0].mxu0
      %1040 = vmatprep.mubr.bf16.mxu0 %v673
      %1041 = vmatmul.mubr.bf16.gmra.mrb[0].mxu0 %v672
      %v1042 = vpop.f32.mrb[0].mxu0
      %v1043 = vadd.f32 0.0, %v1042
      %v1044 = vpop.f32.mrb[0].mxu0
      %v1045 = vpop.f32.mrb[0].mxu0
      %v1046 = vadd.f32 0.0, %v1045
      %v1047 = vpop.f32.mrb[0].mxu0
      %1048 = vmatprep.mubr.bf16.mxu0 %v677
      %1049 = vmatmul.mubr.bf16.gmra.mrb[0].mxu0 %v676
      %v1050 = vpop.f32.mrb[0].mxu0
      %v1051 = vadd.f32 0.0, %v1050
      %v1052 = vpop.f32.mrb[0].mxu0
      %v1053 = vpop.f32.mrb[0].mxu0
      %v1054 = vadd.f32 0.0, %v1053
      %v1055 = vpop.f32.mrb[0].mxu0
      %1056 = vmatprep.mubr.bf16.mxu0 %v681
      %1057 = vmatmul.mubr.bf16.gmra.mrb[0].mxu0 %v680
      %v1058 = vpop.f32.mrb[0].mxu0
      %v1059 = vadd.f32 0.0, %v1058
      %v1060 = vpop.f32.mrb[0].mxu0
      %v1061 = vpop.f32.mrb[0].mxu0
      %v1062 = vadd.f32 0.0, %v1061
      %v1063 = vpop.f32.mrb[0].mxu0
      %1064 = vmatprep.mubr.bf16.mxu0 %v685
      %1065 = vmatmul.mubr.bf16.gmra.mrb[0].mxu0 %v684
      %v1066 = vpop.f32.mrb[0].mxu0
      %v1067 = vadd.f32 0.0, %v1066
      %v1068 = vpop.f32.mrb[0].mxu0
      %v1069 = vpop.f32.mrb[0].mxu0
      %v1070 = vadd.f32 0.0, %v1069
      %v1071 = vpop.f32.mrb[0].mxu0
      %1072 = vmatprep.mubr.bf16.mxu0 %v689
      %1073 = vmatmul.mubr.bf16.gmra.mrb[0].mxu0 %v688
      %v1074 = vpop.f32.mrb[0].mxu0
      %v1075 = vadd.f32 0.0, %v1074
      %v1076 = vpop.f32.mrb[0].mxu0
      %v1077 = vpop.f32.mrb[0].mxu0
      %v1078 = vadd.f32 0.0, %v1077
      %v1079 = vpop.f32.mrb[0].mxu0
      %1080 = vmatprep.mubr.bf16.mxu0 %v693
      %1081 = vmatmul.mubr.bf16.gmra.mrb[0].mxu0 %v692
      %v1082 = vpop.f32.mrb[0].mxu0
      %v1083 = vadd.f32 0.0, %v1082
      %v1084 = vpop.f32.mrb[0].mxu0
      %v1085 = vpop.f32.mrb[0].mxu0
      %v1086 = vadd.f32 0.0, %v1085
      %v1087 = vpop.f32.mrb[0].mxu0
      %1088 = vmatprep.mubr.bf16.mxu0 %v697
      %1089 = vmatmul.mubr.bf16.gmra.mrb[0].mxu0 %v696
      %v1090 = vpop.f32.mrb[0].mxu0
      %v1091 = vadd.f32 0.0, %v1090
      %v1092 = vpop.f32.mrb[0].mxu0
      %v1093 = vpop.f32.mrb[0].mxu0
      %v1094 = vadd.f32 0.0, %v1093
      %v1095 = vpop.f32.mrb[0].mxu0
      %1096 = vmatprep.mubr.bf16.mxu0 %v701
      %1097 = vmatmul.mubr.bf16.gmra.mrb[0].mxu0 %v700
      %v1098 = vpop.f32.mrb[0].mxu0
      %v1099 = vadd.f32 0.0, %v1098
      %v1100 = vpop.f32.mrb[0].mxu0
      %v1101 = vpop.f32.mrb[0].mxu0
      %v1102 = vadd.f32 0.0, %v1101
      %v1103 = vpop.f32.mrb[0].mxu0
      %1104 = vmatprep.mubr.bf16.mxu0 %v705
      %1105 = vmatmul.mubr.bf16.gmra.mrb[0].mxu0 %v704
      %v1106 = vpop.f32.mrb[0].mxu0
      %v1107 = vadd.f32 0.0, %v1106
      %v1108 = vpop.f32.mrb[0].mxu0
      %v1109 = vpop.f32.mrb[0].mxu0
      %v1110 = vadd.f32 0.0, %v1109
      %v1111 = vpop.f32.mrb[0].mxu0
      %1112 = vmatprep.mubr.bf16.mxu0 %v709
      %1113 = vmatmul.mubr.bf16.gmra.mrb[0].mxu0 %v708
      %v1114 = vpop.f32.mrb[0].mxu0
      %v1115 = vadd.f32 0.0, %v1114
      %v1116 = vpop.f32.mrb[0].mxu0
      %v1117 = vpop.f32.mrb[0].mxu0
      %v1118 = vadd.f32 0.0, %v1117
      %v1119 = vpop.f32.mrb[0].mxu0
      %1120 = vmatprep.mubr.bf16.mxu0 %v713
      %1121 = vmatmul.mubr.bf16.gmra.mrb[0].mxu0 %v712
      %v1122 = vpop.f32.mrb[0].mxu0
      %v1123 = vadd.f32 0.0, %v1122
      %v1124 = vpop.f32.mrb[0].mxu0
      %v1125 = vpop.f32.mrb[0].mxu0
      %v1126 = vadd.f32 0.0, %v1125
      %v1127 = vpop.f32.mrb[0].mxu0
      %1128 = vmatprep.mubr.bf16.mxu0 %v717
      %1129 = vmatmul.mubr.bf16.gmra.mrb[0].mxu0 %v716
      %v1130 = vpop.f32.mrb[0].mxu0
      %v1131 = vadd.f32 0.0, %v1130
      %v1132 = vpop.f32.mrb[0].mxu0
      %v1133 = vpop.f32.mrb[0].mxu0
      %v1134 = vadd.f32 0.0, %v1133
      %v1135 = vpop.f32.mrb[0].mxu0
      %1136 = vdwg.mxu0
      %1137 = vmatprep.subr.bf16.mxu0 0
      %1138 = vmatpush1.bf16.msra.mxu0 %v928
      %1139 = vmatprep.subr.bf16.mxu0 0
      %1140 = vmatpush1.bf16.msra.mxu0 %v929
      %1141 = vmatprep.subr.bf16.mxu0 0
      %1142 = vmatpush1.bf16.msra.mxu0 %v930
      %1143 = vmatprep.subr.bf16.mxu0 0
      %1144 = vmatpush1.bf16.msra.mxu0 %v931
      %1145 = vmatprep.subr.bf16.mxu0 0
      %1146 = vmatpush1.bf16.msra.mxu0 %v932
      %1147 = vmatprep.subr.bf16.mxu0 0
      %1148 = vmatpush1.bf16.msra.mxu0 %v933
      %1149 = vmatprep.subr.bf16.mxu0 0
      %1150 = vmatpush1.bf16.msra.mxu0 %v934
      %1151 = vmatprep.subr.bf16.mxu0 0
      %1152 = vmatpush1.bf16.msra.mxu0 %v935
      %1153 = vmatprep.subr.bf16.mxu0 0
      %1154 = vmatpush1.bf16.msra.mxu0 %v936
      %1155 = vmatprep.subr.bf16.mxu0 0
      %1156 = vmatpush1.bf16.msra.mxu0 %v937
      %1157 = vmatprep.subr.bf16.mxu0 0
      %1158 = vmatpush1.bf16.msra.mxu0 %v938
      %1159 = vmatprep.subr.bf16.mxu0 0
      %1160 = vmatpush1.bf16.msra.mxu0 %v939
      %1161 = vmatprep.subr.bf16.mxu0 0
      %1162 = vmatpush1.bf16.msra.mxu0 %v940
      %1163 = vmatprep.subr.bf16.mxu0 0
      %1164 = vmatpush1.bf16.msra.mxu0 %v941
      %1165 = vmatprep.subr.bf16.mxu0 0
      %1166 = vmatpush1.bf16.msra.mxu0 %v942
      %1167 = vmatprep.subr.bf16.mxu0 0
      %1168 = vmatpush1.bf16.msra.mxu0 %v943
      %1169 = vmatprep.mubr.bf16.mxu0 %v659
      %1170 = vmatmul.mubr.bf16.gmra.mrb[0].mxu0 %v658
      %v1171 = vpop.f32.mrb[0].mxu0
      %v1172 = vadd.f32 %v1011, %v1171
      %v1173 = vpop.f32.mrb[0].mxu0
      %v1174 = vpop.f32.mrb[0].mxu0
      %v1175 = vadd.f32 %v1014, %v1174
      %v1176 = vpop.f32.mrb[0].mxu0
      %1177 = vmatprep.mubr.bf16.mxu0 %v663
      %1178 = vmatmul.mubr.bf16.gmra.mrb[0].mxu0 %v662
      %v1179 = vpop.f32.mrb[0].mxu0
      %v1180 = vadd.f32 %v1019, %v1179
      %v1181 = vpop.f32.mrb[0].mxu0
      %v1182 = vpop.f32.mrb[0].mxu0
      %v1183 = vadd.f32 %v1022, %v1182
      %v1184 = vpop.f32.mrb[0].mxu0
      %1185 = vmatprep.mubr.bf16.mxu0 %v667
      %1186 = vmatmul.mubr.bf16.gmra.mrb[0].mxu0 %v666
      %v1187 = vpop.f32.mrb[0].mxu0
      %v1188 = vadd.f32 %v1027, %v1187
      %v1189 = vpop.f32.mrb[0].mxu0
      %v1190 = vpop.f32.mrb[0].mxu0
      %v1191 = vadd.f32 %v1030, %v1190
      %v1192 = vpop.f32.mrb[0].mxu0
      %1193 = vmatprep.mubr.bf16.mxu0 %v671
      %1194 = vmatmul.mubr.bf16.gmra.mrb[0].mxu0 %v670
      %v1195 = vpop.f32.mrb[0].mxu0
      %v1196 = vadd.f32 %v1035, %v1195
      %v1197 = vpop.f32.mrb[0].mxu0
      %v1198 = vpop.f32.mrb[0].mxu0
      %v1199 = vadd.f32 %v1038, %v1198
      %v1200 = vpop.f32.mrb[0].mxu0
      %1201 = vmatprep.mubr.bf16.mxu0 %v675
      %1202 = vmatmul.mubr.bf16.gmra.mrb[0].mxu0 %v674
      %v1203 = vpop.f32.mrb[0].mxu0
      %v1204 = vadd.f32 %v1043, %v1203
      %v1205 = vpop.f32.mrb[0].mxu0
      %v1206 = vpop.f32.mrb[0].mxu0
      %v1207 = vadd.f32 %v1046, %v1206
      %v1208 = vpop.f32.mrb[0].mxu0
      %1209 = vmatprep.mubr.bf16.mxu0 %v679
      %1210 = vmatmul.mubr.bf16.gmra.mrb[0].mxu0 %v678
      %v1211 = vpop.f32.mrb[0].mxu0
      %v1212 = vadd.f32 %v1051, %v1211
      %v1213 = vpop.f32.mrb[0].mxu0
      %v1214 = vpop.f32.mrb[0].mxu0
      %v1215 = vadd.f32 %v1054, %v1214
      %v1216 = vpop.f32.mrb[0].mxu0
      %1217 = vmatprep.mubr.bf16.mxu0 %v683
      %1218 = vmatmul.mubr.bf16.gmra.mrb[0].mxu0 %v682
      %v1219 = vpop.f32.mrb[0].mxu0
      %v1220 = vadd.f32 %v1059, %v1219
      %v1221 = vpop.f32.mrb[0].mxu0
      %v1222 = vpop.f32.mrb[0].mxu0
      %v1223 = vadd.f32 %v1062, %v1222
      %v1224 = vpop.f32.mrb[0].mxu0
      %1225 = vmatprep.mubr.bf16.mxu0 %v687
      %1226 = vmatmul.mubr.bf16.gmra.mrb[0].mxu0 %v686
      %v1227 = vpop.f32.mrb[0].mxu0
      %v1228 = vadd.f32 %v1067, %v1227
      %v1229 = vpop.f32.mrb[0].mxu0
      %v1230 = vpop.f32.mrb[0].mxu0
      %v1231 = vadd.f32 %v1070, %v1230
      %v1232 = vpop.f32.mrb[0].mxu0
      %1233 = vmatprep.mubr.bf16.mxu0 %v691
      %1234 = vmatmul.mubr.bf16.gmra.mrb[0].mxu0 %v690
      %v1235 = vpop.f32.mrb[0].mxu0
      %v1236 = vadd.f32 %v1075, %v1235
      %v1237 = vpop.f32.mrb[0].mxu0
      %v1238 = vpop.f32.mrb[0].mxu0
      %v1239 = vadd.f32 %v1078, %v1238
      %v1240 = vpop.f32.mrb[0].mxu0
      %1241 = vmatprep.mubr.bf16.mxu0 %v695
      %1242 = vmatmul.mubr.bf16.gmra.mrb[0].mxu0 %v694
      %v1243 = vpop.f32.mrb[0].mxu0
      %v1244 = vadd.f32 %v1083, %v1243
      %v1245 = vpop.f32.mrb[0].mxu0
      %v1246 = vpop.f32.mrb[0].mxu0
      %v1247 = vadd.f32 %v1086, %v1246
      %v1248 = vpop.f32.mrb[0].mxu0
      %1249 = vmatprep.mubr.bf16.mxu0 %v699
      %1250 = vmatmul.mubr.bf16.gmra.mrb[0].mxu0 %v698
      %v1251 = vpop.f32.mrb[0].mxu0
      %v1252 = vadd.f32 %v1091, %v1251
      %v1253 = vpop.f32.mrb[0].mxu0
      %v1254 = vpop.f32.mrb[0].mxu0
      %v1255 = vadd.f32 %v1094, %v1254
      %v1256 = vpop.f32.mrb[0].mxu0
      %1257 = vmatprep.mubr.bf16.mxu0 %v703
      %1258 = vmatmul.mubr.bf16.gmra.mrb[0].mxu0 %v702
      %v1259 = vpop.f32.mrb[0].mxu0
      %v1260 = vadd.f32 %v1099, %v1259
      %v1261 = vpop.f32.mrb[0].mxu0
      %v1262 = vpop.f32.mrb[0].mxu0
      %v1263 = vadd.f32 %v1102, %v1262
      %v1264 = vpop.f32.mrb[0].mxu0
      %1265 = vmatprep.mubr.bf16.mxu0 %v707
      %1266 = vmatmul.mubr.bf16.gmra.mrb[0].mxu0 %v706
      %v1267 = vpop.f32.mrb[0].mxu0
      %v1268 = vadd.f32 %v1107, %v1267
      %v1269 = vpop.f32.mrb[0].mxu0
      %v1270 = vpop.f32.mrb[0].mxu0
      %v1271 = vadd.f32 %v1110, %v1270
      %v1272 = vpop.f32.mrb[0].mxu0
      %1273 = vmatprep.mubr.bf16.mxu0 %v711
      %1274 = vmatmul.mubr.bf16.gmra.mrb[0].mxu0 %v710
      %v1275 = vpop.f32.mrb[0].mxu0
      %v1276 = vadd.f32 %v1115, %v1275
      %v1277 = vpop.f32.mrb[0].mxu0
      %v1278 = vpop.f32.mrb[0].mxu0
      %v1279 = vadd.f32 %v1118, %v1278
      %v1280 = vpop.f32.mrb[0].mxu0
      %1281 = vmatprep.mubr.bf16.mxu0 %v715
      %1282 = vmatmul.mubr.bf16.gmra.mrb[0].mxu0 %v714
      %v1283 = vpop.f32.mrb[0].mxu0
      %v1284 = vadd.f32 %v1123, %v1283
      %v1285 = vpop.f32.mrb[0].mxu0
      %v1286 = vpop.f32.mrb[0].mxu0
      %v1287 = vadd.f32 %v1126, %v1286
      %v1288 = vpop.f32.mrb[0].mxu0
      %1289 = vmatprep.mubr.bf16.mxu0 %v719
      %1290 = vmatmul.mubr.bf16.gmra.mrb[0].mxu0 %v718
      %v1291 = vpop.f32.mrb[0].mxu0
      %v1292 = vadd.f32 %v1131, %v1291
      %v1293 = vpop.f32.mrb[0].mxu0
      %v1294 = vpop.f32.mrb[0].mxu0
      %v1295 = vadd.f32 %v1134, %v1294
      %v1296 = vpop.f32.mrb[0].mxu0
      %1297 = vdwg.mxu0
      %v1298 = vadd.f32 %v304, %v1172
      %v1299 = vadd.f32 %v305, %v1175
      %v1300 = vadd.f32 %v306, %v1180
      %v1301 = vadd.f32 %v307, %v1183
      %v1302 = vadd.f32 %v308, %v1188
      %v1303 = vadd.f32 %v309, %v1191
      %v1304 = vadd.f32 %v310, %v1196
      %v1305 = vadd.f32 %v311, %v1199
      %v1306 = vadd.f32 %v312, %v1204
      %v1307 = vadd.f32 %v313, %v1207
      %v1308 = vadd.f32 %v314, %v1212
      %v1309 = vadd.f32 %v315, %v1215
      %v1310 = vadd.f32 %v316, %v1220
      %v1311 = vadd.f32 %v317, %v1223
      %v1312 = vadd.f32 %v318, %v1228
      %v1313 = vadd.f32 %v319, %v1231
      %v1314 = vadd.f32 %v320, %v1236
      %v1315 = vadd.f32 %v321, %v1239
      %v1316 = vadd.f32 %v322, %v1244
      %v1317 = vadd.f32 %v323, %v1247
      %v1318 = vadd.f32 %v324, %v1252
      %v1319 = vadd.f32 %v325, %v1255
      %v1320 = vadd.f32 %v326, %v1260
      %v1321 = vadd.f32 %v327, %v1263
      %v1322 = vadd.f32 %v328, %v1268
      %v1323 = vadd.f32 %v329, %v1271
      %v1324 = vadd.f32 %v330, %v1276
      %v1325 = vadd.f32 %v331, %v1279
      %v1326 = vadd.f32 %v332, %v1284
      %v1327 = vadd.f32 %v333, %v1287
      %v1328 = vadd.f32 %v334, %v1292
      %v1329 = vadd.f32 %v335, %v1295
      %1330 = vst [vmem:[#allocation2] sm:$0xff] %v1298
      %1331 = vst [vmem:[#allocation2 + $0x8] sm:$0xff] %v1299
      %1332 = vst [vmem:[#allocation2 + $0x10] sm:$0xff] %v1300
      %1333 = vst [vmem:[#allocation2 + $0x18] sm:$0xff] %v1301
      %1334 = vst [vmem:[#allocation2 + $0x20] sm:$0xff] %v1302
      %1335 = vst [vmem:[#allocation2 + $0x28] sm:$0xff] %v1303
      %1336 = vst [vmem:[#allocation2 + $0x30] sm:$0xff] %v1304
      %1337 = vst [vmem:[#allocation2 + $0x38] sm:$0xff] %v1305
      %1338 = vst [vmem:[#allocation2 + $0x40] sm:$0xff] %v1306
      %1339 = vst [vmem:[#allocation2 + $0x48] sm:$0xff] %v1307
      %1340 = vst [vmem:[#allocation2 + $0x50] sm:$0xff] %v1308
      %1341 = vst [vmem:[#allocation2 + $0x58] sm:$0xff] %v1309
      %1342 = vst [vmem:[#allocation2 + $0x60] sm:$0xff] %v1310
      %1343 = vst [vmem:[#allocation2 + $0x68] sm:$0xff] %v1311
      %1344 = vst [vmem:[#allocation2 + $0x70] sm:$0xff] %v1312
      %1345 = vst [vmem:[#allocation2 + $0x78] sm:$0xff] %v1313
      %1346 = vst [vmem:[#allocation2 + $0x80] sm:$0xff] %v1314
      %1347 = vst [vmem:[#allocation2 + $0x88] sm:$0xff] %v1315
      %1348 = vst [vmem:[#allocation2 + $0x90] sm:$0xff] %v1316
      %1349 = vst [vmem:[#allocation2 + $0x98] sm:$0xff] %v1317
      %1350 = vst [vmem:[#allocation2 + $0xa0] sm:$0xff] %v1318
      %1351 = vst [vmem:[#allocation2 + $0xa8] sm:$0xff] %v1319
      %1352 = vst [vmem:[#allocation2 + $0xb0] sm:$0xff] %v1320
      %1353 = vst [vmem:[#allocation2 + $0xb8] sm:$0xff] %v1321
      %1354 = vst [vmem:[#allocation2 + $0xc0] sm:$0xff] %v1322
      %1355 = vst [vmem:[#allocation2 + $0xc8] sm:$0xff] %v1323
      %1356 = vst [vmem:[#allocation2 + $0xd0] sm:$0xff] %v1324
      %1357 = vst [vmem:[#allocation2 + $0xd8] sm:$0xff] %v1325
      %1358 = vst [vmem:[#allocation2 + $0xe0] sm:$0xff] %v1326
      %1359 = vst [vmem:[#allocation2 + $0xe8] sm:$0xff] %v1327
      %1360 = vst [vmem:[#allocation2 + $0xf0] sm:$0xff] %v1328
      %1361 = vst [vmem:[#allocation2 + $0xf8] sm:$0xff] %v1329
      // Predicated region
      $region37: #{cyclegan_forward.139} parent=31 // pred_check
        %p1362 = pneg %p268
      $region38: #{cyclegan_forward.139} parent=31 // pred_check_branch
        %1364 = sbr.rel (%p1362) target = $region40
      $region39: #{cyclegan_forward.139} parent=31 // pred_region
        %v1365 = vld [vmem:[#allocation2] sm:$0xff]
        %v1366 = vld [vmem:[#allocation2 + $0x8] sm:$0xff]
        %v1367 = vld [vmem:[#allocation2 + $0x10] sm:$0xff]
        %v1368 = vld [vmem:[#allocation2 + $0x18] sm:$0xff]
        %v1369 = vld [vmem:[#allocation2 + $0x20] sm:$0xff]
        %v1370 = vld [vmem:[#allocation2 + $0x28] sm:$0xff]
        %v1371 = vld [vmem:[#allocation2 + $0x30] sm:$0xff]
        %v1372 = vld [vmem:[#allocation2 + $0x38] sm:$0xff]
        %v1373 = vld [vmem:[#allocation2 + $0x40] sm:$0xff]
        %v1374 = vld [vmem:[#allocation2 + $0x48] sm:$0xff]
        %v1375 = vld [vmem:[#allocation2 + $0x50] sm:$0xff]
        %v1376 = vld [vmem:[#allocation2 + $0x58] sm:$0xff]
        %v1377 = vld [vmem:[#allocation2 + $0x60] sm:$0xff]
        %v1378 = vld [vmem:[#allocation2 + $0x68] sm:$0xff]
        %v1379 = vld [vmem:[#allocation2 + $0x70] sm:$0xff]
        %v1380 = vld [vmem:[#allocation2 + $0x78] sm:$0xff]
        %v1381 = vld [vmem:[#allocation2 + $0x80] sm:$0xff]
        %v1382 = vld [vmem:[#allocation2 + $0x88] sm:$0xff]
        %v1383 = vld [vmem:[#allocation2 + $0x90] sm:$0xff]
        %v1384 = vld [vmem:[#allocation2 + $0x98] sm:$0xff]
        %v1385 = vld [vmem:[#allocation2 + $0xa0] sm:$0xff]
        %v1386 = vld [vmem:[#allocation2 + $0xa8] sm:$0xff]
        %v1387 = vld [vmem:[#allocation2 + $0xb0] sm:$0xff]
        %v1388 = vld [vmem:[#allocation2 + $0xb8] sm:$0xff]
        %v1389 = vld [vmem:[#allocation2 + $0xc0] sm:$0xff]
        %v1390 = vld [vmem:[#allocation2 + $0xc8] sm:$0xff]
        %v1391 = vld [vmem:[#allocation2 + $0xd0] sm:$0xff]
        %v1392 = vld [vmem:[#allocation2 + $0xd8] sm:$0xff]
        %v1393 = vld [vmem:[#allocation2 + $0xe0] sm:$0xff]
        %v1394 = vld [vmem:[#allocation2 + $0xe8] sm:$0xff]
        %v1395 = vld [vmem:[#allocation2 + $0xf0] sm:$0xff]
        %v1396 = vld [vmem:[#allocation2 + $0xf8] sm:$0xff]
        %v1397 = vld [vmem:[%s257] sm:$0x1]
        %v1399 = vlaneseq
        %v1400 = vshrl.u32 %v1399, 7
        %v1401 = vsub.s32 0, %v1400
        %v1402 = vrot.slane %v1397, %v1401
        %v1404 = vadd.f32 %v1365, %v1402
        %v1405 = vadd.f32 %v1366, %v1402
        %v1406 = vadd.f32 %v1367, %v1402
        %v1407 = vadd.f32 %v1368, %v1402
        %v1408 = vadd.f32 %v1369, %v1402
        %v1409 = vadd.f32 %v1370, %v1402
        %v1410 = vadd.f32 %v1371, %v1402
        %v1411 = vadd.f32 %v1372, %v1402
        %v1412 = vadd.f32 %v1373, %v1402
        %v1413 = vadd.f32 %v1374, %v1402
        %v1414 = vadd.f32 %v1375, %v1402
        %v1415 = vadd.f32 %v1376, %v1402
        %v1416 = vadd.f32 %v1377, %v1402
        %v1417 = vadd.f32 %v1378, %v1402
        %v1418 = vadd.f32 %v1379, %v1402
        %v1419 = vadd.f32 %v1380, %v1402
        %v1420 = vadd.f32 %v1381, %v1402
        %v1421 = vadd.f32 %v1382, %v1402
        %v1422 = vadd.f32 %v1383, %v1402
        %v1423 = vadd.f32 %v1384, %v1402
        %v1424 = vadd.f32 %v1385, %v1402
        %v1425 = vadd.f32 %v1386, %v1402
        %v1426 = vadd.f32 %v1387, %v1402
        %v1427 = vadd.f32 %v1388, %v1402
        %v1428 = vadd.f32 %v1389, %v1402
        %v1429 = vadd.f32 %v1390, %v1402
        %v1430 = vadd.f32 %v1391, %v1402
        %v1431 = vadd.f32 %v1392, %v1402
        %v1432 = vadd.f32 %v1393, %v1402
        %v1433 = vadd.f32 %v1394, %v1402
        %v1434 = vadd.f32 %v1395, %v1402
        %v1435 = vadd.f32 %v1396, %v1402
        %v1436 = vtanh.pop %v1404
        %v1437 = vtanh.pop %v1405
        %v1438 = vtanh.pop %v1406
        %v1439 = vtanh.pop %v1407
        %v1440 = vtanh.pop %v1408
        %v1441 = vtanh.pop %v1409
        %v1442 = vtanh.pop %v1410
        %v1443 = vtanh.pop %v1411
        %v1444 = vtanh.pop %v1412
        %v1445 = vtanh.pop %v1413
        %v1446 = vtanh.pop %v1414
        %v1447 = vtanh.pop %v1415
        %v1448 = vtanh.pop %v1416
        %v1449 = vtanh.pop %v1417
        %v1450 = vtanh.pop %v1418
        %v1451 = vtanh.pop %v1419
        %v1452 = vtanh.pop %v1420
        %v1453 = vtanh.pop %v1421
        %v1454 = vtanh.pop %v1422
        %v1455 = vtanh.pop %v1423
        %v1456 = vtanh.pop %v1424
        %v1457 = vtanh.pop %v1425
        %v1458 = vtanh.pop %v1426
        %v1459 = vtanh.pop %v1427
        %v1460 = vtanh.pop %v1428
        %v1461 = vtanh.pop %v1429
        %v1462 = vtanh.pop %v1430
        %v1463 = vtanh.pop %v1431
        %v1464 = vtanh.pop %v1432
        %v1465 = vtanh.pop %v1433
        %v1466 = vtanh.pop %v1434
        %v1467 = vtanh.pop %v1435
        %1468 = vst [vmem:[%s265] sm:$0xff] %v1436
        %1469 = vst [vmem:[%s265 + $0x8] sm:$0xff] %v1437
        %1470 = vst [vmem:[%s265 + $0x10] sm:$0xff] %v1438
        %1471 = vst [vmem:[%s265 + $0x18] sm:$0xff] %v1439
        %1472 = vst [vmem:[%s265 + $0x20] sm:$0xff] %v1440
        %1473 = vst [vmem:[%s265 + $0x28] sm:$0xff] %v1441
        %1474 = vst [vmem:[%s265 + $0x30] sm:$0xff] %v1442
        %1475 = vst [vmem:[%s265 + $0x38] sm:$0xff] %v1443
        %1476 = vst [vmem:[%s265 + $0x40] sm:$0xff] %v1444
        %1477 = vst [vmem:[%s265 + $0x48] sm:$0xff] %v1445
        %1478 = vst [vmem:[%s265 + $0x50] sm:$0xff] %v1446
        %1479 = vst [vmem:[%s265 + $0x58] sm:$0xff] %v1447
        %1480 = vst [vmem:[%s265 + $0x60] sm:$0xff] %v1448
        %1481 = vst [vmem:[%s265 + $0x68] sm:$0xff] %v1449
        %1482 = vst [vmem:[%s265 + $0x70] sm:$0xff] %v1450
        %1483 = vst [vmem:[%s265 + $0x78] sm:$0xff] %v1451
        %1484 = vst [vmem:[%s265 + $0x80] sm:$0xff] %v1452
        %1485 = vst [vmem:[%s265 + $0x88] sm:$0xff] %v1453
        %1486 = vst [vmem:[%s265 + $0x90] sm:$0xff] %v1454
        %1487 = vst [vmem:[%s265 + $0x98] sm:$0xff] %v1455
        %1488 = vst [vmem:[%s265 + $0xa0] sm:$0xff] %v1456
        %1489 = vst [vmem:[%s265 + $0xa8] sm:$0xff] %v1457
        %1490 = vst [vmem:[%s265 + $0xb0] sm:$0xff] %v1458
        %1491 = vst [vmem:[%s265 + $0xb8] sm:$0xff] %v1459
        %1492 = vst [vmem:[%s265 + $0xc0] sm:$0xff] %v1460
        %1493 = vst [vmem:[%s265 + $0xc8] sm:$0xff] %v1461
        %1494 = vst [vmem:[%s265 + $0xd0] sm:$0xff] %v1462
        %1495 = vst [vmem:[%s265 + $0xd8] sm:$0xff] %v1463
        %1496 = vst [vmem:[%s265 + $0xe0] sm:$0xff] %v1464
        %1497 = vst [vmem:[%s265 + $0xe8] sm:$0xff] %v1465
        %1498 = vst [vmem:[%s265 + $0xf0] sm:$0xff] %v1466
        %1499 = vst [vmem:[%s265 + $0xf8] sm:$0xff] %v1467
      $region40: #{cyclegan_forward.139} parent=31 // pred_fallthru
        _
      %s1500 = smul.u32 32, %s19
      %p1501 = scmp.lt.s32.totalorder %s1500, 63
      %s1502 = scalar_select %p1501, %s1500, 63
      %p1503 = scmp.lt.s32.totalorder %s20, 0
      %s1504 = scalar_select %p1503, %s20, 0
      %s1505 = sadd.s32 %s1504, %s1502
      %s1506 = smul.addr %s1505, 8
      %s1507 = scalar_lea.vmem %s3, %s1506
      // Predicated region
      $region41: #{cyclegan_forward.139} parent=31 // pred_check
        %p1508 = pneg %p135
      $region42: #{cyclegan_forward.139} parent=31 // pred_check_branch
        %1510 = sbr.rel (%p1508) target = $region44
      $region43: #{cyclegan_forward.139} parent=31 // pred_region
        %s1511 = smul.u32 32, %s19
      $region44: #{cyclegan_forward.139} parent=31 // pred_fallthru
        _
    $region32: #{cyclegan_forward.139} parent=5 // pred_fallthru
      _
    %p1512 = scmp.le.s32.totalorder 2, %s9
    // Predicated region
    $region45: #{cyclegan_forward.139} parent=5 // pred_check
      %p1513 = pneg %p1512
    $region46: #{cyclegan_forward.139} parent=5 // pred_check_branch
      %1515 = sbr.rel (%p1513) target = $region48
    $region47: #{cyclegan_forward.139} parent=5 // pred_region
      %s1516 = ssub.s32 %s9, 2
      // Predicated region
      $region49: #{cyclegan_forward.139} parent=47 // pred_check
        %p1517 = pneg %p141
      $region50: #{cyclegan_forward.139} parent=47 // pred_check_branch
        %1519 = sbr.rel (%p1517) target = $region52
      $region51: #{cyclegan_forward.139} parent=47 // pred_region
        %s1520 = smul.u32 32, %s22
        %p1521 = scmp.lt.s32.totalorder %s1520, 63
        %s1522 = scalar_select %p1521, %s1520, 63
        %p1523 = scmp.lt.s32.totalorder %s23, 0
        %s1524 = scalar_select %p1523, %s23, 0
        %s1525 = sadd.s32 %s1524, %s1522
        %s1526 = smul.addr %s1525, 8
        %s1527 = scalar_lea.vmem %s3, %s1526
      $region52: #{cyclegan_forward.139} parent=47 // pred_fallthru
        _
    $region48: #{cyclegan_forward.139} parent=5 // pred_fallthru
      _
  $region6: #{cyclegan_forward.139} parent=0 // loop_footer
    %s13 = sadd.s32 1, %s9
  $region7: #{cyclegan_forward.139} parent=0 // loop_footer_branch
    %8 = sbr.rel target = $region3
  $region8: #{cyclegan_forward.139} parent=0 // loop_exit
    _

</llo_original>
